<compile_context>
chip_gen: v6e
topology: v6e:2x2x1
jax: 0.10.0
libtpu: 0.0.40
codegen_flags: <defaults>
</compile_context>

<pallas_src>
import functools

import jax
import jax.numpy as jnp
from jax.experimental import pallas as pl
from jax.experimental.pallas import tpu as pltpu


def _round_up(x, m):
    return (x + m - 1) // m * m


# ----------------------------------------------------------------------------
# Fused Pallas kernel: one graph-block per grid step, all layers stay on-chip
# ----------------------------------------------------------------------------
def _gnn_fused_kernel(adj_ref, x_ref, ea_ref, pool_ref, g_ref, w_ref, out_ref,
                      *, layout, sage, n_gmlp, n_out):
    # adj_ref [Nb,Nb] bf16, x_ref [Nb,F0] f32, ea_ref [Nb,Fe] f32,
    # pool_ref [Gb,Nb] bf16, g_ref [Gb,Fg] f32, w_ref [WR,W] f32 packed slab.

    def w(name):                                   # static slice into the weight slab
        r0, nr, nc = layout[name]
        return w_ref[r0:r0 + nr, 0:nc]

    dot = functools.partial(jnp.dot, preferred_element_type=jnp.float32)

    # 0/1 matrices transported as bf16 (exact); upcast so all math/accumulation is f32.
    adj = adj_ref[...].astype(jnp.float32)
    h = x_ref[...]

    # Folded edge projections (We@Wl) for ALL layers in one matmul, column-sliced below.
    ea_proj = dot(ea_ref[...], w("wel_all"))       # [Nb, sum(Fout_l)]

    col = 0
    for l, (fin, fout, skip) in enumerate(sage):
        wlr = w(f"sage{l}_wlr")                    # [2*Fin, Fout] == [Wl ; Wr]
        b = w(f"sage{l}_b")                        # [1, Fout]
        if fin > fout:
            # project-then-aggregate: the N^2 term costs N^2*Fout instead of N^2*Fin
            out = dot(adj, dot(h, wlr[:fin])) + dot(h, wlr[fin:])
        else:
            # single stacked matmul on the lane-concatenated [A@h | h] (concat = XLU work)
            out = dot(jnp.concatenate([dot(adj, h), h], axis=-1), wlr)
        out = jnp.maximum(out + ea_proj[:, col:col + fout] + b, 0.0)   # conv -> activation
        col += fout
        if skip:                                   # skip connection added AFTER activation
            out = h + out
        h = out

    # readout: global_add_pool == pooling-matrix matmul
    graph_emb = dot(pool_ref[...].astype(jnp.float32), h)              # [Gb, F_last]

    # global-feature MLP (apply_output_activation=True -> ReLU on every layer)
    g = g_ref[...]
    for i in range(n_gmlp):
        g = jnp.maximum(dot(g, w(f"gmlp{i}_w")) + w(f"gmlp{i}_b"), 0.0)

    # output net; first layer consumes [graph_emb ; g] via split weights (no concat)
    out = dot(graph_emb, w("out0_wg")) + dot(g, w("out0_wx")) + w("out0_b")
    if n_out > 1:
        out = jnp.maximum(out, 0.0)
    for i in range(1, n_out):
        out = dot(out, w(f"out{i}_w")) + w(f"out{i}_b")
        if i < n_out - 1:
            out = jnp.maximum(out, 0.0)

    out_ref[...] = out.astype(out_ref.dtype)


# ----------------------------------------------------------------------------
# Weight-slab packing: one DMA instead of ~20 tiny descriptors
# ----------------------------------------------------------------------------
def _pack_weight_slab(named, width):
    layout, blocks, r = {}, [], 0
    for name, a in named:
        a = jnp.asarray(a, jnp.float32)
        nr, nc = a.shape
        nr_pad = _round_up(nr, 8)                  # sublane-align every slice
        blocks.append(jnp.pad(a, ((0, nr_pad - nr), (0, width - nc))))
        layout[name] = (r, nr, nc)
        r += nr_pad
    return jnp.concatenate(blocks, axis=0), layout


# ----------------------------------------------------------------------------
# Parameter construction (deterministic, synthetic)
# ----------------------------------------------------------------------------
def init_linear(key, fan_in, fan_out):
    kw, kb = jax.random.split(key)
    scale = 1.0 / jnp.sqrt(jnp.float32(fan_in))
    w = jax.random.uniform(kw, (fan_in, fan_out), jnp.float32, -scale, scale)
    b = jax.random.uniform(kb, (fan_out,), jnp.float32, -scale, scale)
    return w, b


def build_params(key, n_atom_embeddings, n_edge_features, atom_embedding_sizes,
                 n_global_features, global_hidden, global_out,
                 mol_emb_size, output_hidden, n_tasks):
    params = {"sage": [], "global_mlp": [], "output_net": []}
    in_dim = n_atom_embeddings
    for out_dim in atom_embedding_sizes:
        key, k1, k2, k3 = jax.random.split(key, 4)
        wl, b = init_linear(k1, in_dim, out_dim)
        wr, _ = init_linear(k2, in_dim, out_dim)
        we = jax.random.uniform(k3, (n_edge_features, in_dim), jnp.float32,
                                -1.0 / jnp.sqrt(jnp.float32(n_edge_features)),
                                1.0 / jnp.sqrt(jnp.float32(n_edge_features)))
        params["sage"].append({"wl": wl, "wr": wr, "we": we, "b": b})
        in_dim = out_dim
    dims = [n_global_features] + global_hidden + [global_out]
    for i in range(len(dims) - 1):
        key, k = jax.random.split(key)
        params["global_mlp"].append(init_linear(k, dims[i], dims[i + 1]))
    dims = [mol_emb_size] + output_hidden + [n_tasks]
    for i in range(len(dims) - 1):
        key, k = jax.random.split(key)
        params["output_net"].append(init_linear(k, dims[i], dims[i + 1]))
    return params


# ----------------------------------------------------------------------------
# GNN forward: dense-operator glue in JAX, single fused Pallas kernel for all math
# ----------------------------------------------------------------------------
def gnn_forward(params, x, edge_index, edge_attr, batch_idx, global_features,
                n_graphs, n_blocks=1, skip_connections=True):
    N, F0 = x.shape
    Fe = edge_attr.shape[1]
    Fg = global_features.shape[1]
    assert N % n_blocks == 0 and n_graphs % n_blocks == 0
    npb, gpb = N // n_blocks, n_graphs // n_blocks
    Nb = _round_up(npb, 128)                       # MXU-native row count per block
    Gb = _round_up(gpb, 8)

    # --- blocked dense operators (JAX glue: dynamic scatters) ---
    src, dst = edge_index[0], edge_index[1]
    e_blk, src_l, dst_l = dst // npb, src % npb, dst % npb
    adj = (jnp.zeros((n_blocks, Nb, Nb), jnp.float32)
           .at[e_blk, dst_l, src_l].add(1.0)).astype(jnp.bfloat16)
    ea = (jnp.zeros((n_blocks, Nb, Fe), jnp.float32)
          .at[e_blk, dst_l].add(edge_attr.astype(jnp.float32)))
    n_idx = jnp.arange(N)
    n_blk, n_loc = n_idx // npb, n_idx % npb
    xb = jnp.zeros((n_blocks, Nb, F0), jnp.float32).at[n_blk, n_loc].set(x.astype(jnp.float32))
    pool = (jnp.zeros((n_blocks, Gb, Nb), jnp.float32)
            .at[n_blk, batch_idx % gpb, n_loc].set(1.0)).astype(jnp.bfloat16)
    g_idx = jnp.arange(n_graphs)
    gb = (jnp.zeros((n_blocks, Gb, Fg), jnp.float32)
          .at[g_idx // gpb, g_idx % gpb].set(global_features.astype(jnp.float32)))

    # --- pack every weight/bias into one resident VMEM slab ---
    sage_meta, wel_cols, named = [], [], []
    for layer in params["sage"]:
        fin, fout = layer["wl"].shape
        sage_meta.append((fin, fout, bool(skip_connections and fin == fout)))
        wel_cols.append(jnp.dot(layer["we"], layer["wl"]))       # fold We @ Wl
    named.append(("wel_all", jnp.concatenate(wel_cols, axis=1)))
    for l, layer in enumerate(params["sage"]):
        named.append((f"sage{l}_wlr", jnp.concatenate([layer["wl"], layer["wr"]], axis=0)))
        named.append((f"sage{l}_b", layer["b"].reshape(1, -1)))
    for i, (wm, bm) in enumerate(params["global_mlp"]):
        named += [(f"gmlp{i}_w", wm), (f"gmlp{i}_b", bm.reshape(1, -1))]
    w0, b0 = params["output_net"][0]
    graph_dim = params["sage"][-1]["wl"].shape[1]
    named += [("out0_wg", w0[:graph_dim]), ("out0_wx", w0[graph_dim:]),
              ("out0_b", b0.reshape(1, -1))]
    for i, (wm, bm) in enumerate(params["output_net"][1:], start=1):
        named += [(f"out{i}_w", wm), (f"out{i}_b", bm.reshape(1, -1))]

    width = _round_up(max(int(a.shape[1]) for _, a in named), 128)
    slab, layout = _pack_weight_slab(named, width)
    WR = slab.shape[0]
    n_tasks = params["output_net"][-1][0].shape[1]

    kernel = functools.partial(
        _gnn_fused_kernel, layout=layout, sage=tuple(sage_meta),
        n_gmlp=len(params["global_mlp"]), n_out=len(params["output_net"]))

    # advisory cost estimate so XLA can schedule the scatters around the custom call
    sum_fout = sum(f for _, f, _ in sage_meta)
    flops = n_blocks * (sum(2 * Nb * Nb * fin + 2 * Nb * 2 * fin * fout
                            for fin, fout, _ in sage_meta)
                        + 2 * Nb * Fe * sum_fout
                        + 2 * Gb * Nb * sage_meta[-1][1])
    inputs = (adj, xb, ea, pool, gb, slab)
    bytes_accessed = (sum(int(a.size) * a.dtype.itemsize for a in inputs)
                      + n_blocks * Gb * n_tasks * 4)

    out3 = pl.pallas_call(
        kernel,
        out_shape=jax.ShapeDtypeStruct((n_blocks, Gb, n_tasks), jnp.float32),
        grid=(n_blocks,),
        in_specs=[
            pl.BlockSpec((None, Nb, Nb), lambda b: (b, 0, 0)),
            pl.BlockSpec((None, Nb, F0), lambda b: (b, 0, 0)),
            pl.BlockSpec((None, Nb, Fe), lambda b: (b, 0, 0)),
            pl.BlockSpec((None, Gb, Nb), lambda b: (b, 0, 0)),
            pl.BlockSpec((None, Gb, Fg), lambda b: (b, 0, 0)),
            pl.BlockSpec((WR, width), lambda b: (0, 0)),   # weight slab: resident, one DMA
        ],
        out_specs=pl.BlockSpec((None, Gb, n_tasks), lambda b: (b, 0, 0)),
        compiler_params=pltpu.CompilerParams(
            dimension_semantics=("parallel",),             # blocks split across TCs on v7x
            vmem_limit_bytes=64 * 1024 * 1024),
        cost_estimate=pl.CostEstimate(flops=int(flops), transcendentals=0,
                                      bytes_accessed=int(bytes_accessed)),
    )(*inputs)

    # drop the per-block graph padding; output.ndim == 2 -> returned as-is
    return out3[:, :gpb, :].reshape(n_graphs, n_tasks)


# ----------------------------------------------------------------------------
# Pure-JAX reference (unfolded SAGE form) for numerical verification
# ----------------------------------------------------------------------------
def reference_forward(params, x, edge_index, edge_attr, batch_idx, global_features,
                      n_graphs, skip_connections=True):
    N = x.shape[0]
    src, dst = edge_index[0], edge_index[1]
    adj = jnp.zeros((N, N), jnp.float32).at[dst, src].add(1.0)
    ea_agg = jnp.zeros((N, edge_attr.shape[1]), jnp.float32).at[dst].add(edge_attr.astype(jnp.float32))
    pool = jnp.zeros((n_graphs, N), jnp.float32).at[batch_idx, jnp.arange(N)].set(1.0)
    h = x.astype(jnp.float32)
    for layer in params["sage"]:
        agg = adj @ h + ea_agg @ layer["we"]
        out = agg @ layer["wl"] + h @ layer["wr"] + layer["b"]
        out = jnp.maximum(out, 0.0)
        if skip_connections and layer["wl"].shape[0] == layer["wl"].shape[1]:
            out = h + out
        h = out
    graph_emb = pool @ h
    g = global_features.astype(jnp.float32)
    for w, b in params["global_mlp"]:
        g = jnp.maximum(g @ w + b, 0.0)
    out = jnp.concatenate([graph_emb, g], axis=1)
    n_out = len(params["output_net"])
    for i, (w, b) in enumerate(params["output_net"]):
        out = out @ w + b
        if i < n_out - 1:
            out = jnp.maximum(out, 0.0)
    return out


# ----------------------------------------------------------------------------
# Main
# ----------------------------------------------------------------------------
if __name__ == "__main__":
    # keep reference and kernel matmuls at the same (full f32) precision for the check
    jax.config.update("jax_default_matmul_precision", "highest")

    key = jax.random.PRNGKey(0)

    # model config (small, consistent with the module's __init__)
    n_atom_embeddings = 32
    n_edge_features = 16
    atom_embedding_sizes = [32, 64]          # gnn_embedding['atom_embedding_sizes']
    n_global_features = 8
    global_hidden, global_out = [16], 8      # global_embedding MLP
    output_hidden, n_tasks = [32], 3         # output_net_configs
    mol_emb_size = atom_embedding_sizes[-1] + global_out    # 64 + 8 = 72

    # synthetic batch: 32 ring graphs x 8 nodes = 256 nodes -> two 128-node blocks,
    # so every matmul sees MXU-native 128-row operands and v7x can split the grid.
    n_graphs, nodes_per_graph, n_blocks = 32, 8, 2
    N = n_graphs * nodes_per_graph
    src_list, dst_list = [], []
    for gi in range(n_graphs):
        base = gi * nodes_per_graph
        for i in range(nodes_per_graph):
            j = (i + 1) % nodes_per_graph
            src_list += [base + i, base + j]
            dst_list += [base + j, base + i]
    edge_index = jnp.array([src_list, dst_list], dtype=jnp.int32)   # [2, 512]
    E = edge_index.shape[1]

    kx, ke, kg, kp = jax.random.split(key, 4)
    x = jax.random.normal(kx, (N, n_atom_embeddings), jnp.float32)
    edge_attr = jax.random.normal(ke, (E, n_edge_features), jnp.float32)
    global_features = jax.random.normal(kg, (n_graphs, n_global_features), jnp.float32)
    batch_idx = jnp.repeat(jnp.arange(n_graphs, dtype=jnp.int32), nodes_per_graph)

    params = build_params(kp, n_atom_embeddings, n_edge_features, atom_embedding_sizes,
                          n_global_features, global_hidden, global_out,
                          mol_emb_size, output_hidden, n_tasks)

    fwd = jax.jit(functools.partial(gnn_forward, n_graphs=n_graphs, n_blocks=n_blocks,
                                    skip_connections=True))
    out = jax.block_until_ready(fwd(params, x, edge_index, edge_attr, batch_idx,
                                    global_features))

    ref = reference_forward(params, x, edge_index, edge_attr, batch_idx, global_features,
                            n_graphs, skip_connections=True)
    assert out.shape == (n_graphs, n_tasks) and out.dtype == jnp.float32
    max_diff = float(jnp.max(jnp.abs(out - ref)))
    assert bool(jnp.allclose(out, ref, rtol=2e-3, atol=2e-3)), (
        f"mismatch vs pure-JAX reference (max abs diff {max_diff})")
    print("KERNEL_OK")
</pallas_src>

<mosaic_0001>
module attributes {stable_mosaic.version = 11 : i64} {
  func.func private @main(%arg0: i32) attributes {dimension_semantics = [#tpu.dimension_semantics<core_parallel>], iteration_bounds = array<i64: 2>, tpu.core_type = #tpu.core_type<sc_scalar_subcore>, window_params = []} {
    return
  }
}

module attributes {stable_mosaic.version = 11 : i64} {
  func.func private @main(%arg0: i32) attributes {dimension_semantics = [#tpu.dimension_semantics<core_parallel>], iteration_bounds = array<i64: 2>, tpu.core_type = #tpu.core_type<sc_scalar_subcore>, window_params = []} {
    return
  }
}

module attributes {stable_mosaic.version = 11 : i64} {
  func.func @_gnn_fused_kernel(%arg0: i32, %arg1: memref<1x128x128xbf16, #tpu.memory_space<vmem>>, %arg2: memref<1x128x32xf32, #tpu.memory_space<vmem>>, %arg3: memref<1x128x16xf32, #tpu.memory_space<vmem>>, %arg4: memref<1x16x128xbf16, #tpu.memory_space<vmem>>, %arg5: memref<1x16x8xf32, #tpu.memory_space<vmem>>, %arg6: memref<320x128xf32, #tpu.memory_space<vmem>>, %arg7: memref<1x16x3xf32, #tpu.memory_space<vmem>>) attributes {dimension_semantics = [#tpu.dimension_semantics<parallel>], iteration_bounds = array<i64: 2>, scalar_prefetch = 0 : i64, scratch_operands = 0 : i64, tpu.core_type = #tpu.core_type<tc>, window_params = [{transform_indices = @transform_0, window_bounds = array<i64: 1, 128, 128>}, {transform_indices = @transform_1, window_bounds = array<i64: 1, 128, 32>}, {transform_indices = @transform_2, window_bounds = array<i64: 1, 128, 16>}, {transform_indices = @transform_3, window_bounds = array<i64: 1, 16, 128>}, {transform_indices = @transform_4, window_bounds = array<i64: 1, 16, 8>}, {pipeline_mode = #tpu.pipeline_mode<synchronous>, transform_indices = @transform_5, window_bounds = array<i64: 320, 128>}, {transform_indices = @transform_6, window_bounds = array<i64: 1, 16, 3>}]} {
    %c0 = arith.constant 0 : index
    %c0_0 = arith.constant 0 : index
    %c0_1 = arith.constant 0 : index
    %0 = vector.load %arg1[%c0, %c0_0, %c0_1] : memref<1x128x128xbf16, #tpu.memory_space<vmem>>, vector<1x128x128xbf16>
    %1 = vector.shape_cast %0 : vector<1x128x128xbf16> to vector<128x128xbf16>
    %2 = arith.extf %1 : vector<128x128xbf16> to vector<128x128xf32>
    %c0_2 = arith.constant 0 : index
    %c0_3 = arith.constant 0 : index
    %c0_4 = arith.constant 0 : index
    %3 = vector.load %arg2[%c0_2, %c0_3, %c0_4] : memref<1x128x32xf32, #tpu.memory_space<vmem>>, vector<1x128x32xf32>
    %4 = vector.shape_cast %3 : vector<1x128x32xf32> to vector<128x32xf32>
    %c0_5 = arith.constant 0 : index
    %c0_6 = arith.constant 0 : index
    %c0_7 = arith.constant 0 : index
    %5 = vector.load %arg3[%c0_5, %c0_6, %c0_7] : memref<1x128x16xf32, #tpu.memory_space<vmem>>, vector<1x128x16xf32>
    %6 = vector.shape_cast %5 : vector<1x128x16xf32> to vector<128x16xf32>
    %c0_8 = arith.constant 0 : index
    %c0_9 = arith.constant 0 : index
    %7 = vector.load %arg6[%c0_8, %c0_9] : memref<320x128xf32, #tpu.memory_space<vmem>>, vector<16x96xf32>
    %cst = arith.constant dense<0.000000e+00> : vector<128x96xf32>
    %8 = tpu.matmul %6, %7, %cst {dimension_numbers = #tpu.dot_dimension_numbers<[1], [0], [0], [1], [0, 0, 1, 1], [], []>, precision = #tpu.contract_precision<fp32>} : vector<128x16xf32>, vector<16x96xf32>, vector<128x96xf32> -> vector<128x96xf32>
    %c16 = arith.constant 16 : index
    %c0_10 = arith.constant 0 : index
    %9 = vector.load %arg6[%c16, %c0_10] : memref<320x128xf32, #tpu.memory_space<vmem>>, vector<64x32xf32>
    %c80 = arith.constant 80 : index
    %c0_11 = arith.constant 0 : index
    %10 = vector.load %arg6[%c80, %c0_11] : memref<320x128xf32, #tpu.memory_space<vmem>>, vector<1x32xf32>
    %cst_12 = arith.constant dense<0.000000e+00> : vector<128x32xf32>
    %11 = tpu.matmul %2, %4, %cst_12 {dimension_numbers = #tpu.dot_dimension_numbers<[1], [0], [0], [1], [0, 0, 1, 1], [], []>, precision = #tpu.contract_precision<fp32>} : vector<128x128xf32>, vector<128x32xf32>, vector<128x32xf32> -> vector<128x32xf32>
    %12 = tpu.concatenate %11, %4 in 1 : vector<128x32xf32>, vector<128x32xf32> -> vector<128x64xf32>
    %cst_13 = arith.constant dense<0.000000e+00> : vector<128x32xf32>
    %13 = tpu.matmul %12, %9, %cst_13 {dimension_numbers = #tpu.dot_dimension_numbers<[1], [0], [0], [1], [0, 0, 1, 1], [], []>, precision = #tpu.contract_precision<fp32>} : vector<128x64xf32>, vector<64x32xf32>, vector<128x32xf32> -> vector<128x32xf32>
    %14 = vector.extract_strided_slice %8 {offsets = [0, 0], sizes = [128, 32], strides = [1, 1]} : vector<128x96xf32> to vector<128x32xf32>
    %15 = arith.addf %13, %14 : vector<128x32xf32>
    %16 = vector.broadcast %10 : vector<1x32xf32> to vector<128x32xf32>
    %17 = arith.addf %15, %16 : vector<128x32xf32>
    %cst_14 = arith.constant 0.000000e+00 : f32
    %18 = vector.broadcast %cst_14 : f32 to vector<128x32xf32>
    %19 = arith.maximumf %17, %18 : vector<128x32xf32>
    %20 = arith.addf %4, %19 : vector<128x32xf32>
    %c88 = arith.constant 88 : index
    %c0_15 = arith.constant 0 : index
    %21 = vector.load %arg6[%c88, %c0_15] : memref<320x128xf32, #tpu.memory_space<vmem>>, vector<64x64xf32>
    %c152 = arith.constant 152 : index
    %c0_16 = arith.constant 0 : index
    %22 = vector.load %arg6[%c152, %c0_16] : memref<320x128xf32, #tpu.memory_space<vmem>>, vector<1x64xf32>
    %cst_17 = arith.constant dense<0.000000e+00> : vector<128x32xf32>
    %23 = tpu.matmul %2, %20, %cst_17 {dimension_numbers = #tpu.dot_dimension_numbers<[1], [0], [0], [1], [0, 0, 1, 1], [], []>, precision = #tpu.contract_precision<fp32>} : vector<128x128xf32>, vector<128x32xf32>, vector<128x32xf32> -> vector<128x32xf32>
    %24 = tpu.concatenate %23, %20 in 1 : vector<128x32xf32>, vector<128x32xf32> -> vector<128x64xf32>
    %cst_18 = arith.constant dense<0.000000e+00> : vector<128x64xf32>
    %25 = tpu.matmul %24, %21, %cst_18 {dimension_numbers = #tpu.dot_dimension_numbers<[1], [0], [0], [1], [0, 0, 1, 1], [], []>, precision = #tpu.contract_precision<fp32>} : vector<128x64xf32>, vector<64x64xf32>, vector<128x64xf32> -> vector<128x64xf32>
    %26 = vector.extract_strided_slice %8 {offsets = [0, 32], sizes = [128, 64], strides = [1, 1]} : vector<128x96xf32> to vector<128x64xf32>
    %27 = arith.addf %25, %26 : vector<128x64xf32>
    %28 = vector.broadcast %22 : vector<1x64xf32> to vector<128x64xf32>
    %29 = arith.addf %27, %28 : vector<128x64xf32>
    %cst_19 = arith.constant 0.000000e+00 : f32
    %30 = vector.broadcast %cst_19 : f32 to vector<128x64xf32>
    %31 = arith.maximumf %29, %30 : vector<128x64xf32>
    %c0_20 = arith.constant 0 : index
    %c0_21 = arith.constant 0 : index
    %c0_22 = arith.constant 0 : index
    %32 = vector.load %arg4[%c0_20, %c0_21, %c0_22] : memref<1x16x128xbf16, #tpu.memory_space<vmem>>, vector<1x16x128xbf16>
    %33 = vector.shape_cast %32 : vector<1x16x128xbf16> to vector<16x128xbf16>
    %34 = arith.extf %33 : vector<16x128xbf16> to vector<16x128xf32>
    %cst_23 = arith.constant dense<0.000000e+00> : vector<16x64xf32>
    %35 = tpu.matmul %34, %31, %cst_23 {dimension_numbers = #tpu.dot_dimension_numbers<[1], [0], [0], [1], [0, 0, 1, 1], [], []>, precision = #tpu.contract_precision<fp32>} : vector<16x128xf32>, vector<128x64xf32>, vector<16x64xf32> -> vector<16x64xf32>
    %c0_24 = arith.constant 0 : index
    %c0_25 = arith.constant 0 : index
    %c0_26 = arith.constant 0 : index
    %36 = vector.load %arg5[%c0_24, %c0_25, %c0_26] : memref<1x16x8xf32, #tpu.memory_space<vmem>>, vector<1x16x8xf32>
    %37 = vector.shape_cast %36 : vector<1x16x8xf32> to vector<16x8xf32>
    %c160 = arith.constant 160 : index
    %c0_27 = arith.constant 0 : index
    %38 = vector.load %arg6[%c160, %c0_27] : memref<320x128xf32, #tpu.memory_space<vmem>>, vector<8x16xf32>
    %cst_28 = arith.constant dense<0.000000e+00> : vector<16x16xf32>
    %39 = tpu.matmul %37, %38, %cst_28 {dimension_numbers = #tpu.dot_dimension_numbers<[1], [0], [0], [1], [0, 0, 1, 1], [], []>, precision = #tpu.contract_precision<fp32>} : vector<16x8xf32>, vector<8x16xf32>, vector<16x16xf32> -> vector<16x16xf32>
    %c168 = arith.constant 168 : index
    %c0_29 = arith.constant 0 : index
    %40 = vector.load %arg6[%c168, %c0_29] : memref<320x128xf32, #tpu.memory_space<vmem>>, vector<1x16xf32>
    %41 = vector.broadcast %40 : vector<1x16xf32> to vector<16x16xf32>
    %42 = arith.addf %39, %41 : vector<16x16xf32>
    %cst_30 = arith.constant 0.000000e+00 : f32
    %43 = vector.broadcast %cst_30 : f32 to vector<16x16xf32>
    %44 = arith.maximumf %42, %43 : vector<16x16xf32>
    %c176 = arith.constant 176 : index
    %c0_31 = arith.constant 0 : index
    %45 = vector.load %arg6[%c176, %c0_31] : memref<320x128xf32, #tpu.memory_space<vmem>>, vector<16x8xf32>
    %cst_32 = arith.constant dense<0.000000e+00> : vector<16x8xf32>
    %46 = tpu.matmul %44, %45, %cst_32 {dimension_numbers = #tpu.dot_dimension_numbers<[1], [0], [0], [1], [0, 0, 1, 1], [], []>, precision = #tpu.contract_precision<fp32>} : vector<16x16xf32>, vector<16x8xf32>, vector<16x8xf32> -> vector<16x8xf32>
    %c192 = arith.constant 192 : index
    %c0_33 = arith.constant 0 : index
    %47 = vector.load %arg6[%c192, %c0_33] : memref<320x128xf32, #tpu.memory_space<vmem>>, vector<1x8xf32>
    %48 = vector.broadcast %47 : vector<1x8xf32> to vector<16x8xf32>
    %49 = arith.addf %46, %48 : vector<16x8xf32>
    %cst_34 = arith.constant 0.000000e+00 : f32
    %50 = vector.broadcast %cst_34 : f32 to vector<16x8xf32>
    %51 = arith.maximumf %49, %50 : vector<16x8xf32>
    %c200 = arith.constant 200 : index
    %c0_35 = arith.constant 0 : index
    %52 = vector.load %arg6[%c200, %c0_35] : memref<320x128xf32, #tpu.memory_space<vmem>>, vector<64x32xf32>
    %cst_36 = arith.constant dense<0.000000e+00> : vector<16x32xf32>
    %53 = tpu.matmul %35, %52, %cst_36 {dimension_numbers = #tpu.dot_dimension_numbers<[1], [0], [0], [1], [0, 0, 1, 1], [], []>, precision = #tpu.contract_precision<fp32>} : vector<16x64xf32>, vector<64x32xf32>, vector<16x32xf32> -> vector<16x32xf32>
    %c264 = arith.constant 264 : index
    %c0_37 = arith.constant 0 : index
    %54 = vector.load %arg6[%c264, %c0_37] : memref<320x128xf32, #tpu.memory_space<vmem>>, vector<8x32xf32>
    %cst_38 = arith.constant dense<0.000000e+00> : vector<16x32xf32>
    %55 = tpu.matmul %51, %54, %cst_38 {dimension_numbers = #tpu.dot_dimension_numbers<[1], [0], [0], [1], [0, 0, 1, 1], [], []>, precision = #tpu.contract_precision<fp32>} : vector<16x8xf32>, vector<8x32xf32>, vector<16x32xf32> -> vector<16x32xf32>
    %56 = arith.addf %53, %55 : vector<16x32xf32>
    %c272 = arith.constant 272 : index
    %c0_39 = arith.constant 0 : index
    %57 = vector.load %arg6[%c272, %c0_39] : memref<320x128xf32, #tpu.memory_space<vmem>>, vector<1x32xf32>
    %58 = vector.broadcast %57 : vector<1x32xf32> to vector<16x32xf32>
    %59 = arith.addf %56, %58 : vector<16x32xf32>
    %cst_40 = arith.constant 0.000000e+00 : f32
    %60 = vector.broadcast %cst_40 : f32 to vector<16x32xf32>
    %61 = arith.maximumf %59, %60 : vector<16x32xf32>
    %c280 = arith.constant 280 : index
    %c0_41 = arith.constant 0 : index
    %62 = vector.load %arg6[%c280, %c0_41] : memref<320x128xf32, #tpu.memory_space<vmem>>, vector<32x3xf32>
    %cst_42 = arith.constant dense<0.000000e+00> : vector<16x3xf32>
    %63 = tpu.matmul %61, %62, %cst_42 {dimension_numbers = #tpu.dot_dimension_numbers<[1], [0], [0], [1], [0, 0, 1, 1], [], []>, precision = #tpu.contract_precision<fp32>} : vector<16x32xf32>, vector<32x3xf32>, vector<16x3xf32> -> vector<16x3xf32>
    %c312 = arith.constant 312 : index
    %c0_43 = arith.constant 0 : index
    %64 = vector.load %arg6[%c312, %c0_43] : memref<320x128xf32, #tpu.memory_space<vmem>>, vector<1x3xf32>
    %65 = vector.broadcast %64 : vector<1x3xf32> to vector<16x3xf32>
    %66 = arith.addf %63, %65 : vector<16x3xf32>
    %c0_44 = arith.constant 0 : index
    %c0_45 = arith.constant 0 : index
    %c0_46 = arith.constant 0 : index
    %67 = vector.load %arg7[%c0_44, %c0_45, %c0_46] : memref<1x16x3xf32, #tpu.memory_space<vmem>>, vector<1x16x3xf32>
    %68 = vector.shape_cast %67 : vector<1x16x3xf32> to vector<16x3xf32>
    %69 = vector.shape_cast %66 : vector<16x3xf32> to vector<1x16x3xf32>
    tpu.vector_store %arg7[%c0_44, %c0_45, %c0_46], %69 {strides = array<i32>} : memref<1x16x3xf32, #tpu.memory_space<vmem>>, vector<1x16x3xf32>,
    return
  }
  func.func @transform_0(%arg0: i32) -> (i32, i32, i32) {
    %c0_i32 = arith.constant 0 : i32
    %c0_i32_0 = arith.constant 0 : i32
    %c0_i32_1 = arith.constant 0 : i32
    return %arg0, %c0_i32, %c0_i32_0 : i32, i32, i32
  }
  func.func @transform_1(%arg0: i32) -> (i32, i32, i32) {
    %c0_i32 = arith.constant 0 : i32
    %c0_i32_0 = arith.constant 0 : i32
    %c0_i32_1 = arith.constant 0 : i32
    return %arg0, %c0_i32, %c0_i32_0 : i32, i32, i32
  }
  func.func @transform_2(%arg0: i32) -> (i32, i32, i32) {
    %c0_i32 = arith.constant 0 : i32
    %c0_i32_0 = arith.constant 0 : i32
    %c0_i32_1 = arith.constant 0 : i32
    return %arg0, %c0_i32, %c0_i32_0 : i32, i32, i32
  }
  func.func @transform_3(%arg0: i32) -> (i32, i32, i32) {
    %c0_i32 = arith.constant 0 : i32
    %c0_i32_0 = arith.constant 0 : i32
    %c0_i32_1 = arith.constant 0 : i32
    return %arg0, %c0_i32, %c0_i32_0 : i32, i32, i32
  }
  func.func @transform_4(%arg0: i32) -> (i32, i32, i32) {
    %c0_i32 = arith.constant 0 : i32
    %c0_i32_0 = arith.constant 0 : i32
    %c0_i32_1 = arith.constant 0 : i32
    return %arg0, %c0_i32, %c0_i32_0 : i32, i32, i32
  }
  func.func @transform_5(%arg0: i32) -> (i32, i32) {
    %c0_i32 = arith.constant 0 : i32
    %c0_i32_0 = arith.constant 0 : i32
    %c0_i32_1 = arith.constant 0 : i32
    return %c0_i32, %c0_i32_0 : i32, i32
  }
  func.func @transform_6(%arg0: i32) -> (i32, i32, i32) {
    %c0_i32 = arith.constant 0 : i32
    %c0_i32_0 = arith.constant 0 : i32
    %c0_i32_1 = arith.constant 0 : i32
    return %arg0, %c0_i32, %c0_i32_0 : i32, i32, i32
  }
}

</mosaic_0001>

<llo_original>
// kernel: gnn_forward.1
$region0: #{gnn_forward.1}
  #allocation0 [shape = 'u32[]', space=smem, size = 0x4, offset = 0x4, fixed_abs, tag = 'smem constant byte address 0x4 - core index']
  #allocation1 [shape = 'u32[144,128]{1,0:T(1,128)}', space=vmem, size = 0x12000, scoped, tag = 'internal scratch']
  %s0 = inlined_call_operand.vmem [shape: bf16[2,128,128], index: 0, kind: input, shape index: {}]
  %s1 = inlined_call_operand.vmem [shape: f32[2,128,32], index: 1, kind: input, shape index: {}]
  %s2 = inlined_call_operand.vmem [shape: f32[2,128,16], index: 2, kind: input, shape index: {}]
  %s3 = inlined_call_operand.vmem [shape: bf16[2,16,128], index: 3, kind: input, shape index: {}]
  %s4 = inlined_call_operand.vmem [shape: f32[2,16,8], index: 4, kind: input, shape index: {}]
  %s5 = inlined_call_operand.vmem [shape: f32[320,128], index: 5, kind: input, shape index: {}]
  %s6 = inlined_call_operand.vmem [shape: f32[2,16,3], index: 6, kind: output, shape index: {}]
  %s7 = sld [smem:[#allocation0]]
  $region57: #{gnn_forward.1} parent=0
    _
  %s9 = ssub.s32 1, %s7
  %s10 = scalar_select 0, %s9, %s7
  loop: start=0, step=1, limit=4
  $region2: #{gnn_forward.1} parent=0 // loop_pre_header
    _
  $region3: #{gnn_forward.1} parent=0 // loop_header
    %s12 = sphi 0, %s16
    %p13 = scmp.ge.s32.totalorder %s12, 4
    %s22 = sphi 0, %s24
    %s25 = sphi 0, %s22
    %s26 = sphi 0, %s25
    %s42 = sphi 0, %s26
    %s48 = sphi 0, %s50
    %s51 = sphi 0, %s48
    %s52 = sphi 0, %s51
    %s68 = sphi 0, %s52
    %s74 = sphi 0, %s76
    %s77 = sphi 0, %s74
    %s78 = sphi 0, %s77
    %s94 = sphi 0, %s78
    %s100 = sphi 0, %s102
    %s103 = sphi 0, %s100
    %s104 = sphi 0, %s103
    %s120 = sphi 0, %s104
    %s126 = sphi 0, %s128
    %s129 = sphi 0, %s126
    %s130 = sphi 0, %s129
    %s146 = sphi 0, %s130
    %s150 = sphi 0, %s150
    %s152 = sphi 0, %s150
    %s153 = sphi 0, %s152
    %s167 = sphi 0, %s153
    %s173 = sphi 0, %s175
    %s176 = sphi 0, %s173
    %s177 = sphi 0, %s176
    %s193 = sphi 0, %s177
  $region4: #{gnn_forward.1} parent=0 // loop_header_branch
    %15 = sbr.rel (%p13) target = $region8
  $region5: #{gnn_forward.1} parent=0 // loop_body
    %s17 = ssub.s32 %s12, 1
    %s18 = ssub.s32 %s12, 2
    %s19 = sadd.s32 %s12, 1
    %s20 = ssub.s32 %s12, %s19
    %p21 = scmp.eq.s32.totalorder %s20, 0
    %s23 = sadd.s32 %s22, 1
    %s24 = scalar_select %p21, %s22, %s23
    %p27 = pneg %p21
    %p28 = scmp.eq.s32.totalorder %s12, 1
    %p29 = por %p27, %p28
    %p30 = scmp.ne.s32.totalorder %s22, %s25
    %p31 = scmp.eq.s32.totalorder %s12, 0
    %p32 = por %p30, %p31
    %p33 = scmp.ne.s32.totalorder %s22, %s25
    %p34 = scmp.eq.s32.totalorder %s17, 1
    %p35 = por %p33, %p34
    %p36 = scmp.ne.s32.totalorder %s25, %s26
    %p37 = scmp.eq.s32.totalorder %s17, 0
    %p38 = por %p36, %p37
    %p39 = scmp.ne.s32.totalorder %s25, %s26
    %p40 = scmp.eq.s32.totalorder %s18, 1
    %p41 = por %p39, %p40
    %p43 = scmp.ne.s32.totalorder %s26, %s42
    %p44 = scmp.eq.s32.totalorder %s18, 0
    %p45 = por %p43, %p44
    %s46 = ssub.s32 %s12, %s19
    %p47 = scmp.eq.s32.totalorder %s46, 0
    %s49 = sadd.s32 %s48, 1
    %s50 = scalar_select %p47, %s48, %s49
    %p53 = pneg %p47
    %p54 = scmp.eq.s32.totalorder %s12, 1
    %p55 = por %p53, %p54
    %p56 = scmp.ne.s32.totalorder %s48, %s51
    %p57 = scmp.eq.s32.totalorder %s12, 0
    %p58 = por %p56, %p57
    %p59 = scmp.ne.s32.totalorder %s48, %s51
    %p60 = scmp.eq.s32.totalorder %s17, 1
    %p61 = por %p59, %p60
    %p62 = scmp.ne.s32.totalorder %s51, %s52
    %p63 = scmp.eq.s32.totalorder %s17, 0
    %p64 = por %p62, %p63
    %p65 = scmp.ne.s32.totalorder %s51, %s52
    %p66 = scmp.eq.s32.totalorder %s18, 1
    %p67 = por %p65, %p66
    %p69 = scmp.ne.s32.totalorder %s52, %s68
    %p70 = scmp.eq.s32.totalorder %s18, 0
    %p71 = por %p69, %p70
    %s72 = ssub.s32 %s12, %s19
    %p73 = scmp.eq.s32.totalorder %s72, 0
    %s75 = sadd.s32 %s74, 1
    %s76 = scalar_select %p73, %s74, %s75
    %p79 = pneg %p73
    %p80 = scmp.eq.s32.totalorder %s12, 1
    %p81 = por %p79, %p80
    %p82 = scmp.ne.s32.totalorder %s74, %s77
    %p83 = scmp.eq.s32.totalorder %s12, 0
    %p84 = por %p82, %p83
    %p85 = scmp.ne.s32.totalorder %s74, %s77
    %p86 = scmp.eq.s32.totalorder %s17, 1
    %p87 = por %p85, %p86
    %p88 = scmp.ne.s32.totalorder %s77, %s78
    %p89 = scmp.eq.s32.totalorder %s17, 0
    %p90 = por %p88, %p89
    %p91 = scmp.ne.s32.totalorder %s77, %s78
    %p92 = scmp.eq.s32.totalorder %s18, 1
    %p93 = por %p91, %p92
    %p95 = scmp.ne.s32.totalorder %s78, %s94
    %p96 = scmp.eq.s32.totalorder %s18, 0
    %p97 = por %p95, %p96
    %s98 = ssub.s32 %s12, %s19
    %p99 = scmp.eq.s32.totalorder %s98, 0
    %s101 = sadd.s32 %s100, 1
    %s102 = scalar_select %p99, %s100, %s101
    %p105 = pneg %p99
    %p106 = scmp.eq.s32.totalorder %s12, 1
    %p107 = por %p105, %p106
    %p108 = scmp.ne.s32.totalorder %s100, %s103
    %p109 = scmp.eq.s32.totalorder %s12, 0
    %p110 = por %p108, %p109
    %p111 = scmp.ne.s32.totalorder %s100, %s103
    %p112 = scmp.eq.s32.totalorder %s17, 1
    %p113 = por %p111, %p112
    %p114 = scmp.ne.s32.totalorder %s103, %s104
    %p115 = scmp.eq.s32.totalorder %s17, 0
    %p116 = por %p114, %p115
    %p117 = scmp.ne.s32.totalorder %s103, %s104
    %p118 = scmp.eq.s32.totalorder %s18, 1
    %p119 = por %p117, %p118
    %p121 = scmp.ne.s32.totalorder %s104, %s120
    %p122 = scmp.eq.s32.totalorder %s18, 0
    %p123 = por %p121, %p122
    %s124 = ssub.s32 %s12, %s19
    %p125 = scmp.eq.s32.totalorder %s124, 0
    %s127 = sadd.s32 %s126, 1
    %s128 = scalar_select %p125, %s126, %s127
    %p131 = pneg %p125
    %p132 = scmp.eq.s32.totalorder %s12, 1
    %p133 = por %p131, %p132
    %p134 = scmp.ne.s32.totalorder %s126, %s129
    %p135 = scmp.eq.s32.totalorder %s12, 0
    %p136 = por %p134, %p135
    %p137 = scmp.ne.s32.totalorder %s126, %s129
    %p138 = scmp.eq.s32.totalorder %s17, 1
    %p139 = por %p137, %p138
    %p140 = scmp.ne.s32.totalorder %s129, %s130
    %p141 = scmp.eq.s32.totalorder %s17, 0
    %p142 = por %p140, %p141
    %p143 = scmp.ne.s32.totalorder %s129, %s130
    %p144 = scmp.eq.s32.totalorder %s18, 1
    %p145 = por %p143, %p144
    %p147 = scmp.ne.s32.totalorder %s130, %s146
    %p148 = scmp.eq.s32.totalorder %s18, 0
    %p149 = por %p147, %p148
    %s151 = sadd.s32 %s150, 1
    %p154 = scmp.eq.s32.totalorder %s12, 1
    %p155 = scmp.ne.s32.totalorder %s150, %s152
    %p156 = scmp.eq.s32.totalorder %s12, 0
    %p157 = por %p155, %p156
    %p158 = scmp.ne.s32.totalorder %s150, %s152
    %p159 = scmp.eq.s32.totalorder %s17, 1
    %p160 = por %p158, %p159
    %p161 = scmp.ne.s32.totalorder %s152, %s153
    %p162 = scmp.eq.s32.totalorder %s17, 0
    %p163 = por %p161, %p162
    %p164 = scmp.ne.s32.totalorder %s152, %s153
    %p165 = scmp.eq.s32.totalorder %s18, 1
    %p166 = por %p164, %p165
    %p168 = scmp.ne.s32.totalorder %s153, %s167
    %p169 = scmp.eq.s32.totalorder %s18, 0
    %p170 = por %p168, %p169
    %s171 = ssub.s32 %s12, %s19
    %p172 = scmp.eq.s32.totalorder %s171, 0
    %s174 = sadd.s32 %s173, 1
    %s175 = scalar_select %p172, %s173, %s174
    %p178 = pneg %p172
    %p179 = scmp.eq.s32.totalorder %s12, 1
    %p180 = por %p178, %p179
    %p181 = scmp.ne.s32.totalorder %s173, %s176
    %p182 = scmp.eq.s32.totalorder %s12, 0
    %p183 = por %p181, %p182
    %p184 = scmp.ne.s32.totalorder %s173, %s176
    %p185 = scmp.eq.s32.totalorder %s17, 1
    %p186 = por %p184, %p185
    %p187 = scmp.ne.s32.totalorder %s176, %s177
    %p188 = scmp.eq.s32.totalorder %s17, 0
    %p189 = por %p187, %p188
    %p190 = scmp.ne.s32.totalorder %s176, %s177
    %p191 = scmp.eq.s32.totalorder %s18, 1
    %p192 = por %p190, %p191
    %p194 = scmp.ne.s32.totalorder %s177, %s193
    %p195 = scmp.eq.s32.totalorder %s18, 0
    %p196 = por %p194, %p195
    %p197 = scmp.le.s32.totalorder 1, %s12
    %p198 = scmp.lt.s32.totalorder %s12, 3
    %p199 = pnand %p197, %p198
    %p200 = pneg %p199
    // Predicated region
    $region9: #{gnn_forward.1} parent=5 // pred_check
      _
    $region10: #{gnn_forward.1} parent=5 // pred_check_branch
      %202 = sbr.rel (%p199) target = $region12
    $region11: #{gnn_forward.1} parent=5 // pred_region
      %s203 = ssub.s32 %s12, 1
      // Predicated region
      $region13: #{gnn_forward.1} parent=11 // pred_check
        %p204 = pneg %p163
      $region14: #{gnn_forward.1} parent=11 // pred_check_branch
        %206 = sbr.rel (%p204) target = $region16
      $region15: #{gnn_forward.1} parent=11 // pred_region
        _
      $region16: #{gnn_forward.1} parent=11 // pred_fallthru
        _
    $region12: #{gnn_forward.1} parent=5 // pred_fallthru
      _
    %p207 = scmp.lt.s32.totalorder %s12, 2
    // Predicated region
    $region17: #{gnn_forward.1} parent=5 // pred_check
      %p208 = pneg %p207
    $region18: #{gnn_forward.1} parent=5 // pred_check_branch
      %210 = sbr.rel (%p208) target = $region20
    $region19: #{gnn_forward.1} parent=5 // pred_region
      // Predicated region
      $region21: #{gnn_forward.1} parent=19 // pred_check
        %p211 = pneg %p32
      $region22: #{gnn_forward.1} parent=19 // pred_check_branch
        %213 = sbr.rel (%p211) target = $region24
      $region23: #{gnn_forward.1} parent=19 // pred_region
        %p214 = scmp.lt.s32.totalorder %s12, 1
        %s215 = scalar_select %p214, %s12, 1
        %s216 = smul.addr %s215, 16
        %s217 = smul.addr %s216, 4
        %s218 = scalar_lea.vmem %s0, %s217
      $region24: #{gnn_forward.1} parent=19 // pred_fallthru
        _
      // Predicated region
      $region25: #{gnn_forward.1} parent=19 // pred_check
        %p219 = pneg %p58
      $region26: #{gnn_forward.1} parent=19 // pred_check_branch
        %221 = sbr.rel (%p219) target = $region28
      $region27: #{gnn_forward.1} parent=19 // pred_region
        %p222 = scmp.lt.s32.totalorder %s12, 1
        %s223 = scalar_select %p222, %s12, 1
        %s224 = smul.addr %s223, 16
        %s225 = smul.addr %s224, 8
        %s226 = scalar_lea.vmem %s1, %s225
      $region28: #{gnn_forward.1} parent=19 // pred_fallthru
        _
      // Predicated region
      $region29: #{gnn_forward.1} parent=19 // pred_check
        %p227 = pneg %p84
      $region30: #{gnn_forward.1} parent=19 // pred_check_branch
        %229 = sbr.rel (%p227) target = $region32
      $region31: #{gnn_forward.1} parent=19 // pred_region
        %p230 = scmp.lt.s32.totalorder %s12, 1
        %s231 = scalar_select %p230, %s12, 1
        %s232 = smul.addr %s231, 16
        %s233 = smul.addr %s232, 8
        %s234 = scalar_lea.vmem %s2, %s233
      $region32: #{gnn_forward.1} parent=19 // pred_fallthru
        _
      // Predicated region
      $region33: #{gnn_forward.1} parent=19 // pred_check
        %p235 = pneg %p110
      $region34: #{gnn_forward.1} parent=19 // pred_check_branch
        %237 = sbr.rel (%p235) target = $region36
      $region35: #{gnn_forward.1} parent=19 // pred_region
        %p238 = scmp.lt.s32.totalorder %s12, 1
        %s239 = scalar_select %p238, %s12, 1
        %s240 = smul.addr %s239, 2
        %s241 = smul.addr %s240, 4
        %s242 = scalar_lea.vmem %s3, %s241
      $region36: #{gnn_forward.1} parent=19 // pred_fallthru
        _
      // Predicated region
      $region37: #{gnn_forward.1} parent=19 // pred_check
        %p243 = pneg %p136
      $region38: #{gnn_forward.1} parent=19 // pred_check_branch
        %245 = sbr.rel (%p243) target = $region40
      $region39: #{gnn_forward.1} parent=19 // pred_region
        %p246 = scmp.lt.s32.totalorder %s12, 1
        %s247 = scalar_select %p246, %s12, 1
        %s248 = smul.addr %s247, 2
        %s249 = smul.addr %s248, 8
        %s250 = scalar_lea.vmem %s4, %s249
      $region40: #{gnn_forward.1} parent=19 // pred_fallthru
        _
    $region20: #{gnn_forward.1} parent=5 // pred_fallthru
      _
    %p251 = scmp.le.s32.totalorder 1, %s12
    %p252 = scmp.lt.s32.totalorder %s12, 3
    %p253 = pnand %p251, %p252
    %p254 = pneg %p253
    // Predicated region
    $region41: #{gnn_forward.1} parent=5 // pred_check
      _
    $region42: #{gnn_forward.1} parent=5 // pred_check_branch
      %256 = sbr.rel (%p253) target = $region44
    $region43: #{gnn_forward.1} parent=5 // pred_region
      %s257 = ssub.s32 %s12, 1
      %p258 = scmp.lt.s32.totalorder %s17, 1
      %s259 = scalar_select %p258, %s17, 1
      %s260 = smul.addr %s259, 16
      %s261 = smul.addr %s260, 4
      %s262 = scalar_lea.vmem %s0, %s261
      %p263 = pneg %p38
      %p264 = pneg %p35
      %p265 = scmp.lt.s32.totalorder %s17, 1
      %s266 = scalar_select %p265, %s17, 1
      %s267 = smul.addr %s266, 16
      %s268 = smul.addr %s267, 8
      %s269 = scalar_lea.vmem %s1, %s268
      %p270 = pneg %p64
      %p271 = pneg %p61
      %p272 = scmp.lt.s32.totalorder %s17, 1
      %s273 = scalar_select %p272, %s17, 1
      %s274 = smul.addr %s273, 16
      %s275 = smul.addr %s274, 8
      %s276 = scalar_lea.vmem %s2, %s275
      %p277 = pneg %p90
      %p278 = pneg %p87
      %p279 = scmp.lt.s32.totalorder %s17, 1
      %s280 = scalar_select %p279, %s17, 1
      %s281 = smul.addr %s280, 2
      %s282 = smul.addr %s281, 4
      %s283 = scalar_lea.vmem %s3, %s282
      %p284 = pneg %p116
      %p285 = pneg %p113
      %p286 = scmp.lt.s32.totalorder %s17, 1
      %s287 = scalar_select %p286, %s17, 1
      %s288 = smul.addr %s287, 2
      %s289 = smul.addr %s288, 8
      %s290 = scalar_lea.vmem %s4, %s289
      %p291 = pneg %p142
      %p292 = pneg %p139
      %p293 = pneg %p163
      %p294 = pneg %p160
      %p295 = pneg %p189
      %p296 = pneg %p186
      %p297 = scmp.lt.s32.totalorder %s17, 1
      %s298 = scalar_select %p297, %s17, 1
      %s299 = smul.addr %s298, 2
      %s300 = smul.addr %s299, 8
      %s301 = scalar_lea.vmem %s6, %s300
      %p302 = scmp.lt.s32.totalorder %s17, 1
      %s303 = scalar_select %p302, %s17, 1
      %s304 = smul.addr %s303, 16
      %s305 = smul.addr %s304, 4
      %s306 = scalar_lea.vmem %s0, %s305
      %p307 = scmp.lt.s32.totalorder %s17, 1
      %s308 = scalar_select %p307, %s17, 1
      %s309 = smul.addr %s308, 16
      %s310 = smul.addr %s309, 8
      %s311 = scalar_lea.vmem %s1, %s310
      %p312 = scmp.lt.s32.totalorder %s17, 1
      %s313 = scalar_select %p312, %s17, 1
      %s314 = smul.addr %s313, 16
      %s315 = smul.addr %s314, 8
      %s316 = scalar_lea.vmem %s2, %s315
      %p317 = scmp.lt.s32.totalorder %s17, 1
      %s318 = scalar_select %p317, %s17, 1
      %s319 = smul.addr %s318, 2
      %s320 = smul.addr %s319, 4
      %s321 = scalar_lea.vmem %s3, %s320
      %p322 = scmp.lt.s32.totalorder %s17, 1
      %s323 = scalar_select %p322, %s17, 1
      %s324 = smul.addr %s323, 2
      %s325 = smul.addr %s324, 8
      %s326 = scalar_lea.vmem %s4, %s325
      %p327 = scmp.lt.s32.totalorder %s17, 1
      %s328 = scalar_select %p327, %s17, 1
      %s329 = smul.addr %s328, 2
      %s330 = smul.addr %s329, 8
      %s331 = scalar_lea.vmem %s6, %s330
      %v332 = vld [vmem:[%s306] sm:$0xf]
      %v333 = vld [vmem:[%s306 + $0x4] sm:$0xf]
      %v334 = vld [vmem:[%s306 + $0x8] sm:$0xf]
      %v335 = vld [vmem:[%s306 + $0xc] sm:$0xf]
      %v336 = vld [vmem:[%s306 + $0x10] sm:$0xf]
      %v337 = vld [vmem:[%s306 + $0x14] sm:$0xf]
      %v338 = vld [vmem:[%s306 + $0x18] sm:$0xf]
      %v339 = vld [vmem:[%s306 + $0x1c] sm:$0xf]
      %v340 = vld [vmem:[%s306 + $0x20] sm:$0xf]
      %v341 = vld [vmem:[%s306 + $0x24] sm:$0xf]
      %v342 = vld [vmem:[%s306 + $0x28] sm:$0xf]
      %v343 = vld [vmem:[%s306 + $0x2c] sm:$0xf]
      %v344 = vld [vmem:[%s306 + $0x30] sm:$0xf]
      %v345 = vld [vmem:[%s306 + $0x34] sm:$0xf]
      %v346 = vld [vmem:[%s306 + $0x38] sm:$0xf]
      %v347 = vld [vmem:[%s306 + $0x3c] sm:$0xf]
      %v348 = vunpack.c.l.bf16 %v332
      %v349 = vunpack.c.l.bf16 %v333
      %v350 = vunpack.c.l.bf16 %v334
      %v351 = vunpack.c.l.bf16 %v335
      %v352 = vunpack.c.l.bf16 %v336
      %v353 = vunpack.c.l.bf16 %v337
      %v354 = vunpack.c.l.bf16 %v338
      %v355 = vunpack.c.l.bf16 %v339
      %v356 = vunpack.c.l.bf16 %v340
      %v357 = vunpack.c.l.bf16 %v341
      %v358 = vunpack.c.l.bf16 %v342
      %v359 = vunpack.c.l.bf16 %v343
      %v360 = vunpack.c.l.bf16 %v344
      %v361 = vunpack.c.l.bf16 %v345
      %v362 = vunpack.c.l.bf16 %v346
      %v363 = vunpack.c.l.bf16 %v347
      %v364 = vld [vmem:[%s311] sm:$0xff]
      %v365 = vld [vmem:[%s311 + $0x8] sm:$0xff]
      %v366 = vld [vmem:[%s311 + $0x10] sm:$0xff]
      %v367 = vld [vmem:[%s311 + $0x18] sm:$0xff]
      %v368 = vld [vmem:[%s311 + $0x20] sm:$0xff]
      %v369 = vld [vmem:[%s311 + $0x28] sm:$0xff]
      %v370 = vld [vmem:[%s311 + $0x30] sm:$0xff]
      %v371 = vld [vmem:[%s311 + $0x38] sm:$0xff]
      %v372 = vld [vmem:[%s311 + $0x40] sm:$0xff]
      %v373 = vld [vmem:[%s311 + $0x48] sm:$0xff]
      %v374 = vld [vmem:[%s311 + $0x50] sm:$0xff]
      %v375 = vld [vmem:[%s311 + $0x58] sm:$0xff]
      %v376 = vld [vmem:[%s311 + $0x60] sm:$0xff]
      %v377 = vld [vmem:[%s311 + $0x68] sm:$0xff]
      %v378 = vld [vmem:[%s311 + $0x70] sm:$0xff]
      %v379 = vld [vmem:[%s311 + $0x78] sm:$0xff]
      %v380 = vld [vmem:[%s316] sm:$0xff]
      %v381 = vld [vmem:[%s316 + $0x8] sm:$0xff]
      %v382 = vld [vmem:[%s316 + $0x10] sm:$0xff]
      %v383 = vld [vmem:[%s316 + $0x18] sm:$0xff]
      %v384 = vld [vmem:[%s316 + $0x20] sm:$0xff]
      %v385 = vld [vmem:[%s316 + $0x28] sm:$0xff]
      %v386 = vld [vmem:[%s316 + $0x30] sm:$0xff]
      %v387 = vld [vmem:[%s316 + $0x38] sm:$0xff]
      %v388 = vld [vmem:[%s316 + $0x40] sm:$0xff]
      %v389 = vld [vmem:[%s316 + $0x48] sm:$0xff]
      %v390 = vld [vmem:[%s316 + $0x50] sm:$0xff]
      %v391 = vld [vmem:[%s316 + $0x58] sm:$0xff]
      %v392 = vld [vmem:[%s316 + $0x60] sm:$0xff]
      %v393 = vld [vmem:[%s316 + $0x68] sm:$0xff]
      %v394 = vld [vmem:[%s316 + $0x70] sm:$0xff]
      %v395 = vld [vmem:[%s316 + $0x78] sm:$0xff]
      %v396 = vld [vmem:[%s5] sm:$0xff]
      %v397 = vld [vmem:[%s5 + $0x8] sm:$0xff]
      %vm398 = vcmask 130048
      %v400 = vsel %vm398, %v380, 0
      %v403 = vsel %vm398, %v381, 0
      %v406 = vsel %vm398, %v382, 0
      %v409 = vsel %vm398, %v383, 0
      %v412 = vsel %vm398, %v384, 0
      %v415 = vsel %vm398, %v385, 0
      %v418 = vsel %vm398, %v386, 0
      %v421 = vsel %vm398, %v387, 0
      %v424 = vsel %vm398, %v388, 0
      %v427 = vsel %vm398, %v389, 0
      %v430 = vsel %vm398, %v390, 0
      %v433 = vsel %vm398, %v391, 0
      %v436 = vsel %vm398, %v392, 0
      %v439 = vsel %vm398, %v393, 0
      %v442 = vsel %vm398, %v394, 0
      %v445 = vsel %vm398, %v395, 0
      %447 = vmatprep.subr.mxu0 0.0
      %448 = vmatpush1.msra.mxu0 0.0
      %449 = vmatprep.subr.mxu0 0.0
      %450 = vmatpush1.msra.mxu0 0.0
      %451 = vmatprep.subr.mxu0 0.0
      %452 = vmatpush1.msra.mxu0 0.0
      %453 = vmatprep.subr.mxu0 0.0
      %454 = vmatpush1.msra.mxu0 0.0
      %455 = vmatprep.subr.mxu0 0.0
      %456 = vmatpush1.msra.mxu0 0.0
      %457 = vmatprep.subr.mxu0 0.0
      %458 = vmatpush1.msra.mxu0 0.0
      %459 = vmatprep.subr.mxu0 0.0
      %460 = vmatpush1.msra.mxu0 0.0
      %461 = vmatprep.subr.mxu0 0.0
      %462 = vmatpush1.msra.mxu0 0.0
      %463 = vmatprep.subr.mxu0 0.0
      %464 = vmatpush1.msra.mxu0 0.0
      %465 = vmatprep.subr.mxu0 0.0
      %466 = vmatpush1.msra.mxu0 0.0
      %467 = vmatprep.subr.mxu0 0.0
      %468 = vmatpush1.msra.mxu0 0.0
      %469 = vmatprep.subr.mxu0 0.0
      %470 = vmatpush1.msra.mxu0 0.0
      %471 = vmatprep.subr.mxu0 0.0
      %472 = vmatpush1.msra.mxu0 0.0
      %473 = vmatprep.subr.mxu0 0.0
      %474 = vmatpush1.msra.mxu0 0.0
      %475 = vmatprep.subr.mxu0 0.0
      %v476 = vand.u32 %v397, 4294901760
      %477 = vmatpush1.msra.mxu0 %v476
      %478 = vmatprep.subr.mxu0 0.0
      %v479 = vand.u32 %v396, 4294901760
      %480 = vmatpush1.msra.mxu0 %v479
      %481 = vmatprep.subr.mxu0 0.0
      %482 = vmatpush2.msra.mxu0 0.0
      %483 = vmatprep.subr.mxu0 0.0
      %484 = vmatpush2.msra.mxu0 0.0
      %485 = vmatprep.subr.mxu0 0.0
      %486 = vmatpush2.msra.mxu0 0.0
      %487 = vmatprep.subr.mxu0 0.0
      %488 = vmatpush2.msra.mxu0 0.0
      %489 = vmatprep.subr.mxu0 0.0
      %490 = vmatpush2.msra.mxu0 0.0
      %491 = vmatprep.subr.mxu0 0.0
      %492 = vmatpush2.msra.mxu0 0.0
      %493 = vmatprep.subr.mxu0 0.0
      %494 = vmatpush2.msra.mxu0 0.0
      %495 = vmatprep.subr.mxu0 0.0
      %496 = vmatpush2.msra.mxu0 0.0
      %497 = vmatprep.subr.mxu0 0.0
      %498 = vmatpush2.msra.mxu0 0.0
      %499 = vmatprep.subr.mxu0 0.0
      %500 = vmatpush2.msra.mxu0 0.0
      %501 = vmatprep.subr.mxu0 0.0
      %502 = vmatpush2.msra.mxu0 0.0
      %503 = vmatprep.subr.mxu0 0.0
      %504 = vmatpush2.msra.mxu0 0.0
      %505 = vmatprep.subr.mxu0 0.0
      %506 = vmatpush2.msra.mxu0 0.0
      %507 = vmatprep.subr.mxu0 0.0
      %508 = vmatpush2.msra.mxu0 0.0
      %509 = vmatprep.subr.mxu0 0.0
      %510 = vmatpush2.msra.mxu0 0.0
      %511 = vmatprep.subr.mxu0 0.0
      %512 = vmatpush2.msra.mxu0 0.0
      %513 = vmatprep.mubr.f32.mxu0 0.0
      %v514 = vand.u32 %v400, 4294901760
      %v515 = vsub.f32 %v400, %v514
      %v516 = vand.u32 %v515, 4294901760
      %v517 = vsub.f32 %v515, %v516
      %v518 = vand.u32 %v517, 4294901760
      %519 = vmatmul.mubr.f32.gmra.mxu0 %v518
      %v520 = vpop.f32.mrf.mxu0
      %v521 = vadd.f32 0.0, %v520
      %v522 = vpop.f32.mrf.mxu0
      %523 = vmatprep.mubr.f32.mxu0 0.0
      %v524 = vand.u32 %v403, 4294901760
      %v525 = vsub.f32 %v403, %v524
      %v526 = vand.u32 %v525, 4294901760
      %v527 = vsub.f32 %v525, %v526
      %v528 = vand.u32 %v527, 4294901760
      %529 = vmatmul.mubr.f32.gmra.mxu0 %v528
      %v530 = vpop.f32.mrf.mxu0
      %v531 = vadd.f32 0.0, %v530
      %v532 = vpop.f32.mrf.mxu0
      %533 = vmatprep.mubr.f32.mxu0 0.0
      %v534 = vand.u32 %v406, 4294901760
      %v535 = vsub.f32 %v406, %v534
      %v536 = vand.u32 %v535, 4294901760
      %v537 = vsub.f32 %v535, %v536
      %v538 = vand.u32 %v537, 4294901760
      %539 = vmatmul.mubr.f32.gmra.mxu0 %v538
      %v540 = vpop.f32.mrf.mxu0
      %v541 = vadd.f32 0.0, %v540
      %v542 = vpop.f32.mrf.mxu0
      %543 = vmatprep.mubr.f32.mxu0 0.0
      %v544 = vand.u32 %v409, 4294901760
      %v545 = vsub.f32 %v409, %v544
      %v546 = vand.u32 %v545, 4294901760
      %v547 = vsub.f32 %v545, %v546
      %v548 = vand.u32 %v547, 4294901760
      %549 = vmatmul.mubr.f32.gmra.mxu0 %v548
      %v550 = vpop.f32.mrf.mxu0
      %v551 = vadd.f32 0.0, %v550
      %v552 = vpop.f32.mrf.mxu0
      %553 = vmatprep.mubr.f32.mxu0 0.0
      %v554 = vand.u32 %v412, 4294901760
      %v555 = vsub.f32 %v412, %v554
      %v556 = vand.u32 %v555, 4294901760
      %v557 = vsub.f32 %v555, %v556
      %v558 = vand.u32 %v557, 4294901760
      %559 = vmatmul.mubr.f32.gmra.mxu0 %v558
      %v560 = vpop.f32.mrf.mxu0
      %v561 = vadd.f32 0.0, %v560
      %v562 = vpop.f32.mrf.mxu0
      %563 = vmatprep.mubr.f32.mxu0 0.0
      %v564 = vand.u32 %v415, 4294901760
      %v565 = vsub.f32 %v415, %v564
      %v566 = vand.u32 %v565, 4294901760
      %v567 = vsub.f32 %v565, %v566
      %v568 = vand.u32 %v567, 4294901760
      %569 = vmatmul.mubr.f32.gmra.mxu0 %v568
      %v570 = vpop.f32.mrf.mxu0
      %v571 = vadd.f32 0.0, %v570
      %v572 = vpop.f32.mrf.mxu0
      %573 = vmatprep.mubr.f32.mxu0 0.0
      %v574 = vand.u32 %v418, 4294901760
      %v575 = vsub.f32 %v418, %v574
      %v576 = vand.u32 %v575, 4294901760
      %v577 = vsub.f32 %v575, %v576
      %v578 = vand.u32 %v577, 4294901760
      %579 = vmatmul.mubr.f32.gmra.mxu0 %v578
      %v580 = vpop.f32.mrf.mxu0
      %v581 = vadd.f32 0.0, %v580
      %v582 = vpop.f32.mrf.mxu0
      %583 = vmatprep.mubr.f32.mxu0 0.0
      %v584 = vand.u32 %v421, 4294901760
      %v585 = vsub.f32 %v421, %v584
      %v586 = vand.u32 %v585, 4294901760
      %v587 = vsub.f32 %v585, %v586
      %v588 = vand.u32 %v587, 4294901760
      %589 = vmatmul.mubr.f32.gmra.mxu0 %v588
      %v590 = vpop.f32.mrf.mxu0
      %v591 = vadd.f32 0.0, %v590
      %v592 = vpop.f32.mrf.mxu0
      %593 = vmatprep.mubr.f32.mxu0 0.0
      %v594 = vand.u32 %v424, 4294901760
      %v595 = vsub.f32 %v424, %v594
      %v596 = vand.u32 %v595, 4294901760
      %v597 = vsub.f32 %v595, %v596
      %v598 = vand.u32 %v597, 4294901760
      %599 = vmatmul.mubr.f32.gmra.mxu0 %v598
      %v600 = vpop.f32.mrf.mxu0
      %v601 = vadd.f32 0.0, %v600
      %v602 = vpop.f32.mrf.mxu0
      %603 = vmatprep.mubr.f32.mxu0 0.0
      %v604 = vand.u32 %v427, 4294901760
      %v605 = vsub.f32 %v427, %v604
      %v606 = vand.u32 %v605, 4294901760
      %v607 = vsub.f32 %v605, %v606
      %v608 = vand.u32 %v607, 4294901760
      %609 = vmatmul.mubr.f32.gmra.mxu0 %v608
      %v610 = vpop.f32.mrf.mxu0
      %v611 = vadd.f32 0.0, %v610
      %v612 = vpop.f32.mrf.mxu0
      %613 = vmatprep.mubr.f32.mxu0 0.0
      %v614 = vand.u32 %v430, 4294901760
      %v615 = vsub.f32 %v430, %v614
      %v616 = vand.u32 %v615, 4294901760
      %v617 = vsub.f32 %v615, %v616
      %v618 = vand.u32 %v617, 4294901760
      %619 = vmatmul.mubr.f32.gmra.mxu0 %v618
      %v620 = vpop.f32.mrf.mxu0
      %v621 = vadd.f32 0.0, %v620
      %v622 = vpop.f32.mrf.mxu0
      %623 = vmatprep.mubr.f32.mxu0 0.0
      %v624 = vand.u32 %v433, 4294901760
      %v625 = vsub.f32 %v433, %v624
      %v626 = vand.u32 %v625, 4294901760
      %v627 = vsub.f32 %v625, %v626
      %v628 = vand.u32 %v627, 4294901760
      %629 = vmatmul.mubr.f32.gmra.mxu0 %v628
      %v630 = vpop.f32.mrf.mxu0
      %v631 = vadd.f32 0.0, %v630
      %v632 = vpop.f32.mrf.mxu0
      %633 = vmatprep.mubr.f32.mxu0 0.0
      %v634 = vand.u32 %v436, 4294901760
      %v635 = vsub.f32 %v436, %v634
      %v636 = vand.u32 %v635, 4294901760
      %v637 = vsub.f32 %v635, %v636
      %v638 = vand.u32 %v637, 4294901760
      %639 = vmatmul.mubr.f32.gmra.mxu0 %v638
      %v640 = vpop.f32.mrf.mxu0
      %v641 = vadd.f32 0.0, %v640
      %v642 = vpop.f32.mrf.mxu0
      %643 = vmatprep.mubr.f32.mxu0 0.0
      %v644 = vand.u32 %v439, 4294901760
      %v645 = vsub.f32 %v439, %v644
      %v646 = vand.u32 %v645, 4294901760
      %v647 = vsub.f32 %v645, %v646
      %v648 = vand.u32 %v647, 4294901760
      %649 = vmatmul.mubr.f32.gmra.mxu0 %v648
      %v650 = vpop.f32.mrf.mxu0
      %v651 = vadd.f32 0.0, %v650
      %v652 = vpop.f32.mrf.mxu0
      %653 = vmatprep.mubr.f32.mxu0 0.0
      %v654 = vand.u32 %v442, 4294901760
      %v655 = vsub.f32 %v442, %v654
      %v656 = vand.u32 %v655, 4294901760
      %v657 = vsub.f32 %v655, %v656
      %v658 = vand.u32 %v657, 4294901760
      %659 = vmatmul.mubr.f32.gmra.mxu0 %v658
      %v660 = vpop.f32.mrf.mxu0
      %v661 = vadd.f32 0.0, %v660
      %v662 = vpop.f32.mrf.mxu0
      %663 = vmatprep.mubr.f32.mxu0 0.0
      %v664 = vand.u32 %v445, 4294901760
      %v665 = vsub.f32 %v445, %v664
      %v666 = vand.u32 %v665, 4294901760
      %v667 = vsub.f32 %v665, %v666
      %v668 = vand.u32 %v667, 4294901760
      %669 = vmatmul.mubr.f32.gmra.mxu0 %v668
      %v670 = vpop.f32.mrf.mxu0
      %v671 = vadd.f32 0.0, %v670
      %v672 = vpop.f32.mrf.mxu0
      %673 = vdwg.mxu0
      %674 = vmatprep.subr.mxu0 0.0
      %675 = vmatpush1.msra.mxu0 0.0
      %676 = vmatprep.subr.mxu0 0.0
      %677 = vmatpush1.msra.mxu0 0.0
      %678 = vmatprep.subr.mxu0 0.0
      %679 = vmatpush1.msra.mxu0 0.0
      %680 = vmatprep.subr.mxu0 0.0
      %681 = vmatpush1.msra.mxu0 0.0
      %682 = vmatprep.subr.mxu0 0.0
      %683 = vmatpush1.msra.mxu0 0.0
      %684 = vmatprep.subr.mxu0 0.0
      %685 = vmatpush1.msra.mxu0 0.0
      %686 = vmatprep.subr.mxu0 0.0
      %687 = vmatpush1.msra.mxu0 0.0
      %688 = vmatprep.subr.mxu0 0.0
      %689 = vmatpush1.msra.mxu0 0.0
      %690 = vmatprep.subr.mxu0 0.0
      %691 = vmatpush1.msra.mxu0 0.0
      %692 = vmatprep.subr.mxu0 0.0
      %693 = vmatpush1.msra.mxu0 0.0
      %694 = vmatprep.subr.mxu0 0.0
      %695 = vmatpush1.msra.mxu0 0.0
      %696 = vmatprep.subr.mxu0 0.0
      %697 = vmatpush1.msra.mxu0 0.0
      %698 = vmatprep.subr.mxu0 0.0
      %699 = vmatpush1.msra.mxu0 0.0
      %700 = vmatprep.subr.mxu0 0.0
      %701 = vmatpush1.msra.mxu0 0.0
      %702 = vmatprep.subr.mxu0 0.0
      %v703 = vand.u32 %v397, 4294901760
      %v704 = vsub.f32 %v397, %v703
      %v705 = vand.u32 %v704, 4294901760
      %v706 = vsub.f32 %v704, %v705
      %v707 = vand.u32 %v706, 4294901760
      %708 = vmatpush1.msra.mxu0 %v707
      %709 = vmatprep.subr.mxu0 0.0
      %v710 = vand.u32 %v396, 4294901760
      %v711 = vsub.f32 %v396, %v710
      %v712 = vand.u32 %v711, 4294901760
      %v713 = vsub.f32 %v711, %v712
      %v714 = vand.u32 %v713, 4294901760
      %715 = vmatpush1.msra.mxu0 %v714
      %716 = vmatprep.subr.mxu0 0.0
      %717 = vmatpush2.msra.mxu0 0.0
      %718 = vmatprep.subr.mxu0 0.0
      %719 = vmatpush2.msra.mxu0 0.0
      %720 = vmatprep.subr.mxu0 0.0
      %721 = vmatpush2.msra.mxu0 0.0
      %722 = vmatprep.subr.mxu0 0.0
      %723 = vmatpush2.msra.mxu0 0.0
      %724 = vmatprep.subr.mxu0 0.0
      %725 = vmatpush2.msra.mxu0 0.0
      %726 = vmatprep.subr.mxu0 0.0
      %727 = vmatpush2.msra.mxu0 0.0
      %728 = vmatprep.subr.mxu0 0.0
      %729 = vmatpush2.msra.mxu0 0.0
      %730 = vmatprep.subr.mxu0 0.0
      %731 = vmatpush2.msra.mxu0 0.0
      %732 = vmatprep.subr.mxu0 0.0
      %733 = vmatpush2.msra.mxu0 0.0
      %734 = vmatprep.subr.mxu0 0.0
      %735 = vmatpush2.msra.mxu0 0.0
      %736 = vmatprep.subr.mxu0 0.0
      %737 = vmatpush2.msra.mxu0 0.0
      %738 = vmatprep.subr.mxu0 0.0
      %739 = vmatpush2.msra.mxu0 0.0
      %740 = vmatprep.subr.mxu0 0.0
      %741 = vmatpush2.msra.mxu0 0.0
      %742 = vmatprep.subr.mxu0 0.0
      %743 = vmatpush2.msra.mxu0 0.0
      %744 = vmatprep.subr.mxu0 0.0
      %745 = vmatpush2.msra.mxu0 0.0
      %746 = vmatprep.subr.mxu0 0.0
      %747 = vmatpush2.msra.mxu0 0.0
      %748 = vmatprep.mubr.f32.mxu0 0.0
      %v749 = vand.u32 %v400, 4294901760
      %750 = vmatmul.mubr.f32.gmra.mxu0 %v749
      %v751 = vpop.f32.mrf.mxu0
      %v752 = vadd.f32 %v521, %v751
      %v753 = vpop.f32.mrf.mxu0
      %754 = vmatprep.mubr.f32.mxu0 0.0
      %v755 = vand.u32 %v403, 4294901760
      %756 = vmatmul.mubr.f32.gmra.mxu0 %v755
      %v757 = vpop.f32.mrf.mxu0
      %v758 = vadd.f32 %v531, %v757
      %v759 = vpop.f32.mrf.mxu0
      %760 = vmatprep.mubr.f32.mxu0 0.0
      %v761 = vand.u32 %v406, 4294901760
      %762 = vmatmul.mubr.f32.gmra.mxu0 %v761
      %v763 = vpop.f32.mrf.mxu0
      %v764 = vadd.f32 %v541, %v763
      %v765 = vpop.f32.mrf.mxu0
      %766 = vmatprep.mubr.f32.mxu0 0.0
      %v767 = vand.u32 %v409, 4294901760
      %768 = vmatmul.mubr.f32.gmra.mxu0 %v767
      %v769 = vpop.f32.mrf.mxu0
      %v770 = vadd.f32 %v551, %v769
      %v771 = vpop.f32.mrf.mxu0
      %772 = vmatprep.mubr.f32.mxu0 0.0
      %v773 = vand.u32 %v412, 4294901760
      %774 = vmatmul.mubr.f32.gmra.mxu0 %v773
      %v775 = vpop.f32.mrf.mxu0
      %v776 = vadd.f32 %v561, %v775
      %v777 = vpop.f32.mrf.mxu0
      %778 = vmatprep.mubr.f32.mxu0 0.0
      %v779 = vand.u32 %v415, 4294901760
      %780 = vmatmul.mubr.f32.gmra.mxu0 %v779
      %v781 = vpop.f32.mrf.mxu0
      %v782 = vadd.f32 %v571, %v781
      %v783 = vpop.f32.mrf.mxu0
      %784 = vmatprep.mubr.f32.mxu0 0.0
      %v785 = vand.u32 %v418, 4294901760
      %786 = vmatmul.mubr.f32.gmra.mxu0 %v785
      %v787 = vpop.f32.mrf.mxu0
      %v788 = vadd.f32 %v581, %v787
      %v789 = vpop.f32.mrf.mxu0
      %790 = vmatprep.mubr.f32.mxu0 0.0
      %v791 = vand.u32 %v421, 4294901760
      %792 = vmatmul.mubr.f32.gmra.mxu0 %v791
      %v793 = vpop.f32.mrf.mxu0
      %v794 = vadd.f32 %v591, %v793
      %v795 = vpop.f32.mrf.mxu0
      %796 = vmatprep.mubr.f32.mxu0 0.0
      %v797 = vand.u32 %v424, 4294901760
      %798 = vmatmul.mubr.f32.gmra.mxu0 %v797
      %v799 = vpop.f32.mrf.mxu0
      %v800 = vadd.f32 %v601, %v799
      %v801 = vpop.f32.mrf.mxu0
      %802 = vmatprep.mubr.f32.mxu0 0.0
      %v803 = vand.u32 %v427, 4294901760
      %804 = vmatmul.mubr.f32.gmra.mxu0 %v803
      %v805 = vpop.f32.mrf.mxu0
      %v806 = vadd.f32 %v611, %v805
      %v807 = vpop.f32.mrf.mxu0
      %808 = vmatprep.mubr.f32.mxu0 0.0
      %v809 = vand.u32 %v430, 4294901760
      %810 = vmatmul.mubr.f32.gmra.mxu0 %v809
      %v811 = vpop.f32.mrf.mxu0
      %v812 = vadd.f32 %v621, %v811
      %v813 = vpop.f32.mrf.mxu0
      %814 = vmatprep.mubr.f32.mxu0 0.0
      %v815 = vand.u32 %v433, 4294901760
      %816 = vmatmul.mubr.f32.gmra.mxu0 %v815
      %v817 = vpop.f32.mrf.mxu0
      %v818 = vadd.f32 %v631, %v817
      %v819 = vpop.f32.mrf.mxu0
      %820 = vmatprep.mubr.f32.mxu0 0.0
      %v821 = vand.u32 %v436, 4294901760
      %822 = vmatmul.mubr.f32.gmra.mxu0 %v821
      %v823 = vpop.f32.mrf.mxu0
      %v824 = vadd.f32 %v641, %v823
      %v825 = vpop.f32.mrf.mxu0
      %826 = vmatprep.mubr.f32.mxu0 0.0
      %v827 = vand.u32 %v439, 4294901760
      %828 = vmatmul.mubr.f32.gmra.mxu0 %v827
      %v829 = vpop.f32.mrf.mxu0
      %v830 = vadd.f32 %v651, %v829
      %v831 = vpop.f32.mrf.mxu0
      %832 = vmatprep.mubr.f32.mxu0 0.0
      %v833 = vand.u32 %v442, 4294901760
      %834 = vmatmul.mubr.f32.gmra.mxu0 %v833
      %v835 = vpop.f32.mrf.mxu0
      %v836 = vadd.f32 %v661, %v835
      %v837 = vpop.f32.mrf.mxu0
      %838 = vmatprep.mubr.f32.mxu0 0.0
      %v839 = vand.u32 %v445, 4294901760
      %840 = vmatmul.mubr.f32.gmra.mxu0 %v839
      %v841 = vpop.f32.mrf.mxu0
      %v842 = vadd.f32 %v671, %v841
      %v843 = vpop.f32.mrf.mxu0
      %844 = vdwg.mxu0
      %845 = vmatprep.subr.mxu0 0.0
      %846 = vmatpush1.msra.mxu0 0.0
      %847 = vmatprep.subr.mxu0 0.0
      %848 = vmatpush1.msra.mxu0 0.0
      %849 = vmatprep.subr.mxu0 0.0
      %850 = vmatpush1.msra.mxu0 0.0
      %851 = vmatprep.subr.mxu0 0.0
      %852 = vmatpush1.msra.mxu0 0.0
      %853 = vmatprep.subr.mxu0 0.0
      %854 = vmatpush1.msra.mxu0 0.0
      %855 = vmatprep.subr.mxu0 0.0
      %856 = vmatpush1.msra.mxu0 0.0
      %857 = vmatprep.subr.mxu0 0.0
      %858 = vmatpush1.msra.mxu0 0.0
      %859 = vmatprep.subr.mxu0 0.0
      %860 = vmatpush1.msra.mxu0 0.0
      %861 = vmatprep.subr.mxu0 0.0
      %862 = vmatpush1.msra.mxu0 0.0
      %863 = vmatprep.subr.mxu0 0.0
      %864 = vmatpush1.msra.mxu0 0.0
      %865 = vmatprep.subr.mxu0 0.0
      %866 = vmatpush1.msra.mxu0 0.0
      %867 = vmatprep.subr.mxu0 0.0
      %868 = vmatpush1.msra.mxu0 0.0
      %869 = vmatprep.subr.mxu0 0.0
      %870 = vmatpush1.msra.mxu0 0.0
      %871 = vmatprep.subr.mxu0 0.0
      %872 = vmatpush1.msra.mxu0 0.0
      %873 = vmatprep.subr.mxu0 0.0
      %v874 = vand.u32 %v397, 4294901760
      %v875 = vsub.f32 %v397, %v874
      %876 = vmatpush1.msra.mxu0 %v875
      %877 = vmatprep.subr.mxu0 0.0
      %v878 = vand.u32 %v396, 4294901760
      %v879 = vsub.f32 %v396, %v878
      %880 = vmatpush1.msra.mxu0 %v879
      %881 = vmatprep.subr.mxu0 0.0
      %882 = vmatpush2.msra.mxu0 0.0
      %883 = vmatprep.subr.mxu0 0.0
      %884 = vmatpush2.msra.mxu0 0.0
      %885 = vmatprep.subr.mxu0 0.0
      %886 = vmatpush2.msra.mxu0 0.0
      %887 = vmatprep.subr.mxu0 0.0
      %888 = vmatpush2.msra.mxu0 0.0
      %889 = vmatprep.subr.mxu0 0.0
      %890 = vmatpush2.msra.mxu0 0.0
      %891 = vmatprep.subr.mxu0 0.0
      %892 = vmatpush2.msra.mxu0 0.0
      %893 = vmatprep.subr.mxu0 0.0
      %894 = vmatpush2.msra.mxu0 0.0
      %895 = vmatprep.subr.mxu0 0.0
      %896 = vmatpush2.msra.mxu0 0.0
      %897 = vmatprep.subr.mxu0 0.0
      %898 = vmatpush2.msra.mxu0 0.0
      %899 = vmatprep.subr.mxu0 0.0
      %900 = vmatpush2.msra.mxu0 0.0
      %901 = vmatprep.subr.mxu0 0.0
      %902 = vmatpush2.msra.mxu0 0.0
      %903 = vmatprep.subr.mxu0 0.0
      %904 = vmatpush2.msra.mxu0 0.0
      %905 = vmatprep.subr.mxu0 0.0
      %906 = vmatpush2.msra.mxu0 0.0
      %907 = vmatprep.subr.mxu0 0.0
      %908 = vmatpush2.msra.mxu0 0.0
      %909 = vmatprep.subr.mxu0 0.0
      %910 = vmatpush2.msra.mxu0 0.0
      %911 = vmatprep.subr.mxu0 0.0
      %912 = vmatpush2.msra.mxu0 0.0
      %913 = vmatprep.mubr.f32.mxu0 0.0
      %v914 = vand.u32 %v400, 4294901760
      %v915 = vsub.f32 %v400, %v914
      %916 = vmatmul.mubr.f32.gmra.mxu0 %v915
      %v917 = vpop.f32.mrf.mxu0
      %v918 = vadd.f32 %v752, %v917
      %v919 = vpop.f32.mrf.mxu0
      %920 = vmatprep.mubr.f32.mxu0 0.0
      %v921 = vand.u32 %v403, 4294901760
      %v922 = vsub.f32 %v403, %v921
      %923 = vmatmul.mubr.f32.gmra.mxu0 %v922
      %v924 = vpop.f32.mrf.mxu0
      %v925 = vadd.f32 %v758, %v924
      %v926 = vpop.f32.mrf.mxu0
      %927 = vmatprep.mubr.f32.mxu0 0.0
      %v928 = vand.u32 %v406, 4294901760
      %v929 = vsub.f32 %v406, %v928
      %930 = vmatmul.mubr.f32.gmra.mxu0 %v929
      %v931 = vpop.f32.mrf.mxu0
      %v932 = vadd.f32 %v764, %v931
      %v933 = vpop.f32.mrf.mxu0
      %934 = vmatprep.mubr.f32.mxu0 0.0
      %v935 = vand.u32 %v409, 4294901760
      %v936 = vsub.f32 %v409, %v935
      %937 = vmatmul.mubr.f32.gmra.mxu0 %v936
      %v938 = vpop.f32.mrf.mxu0
      %v939 = vadd.f32 %v770, %v938
      %v940 = vpop.f32.mrf.mxu0
      %941 = vmatprep.mubr.f32.mxu0 0.0
      %v942 = vand.u32 %v412, 4294901760
      %v943 = vsub.f32 %v412, %v942
      %944 = vmatmul.mubr.f32.gmra.mxu0 %v943
      %v945 = vpop.f32.mrf.mxu0
      %v946 = vadd.f32 %v776, %v945
      %v947 = vpop.f32.mrf.mxu0
      %948 = vmatprep.mubr.f32.mxu0 0.0
      %v949 = vand.u32 %v415, 4294901760
      %v950 = vsub.f32 %v415, %v949
      %951 = vmatmul.mubr.f32.gmra.mxu0 %v950
      %v952 = vpop.f32.mrf.mxu0
      %v953 = vadd.f32 %v782, %v952
      %v954 = vpop.f32.mrf.mxu0
      %955 = vmatprep.mubr.f32.mxu0 0.0
      %v956 = vand.u32 %v418, 4294901760
      %v957 = vsub.f32 %v418, %v956
      %958 = vmatmul.mubr.f32.gmra.mxu0 %v957
      %v959 = vpop.f32.mrf.mxu0
      %v960 = vadd.f32 %v788, %v959
      %v961 = vpop.f32.mrf.mxu0
      %962 = vmatprep.mubr.f32.mxu0 0.0
      %v963 = vand.u32 %v421, 4294901760
      %v964 = vsub.f32 %v421, %v963
      %965 = vmatmul.mubr.f32.gmra.mxu0 %v964
      %v966 = vpop.f32.mrf.mxu0
      %v967 = vadd.f32 %v794, %v966
      %v968 = vpop.f32.mrf.mxu0
      %969 = vmatprep.mubr.f32.mxu0 0.0
      %v970 = vand.u32 %v424, 4294901760
      %v971 = vsub.f32 %v424, %v970
      %972 = vmatmul.mubr.f32.gmra.mxu0 %v971
      %v973 = vpop.f32.mrf.mxu0
      %v974 = vadd.f32 %v800, %v973
      %v975 = vpop.f32.mrf.mxu0
      %976 = vmatprep.mubr.f32.mxu0 0.0
      %v977 = vand.u32 %v427, 4294901760
      %v978 = vsub.f32 %v427, %v977
      %979 = vmatmul.mubr.f32.gmra.mxu0 %v978
      %v980 = vpop.f32.mrf.mxu0
      %v981 = vadd.f32 %v806, %v980
      %v982 = vpop.f32.mrf.mxu0
      %983 = vmatprep.mubr.f32.mxu0 0.0
      %v984 = vand.u32 %v430, 4294901760
      %v985 = vsub.f32 %v430, %v984
      %986 = vmatmul.mubr.f32.gmra.mxu0 %v985
      %v987 = vpop.f32.mrf.mxu0
      %v988 = vadd.f32 %v812, %v987
      %v989 = vpop.f32.mrf.mxu0
      %990 = vmatprep.mubr.f32.mxu0 0.0
      %v991 = vand.u32 %v433, 4294901760
      %v992 = vsub.f32 %v433, %v991
      %993 = vmatmul.mubr.f32.gmra.mxu0 %v992
      %v994 = vpop.f32.mrf.mxu0
      %v995 = vadd.f32 %v818, %v994
      %v996 = vpop.f32.mrf.mxu0
      %997 = vmatprep.mubr.f32.mxu0 0.0
      %v998 = vand.u32 %v436, 4294901760
      %v999 = vsub.f32 %v436, %v998
      %1000 = vmatmul.mubr.f32.gmra.mxu0 %v999
      %v1001 = vpop.f32.mrf.mxu0
      %v1002 = vadd.f32 %v824, %v1001
      %v1003 = vpop.f32.mrf.mxu0
      %1004 = vmatprep.mubr.f32.mxu0 0.0
      %v1005 = vand.u32 %v439, 4294901760
      %v1006 = vsub.f32 %v439, %v1005
      %1007 = vmatmul.mubr.f32.gmra.mxu0 %v1006
      %v1008 = vpop.f32.mrf.mxu0
      %v1009 = vadd.f32 %v830, %v1008
      %v1010 = vpop.f32.mrf.mxu0
      %1011 = vmatprep.mubr.f32.mxu0 0.0
      %v1012 = vand.u32 %v442, 4294901760
      %v1013 = vsub.f32 %v442, %v1012
      %1014 = vmatmul.mubr.f32.gmra.mxu0 %v1013
      %v1015 = vpop.f32.mrf.mxu0
      %v1016 = vadd.f32 %v836, %v1015
      %v1017 = vpop.f32.mrf.mxu0
      %1018 = vmatprep.mubr.f32.mxu0 0.0
      %v1019 = vand.u32 %v445, 4294901760
      %v1020 = vsub.f32 %v445, %v1019
      %1021 = vmatmul.mubr.f32.gmra.mxu0 %v1020
      %v1022 = vpop.f32.mrf.mxu0
      %v1023 = vadd.f32 %v842, %v1022
      %v1024 = vpop.f32.mrf.mxu0
      %1025 = vdwg.mxu0
      %1026 = vmatprep.subr.mxu0 0.0
      %1027 = vmatpush1.msra.mxu0 0.0
      %1028 = vmatprep.subr.mxu0 0.0
      %1029 = vmatpush1.msra.mxu0 0.0
      %1030 = vmatprep.subr.mxu0 0.0
      %1031 = vmatpush1.msra.mxu0 0.0
      %1032 = vmatprep.subr.mxu0 0.0
      %1033 = vmatpush1.msra.mxu0 0.0
      %1034 = vmatprep.subr.mxu0 0.0
      %1035 = vmatpush1.msra.mxu0 0.0
      %1036 = vmatprep.subr.mxu0 0.0
      %1037 = vmatpush1.msra.mxu0 0.0
      %1038 = vmatprep.subr.mxu0 0.0
      %1039 = vmatpush1.msra.mxu0 0.0
      %1040 = vmatprep.subr.mxu0 0.0
      %1041 = vmatpush1.msra.mxu0 0.0
      %1042 = vmatprep.subr.mxu0 0.0
      %1043 = vmatpush1.msra.mxu0 0.0
      %1044 = vmatprep.subr.mxu0 0.0
      %1045 = vmatpush1.msra.mxu0 0.0
      %1046 = vmatprep.subr.mxu0 0.0
      %1047 = vmatpush1.msra.mxu0 0.0
      %1048 = vmatprep.subr.mxu0 0.0
      %1049 = vmatpush1.msra.mxu0 0.0
      %1050 = vmatprep.subr.mxu0 0.0
      %1051 = vmatpush1.msra.mxu0 0.0
      %1052 = vmatprep.subr.mxu0 0.0
      %1053 = vmatpush1.msra.mxu0 0.0
      %1054 = vmatprep.subr.mxu0 0.0
      %v1055 = vand.u32 %v397, 4294901760
      %1056 = vmatpush1.msra.mxu0 %v1055
      %1057 = vmatprep.subr.mxu0 0.0
      %v1058 = vand.u32 %v396, 4294901760
      %1059 = vmatpush1.msra.mxu0 %v1058
      %1060 = vmatprep.subr.mxu0 0.0
      %1061 = vmatpush2.msra.mxu0 0.0
      %1062 = vmatprep.subr.mxu0 0.0
      %1063 = vmatpush2.msra.mxu0 0.0
      %1064 = vmatprep.subr.mxu0 0.0
      %1065 = vmatpush2.msra.mxu0 0.0
      %1066 = vmatprep.subr.mxu0 0.0
      %1067 = vmatpush2.msra.mxu0 0.0
      %1068 = vmatprep.subr.mxu0 0.0
      %1069 = vmatpush2.msra.mxu0 0.0
      %1070 = vmatprep.subr.mxu0 0.0
      %1071 = vmatpush2.msra.mxu0 0.0
      %1072 = vmatprep.subr.mxu0 0.0
      %1073 = vmatpush2.msra.mxu0 0.0
      %1074 = vmatprep.subr.mxu0 0.0
      %1075 = vmatpush2.msra.mxu0 0.0
      %1076 = vmatprep.subr.mxu0 0.0
      %1077 = vmatpush2.msra.mxu0 0.0
      %1078 = vmatprep.subr.mxu0 0.0
      %1079 = vmatpush2.msra.mxu0 0.0
      %1080 = vmatprep.subr.mxu0 0.0
      %1081 = vmatpush2.msra.mxu0 0.0
      %1082 = vmatprep.subr.mxu0 0.0
      %1083 = vmatpush2.msra.mxu0 0.0
      %1084 = vmatprep.subr.mxu0 0.0
      %1085 = vmatpush2.msra.mxu0 0.0
      %1086 = vmatprep.subr.mxu0 0.0
      %1087 = vmatpush2.msra.mxu0 0.0
      %1088 = vmatprep.subr.mxu0 0.0
      %1089 = vmatpush2.msra.mxu0 0.0
      %1090 = vmatprep.subr.mxu0 0.0
      %1091 = vmatpush2.msra.mxu0 0.0
      %1092 = vmatprep.mubr.f32.mxu0 0.0
      %v1093 = vand.u32 %v400, 4294901760
      %v1094 = vsub.f32 %v400, %v1093
      %v1095 = vand.u32 %v1094, 4294901760
      %1096 = vmatmul.mubr.f32.gmra.mxu0 %v1095
      %v1097 = vpop.f32.mrf.mxu0
      %v1098 = vadd.f32 %v918, %v1097
      %v1099 = vpop.f32.mrf.mxu0
      %1100 = vmatprep.mubr.f32.mxu0 0.0
      %v1101 = vand.u32 %v403, 4294901760
      %v1102 = vsub.f32 %v403, %v1101
      %v1103 = vand.u32 %v1102, 4294901760
      %1104 = vmatmul.mubr.f32.gmra.mxu0 %v1103
      %v1105 = vpop.f32.mrf.mxu0
      %v1106 = vadd.f32 %v925, %v1105
      %v1107 = vpop.f32.mrf.mxu0
      %1108 = vmatprep.mubr.f32.mxu0 0.0
      %v1109 = vand.u32 %v406, 4294901760
      %v1110 = vsub.f32 %v406, %v1109
      %v1111 = vand.u32 %v1110, 4294901760
      %1112 = vmatmul.mubr.f32.gmra.mxu0 %v1111
      %v1113 = vpop.f32.mrf.mxu0
      %v1114 = vadd.f32 %v932, %v1113
      %v1115 = vpop.f32.mrf.mxu0
      %1116 = vmatprep.mubr.f32.mxu0 0.0
      %v1117 = vand.u32 %v409, 4294901760
      %v1118 = vsub.f32 %v409, %v1117
      %v1119 = vand.u32 %v1118, 4294901760
      %1120 = vmatmul.mubr.f32.gmra.mxu0 %v1119
      %v1121 = vpop.f32.mrf.mxu0
      %v1122 = vadd.f32 %v939, %v1121
      %v1123 = vpop.f32.mrf.mxu0
      %1124 = vmatprep.mubr.f32.mxu0 0.0
      %v1125 = vand.u32 %v412, 4294901760
      %v1126 = vsub.f32 %v412, %v1125
      %v1127 = vand.u32 %v1126, 4294901760
      %1128 = vmatmul.mubr.f32.gmra.mxu0 %v1127
      %v1129 = vpop.f32.mrf.mxu0
      %v1130 = vadd.f32 %v946, %v1129
      %v1131 = vpop.f32.mrf.mxu0
      %1132 = vmatprep.mubr.f32.mxu0 0.0
      %v1133 = vand.u32 %v415, 4294901760
      %v1134 = vsub.f32 %v415, %v1133
      %v1135 = vand.u32 %v1134, 4294901760
      %1136 = vmatmul.mubr.f32.gmra.mxu0 %v1135
      %v1137 = vpop.f32.mrf.mxu0
      %v1138 = vadd.f32 %v953, %v1137
      %v1139 = vpop.f32.mrf.mxu0
      %1140 = vmatprep.mubr.f32.mxu0 0.0
      %v1141 = vand.u32 %v418, 4294901760
      %v1142 = vsub.f32 %v418, %v1141
      %v1143 = vand.u32 %v1142, 4294901760
      %1144 = vmatmul.mubr.f32.gmra.mxu0 %v1143
      %v1145 = vpop.f32.mrf.mxu0
      %v1146 = vadd.f32 %v960, %v1145
      %v1147 = vpop.f32.mrf.mxu0
      %1148 = vmatprep.mubr.f32.mxu0 0.0
      %v1149 = vand.u32 %v421, 4294901760
      %v1150 = vsub.f32 %v421, %v1149
      %v1151 = vand.u32 %v1150, 4294901760
      %1152 = vmatmul.mubr.f32.gmra.mxu0 %v1151
      %v1153 = vpop.f32.mrf.mxu0
      %v1154 = vadd.f32 %v967, %v1153
      %v1155 = vpop.f32.mrf.mxu0
      %1156 = vmatprep.mubr.f32.mxu0 0.0
      %v1157 = vand.u32 %v424, 4294901760
      %v1158 = vsub.f32 %v424, %v1157
      %v1159 = vand.u32 %v1158, 4294901760
      %1160 = vmatmul.mubr.f32.gmra.mxu0 %v1159
      %v1161 = vpop.f32.mrf.mxu0
      %v1162 = vadd.f32 %v974, %v1161
      %v1163 = vpop.f32.mrf.mxu0
      %1164 = vmatprep.mubr.f32.mxu0 0.0
      %v1165 = vand.u32 %v427, 4294901760
      %v1166 = vsub.f32 %v427, %v1165
      %v1167 = vand.u32 %v1166, 4294901760
      %1168 = vmatmul.mubr.f32.gmra.mxu0 %v1167
      %v1169 = vpop.f32.mrf.mxu0
      %v1170 = vadd.f32 %v981, %v1169
      %v1171 = vpop.f32.mrf.mxu0
      %1172 = vmatprep.mubr.f32.mxu0 0.0
      %v1173 = vand.u32 %v430, 4294901760
      %v1174 = vsub.f32 %v430, %v1173
      %v1175 = vand.u32 %v1174, 4294901760
      %1176 = vmatmul.mubr.f32.gmra.mxu0 %v1175
      %v1177 = vpop.f32.mrf.mxu0
      %v1178 = vadd.f32 %v988, %v1177
      %v1179 = vpop.f32.mrf.mxu0
      %1180 = vmatprep.mubr.f32.mxu0 0.0
      %v1181 = vand.u32 %v433, 4294901760
      %v1182 = vsub.f32 %v433, %v1181
      %v1183 = vand.u32 %v1182, 4294901760
      %1184 = vmatmul.mubr.f32.gmra.mxu0 %v1183
      %v1185 = vpop.f32.mrf.mxu0
      %v1186 = vadd.f32 %v995, %v1185
      %v1187 = vpop.f32.mrf.mxu0
      %1188 = vmatprep.mubr.f32.mxu0 0.0
      %v1189 = vand.u32 %v436, 4294901760
      %v1190 = vsub.f32 %v436, %v1189
      %v1191 = vand.u32 %v1190, 4294901760
      %1192 = vmatmul.mubr.f32.gmra.mxu0 %v1191
      %v1193 = vpop.f32.mrf.mxu0
      %v1194 = vadd.f32 %v1002, %v1193
      %v1195 = vpop.f32.mrf.mxu0
      %1196 = vmatprep.mubr.f32.mxu0 0.0
      %v1197 = vand.u32 %v439, 4294901760
      %v1198 = vsub.f32 %v439, %v1197
      %v1199 = vand.u32 %v1198, 4294901760
      %1200 = vmatmul.mubr.f32.gmra.mxu0 %v1199
      %v1201 = vpop.f32.mrf.mxu0
      %v1202 = vadd.f32 %v1009, %v1201
      %v1203 = vpop.f32.mrf.mxu0
      %1204 = vmatprep.mubr.f32.mxu0 0.0
      %v1205 = vand.u32 %v442, 4294901760
      %v1206 = vsub.f32 %v442, %v1205
      %v1207 = vand.u32 %v1206, 4294901760
      %1208 = vmatmul.mubr.f32.gmra.mxu0 %v1207
      %v1209 = vpop.f32.mrf.mxu0
      %v1210 = vadd.f32 %v1016, %v1209
      %v1211 = vpop.f32.mrf.mxu0
      %1212 = vmatprep.mubr.f32.mxu0 0.0
      %v1213 = vand.u32 %v445, 4294901760
      %v1214 = vsub.f32 %v445, %v1213
      %v1215 = vand.u32 %v1214, 4294901760
      %1216 = vmatmul.mubr.f32.gmra.mxu0 %v1215
      %v1217 = vpop.f32.mrf.mxu0
      %v1218 = vadd.f32 %v1023, %v1217
      %v1219 = vpop.f32.mrf.mxu0
      %1220 = vdwg.mxu0
      %1221 = vmatprep.subr.mxu0 0.0
      %1222 = vmatpush1.msra.mxu0 0.0
      %1223 = vmatprep.subr.mxu0 0.0
      %1224 = vmatpush1.msra.mxu0 0.0
      %1225 = vmatprep.subr.mxu0 0.0
      %1226 = vmatpush1.msra.mxu0 0.0
      %1227 = vmatprep.subr.mxu0 0.0
      %1228 = vmatpush1.msra.mxu0 0.0
      %1229 = vmatprep.subr.mxu0 0.0
      %1230 = vmatpush1.msra.mxu0 0.0
      %1231 = vmatprep.subr.mxu0 0.0
      %1232 = vmatpush1.msra.mxu0 0.0
      %1233 = vmatprep.subr.mxu0 0.0
      %1234 = vmatpush1.msra.mxu0 0.0
      %1235 = vmatprep.subr.mxu0 0.0
      %1236 = vmatpush1.msra.mxu0 0.0
      %1237 = vmatprep.subr.mxu0 0.0
      %1238 = vmatpush1.msra.mxu0 0.0
      %1239 = vmatprep.subr.mxu0 0.0
      %1240 = vmatpush1.msra.mxu0 0.0
      %1241 = vmatprep.subr.mxu0 0.0
      %1242 = vmatpush1.msra.mxu0 0.0
      %1243 = vmatprep.subr.mxu0 0.0
      %1244 = vmatpush1.msra.mxu0 0.0
      %1245 = vmatprep.subr.mxu0 0.0
      %1246 = vmatpush1.msra.mxu0 0.0
      %1247 = vmatprep.subr.mxu0 0.0
      %1248 = vmatpush1.msra.mxu0 0.0
      %1249 = vmatprep.subr.mxu0 0.0
      %v1250 = vand.u32 %v397, 4294901760
      %v1251 = vsub.f32 %v397, %v1250
      %v1252 = vand.u32 %v1251, 4294901760
      %1253 = vmatpush1.msra.mxu0 %v1252
      %1254 = vmatprep.subr.mxu0 0.0
      %v1255 = vand.u32 %v396, 4294901760
      %v1256 = vsub.f32 %v396, %v1255
      %v1257 = vand.u32 %v1256, 4294901760
      %1258 = vmatpush1.msra.mxu0 %v1257
      %1259 = vmatprep.subr.mxu0 0.0
      %1260 = vmatpush2.msra.mxu0 0.0
      %1261 = vmatprep.subr.mxu0 0.0
      %1262 = vmatpush2.msra.mxu0 0.0
      %1263 = vmatprep.subr.mxu0 0.0
      %1264 = vmatpush2.msra.mxu0 0.0
      %1265 = vmatprep.subr.mxu0 0.0
      %1266 = vmatpush2.msra.mxu0 0.0
      %1267 = vmatprep.subr.mxu0 0.0
      %1268 = vmatpush2.msra.mxu0 0.0
      %1269 = vmatprep.subr.mxu0 0.0
      %1270 = vmatpush2.msra.mxu0 0.0
      %1271 = vmatprep.subr.mxu0 0.0
      %1272 = vmatpush2.msra.mxu0 0.0
      %1273 = vmatprep.subr.mxu0 0.0
      %1274 = vmatpush2.msra.mxu0 0.0
      %1275 = vmatprep.subr.mxu0 0.0
      %1276 = vmatpush2.msra.mxu0 0.0
      %1277 = vmatprep.subr.mxu0 0.0
      %1278 = vmatpush2.msra.mxu0 0.0
      %1279 = vmatprep.subr.mxu0 0.0
      %1280 = vmatpush2.msra.mxu0 0.0
      %1281 = vmatprep.subr.mxu0 0.0
      %1282 = vmatpush2.msra.mxu0 0.0
      %1283 = vmatprep.subr.mxu0 0.0
      %1284 = vmatpush2.msra.mxu0 0.0
      %1285 = vmatprep.subr.mxu0 0.0
      %1286 = vmatpush2.msra.mxu0 0.0
      %1287 = vmatprep.subr.mxu0 0.0
      %1288 = vmatpush2.msra.mxu0 0.0
      %1289 = vmatprep.subr.mxu0 0.0
      %1290 = vmatpush2.msra.mxu0 0.0
      %1291 = vmatprep.mubr.f32.mxu0 0.0
      %v1292 = vand.u32 %v400, 4294901760
      %1293 = vmatmul.mubr.f32.gmra.mxu0 %v1292
      %v1294 = vpop.f32.mrf.mxu0
      %v1295 = vadd.f32 %v1098, %v1294
      %v1296 = vpop.f32.mrf.mxu0
      %1297 = vmatprep.mubr.f32.mxu0 0.0
      %v1298 = vand.u32 %v403, 4294901760
      %1299 = vmatmul.mubr.f32.gmra.mxu0 %v1298
      %v1300 = vpop.f32.mrf.mxu0
      %v1301 = vadd.f32 %v1106, %v1300
      %v1302 = vpop.f32.mrf.mxu0
      %1303 = vmatprep.mubr.f32.mxu0 0.0
      %v1304 = vand.u32 %v406, 4294901760
      %1305 = vmatmul.mubr.f32.gmra.mxu0 %v1304
      %v1306 = vpop.f32.mrf.mxu0
      %v1307 = vadd.f32 %v1114, %v1306
      %v1308 = vpop.f32.mrf.mxu0
      %1309 = vmatprep.mubr.f32.mxu0 0.0
      %v1310 = vand.u32 %v409, 4294901760
      %1311 = vmatmul.mubr.f32.gmra.mxu0 %v1310
      %v1312 = vpop.f32.mrf.mxu0
      %v1313 = vadd.f32 %v1122, %v1312
      %v1314 = vpop.f32.mrf.mxu0
      %1315 = vmatprep.mubr.f32.mxu0 0.0
      %v1316 = vand.u32 %v412, 4294901760
      %1317 = vmatmul.mubr.f32.gmra.mxu0 %v1316
      %v1318 = vpop.f32.mrf.mxu0
      %v1319 = vadd.f32 %v1130, %v1318
      %v1320 = vpop.f32.mrf.mxu0
      %1321 = vmatprep.mubr.f32.mxu0 0.0
      %v1322 = vand.u32 %v415, 4294901760
      %1323 = vmatmul.mubr.f32.gmra.mxu0 %v1322
      %v1324 = vpop.f32.mrf.mxu0
      %v1325 = vadd.f32 %v1138, %v1324
      %v1326 = vpop.f32.mrf.mxu0
      %1327 = vmatprep.mubr.f32.mxu0 0.0
      %v1328 = vand.u32 %v418, 4294901760
      %1329 = vmatmul.mubr.f32.gmra.mxu0 %v1328
      %v1330 = vpop.f32.mrf.mxu0
      %v1331 = vadd.f32 %v1146, %v1330
      %v1332 = vpop.f32.mrf.mxu0
      %1333 = vmatprep.mubr.f32.mxu0 0.0
      %v1334 = vand.u32 %v421, 4294901760
      %1335 = vmatmul.mubr.f32.gmra.mxu0 %v1334
      %v1336 = vpop.f32.mrf.mxu0
      %v1337 = vadd.f32 %v1154, %v1336
      %v1338 = vpop.f32.mrf.mxu0
      %1339 = vmatprep.mubr.f32.mxu0 0.0
      %v1340 = vand.u32 %v424, 4294901760
      %1341 = vmatmul.mubr.f32.gmra.mxu0 %v1340
      %v1342 = vpop.f32.mrf.mxu0
      %v1343 = vadd.f32 %v1162, %v1342
      %v1344 = vpop.f32.mrf.mxu0
      %1345 = vmatprep.mubr.f32.mxu0 0.0
      %v1346 = vand.u32 %v427, 4294901760
      %1347 = vmatmul.mubr.f32.gmra.mxu0 %v1346
      %v1348 = vpop.f32.mrf.mxu0
      %v1349 = vadd.f32 %v1170, %v1348
      %v1350 = vpop.f32.mrf.mxu0
      %1351 = vmatprep.mubr.f32.mxu0 0.0
      %v1352 = vand.u32 %v430, 4294901760
      %1353 = vmatmul.mubr.f32.gmra.mxu0 %v1352
      %v1354 = vpop.f32.mrf.mxu0
      %v1355 = vadd.f32 %v1178, %v1354
      %v1356 = vpop.f32.mrf.mxu0
      %1357 = vmatprep.mubr.f32.mxu0 0.0
      %v1358 = vand.u32 %v433, 4294901760
      %1359 = vmatmul.mubr.f32.gmra.mxu0 %v1358
      %v1360 = vpop.f32.mrf.mxu0
      %v1361 = vadd.f32 %v1186, %v1360
      %v1362 = vpop.f32.mrf.mxu0
      %1363 = vmatprep.mubr.f32.mxu0 0.0
      %v1364 = vand.u32 %v436, 4294901760
      %1365 = vmatmul.mubr.f32.gmra.mxu0 %v1364
      %v1366 = vpop.f32.mrf.mxu0
      %v1367 = vadd.f32 %v1194, %v1366
      %v1368 = vpop.f32.mrf.mxu0
      %1369 = vmatprep.mubr.f32.mxu0 0.0
      %v1370 = vand.u32 %v439, 4294901760
      %1371 = vmatmul.mubr.f32.gmra.mxu0 %v1370
      %v1372 = vpop.f32.mrf.mxu0
      %v1373 = vadd.f32 %v1202, %v1372
      %v1374 = vpop.f32.mrf.mxu0
      %1375 = vmatprep.mubr.f32.mxu0 0.0
      %v1376 = vand.u32 %v442, 4294901760
      %1377 = vmatmul.mubr.f32.gmra.mxu0 %v1376
      %v1378 = vpop.f32.mrf.mxu0
      %v1379 = vadd.f32 %v1210, %v1378
      %v1380 = vpop.f32.mrf.mxu0
      %1381 = vmatprep.mubr.f32.mxu0 0.0
      %v1382 = vand.u32 %v445, 4294901760
      %1383 = vmatmul.mubr.f32.gmra.mxu0 %v1382
      %v1384 = vpop.f32.mrf.mxu0
      %v1385 = vadd.f32 %v1218, %v1384
      %v1386 = vpop.f32.mrf.mxu0
      %1387 = vdwg.mxu0
      %1388 = vmatprep.subr.mxu0 0.0
      %1389 = vmatpush1.msra.mxu0 0.0
      %1390 = vmatprep.subr.mxu0 0.0
      %1391 = vmatpush1.msra.mxu0 0.0
      %1392 = vmatprep.subr.mxu0 0.0
      %1393 = vmatpush1.msra.mxu0 0.0
      %1394 = vmatprep.subr.mxu0 0.0
      %1395 = vmatpush1.msra.mxu0 0.0
      %1396 = vmatprep.subr.mxu0 0.0
      %1397 = vmatpush1.msra.mxu0 0.0
      %1398 = vmatprep.subr.mxu0 0.0
      %1399 = vmatpush1.msra.mxu0 0.0
      %1400 = vmatprep.subr.mxu0 0.0
      %1401 = vmatpush1.msra.mxu0 0.0
      %1402 = vmatprep.subr.mxu0 0.0
      %1403 = vmatpush1.msra.mxu0 0.0
      %1404 = vmatprep.subr.mxu0 0.0
      %1405 = vmatpush1.msra.mxu0 0.0
      %1406 = vmatprep.subr.mxu0 0.0
      %1407 = vmatpush1.msra.mxu0 0.0
      %1408 = vmatprep.subr.mxu0 0.0
      %1409 = vmatpush1.msra.mxu0 0.0
      %1410 = vmatprep.subr.mxu0 0.0
      %1411 = vmatpush1.msra.mxu0 0.0
      %1412 = vmatprep.subr.mxu0 0.0
      %1413 = vmatpush1.msra.mxu0 0.0
      %1414 = vmatprep.subr.mxu0 0.0
      %1415 = vmatpush1.msra.mxu0 0.0
      %1416 = vmatprep.subr.mxu0 0.0
      %v1417 = vand.u32 %v397, 4294901760
      %1418 = vmatpush1.msra.mxu0 %v1417
      %1419 = vmatprep.subr.mxu0 0.0
      %v1420 = vand.u32 %v396, 4294901760
      %1421 = vmatpush1.msra.mxu0 %v1420
      %1422 = vmatprep.subr.mxu0 0.0
      %1423 = vmatpush2.msra.mxu0 0.0
      %1424 = vmatprep.subr.mxu0 0.0
      %1425 = vmatpush2.msra.mxu0 0.0
      %1426 = vmatprep.subr.mxu0 0.0
      %1427 = vmatpush2.msra.mxu0 0.0
      %1428 = vmatprep.subr.mxu0 0.0
      %1429 = vmatpush2.msra.mxu0 0.0
      %1430 = vmatprep.subr.mxu0 0.0
      %1431 = vmatpush2.msra.mxu0 0.0
      %1432 = vmatprep.subr.mxu0 0.0
      %1433 = vmatpush2.msra.mxu0 0.0
      %1434 = vmatprep.subr.mxu0 0.0
      %1435 = vmatpush2.msra.mxu0 0.0
      %1436 = vmatprep.subr.mxu0 0.0
      %1437 = vmatpush2.msra.mxu0 0.0
      %1438 = vmatprep.subr.mxu0 0.0
      %1439 = vmatpush2.msra.mxu0 0.0
      %1440 = vmatprep.subr.mxu0 0.0
      %1441 = vmatpush2.msra.mxu0 0.0
      %1442 = vmatprep.subr.mxu0 0.0
      %1443 = vmatpush2.msra.mxu0 0.0
      %1444 = vmatprep.subr.mxu0 0.0
      %1445 = vmatpush2.msra.mxu0 0.0
      %1446 = vmatprep.subr.mxu0 0.0
      %1447 = vmatpush2.msra.mxu0 0.0
      %1448 = vmatprep.subr.mxu0 0.0
      %1449 = vmatpush2.msra.mxu0 0.0
      %1450 = vmatprep.subr.mxu0 0.0
      %1451 = vmatpush2.msra.mxu0 0.0
      %1452 = vmatprep.subr.mxu0 0.0
      %1453 = vmatpush2.msra.mxu0 0.0
      %1454 = vmatprep.mubr.f32.mxu0 0.0
      %v1455 = vand.u32 %v400, 4294901760
      %1456 = vmatmul.mubr.f32.gmra.mxu0 %v1455
      %v1457 = vpop.f32.mrf.mxu0
      %v1458 = vadd.f32 %v1295, %v1457
      %v1459 = vpop.f32.mrf.mxu0
      %1460 = vmatprep.mubr.f32.mxu0 0.0
      %v1461 = vand.u32 %v403, 4294901760
      %1462 = vmatmul.mubr.f32.gmra.mxu0 %v1461
      %v1463 = vpop.f32.mrf.mxu0
      %v1464 = vadd.f32 %v1301, %v1463
      %v1465 = vpop.f32.mrf.mxu0
      %1466 = vmatprep.mubr.f32.mxu0 0.0
      %v1467 = vand.u32 %v406, 4294901760
      %1468 = vmatmul.mubr.f32.gmra.mxu0 %v1467
      %v1469 = vpop.f32.mrf.mxu0
      %v1470 = vadd.f32 %v1307, %v1469
      %v1471 = vpop.f32.mrf.mxu0
      %1472 = vmatprep.mubr.f32.mxu0 0.0
      %v1473 = vand.u32 %v409, 4294901760
      %1474 = vmatmul.mubr.f32.gmra.mxu0 %v1473
      %v1475 = vpop.f32.mrf.mxu0
      %v1476 = vadd.f32 %v1313, %v1475
      %v1477 = vpop.f32.mrf.mxu0
      %1478 = vmatprep.mubr.f32.mxu0 0.0
      %v1479 = vand.u32 %v412, 4294901760
      %1480 = vmatmul.mubr.f32.gmra.mxu0 %v1479
      %v1481 = vpop.f32.mrf.mxu0
      %v1482 = vadd.f32 %v1319, %v1481
      %v1483 = vpop.f32.mrf.mxu0
      %1484 = vmatprep.mubr.f32.mxu0 0.0
      %v1485 = vand.u32 %v415, 4294901760
      %1486 = vmatmul.mubr.f32.gmra.mxu0 %v1485
      %v1487 = vpop.f32.mrf.mxu0
      %v1488 = vadd.f32 %v1325, %v1487
      %v1489 = vpop.f32.mrf.mxu0
      %1490 = vmatprep.mubr.f32.mxu0 0.0
      %v1491 = vand.u32 %v418, 4294901760
      %1492 = vmatmul.mubr.f32.gmra.mxu0 %v1491
      %v1493 = vpop.f32.mrf.mxu0
      %v1494 = vadd.f32 %v1331, %v1493
      %v1495 = vpop.f32.mrf.mxu0
      %1496 = vmatprep.mubr.f32.mxu0 0.0
      %v1497 = vand.u32 %v421, 4294901760
      %1498 = vmatmul.mubr.f32.gmra.mxu0 %v1497
      %v1499 = vpop.f32.mrf.mxu0
      %v1500 = vadd.f32 %v1337, %v1499
      %v1501 = vpop.f32.mrf.mxu0
      %1502 = vmatprep.mubr.f32.mxu0 0.0
      %v1503 = vand.u32 %v424, 4294901760
      %1504 = vmatmul.mubr.f32.gmra.mxu0 %v1503
      %v1505 = vpop.f32.mrf.mxu0
      %v1506 = vadd.f32 %v1343, %v1505
      %v1507 = vpop.f32.mrf.mxu0
      %1508 = vmatprep.mubr.f32.mxu0 0.0
      %v1509 = vand.u32 %v427, 4294901760
      %1510 = vmatmul.mubr.f32.gmra.mxu0 %v1509
      %v1511 = vpop.f32.mrf.mxu0
      %v1512 = vadd.f32 %v1349, %v1511
      %v1513 = vpop.f32.mrf.mxu0
      %1514 = vmatprep.mubr.f32.mxu0 0.0
      %v1515 = vand.u32 %v430, 4294901760
      %1516 = vmatmul.mubr.f32.gmra.mxu0 %v1515
      %v1517 = vpop.f32.mrf.mxu0
      %v1518 = vadd.f32 %v1355, %v1517
      %v1519 = vpop.f32.mrf.mxu0
      %1520 = vmatprep.mubr.f32.mxu0 0.0
      %v1521 = vand.u32 %v433, 4294901760
      %1522 = vmatmul.mubr.f32.gmra.mxu0 %v1521
      %v1523 = vpop.f32.mrf.mxu0
      %v1524 = vadd.f32 %v1361, %v1523
      %v1525 = vpop.f32.mrf.mxu0
      %1526 = vmatprep.mubr.f32.mxu0 0.0
      %v1527 = vand.u32 %v436, 4294901760
      %1528 = vmatmul.mubr.f32.gmra.mxu0 %v1527
      %v1529 = vpop.f32.mrf.mxu0
      %v1530 = vadd.f32 %v1367, %v1529
      %v1531 = vpop.f32.mrf.mxu0
      %1532 = vmatprep.mubr.f32.mxu0 0.0
      %v1533 = vand.u32 %v439, 4294901760
      %1534 = vmatmul.mubr.f32.gmra.mxu0 %v1533
      %v1535 = vpop.f32.mrf.mxu0
      %v1536 = vadd.f32 %v1373, %v1535
      %v1537 = vpop.f32.mrf.mxu0
      %1538 = vmatprep.mubr.f32.mxu0 0.0
      %v1539 = vand.u32 %v442, 4294901760
      %1540 = vmatmul.mubr.f32.gmra.mxu0 %v1539
      %v1541 = vpop.f32.mrf.mxu0
      %v1542 = vadd.f32 %v1379, %v1541
      %v1543 = vpop.f32.mrf.mxu0
      %1544 = vmatprep.mubr.f32.mxu0 0.0
      %v1545 = vand.u32 %v445, 4294901760
      %1546 = vmatmul.mubr.f32.gmra.mxu0 %v1545
      %v1547 = vpop.f32.mrf.mxu0
      %v1548 = vadd.f32 %v1385, %v1547
      %v1549 = vpop.f32.mrf.mxu0
      %1550 = vdwg.mxu0
      %v1551 = vld [vmem:[%s5 + $0x10] sm:$0xff]
      %v1552 = vld [vmem:[%s5 + $0x18] sm:$0xff]
      %v1553 = vld [vmem:[%s5 + $0x20] sm:$0xff]
      %v1554 = vld [vmem:[%s5 + $0x28] sm:$0xff]
      %v1555 = vld [vmem:[%s5 + $0x30] sm:$0xff]
      %v1556 = vld [vmem:[%s5 + $0x38] sm:$0xff]
      %v1557 = vld [vmem:[%s5 + $0x40] sm:$0xff]
      %v1558 = vld [vmem:[%s5 + $0x48] sm:$0xff]
      %v1559 = vld [vmem:[%s5 + $0x50] sm:$0x1]
      %1560 = vmatprep.subr.mxu0 0.0
      %v1561 = vand.u32 %v379, 4294901760
      %1562 = vmatpush1.msra.mxu0 %v1561
      %1563 = vmatprep.subr.mxu0 0.0
      %v1564 = vand.u32 %v378, 4294901760
      %1565 = vmatpush1.msra.mxu0 %v1564
      %1566 = vmatprep.subr.mxu0 0.0
      %v1567 = vand.u32 %v377, 4294901760
      %1568 = vmatpush1.msra.mxu0 %v1567
      %1569 = vmatprep.subr.mxu0 0.0
      %v1570 = vand.u32 %v376, 4294901760
      %1571 = vmatpush1.msra.mxu0 %v1570
      %1572 = vmatprep.subr.mxu0 0.0
      %v1573 = vand.u32 %v375, 4294901760
      %1574 = vmatpush1.msra.mxu0 %v1573
      %1575 = vmatprep.subr.mxu0 0.0
      %v1576 = vand.u32 %v374, 4294901760
      %1577 = vmatpush1.msra.mxu0 %v1576
      %1578 = vmatprep.subr.mxu0 0.0
      %v1579 = vand.u32 %v373, 4294901760
      %1580 = vmatpush1.msra.mxu0 %v1579
      %1581 = vmatprep.subr.mxu0 0.0
      %v1582 = vand.u32 %v372, 4294901760
      %1583 = vmatpush1.msra.mxu0 %v1582
      %1584 = vmatprep.subr.mxu0 0.0
      %v1585 = vand.u32 %v371, 4294901760
      %1586 = vmatpush1.msra.mxu0 %v1585
      %1587 = vmatprep.subr.mxu0 0.0
      %v1588 = vand.u32 %v370, 4294901760
      %1589 = vmatpush1.msra.mxu0 %v1588
      %1590 = vmatprep.subr.mxu0 0.0
      %v1591 = vand.u32 %v369, 4294901760
      %1592 = vmatpush1.msra.mxu0 %v1591
      %1593 = vmatprep.subr.mxu0 0.0
      %v1594 = vand.u32 %v368, 4294901760
      %1595 = vmatpush1.msra.mxu0 %v1594
      %1596 = vmatprep.subr.mxu0 0.0
      %v1597 = vand.u32 %v367, 4294901760
      %1598 = vmatpush1.msra.mxu0 %v1597
      %1599 = vmatprep.subr.mxu0 0.0
      %v1600 = vand.u32 %v366, 4294901760
      %1601 = vmatpush1.msra.mxu0 %v1600
      %1602 = vmatprep.subr.mxu0 0.0
      %v1603 = vand.u32 %v365, 4294901760
      %1604 = vmatpush1.msra.mxu0 %v1603
      %1605 = vmatprep.subr.mxu0 0.0
      %v1606 = vand.u32 %v364, 4294901760
      %1607 = vmatpush1.msra.mxu0 %v1606
      %1608 = vmatprep.subr.mxu0 0.0
      %1609 = vmatpush2.msra.mxu0 0.0
      %1610 = vmatprep.subr.mxu0 0.0
      %1611 = vmatpush2.msra.mxu0 0.0
      %1612 = vmatprep.subr.mxu0 0.0
      %1613 = vmatpush2.msra.mxu0 0.0
      %1614 = vmatprep.subr.mxu0 0.0
      %1615 = vmatpush2.msra.mxu0 0.0
      %1616 = vmatprep.subr.mxu0 0.0
      %1617 = vmatpush2.msra.mxu0 0.0
      %1618 = vmatprep.subr.mxu0 0.0
      %1619 = vmatpush2.msra.mxu0 0.0
      %1620 = vmatprep.subr.mxu0 0.0
      %1621 = vmatpush2.msra.mxu0 0.0
      %1622 = vmatprep.subr.mxu0 0.0
      %1623 = vmatpush2.msra.mxu0 0.0
      %1624 = vmatprep.subr.mxu0 0.0
      %1625 = vmatpush2.msra.mxu0 0.0
      %1626 = vmatprep.subr.mxu0 0.0
      %1627 = vmatpush2.msra.mxu0 0.0
      %1628 = vmatprep.subr.mxu0 0.0
      %1629 = vmatpush2.msra.mxu0 0.0
      %1630 = vmatprep.subr.mxu0 0.0
      %1631 = vmatpush2.msra.mxu0 0.0
      %1632 = vmatprep.subr.mxu0 0.0
      %1633 = vmatpush2.msra.mxu0 0.0
      %1634 = vmatprep.subr.mxu0 0.0
      %1635 = vmatpush2.msra.mxu0 0.0
      %1636 = vmatprep.subr.mxu0 0.0
      %1637 = vmatpush2.msra.mxu0 0.0
      %1638 = vmatprep.subr.mxu0 0.0
      %1639 = vmatpush2.msra.mxu0 0.0
      %1640 = vmatprep.mubr.f32.mxu0 0.0
      %v1641 = vsub.f32 %v348, %v348
      %v1642 = vand.u32 %v1641, 4294901760
      %v1643 = vsub.f32 %v1641, %v1642
      %v1644 = vand.u32 %v1643, 4294901760
      %1645 = vmatmul.mubr.f32.gmra.mxu0 %v1644
      %v1646 = vpop.f32.mrf.mxu0
      %v1647 = vadd.f32 0.0, %v1646
      %v1648 = vpop.f32.mrf.mxu0
      %1649 = vmatprep.mubr.f32.mxu0 0.0
      %v1650 = vsub.f32 %v349, %v349
      %v1651 = vand.u32 %v1650, 4294901760
      %v1652 = vsub.f32 %v1650, %v1651
      %v1653 = vand.u32 %v1652, 4294901760
      %1654 = vmatmul.mubr.f32.gmra.mxu0 %v1653
      %v1655 = vpop.f32.mrf.mxu0
      %v1656 = vadd.f32 0.0, %v1655
      %v1657 = vpop.f32.mrf.mxu0
      %1658 = vmatprep.mubr.f32.mxu0 0.0
      %v1659 = vsub.f32 %v350, %v350
      %v1660 = vand.u32 %v1659, 4294901760
      %v1661 = vsub.f32 %v1659, %v1660
      %v1662 = vand.u32 %v1661, 4294901760
      %1663 = vmatmul.mubr.f32.gmra.mxu0 %v1662
      %v1664 = vpop.f32.mrf.mxu0
      %v1665 = vadd.f32 0.0, %v1664
      %v1666 = vpop.f32.mrf.mxu0
      %1667 = vmatprep.mubr.f32.mxu0 0.0
      %v1668 = vsub.f32 %v351, %v351
      %v1669 = vand.u32 %v1668, 4294901760
      %v1670 = vsub.f32 %v1668, %v1669
      %v1671 = vand.u32 %v1670, 4294901760
      %1672 = vmatmul.mubr.f32.gmra.mxu0 %v1671
      %v1673 = vpop.f32.mrf.mxu0
      %v1674 = vadd.f32 0.0, %v1673
      %v1675 = vpop.f32.mrf.mxu0
      %1676 = vmatprep.mubr.f32.mxu0 0.0
      %v1677 = vsub.f32 %v352, %v352
      %v1678 = vand.u32 %v1677, 4294901760
      %v1679 = vsub.f32 %v1677, %v1678
      %v1680 = vand.u32 %v1679, 4294901760
      %1681 = vmatmul.mubr.f32.gmra.mxu0 %v1680
      %v1682 = vpop.f32.mrf.mxu0
      %v1683 = vadd.f32 0.0, %v1682
      %v1684 = vpop.f32.mrf.mxu0
      %1685 = vmatprep.mubr.f32.mxu0 0.0
      %v1686 = vsub.f32 %v353, %v353
      %v1687 = vand.u32 %v1686, 4294901760
      %v1688 = vsub.f32 %v1686, %v1687
      %v1689 = vand.u32 %v1688, 4294901760
      %1690 = vmatmul.mubr.f32.gmra.mxu0 %v1689
      %v1691 = vpop.f32.mrf.mxu0
      %v1692 = vadd.f32 0.0, %v1691
      %v1693 = vpop.f32.mrf.mxu0
      %1694 = vmatprep.mubr.f32.mxu0 0.0
      %v1695 = vsub.f32 %v354, %v354
      %v1696 = vand.u32 %v1695, 4294901760
      %v1697 = vsub.f32 %v1695, %v1696
      %v1698 = vand.u32 %v1697, 4294901760
      %1699 = vmatmul.mubr.f32.gmra.mxu0 %v1698
      %v1700 = vpop.f32.mrf.mxu0
      %v1701 = vadd.f32 0.0, %v1700
      %v1702 = vpop.f32.mrf.mxu0
      %1703 = vmatprep.mubr.f32.mxu0 0.0
      %v1704 = vsub.f32 %v355, %v355
      %v1705 = vand.u32 %v1704, 4294901760
      %v1706 = vsub.f32 %v1704, %v1705
      %v1707 = vand.u32 %v1706, 4294901760
      %1708 = vmatmul.mubr.f32.gmra.mxu0 %v1707
      %v1709 = vpop.f32.mrf.mxu0
      %v1710 = vadd.f32 0.0, %v1709
      %v1711 = vpop.f32.mrf.mxu0
      %1712 = vmatprep.mubr.f32.mxu0 0.0
      %v1713 = vsub.f32 %v356, %v356
      %v1714 = vand.u32 %v1713, 4294901760
      %v1715 = vsub.f32 %v1713, %v1714
      %v1716 = vand.u32 %v1715, 4294901760
      %1717 = vmatmul.mubr.f32.gmra.mxu0 %v1716
      %v1718 = vpop.f32.mrf.mxu0
      %v1719 = vadd.f32 0.0, %v1718
      %v1720 = vpop.f32.mrf.mxu0
      %1721 = vmatprep.mubr.f32.mxu0 0.0
      %v1722 = vsub.f32 %v357, %v357
      %v1723 = vand.u32 %v1722, 4294901760
      %v1724 = vsub.f32 %v1722, %v1723
      %v1725 = vand.u32 %v1724, 4294901760
      %1726 = vmatmul.mubr.f32.gmra.mxu0 %v1725
      %v1727 = vpop.f32.mrf.mxu0
      %v1728 = vadd.f32 0.0, %v1727
      %v1729 = vpop.f32.mrf.mxu0
      %1730 = vmatprep.mubr.f32.mxu0 0.0
      %v1731 = vsub.f32 %v358, %v358
      %v1732 = vand.u32 %v1731, 4294901760
      %v1733 = vsub.f32 %v1731, %v1732
      %v1734 = vand.u32 %v1733, 4294901760
      %1735 = vmatmul.mubr.f32.gmra.mxu0 %v1734
      %v1736 = vpop.f32.mrf.mxu0
      %v1737 = vadd.f32 0.0, %v1736
      %v1738 = vpop.f32.mrf.mxu0
      %1739 = vmatprep.mubr.f32.mxu0 0.0
      %v1740 = vsub.f32 %v359, %v359
      %v1741 = vand.u32 %v1740, 4294901760
      %v1742 = vsub.f32 %v1740, %v1741
      %v1743 = vand.u32 %v1742, 4294901760
      %1744 = vmatmul.mubr.f32.gmra.mxu0 %v1743
      %v1745 = vpop.f32.mrf.mxu0
      %v1746 = vadd.f32 0.0, %v1745
      %v1747 = vpop.f32.mrf.mxu0
      %1748 = vmatprep.mubr.f32.mxu0 0.0
      %v1749 = vsub.f32 %v360, %v360
      %v1750 = vand.u32 %v1749, 4294901760
      %v1751 = vsub.f32 %v1749, %v1750
      %v1752 = vand.u32 %v1751, 4294901760
      %1753 = vmatmul.mubr.f32.gmra.mxu0 %v1752
      %v1754 = vpop.f32.mrf.mxu0
      %v1755 = vadd.f32 0.0, %v1754
      %v1756 = vpop.f32.mrf.mxu0
      %1757 = vmatprep.mubr.f32.mxu0 0.0
      %v1758 = vsub.f32 %v361, %v361
      %v1759 = vand.u32 %v1758, 4294901760
      %v1760 = vsub.f32 %v1758, %v1759
      %v1761 = vand.u32 %v1760, 4294901760
      %1762 = vmatmul.mubr.f32.gmra.mxu0 %v1761
      %v1763 = vpop.f32.mrf.mxu0
      %v1764 = vadd.f32 0.0, %v1763
      %v1765 = vpop.f32.mrf.mxu0
      %1766 = vmatprep.mubr.f32.mxu0 0.0
      %v1767 = vsub.f32 %v362, %v362
      %v1768 = vand.u32 %v1767, 4294901760
      %v1769 = vsub.f32 %v1767, %v1768
      %v1770 = vand.u32 %v1769, 4294901760
      %1771 = vmatmul.mubr.f32.gmra.mxu0 %v1770
      %v1772 = vpop.f32.mrf.mxu0
      %v1773 = vadd.f32 0.0, %v1772
      %v1774 = vpop.f32.mrf.mxu0
      %1775 = vmatprep.mubr.f32.mxu0 0.0
      %v1776 = vsub.f32 %v363, %v363
      %v1777 = vand.u32 %v1776, 4294901760
      %v1778 = vsub.f32 %v1776, %v1777
      %v1779 = vand.u32 %v1778, 4294901760
      %1780 = vmatmul.mubr.f32.gmra.mxu0 %v1779
      %v1781 = vpop.f32.mrf.mxu0
      %v1782 = vadd.f32 0.0, %v1781
      %v1783 = vpop.f32.mrf.mxu0
      %1784 = vdwg.mxu0
      %1785 = vmatprep.subr.mxu0 0.0
      %v1786 = vand.u32 %v379, 4294901760
      %v1787 = vsub.f32 %v379, %v1786
      %v1788 = vand.u32 %v1787, 4294901760
      %v1789 = vsub.f32 %v1787, %v1788
      %v1790 = vand.u32 %v1789, 4294901760
      %1791 = vmatpush1.msra.mxu0 %v1790
      %1792 = vmatprep.subr.mxu0 0.0
      %v1793 = vand.u32 %v378, 4294901760
      %v1794 = vsub.f32 %v378, %v1793
      %v1795 = vand.u32 %v1794, 4294901760
      %v1796 = vsub.f32 %v1794, %v1795
      %v1797 = vand.u32 %v1796, 4294901760
      %1798 = vmatpush1.msra.mxu0 %v1797
      %1799 = vmatprep.subr.mxu0 0.0
      %v1800 = vand.u32 %v377, 4294901760
      %v1801 = vsub.f32 %v377, %v1800
      %v1802 = vand.u32 %v1801, 4294901760
      %v1803 = vsub.f32 %v1801, %v1802
      %v1804 = vand.u32 %v1803, 4294901760
      %1805 = vmatpush1.msra.mxu0 %v1804
      %1806 = vmatprep.subr.mxu0 0.0
      %v1807 = vand.u32 %v376, 4294901760
      %v1808 = vsub.f32 %v376, %v1807
      %v1809 = vand.u32 %v1808, 4294901760
      %v1810 = vsub.f32 %v1808, %v1809
      %v1811 = vand.u32 %v1810, 4294901760
      %1812 = vmatpush1.msra.mxu0 %v1811
      %1813 = vmatprep.subr.mxu0 0.0
      %v1814 = vand.u32 %v375, 4294901760
      %v1815 = vsub.f32 %v375, %v1814
      %v1816 = vand.u32 %v1815, 4294901760
      %v1817 = vsub.f32 %v1815, %v1816
      %v1818 = vand.u32 %v1817, 4294901760
      %1819 = vmatpush1.msra.mxu0 %v1818
      %1820 = vmatprep.subr.mxu0 0.0
      %v1821 = vand.u32 %v374, 4294901760
      %v1822 = vsub.f32 %v374, %v1821
      %v1823 = vand.u32 %v1822, 4294901760
      %v1824 = vsub.f32 %v1822, %v1823
      %v1825 = vand.u32 %v1824, 4294901760
      %1826 = vmatpush1.msra.mxu0 %v1825
      %1827 = vmatprep.subr.mxu0 0.0
      %v1828 = vand.u32 %v373, 4294901760
      %v1829 = vsub.f32 %v373, %v1828
      %v1830 = vand.u32 %v1829, 4294901760
      %v1831 = vsub.f32 %v1829, %v1830
      %v1832 = vand.u32 %v1831, 4294901760
      %1833 = vmatpush1.msra.mxu0 %v1832
      %1834 = vmatprep.subr.mxu0 0.0
      %v1835 = vand.u32 %v372, 4294901760
      %v1836 = vsub.f32 %v372, %v1835
      %v1837 = vand.u32 %v1836, 4294901760
      %v1838 = vsub.f32 %v1836, %v1837
      %v1839 = vand.u32 %v1838, 4294901760
      %1840 = vmatpush1.msra.mxu0 %v1839
      %1841 = vmatprep.subr.mxu0 0.0
      %v1842 = vand.u32 %v371, 4294901760
      %v1843 = vsub.f32 %v371, %v1842
      %v1844 = vand.u32 %v1843, 4294901760
      %v1845 = vsub.f32 %v1843, %v1844
      %v1846 = vand.u32 %v1845, 4294901760
      %1847 = vmatpush1.msra.mxu0 %v1846
      %1848 = vmatprep.subr.mxu0 0.0
      %v1849 = vand.u32 %v370, 4294901760
      %v1850 = vsub.f32 %v370, %v1849
      %v1851 = vand.u32 %v1850, 4294901760
      %v1852 = vsub.f32 %v1850, %v1851
      %v1853 = vand.u32 %v1852, 4294901760
      %1854 = vmatpush1.msra.mxu0 %v1853
      %1855 = vmatprep.subr.mxu0 0.0
      %v1856 = vand.u32 %v369, 4294901760
      %v1857 = vsub.f32 %v369, %v1856
      %v1858 = vand.u32 %v1857, 4294901760
      %v1859 = vsub.f32 %v1857, %v1858
      %v1860 = vand.u32 %v1859, 4294901760
      %1861 = vmatpush1.msra.mxu0 %v1860
      %1862 = vmatprep.subr.mxu0 0.0
      %v1863 = vand.u32 %v368, 4294901760
      %v1864 = vsub.f32 %v368, %v1863
      %v1865 = vand.u32 %v1864, 4294901760
      %v1866 = vsub.f32 %v1864, %v1865
      %v1867 = vand.u32 %v1866, 4294901760
      %1868 = vmatpush1.msra.mxu0 %v1867
      %1869 = vmatprep.subr.mxu0 0.0
      %v1870 = vand.u32 %v367, 4294901760
      %v1871 = vsub.f32 %v367, %v1870
      %v1872 = vand.u32 %v1871, 4294901760
      %v1873 = vsub.f32 %v1871, %v1872
      %v1874 = vand.u32 %v1873, 4294901760
      %1875 = vmatpush1.msra.mxu0 %v1874
      %1876 = vmatprep.subr.mxu0 0.0
      %v1877 = vand.u32 %v366, 4294901760
      %v1878 = vsub.f32 %v366, %v1877
      %v1879 = vand.u32 %v1878, 4294901760
      %v1880 = vsub.f32 %v1878, %v1879
      %v1881 = vand.u32 %v1880, 4294901760
      %1882 = vmatpush1.msra.mxu0 %v1881
      %1883 = vmatprep.subr.mxu0 0.0
      %v1884 = vand.u32 %v365, 4294901760
      %v1885 = vsub.f32 %v365, %v1884
      %v1886 = vand.u32 %v1885, 4294901760
      %v1887 = vsub.f32 %v1885, %v1886
      %v1888 = vand.u32 %v1887, 4294901760
      %1889 = vmatpush1.msra.mxu0 %v1888
      %1890 = vmatprep.subr.mxu0 0.0
      %v1891 = vand.u32 %v364, 4294901760
      %v1892 = vsub.f32 %v364, %v1891
      %v1893 = vand.u32 %v1892, 4294901760
      %v1894 = vsub.f32 %v1892, %v1893
      %v1895 = vand.u32 %v1894, 4294901760
      %1896 = vmatpush1.msra.mxu0 %v1895
      %1897 = vmatprep.subr.mxu0 0.0
      %1898 = vmatpush2.msra.mxu0 0.0
      %1899 = vmatprep.subr.mxu0 0.0
      %1900 = vmatpush2.msra.mxu0 0.0
      %1901 = vmatprep.subr.mxu0 0.0
      %1902 = vmatpush2.msra.mxu0 0.0
      %1903 = vmatprep.subr.mxu0 0.0
      %1904 = vmatpush2.msra.mxu0 0.0
      %1905 = vmatprep.subr.mxu0 0.0
      %1906 = vmatpush2.msra.mxu0 0.0
      %1907 = vmatprep.subr.mxu0 0.0
      %1908 = vmatpush2.msra.mxu0 0.0
      %1909 = vmatprep.subr.mxu0 0.0
      %1910 = vmatpush2.msra.mxu0 0.0
      %1911 = vmatprep.subr.mxu0 0.0
      %1912 = vmatpush2.msra.mxu0 0.0
      %1913 = vmatprep.subr.mxu0 0.0
      %1914 = vmatpush2.msra.mxu0 0.0
      %1915 = vmatprep.subr.mxu0 0.0
      %1916 = vmatpush2.msra.mxu0 0.0
      %1917 = vmatprep.subr.mxu0 0.0
      %1918 = vmatpush2.msra.mxu0 0.0
      %1919 = vmatprep.subr.mxu0 0.0
      %1920 = vmatpush2.msra.mxu0 0.0
      %1921 = vmatprep.subr.mxu0 0.0
      %1922 = vmatpush2.msra.mxu0 0.0
      %1923 = vmatprep.subr.mxu0 0.0
      %1924 = vmatpush2.msra.mxu0 0.0
      %1925 = vmatprep.subr.mxu0 0.0
      %1926 = vmatpush2.msra.mxu0 0.0
      %1927 = vmatprep.subr.mxu0 0.0
      %1928 = vmatpush2.msra.mxu0 0.0
      %1929 = vmatprep.mubr.f32.mxu0 0.0
      %1930 = vmatmul.mubr.f32.gmra.mxu0 %v348
      %v1931 = vpop.f32.mrf.mxu0
      %v1932 = vadd.f32 %v1647, %v1931
      %v1933 = vpop.f32.mrf.mxu0
      %1934 = vmatprep.mubr.f32.mxu0 0.0
      %1935 = vmatmul.mubr.f32.gmra.mxu0 %v349
      %v1936 = vpop.f32.mrf.mxu0
      %v1937 = vadd.f32 %v1656, %v1936
      %v1938 = vpop.f32.mrf.mxu0
      %1939 = vmatprep.mubr.f32.mxu0 0.0
      %1940 = vmatmul.mubr.f32.gmra.mxu0 %v350
      %v1941 = vpop.f32.mrf.mxu0
      %v1942 = vadd.f32 %v1665, %v1941
      %v1943 = vpop.f32.mrf.mxu0
      %1944 = vmatprep.mubr.f32.mxu0 0.0
      %1945 = vmatmul.mubr.f32.gmra.mxu0 %v351
      %v1946 = vpop.f32.mrf.mxu0
      %v1947 = vadd.f32 %v1674, %v1946
      %v1948 = vpop.f32.mrf.mxu0
      %1949 = vmatprep.mubr.f32.mxu0 0.0
      %1950 = vmatmul.mubr.f32.gmra.mxu0 %v352
      %v1951 = vpop.f32.mrf.mxu0
      %v1952 = vadd.f32 %v1683, %v1951
      %v1953 = vpop.f32.mrf.mxu0
      %1954 = vmatprep.mubr.f32.mxu0 0.0
      %1955 = vmatmul.mubr.f32.gmra.mxu0 %v353
      %v1956 = vpop.f32.mrf.mxu0
      %v1957 = vadd.f32 %v1692, %v1956
      %v1958 = vpop.f32.mrf.mxu0
      %1959 = vmatprep.mubr.f32.mxu0 0.0
      %1960 = vmatmul.mubr.f32.gmra.mxu0 %v354
      %v1961 = vpop.f32.mrf.mxu0
      %v1962 = vadd.f32 %v1701, %v1961
      %v1963 = vpop.f32.mrf.mxu0
      %1964 = vmatprep.mubr.f32.mxu0 0.0
      %1965 = vmatmul.mubr.f32.gmra.mxu0 %v355
      %v1966 = vpop.f32.mrf.mxu0
      %v1967 = vadd.f32 %v1710, %v1966
      %v1968 = vpop.f32.mrf.mxu0
      %1969 = vmatprep.mubr.f32.mxu0 0.0
      %1970 = vmatmul.mubr.f32.gmra.mxu0 %v356
      %v1971 = vpop.f32.mrf.mxu0
      %v1972 = vadd.f32 %v1719, %v1971
      %v1973 = vpop.f32.mrf.mxu0
      %1974 = vmatprep.mubr.f32.mxu0 0.0
      %1975 = vmatmul.mubr.f32.gmra.mxu0 %v357
      %v1976 = vpop.f32.mrf.mxu0
      %v1977 = vadd.f32 %v1728, %v1976
      %v1978 = vpop.f32.mrf.mxu0
      %1979 = vmatprep.mubr.f32.mxu0 0.0
      %1980 = vmatmul.mubr.f32.gmra.mxu0 %v358
      %v1981 = vpop.f32.mrf.mxu0
      %v1982 = vadd.f32 %v1737, %v1981
      %v1983 = vpop.f32.mrf.mxu0
      %1984 = vmatprep.mubr.f32.mxu0 0.0
      %1985 = vmatmul.mubr.f32.gmra.mxu0 %v359
      %v1986 = vpop.f32.mrf.mxu0
      %v1987 = vadd.f32 %v1746, %v1986
      %v1988 = vpop.f32.mrf.mxu0
      %1989 = vmatprep.mubr.f32.mxu0 0.0
      %1990 = vmatmul.mubr.f32.gmra.mxu0 %v360
      %v1991 = vpop.f32.mrf.mxu0
      %v1992 = vadd.f32 %v1755, %v1991
      %v1993 = vpop.f32.mrf.mxu0
      %1994 = vmatprep.mubr.f32.mxu0 0.0
      %1995 = vmatmul.mubr.f32.gmra.mxu0 %v361
      %v1996 = vpop.f32.mrf.mxu0
      %v1997 = vadd.f32 %v1764, %v1996
      %v1998 = vpop.f32.mrf.mxu0
      %1999 = vmatprep.mubr.f32.mxu0 0.0
      %2000 = vmatmul.mubr.f32.gmra.mxu0 %v362
      %v2001 = vpop.f32.mrf.mxu0
      %v2002 = vadd.f32 %v1773, %v2001
      %v2003 = vpop.f32.mrf.mxu0
      %2004 = vmatprep.mubr.f32.mxu0 0.0
      %2005 = vmatmul.mubr.f32.gmra.mxu0 %v363
      %v2006 = vpop.f32.mrf.mxu0
      %v2007 = vadd.f32 %v1782, %v2006
      %v2008 = vpop.f32.mrf.mxu0
      %2009 = vdwg.mxu0
      %2010 = vmatprep.subr.mxu0 0.0
      %v2011 = vand.u32 %v379, 4294901760
      %v2012 = vsub.f32 %v379, %v2011
      %2013 = vmatpush1.msra.mxu0 %v2012
      %2014 = vmatprep.subr.mxu0 0.0
      %v2015 = vand.u32 %v378, 4294901760
      %v2016 = vsub.f32 %v378, %v2015
      %2017 = vmatpush1.msra.mxu0 %v2016
      %2018 = vmatprep.subr.mxu0 0.0
      %v2019 = vand.u32 %v377, 4294901760
      %v2020 = vsub.f32 %v377, %v2019
      %2021 = vmatpush1.msra.mxu0 %v2020
      %2022 = vmatprep.subr.mxu0 0.0
      %v2023 = vand.u32 %v376, 4294901760
      %v2024 = vsub.f32 %v376, %v2023
      %2025 = vmatpush1.msra.mxu0 %v2024
      %2026 = vmatprep.subr.mxu0 0.0
      %v2027 = vand.u32 %v375, 4294901760
      %v2028 = vsub.f32 %v375, %v2027
      %2029 = vmatpush1.msra.mxu0 %v2028
      %2030 = vmatprep.subr.mxu0 0.0
      %v2031 = vand.u32 %v374, 4294901760
      %v2032 = vsub.f32 %v374, %v2031
      %2033 = vmatpush1.msra.mxu0 %v2032
      %2034 = vmatprep.subr.mxu0 0.0
      %v2035 = vand.u32 %v373, 4294901760
      %v2036 = vsub.f32 %v373, %v2035
      %2037 = vmatpush1.msra.mxu0 %v2036
      %2038 = vmatprep.subr.mxu0 0.0
      %v2039 = vand.u32 %v372, 4294901760
      %v2040 = vsub.f32 %v372, %v2039
      %2041 = vmatpush1.msra.mxu0 %v2040
      %2042 = vmatprep.subr.mxu0 0.0
      %v2043 = vand.u32 %v371, 4294901760
      %v2044 = vsub.f32 %v371, %v2043
      %2045 = vmatpush1.msra.mxu0 %v2044
      %2046 = vmatprep.subr.mxu0 0.0
      %v2047 = vand.u32 %v370, 4294901760
      %v2048 = vsub.f32 %v370, %v2047
      %2049 = vmatpush1.msra.mxu0 %v2048
      %2050 = vmatprep.subr.mxu0 0.0
      %v2051 = vand.u32 %v369, 4294901760
      %v2052 = vsub.f32 %v369, %v2051
      %2053 = vmatpush1.msra.mxu0 %v2052
      %2054 = vmatprep.subr.mxu0 0.0
      %v2055 = vand.u32 %v368, 4294901760
      %v2056 = vsub.f32 %v368, %v2055
      %2057 = vmatpush1.msra.mxu0 %v2056
      %2058 = vmatprep.subr.mxu0 0.0
      %v2059 = vand.u32 %v367, 4294901760
      %v2060 = vsub.f32 %v367, %v2059
      %2061 = vmatpush1.msra.mxu0 %v2060
      %2062 = vmatprep.subr.mxu0 0.0
      %v2063 = vand.u32 %v366, 4294901760
      %v2064 = vsub.f32 %v366, %v2063
      %2065 = vmatpush1.msra.mxu0 %v2064
      %2066 = vmatprep.subr.mxu0 0.0
      %v2067 = vand.u32 %v365, 4294901760
      %v2068 = vsub.f32 %v365, %v2067
      %2069 = vmatpush1.msra.mxu0 %v2068
      %2070 = vmatprep.subr.mxu0 0.0
      %v2071 = vand.u32 %v364, 4294901760
      %v2072 = vsub.f32 %v364, %v2071
      %2073 = vmatpush1.msra.mxu0 %v2072
      %2074 = vmatprep.subr.mxu0 0.0
      %2075 = vmatpush2.msra.mxu0 0.0
      %2076 = vmatprep.subr.mxu0 0.0
      %2077 = vmatpush2.msra.mxu0 0.0
      %2078 = vmatprep.subr.mxu0 0.0
      %2079 = vmatpush2.msra.mxu0 0.0
      %2080 = vmatprep.subr.mxu0 0.0
      %2081 = vmatpush2.msra.mxu0 0.0
      %2082 = vmatprep.subr.mxu0 0.0
      %2083 = vmatpush2.msra.mxu0 0.0
      %2084 = vmatprep.subr.mxu0 0.0
      %2085 = vmatpush2.msra.mxu0 0.0
      %2086 = vmatprep.subr.mxu0 0.0
      %2087 = vmatpush2.msra.mxu0 0.0
      %2088 = vmatprep.subr.mxu0 0.0
      %2089 = vmatpush2.msra.mxu0 0.0
      %2090 = vmatprep.subr.mxu0 0.0
      %2091 = vmatpush2.msra.mxu0 0.0
      %2092 = vmatprep.subr.mxu0 0.0
      %2093 = vmatpush2.msra.mxu0 0.0
      %2094 = vmatprep.subr.mxu0 0.0
      %2095 = vmatpush2.msra.mxu0 0.0
      %2096 = vmatprep.subr.mxu0 0.0
      %2097 = vmatpush2.msra.mxu0 0.0
      %2098 = vmatprep.subr.mxu0 0.0
      %2099 = vmatpush2.msra.mxu0 0.0
      %2100 = vmatprep.subr.mxu0 0.0
      %2101 = vmatpush2.msra.mxu0 0.0
      %2102 = vmatprep.subr.mxu0 0.0
      %2103 = vmatpush2.msra.mxu0 0.0
      %2104 = vmatprep.subr.mxu0 0.0
      %2105 = vmatpush2.msra.mxu0 0.0
      %2106 = vmatprep.mubr.f32.mxu0 0.0
      %v2107 = vsub.f32 %v348, %v348
      %2108 = vmatmul.mubr.f32.gmra.mxu0 %v2107
      %v2109 = vpop.f32.mrf.mxu0
      %v2110 = vadd.f32 %v1932, %v2109
      %v2111 = vpop.f32.mrf.mxu0
      %2112 = vmatprep.mubr.f32.mxu0 0.0
      %v2113 = vsub.f32 %v349, %v349
      %2114 = vmatmul.mubr.f32.gmra.mxu0 %v2113
      %v2115 = vpop.f32.mrf.mxu0
      %v2116 = vadd.f32 %v1937, %v2115
      %v2117 = vpop.f32.mrf.mxu0
      %2118 = vmatprep.mubr.f32.mxu0 0.0
      %v2119 = vsub.f32 %v350, %v350
      %2120 = vmatmul.mubr.f32.gmra.mxu0 %v2119
      %v2121 = vpop.f32.mrf.mxu0
      %v2122 = vadd.f32 %v1942, %v2121
      %v2123 = vpop.f32.mrf.mxu0
      %2124 = vmatprep.mubr.f32.mxu0 0.0
      %v2125 = vsub.f32 %v351, %v351
      %2126 = vmatmul.mubr.f32.gmra.mxu0 %v2125
      %v2127 = vpop.f32.mrf.mxu0
      %v2128 = vadd.f32 %v1947, %v2127
      %v2129 = vpop.f32.mrf.mxu0
      %2130 = vmatprep.mubr.f32.mxu0 0.0
      %v2131 = vsub.f32 %v352, %v352
      %2132 = vmatmul.mubr.f32.gmra.mxu0 %v2131
      %v2133 = vpop.f32.mrf.mxu0
      %v2134 = vadd.f32 %v1952, %v2133
      %v2135 = vpop.f32.mrf.mxu0
      %2136 = vmatprep.mubr.f32.mxu0 0.0
      %v2137 = vsub.f32 %v353, %v353
      %2138 = vmatmul.mubr.f32.gmra.mxu0 %v2137
      %v2139 = vpop.f32.mrf.mxu0
      %v2140 = vadd.f32 %v1957, %v2139
      %v2141 = vpop.f32.mrf.mxu0
      %2142 = vmatprep.mubr.f32.mxu0 0.0
      %v2143 = vsub.f32 %v354, %v354
      %2144 = vmatmul.mubr.f32.gmra.mxu0 %v2143
      %v2145 = vpop.f32.mrf.mxu0
      %v2146 = vadd.f32 %v1962, %v2145
      %v2147 = vpop.f32.mrf.mxu0
      %2148 = vmatprep.mubr.f32.mxu0 0.0
      %v2149 = vsub.f32 %v355, %v355
      %2150 = vmatmul.mubr.f32.gmra.mxu0 %v2149
      %v2151 = vpop.f32.mrf.mxu0
      %v2152 = vadd.f32 %v1967, %v2151
      %v2153 = vpop.f32.mrf.mxu0
      %2154 = vmatprep.mubr.f32.mxu0 0.0
      %v2155 = vsub.f32 %v356, %v356
      %2156 = vmatmul.mubr.f32.gmra.mxu0 %v2155
      %v2157 = vpop.f32.mrf.mxu0
      %v2158 = vadd.f32 %v1972, %v2157
      %v2159 = vpop.f32.mrf.mxu0
      %2160 = vmatprep.mubr.f32.mxu0 0.0
      %v2161 = vsub.f32 %v357, %v357
      %2162 = vmatmul.mubr.f32.gmra.mxu0 %v2161
      %v2163 = vpop.f32.mrf.mxu0
      %v2164 = vadd.f32 %v1977, %v2163
      %v2165 = vpop.f32.mrf.mxu0
      %2166 = vmatprep.mubr.f32.mxu0 0.0
      %v2167 = vsub.f32 %v358, %v358
      %2168 = vmatmul.mubr.f32.gmra.mxu0 %v2167
      %v2169 = vpop.f32.mrf.mxu0
      %v2170 = vadd.f32 %v1982, %v2169
      %v2171 = vpop.f32.mrf.mxu0
      %2172 = vmatprep.mubr.f32.mxu0 0.0
      %v2173 = vsub.f32 %v359, %v359
      %2174 = vmatmul.mubr.f32.gmra.mxu0 %v2173
      %v2175 = vpop.f32.mrf.mxu0
      %v2176 = vadd.f32 %v1987, %v2175
      %v2177 = vpop.f32.mrf.mxu0
      %2178 = vmatprep.mubr.f32.mxu0 0.0
      %v2179 = vsub.f32 %v360, %v360
      %2180 = vmatmul.mubr.f32.gmra.mxu0 %v2179
      %v2181 = vpop.f32.mrf.mxu0
      %v2182 = vadd.f32 %v1992, %v2181
      %v2183 = vpop.f32.mrf.mxu0
      %2184 = vmatprep.mubr.f32.mxu0 0.0
      %v2185 = vsub.f32 %v361, %v361
      %2186 = vmatmul.mubr.f32.gmra.mxu0 %v2185
      %v2187 = vpop.f32.mrf.mxu0
      %v2188 = vadd.f32 %v1997, %v2187
      %v2189 = vpop.f32.mrf.mxu0
      %2190 = vmatprep.mubr.f32.mxu0 0.0
      %v2191 = vsub.f32 %v362, %v362
      %2192 = vmatmul.mubr.f32.gmra.mxu0 %v2191
      %v2193 = vpop.f32.mrf.mxu0
      %v2194 = vadd.f32 %v2002, %v2193
      %v2195 = vpop.f32.mrf.mxu0
      %2196 = vmatprep.mubr.f32.mxu0 0.0
      %v2197 = vsub.f32 %v363, %v363
      %2198 = vmatmul.mubr.f32.gmra.mxu0 %v2197
      %v2199 = vpop.f32.mrf.mxu0
      %v2200 = vadd.f32 %v2007, %v2199
      %v2201 = vpop.f32.mrf.mxu0
      %2202 = vdwg.mxu0
      %2203 = vmatprep.subr.mxu0 0.0
      %v2204 = vand.u32 %v379, 4294901760
      %2205 = vmatpush1.msra.mxu0 %v2204
      %2206 = vmatprep.subr.mxu0 0.0
      %v2207 = vand.u32 %v378, 4294901760
      %2208 = vmatpush1.msra.mxu0 %v2207
      %2209 = vmatprep.subr.mxu0 0.0
      %v2210 = vand.u32 %v377, 4294901760
      %2211 = vmatpush1.msra.mxu0 %v2210
      %2212 = vmatprep.subr.mxu0 0.0
      %v2213 = vand.u32 %v376, 4294901760
      %2214 = vmatpush1.msra.mxu0 %v2213
      %2215 = vmatprep.subr.mxu0 0.0
      %v2216 = vand.u32 %v375, 4294901760
      %2217 = vmatpush1.msra.mxu0 %v2216
      %2218 = vmatprep.subr.mxu0 0.0
      %v2219 = vand.u32 %v374, 4294901760
      %2220 = vmatpush1.msra.mxu0 %v2219
      %2221 = vmatprep.subr.mxu0 0.0
      %v2222 = vand.u32 %v373, 4294901760
      %2223 = vmatpush1.msra.mxu0 %v2222
      %2224 = vmatprep.subr.mxu0 0.0
      %v2225 = vand.u32 %v372, 4294901760
      %2226 = vmatpush1.msra.mxu0 %v2225
      %2227 = vmatprep.subr.mxu0 0.0
      %v2228 = vand.u32 %v371, 4294901760
      %2229 = vmatpush1.msra.mxu0 %v2228
      %2230 = vmatprep.subr.mxu0 0.0
      %v2231 = vand.u32 %v370, 4294901760
      %2232 = vmatpush1.msra.mxu0 %v2231
      %2233 = vmatprep.subr.mxu0 0.0
      %v2234 = vand.u32 %v369, 4294901760
      %2235 = vmatpush1.msra.mxu0 %v2234
      %2236 = vmatprep.subr.mxu0 0.0
      %v2237 = vand.u32 %v368, 4294901760
      %2238 = vmatpush1.msra.mxu0 %v2237
      %2239 = vmatprep.subr.mxu0 0.0
      %v2240 = vand.u32 %v367, 4294901760
      %2241 = vmatpush1.msra.mxu0 %v2240
      %2242 = vmatprep.subr.mxu0 0.0
      %v2243 = vand.u32 %v366, 4294901760
      %2244 = vmatpush1.msra.mxu0 %v2243
      %2245 = vmatprep.subr.mxu0 0.0
      %v2246 = vand.u32 %v365, 4294901760
      %2247 = vmatpush1.msra.mxu0 %v2246
      %2248 = vmatprep.subr.mxu0 0.0
      %v2249 = vand.u32 %v364, 4294901760
      %2250 = vmatpush1.msra.mxu0 %v2249
      %2251 = vmatprep.subr.mxu0 0.0
      %2252 = vmatpush2.msra.mxu0 0.0
      %2253 = vmatprep.subr.mxu0 0.0
      %2254 = vmatpush2.msra.mxu0 0.0
      %2255 = vmatprep.subr.mxu0 0.0
      %2256 = vmatpush2.msra.mxu0 0.0
      %2257 = vmatprep.subr.mxu0 0.0
      %2258 = vmatpush2.msra.mxu0 0.0
      %2259 = vmatprep.subr.mxu0 0.0
      %2260 = vmatpush2.msra.mxu0 0.0
      %2261 = vmatprep.subr.mxu0 0.0
      %2262 = vmatpush2.msra.mxu0 0.0
      %2263 = vmatprep.subr.mxu0 0.0
      %2264 = vmatpush2.msra.mxu0 0.0
      %2265 = vmatprep.subr.mxu0 0.0
      %2266 = vmatpush2.msra.mxu0 0.0
      %2267 = vmatprep.subr.mxu0 0.0
      %2268 = vmatpush2.msra.mxu0 0.0
      %2269 = vmatprep.subr.mxu0 0.0
      %2270 = vmatpush2.msra.mxu0 0.0
      %2271 = vmatprep.subr.mxu0 0.0
      %2272 = vmatpush2.msra.mxu0 0.0
      %2273 = vmatprep.subr.mxu0 0.0
      %2274 = vmatpush2.msra.mxu0 0.0
      %2275 = vmatprep.subr.mxu0 0.0
      %2276 = vmatpush2.msra.mxu0 0.0
      %2277 = vmatprep.subr.mxu0 0.0
      %2278 = vmatpush2.msra.mxu0 0.0
      %2279 = vmatprep.subr.mxu0 0.0
      %2280 = vmatpush2.msra.mxu0 0.0
      %2281 = vmatprep.subr.mxu0 0.0
      %2282 = vmatpush2.msra.mxu0 0.0
      %2283 = vmatprep.mubr.f32.mxu0 0.0
      %v2284 = vsub.f32 %v348, %v348
      %v2285 = vand.u32 %v2284, 4294901760
      %2286 = vmatmul.mubr.f32.gmra.mxu0 %v2285
      %v2287 = vpop.f32.mrf.mxu0
      %v2288 = vadd.f32 %v2110, %v2287
      %v2289 = vpop.f32.mrf.mxu0
      %2290 = vmatprep.mubr.f32.mxu0 0.0
      %v2291 = vsub.f32 %v349, %v349
      %v2292 = vand.u32 %v2291, 4294901760
      %2293 = vmatmul.mubr.f32.gmra.mxu0 %v2292
      %v2294 = vpop.f32.mrf.mxu0
      %v2295 = vadd.f32 %v2116, %v2294
      %v2296 = vpop.f32.mrf.mxu0
      %2297 = vmatprep.mubr.f32.mxu0 0.0
      %v2298 = vsub.f32 %v350, %v350
      %v2299 = vand.u32 %v2298, 4294901760
      %2300 = vmatmul.mubr.f32.gmra.mxu0 %v2299
      %v2301 = vpop.f32.mrf.mxu0
      %v2302 = vadd.f32 %v2122, %v2301
      %v2303 = vpop.f32.mrf.mxu0
      %2304 = vmatprep.mubr.f32.mxu0 0.0
      %v2305 = vsub.f32 %v351, %v351
      %v2306 = vand.u32 %v2305, 4294901760
      %2307 = vmatmul.mubr.f32.gmra.mxu0 %v2306
      %v2308 = vpop.f32.mrf.mxu0
      %v2309 = vadd.f32 %v2128, %v2308
      %v2310 = vpop.f32.mrf.mxu0
      %2311 = vmatprep.mubr.f32.mxu0 0.0
      %v2312 = vsub.f32 %v352, %v352
      %v2313 = vand.u32 %v2312, 4294901760
      %2314 = vmatmul.mubr.f32.gmra.mxu0 %v2313
      %v2315 = vpop.f32.mrf.mxu0
      %v2316 = vadd.f32 %v2134, %v2315
      %v2317 = vpop.f32.mrf.mxu0
      %2318 = vmatprep.mubr.f32.mxu0 0.0
      %v2319 = vsub.f32 %v353, %v353
      %v2320 = vand.u32 %v2319, 4294901760
      %2321 = vmatmul.mubr.f32.gmra.mxu0 %v2320
      %v2322 = vpop.f32.mrf.mxu0
      %v2323 = vadd.f32 %v2140, %v2322
      %v2324 = vpop.f32.mrf.mxu0
      %2325 = vmatprep.mubr.f32.mxu0 0.0
      %v2326 = vsub.f32 %v354, %v354
      %v2327 = vand.u32 %v2326, 4294901760
      %2328 = vmatmul.mubr.f32.gmra.mxu0 %v2327
      %v2329 = vpop.f32.mrf.mxu0
      %v2330 = vadd.f32 %v2146, %v2329
      %v2331 = vpop.f32.mrf.mxu0
      %2332 = vmatprep.mubr.f32.mxu0 0.0
      %v2333 = vsub.f32 %v355, %v355
      %v2334 = vand.u32 %v2333, 4294901760
      %2335 = vmatmul.mubr.f32.gmra.mxu0 %v2334
      %v2336 = vpop.f32.mrf.mxu0
      %v2337 = vadd.f32 %v2152, %v2336
      %v2338 = vpop.f32.mrf.mxu0
      %2339 = vmatprep.mubr.f32.mxu0 0.0
      %v2340 = vsub.f32 %v356, %v356
      %v2341 = vand.u32 %v2340, 4294901760
      %2342 = vmatmul.mubr.f32.gmra.mxu0 %v2341
      %v2343 = vpop.f32.mrf.mxu0
      %v2344 = vadd.f32 %v2158, %v2343
      %v2345 = vpop.f32.mrf.mxu0
      %2346 = vmatprep.mubr.f32.mxu0 0.0
      %v2347 = vsub.f32 %v357, %v357
      %v2348 = vand.u32 %v2347, 4294901760
      %2349 = vmatmul.mubr.f32.gmra.mxu0 %v2348
      %v2350 = vpop.f32.mrf.mxu0
      %v2351 = vadd.f32 %v2164, %v2350
      %v2352 = vpop.f32.mrf.mxu0
      %2353 = vmatprep.mubr.f32.mxu0 0.0
      %v2354 = vsub.f32 %v358, %v358
      %v2355 = vand.u32 %v2354, 4294901760
      %2356 = vmatmul.mubr.f32.gmra.mxu0 %v2355
      %v2357 = vpop.f32.mrf.mxu0
      %v2358 = vadd.f32 %v2170, %v2357
      %v2359 = vpop.f32.mrf.mxu0
      %2360 = vmatprep.mubr.f32.mxu0 0.0
      %v2361 = vsub.f32 %v359, %v359
      %v2362 = vand.u32 %v2361, 4294901760
      %2363 = vmatmul.mubr.f32.gmra.mxu0 %v2362
      %v2364 = vpop.f32.mrf.mxu0
      %v2365 = vadd.f32 %v2176, %v2364
      %v2366 = vpop.f32.mrf.mxu0
      %2367 = vmatprep.mubr.f32.mxu0 0.0
      %v2368 = vsub.f32 %v360, %v360
      %v2369 = vand.u32 %v2368, 4294901760
      %2370 = vmatmul.mubr.f32.gmra.mxu0 %v2369
      %v2371 = vpop.f32.mrf.mxu0
      %v2372 = vadd.f32 %v2182, %v2371
      %v2373 = vpop.f32.mrf.mxu0
      %2374 = vmatprep.mubr.f32.mxu0 0.0
      %v2375 = vsub.f32 %v361, %v361
      %v2376 = vand.u32 %v2375, 4294901760
      %2377 = vmatmul.mubr.f32.gmra.mxu0 %v2376
      %v2378 = vpop.f32.mrf.mxu0
      %v2379 = vadd.f32 %v2188, %v2378
      %v2380 = vpop.f32.mrf.mxu0
      %2381 = vmatprep.mubr.f32.mxu0 0.0
      %v2382 = vsub.f32 %v362, %v362
      %v2383 = vand.u32 %v2382, 4294901760
      %2384 = vmatmul.mubr.f32.gmra.mxu0 %v2383
      %v2385 = vpop.f32.mrf.mxu0
      %v2386 = vadd.f32 %v2194, %v2385
      %v2387 = vpop.f32.mrf.mxu0
      %2388 = vmatprep.mubr.f32.mxu0 0.0
      %v2389 = vsub.f32 %v363, %v363
      %v2390 = vand.u32 %v2389, 4294901760
      %2391 = vmatmul.mubr.f32.gmra.mxu0 %v2390
      %v2392 = vpop.f32.mrf.mxu0
      %v2393 = vadd.f32 %v2200, %v2392
      %v2394 = vpop.f32.mrf.mxu0
      %2395 = vdwg.mxu0
      %2396 = vmatprep.subr.mxu0 0.0
      %v2397 = vand.u32 %v379, 4294901760
      %v2398 = vsub.f32 %v379, %v2397
      %v2399 = vand.u32 %v2398, 4294901760
      %2400 = vmatpush1.msra.mxu0 %v2399
      %2401 = vmatprep.subr.mxu0 0.0
      %v2402 = vand.u32 %v378, 4294901760
      %v2403 = vsub.f32 %v378, %v2402
      %v2404 = vand.u32 %v2403, 4294901760
      %2405 = vmatpush1.msra.mxu0 %v2404
      %2406 = vmatprep.subr.mxu0 0.0
      %v2407 = vand.u32 %v377, 4294901760
      %v2408 = vsub.f32 %v377, %v2407
      %v2409 = vand.u32 %v2408, 4294901760
      %2410 = vmatpush1.msra.mxu0 %v2409
      %2411 = vmatprep.subr.mxu0 0.0
      %v2412 = vand.u32 %v376, 4294901760
      %v2413 = vsub.f32 %v376, %v2412
      %v2414 = vand.u32 %v2413, 4294901760
      %2415 = vmatpush1.msra.mxu0 %v2414
      %2416 = vmatprep.subr.mxu0 0.0
      %v2417 = vand.u32 %v375, 4294901760
      %v2418 = vsub.f32 %v375, %v2417
      %v2419 = vand.u32 %v2418, 4294901760
      %2420 = vmatpush1.msra.mxu0 %v2419
      %2421 = vmatprep.subr.mxu0 0.0
      %v2422 = vand.u32 %v374, 4294901760
      %v2423 = vsub.f32 %v374, %v2422
      %v2424 = vand.u32 %v2423, 4294901760
      %2425 = vmatpush1.msra.mxu0 %v2424
      %2426 = vmatprep.subr.mxu0 0.0
      %v2427 = vand.u32 %v373, 4294901760
      %v2428 = vsub.f32 %v373, %v2427
      %v2429 = vand.u32 %v2428, 4294901760
      %2430 = vmatpush1.msra.mxu0 %v2429
      %2431 = vmatprep.subr.mxu0 0.0
      %v2432 = vand.u32 %v372, 4294901760
      %v2433 = vsub.f32 %v372, %v2432
      %v2434 = vand.u32 %v2433, 4294901760
      %2435 = vmatpush1.msra.mxu0 %v2434
      %2436 = vmatprep.subr.mxu0 0.0
      %v2437 = vand.u32 %v371, 4294901760
      %v2438 = vsub.f32 %v371, %v2437
      %v2439 = vand.u32 %v2438, 4294901760
      %2440 = vmatpush1.msra.mxu0 %v2439
      %2441 = vmatprep.subr.mxu0 0.0
      %v2442 = vand.u32 %v370, 4294901760
      %v2443 = vsub.f32 %v370, %v2442
      %v2444 = vand.u32 %v2443, 4294901760
      %2445 = vmatpush1.msra.mxu0 %v2444
      %2446 = vmatprep.subr.mxu0 0.0
      %v2447 = vand.u32 %v369, 4294901760
      %v2448 = vsub.f32 %v369, %v2447
      %v2449 = vand.u32 %v2448, 4294901760
      %2450 = vmatpush1.msra.mxu0 %v2449
      %2451 = vmatprep.subr.mxu0 0.0
      %v2452 = vand.u32 %v368, 4294901760
      %v2453 = vsub.f32 %v368, %v2452
      %v2454 = vand.u32 %v2453, 4294901760
      %2455 = vmatpush1.msra.mxu0 %v2454
      %2456 = vmatprep.subr.mxu0 0.0
      %v2457 = vand.u32 %v367, 4294901760
      %v2458 = vsub.f32 %v367, %v2457
      %v2459 = vand.u32 %v2458, 4294901760
      %2460 = vmatpush1.msra.mxu0 %v2459
      %2461 = vmatprep.subr.mxu0 0.0
      %v2462 = vand.u32 %v366, 4294901760
      %v2463 = vsub.f32 %v366, %v2462
      %v2464 = vand.u32 %v2463, 4294901760
      %2465 = vmatpush1.msra.mxu0 %v2464
      %2466 = vmatprep.subr.mxu0 0.0
      %v2467 = vand.u32 %v365, 4294901760
      %v2468 = vsub.f32 %v365, %v2467
      %v2469 = vand.u32 %v2468, 4294901760
      %2470 = vmatpush1.msra.mxu0 %v2469
      %2471 = vmatprep.subr.mxu0 0.0
      %v2472 = vand.u32 %v364, 4294901760
      %v2473 = vsub.f32 %v364, %v2472
      %v2474 = vand.u32 %v2473, 4294901760
      %2475 = vmatpush1.msra.mxu0 %v2474
      %2476 = vmatprep.subr.mxu0 0.0
      %2477 = vmatpush2.msra.mxu0 0.0
      %2478 = vmatprep.subr.mxu0 0.0
      %2479 = vmatpush2.msra.mxu0 0.0
      %2480 = vmatprep.subr.mxu0 0.0
      %2481 = vmatpush2.msra.mxu0 0.0
      %2482 = vmatprep.subr.mxu0 0.0
      %2483 = vmatpush2.msra.mxu0 0.0
      %2484 = vmatprep.subr.mxu0 0.0
      %2485 = vmatpush2.msra.mxu0 0.0
      %2486 = vmatprep.subr.mxu0 0.0
      %2487 = vmatpush2.msra.mxu0 0.0
      %2488 = vmatprep.subr.mxu0 0.0
      %2489 = vmatpush2.msra.mxu0 0.0
      %2490 = vmatprep.subr.mxu0 0.0
      %2491 = vmatpush2.msra.mxu0 0.0
      %2492 = vmatprep.subr.mxu0 0.0
      %2493 = vmatpush2.msra.mxu0 0.0
      %2494 = vmatprep.subr.mxu0 0.0
      %2495 = vmatpush2.msra.mxu0 0.0
      %2496 = vmatprep.subr.mxu0 0.0
      %2497 = vmatpush2.msra.mxu0 0.0
      %2498 = vmatprep.subr.mxu0 0.0
      %2499 = vmatpush2.msra.mxu0 0.0
      %2500 = vmatprep.subr.mxu0 0.0
      %2501 = vmatpush2.msra.mxu0 0.0
      %2502 = vmatprep.subr.mxu0 0.0
      %2503 = vmatpush2.msra.mxu0 0.0
      %2504 = vmatprep.subr.mxu0 0.0
      %2505 = vmatpush2.msra.mxu0 0.0
      %2506 = vmatprep.subr.mxu0 0.0
      %2507 = vmatpush2.msra.mxu0 0.0
      %2508 = vmatprep.mubr.f32.mxu0 0.0
      %2509 = vmatmul.mubr.f32.gmra.mxu0 %v348
      %v2510 = vpop.f32.mrf.mxu0
      %v2511 = vadd.f32 %v2288, %v2510
      %v2512 = vpop.f32.mrf.mxu0
      %2513 = vmatprep.mubr.f32.mxu0 0.0
      %2514 = vmatmul.mubr.f32.gmra.mxu0 %v349
      %v2515 = vpop.f32.mrf.mxu0
      %v2516 = vadd.f32 %v2295, %v2515
      %v2517 = vpop.f32.mrf.mxu0
      %2518 = vmatprep.mubr.f32.mxu0 0.0
      %2519 = vmatmul.mubr.f32.gmra.mxu0 %v350
      %v2520 = vpop.f32.mrf.mxu0
      %v2521 = vadd.f32 %v2302, %v2520
      %v2522 = vpop.f32.mrf.mxu0
      %2523 = vmatprep.mubr.f32.mxu0 0.0
      %2524 = vmatmul.mubr.f32.gmra.mxu0 %v351
      %v2525 = vpop.f32.mrf.mxu0
      %v2526 = vadd.f32 %v2309, %v2525
      %v2527 = vpop.f32.mrf.mxu0
      %2528 = vmatprep.mubr.f32.mxu0 0.0
      %2529 = vmatmul.mubr.f32.gmra.mxu0 %v352
      %v2530 = vpop.f32.mrf.mxu0
      %v2531 = vadd.f32 %v2316, %v2530
      %v2532 = vpop.f32.mrf.mxu0
      %2533 = vmatprep.mubr.f32.mxu0 0.0
      %2534 = vmatmul.mubr.f32.gmra.mxu0 %v353
      %v2535 = vpop.f32.mrf.mxu0
      %v2536 = vadd.f32 %v2323, %v2535
      %v2537 = vpop.f32.mrf.mxu0
      %2538 = vmatprep.mubr.f32.mxu0 0.0
      %2539 = vmatmul.mubr.f32.gmra.mxu0 %v354
      %v2540 = vpop.f32.mrf.mxu0
      %v2541 = vadd.f32 %v2330, %v2540
      %v2542 = vpop.f32.mrf.mxu0
      %2543 = vmatprep.mubr.f32.mxu0 0.0
      %2544 = vmatmul.mubr.f32.gmra.mxu0 %v355
      %v2545 = vpop.f32.mrf.mxu0
      %v2546 = vadd.f32 %v2337, %v2545
      %v2547 = vpop.f32.mrf.mxu0
      %2548 = vmatprep.mubr.f32.mxu0 0.0
      %2549 = vmatmul.mubr.f32.gmra.mxu0 %v356
      %v2550 = vpop.f32.mrf.mxu0
      %v2551 = vadd.f32 %v2344, %v2550
      %v2552 = vpop.f32.mrf.mxu0
      %2553 = vmatprep.mubr.f32.mxu0 0.0
      %2554 = vmatmul.mubr.f32.gmra.mxu0 %v357
      %v2555 = vpop.f32.mrf.mxu0
      %v2556 = vadd.f32 %v2351, %v2555
      %v2557 = vpop.f32.mrf.mxu0
      %2558 = vmatprep.mubr.f32.mxu0 0.0
      %2559 = vmatmul.mubr.f32.gmra.mxu0 %v358
      %v2560 = vpop.f32.mrf.mxu0
      %v2561 = vadd.f32 %v2358, %v2560
      %v2562 = vpop.f32.mrf.mxu0
      %2563 = vmatprep.mubr.f32.mxu0 0.0
      %2564 = vmatmul.mubr.f32.gmra.mxu0 %v359
      %v2565 = vpop.f32.mrf.mxu0
      %v2566 = vadd.f32 %v2365, %v2565
      %v2567 = vpop.f32.mrf.mxu0
      %2568 = vmatprep.mubr.f32.mxu0 0.0
      %2569 = vmatmul.mubr.f32.gmra.mxu0 %v360
      %v2570 = vpop.f32.mrf.mxu0
      %v2571 = vadd.f32 %v2372, %v2570
      %v2572 = vpop.f32.mrf.mxu0
      %2573 = vmatprep.mubr.f32.mxu0 0.0
      %2574 = vmatmul.mubr.f32.gmra.mxu0 %v361
      %v2575 = vpop.f32.mrf.mxu0
      %v2576 = vadd.f32 %v2379, %v2575
      %v2577 = vpop.f32.mrf.mxu0
      %2578 = vmatprep.mubr.f32.mxu0 0.0
      %2579 = vmatmul.mubr.f32.gmra.mxu0 %v362
      %v2580 = vpop.f32.mrf.mxu0
      %v2581 = vadd.f32 %v2386, %v2580
      %v2582 = vpop.f32.mrf.mxu0
      %2583 = vmatprep.mubr.f32.mxu0 0.0
      %2584 = vmatmul.mubr.f32.gmra.mxu0 %v363
      %v2585 = vpop.f32.mrf.mxu0
      %v2586 = vadd.f32 %v2393, %v2585
      %v2587 = vpop.f32.mrf.mxu0
      %2588 = vdwg.mxu0
      %2589 = vmatprep.subr.mxu0 0.0
      %v2590 = vand.u32 %v379, 4294901760
      %2591 = vmatpush1.msra.mxu0 %v2590
      %2592 = vmatprep.subr.mxu0 0.0
      %v2593 = vand.u32 %v378, 4294901760
      %2594 = vmatpush1.msra.mxu0 %v2593
      %2595 = vmatprep.subr.mxu0 0.0
      %v2596 = vand.u32 %v377, 4294901760
      %2597 = vmatpush1.msra.mxu0 %v2596
      %2598 = vmatprep.subr.mxu0 0.0
      %v2599 = vand.u32 %v376, 4294901760
      %2600 = vmatpush1.msra.mxu0 %v2599
      %2601 = vmatprep.subr.mxu0 0.0
      %v2602 = vand.u32 %v375, 4294901760
      %2603 = vmatpush1.msra.mxu0 %v2602
      %2604 = vmatprep.subr.mxu0 0.0
      %v2605 = vand.u32 %v374, 4294901760
      %2606 = vmatpush1.msra.mxu0 %v2605
      %2607 = vmatprep.subr.mxu0 0.0
      %v2608 = vand.u32 %v373, 4294901760
      %2609 = vmatpush1.msra.mxu0 %v2608
      %2610 = vmatprep.subr.mxu0 0.0
      %v2611 = vand.u32 %v372, 4294901760
      %2612 = vmatpush1.msra.mxu0 %v2611
      %2613 = vmatprep.subr.mxu0 0.0
      %v2614 = vand.u32 %v371, 4294901760
      %2615 = vmatpush1.msra.mxu0 %v2614
      %2616 = vmatprep.subr.mxu0 0.0
      %v2617 = vand.u32 %v370, 4294901760
      %2618 = vmatpush1.msra.mxu0 %v2617
      %2619 = vmatprep.subr.mxu0 0.0
      %v2620 = vand.u32 %v369, 4294901760
      %2621 = vmatpush1.msra.mxu0 %v2620
      %2622 = vmatprep.subr.mxu0 0.0
      %v2623 = vand.u32 %v368, 4294901760
      %2624 = vmatpush1.msra.mxu0 %v2623
      %2625 = vmatprep.subr.mxu0 0.0
      %v2626 = vand.u32 %v367, 4294901760
      %2627 = vmatpush1.msra.mxu0 %v2626
      %2628 = vmatprep.subr.mxu0 0.0
      %v2629 = vand.u32 %v366, 4294901760
      %2630 = vmatpush1.msra.mxu0 %v2629
      %2631 = vmatprep.subr.mxu0 0.0
      %v2632 = vand.u32 %v365, 4294901760
      %2633 = vmatpush1.msra.mxu0 %v2632
      %2634 = vmatprep.subr.mxu0 0.0
      %v2635 = vand.u32 %v364, 4294901760
      %2636 = vmatpush1.msra.mxu0 %v2635
      %2637 = vmatprep.subr.mxu0 0.0
      %2638 = vmatpush2.msra.mxu0 0.0
      %2639 = vmatprep.subr.mxu0 0.0
      %2640 = vmatpush2.msra.mxu0 0.0
      %2641 = vmatprep.subr.mxu0 0.0
      %2642 = vmatpush2.msra.mxu0 0.0
      %2643 = vmatprep.subr.mxu0 0.0
      %2644 = vmatpush2.msra.mxu0 0.0
      %2645 = vmatprep.subr.mxu0 0.0
      %2646 = vmatpush2.msra.mxu0 0.0
      %2647 = vmatprep.subr.mxu0 0.0
      %2648 = vmatpush2.msra.mxu0 0.0
      %2649 = vmatprep.subr.mxu0 0.0
      %2650 = vmatpush2.msra.mxu0 0.0
      %2651 = vmatprep.subr.mxu0 0.0
      %2652 = vmatpush2.msra.mxu0 0.0
      %2653 = vmatprep.subr.mxu0 0.0
      %2654 = vmatpush2.msra.mxu0 0.0
      %2655 = vmatprep.subr.mxu0 0.0
      %2656 = vmatpush2.msra.mxu0 0.0
      %2657 = vmatprep.subr.mxu0 0.0
      %2658 = vmatpush2.msra.mxu0 0.0
      %2659 = vmatprep.subr.mxu0 0.0
      %2660 = vmatpush2.msra.mxu0 0.0
      %2661 = vmatprep.subr.mxu0 0.0
      %2662 = vmatpush2.msra.mxu0 0.0
      %2663 = vmatprep.subr.mxu0 0.0
      %2664 = vmatpush2.msra.mxu0 0.0
      %2665 = vmatprep.subr.mxu0 0.0
      %2666 = vmatpush2.msra.mxu0 0.0
      %2667 = vmatprep.subr.mxu0 0.0
      %2668 = vmatpush2.msra.mxu0 0.0
      %2669 = vmatprep.mubr.f32.mxu0 0.0
      %2670 = vmatmul.mubr.f32.gmra.mxu0 %v348
      %v2671 = vpop.f32.mrf.mxu0
      %v2672 = vadd.f32 %v2511, %v2671
      %v2673 = vpop.f32.mrf.mxu0
      %2674 = vmatprep.mubr.f32.mxu0 0.0
      %2675 = vmatmul.mubr.f32.gmra.mxu0 %v349
      %v2676 = vpop.f32.mrf.mxu0
      %v2677 = vadd.f32 %v2516, %v2676
      %v2678 = vpop.f32.mrf.mxu0
      %2679 = vmatprep.mubr.f32.mxu0 0.0
      %2680 = vmatmul.mubr.f32.gmra.mxu0 %v350
      %v2681 = vpop.f32.mrf.mxu0
      %v2682 = vadd.f32 %v2521, %v2681
      %v2683 = vpop.f32.mrf.mxu0
      %2684 = vmatprep.mubr.f32.mxu0 0.0
      %2685 = vmatmul.mubr.f32.gmra.mxu0 %v351
      %v2686 = vpop.f32.mrf.mxu0
      %v2687 = vadd.f32 %v2526, %v2686
      %v2688 = vpop.f32.mrf.mxu0
      %2689 = vmatprep.mubr.f32.mxu0 0.0
      %2690 = vmatmul.mubr.f32.gmra.mxu0 %v352
      %v2691 = vpop.f32.mrf.mxu0
      %v2692 = vadd.f32 %v2531, %v2691
      %v2693 = vpop.f32.mrf.mxu0
      %2694 = vmatprep.mubr.f32.mxu0 0.0
      %2695 = vmatmul.mubr.f32.gmra.mxu0 %v353
      %v2696 = vpop.f32.mrf.mxu0
      %v2697 = vadd.f32 %v2536, %v2696
      %v2698 = vpop.f32.mrf.mxu0
      %2699 = vmatprep.mubr.f32.mxu0 0.0
      %2700 = vmatmul.mubr.f32.gmra.mxu0 %v354
      %v2701 = vpop.f32.mrf.mxu0
      %v2702 = vadd.f32 %v2541, %v2701
      %v2703 = vpop.f32.mrf.mxu0
      %2704 = vmatprep.mubr.f32.mxu0 0.0
      %2705 = vmatmul.mubr.f32.gmra.mxu0 %v355
      %v2706 = vpop.f32.mrf.mxu0
      %v2707 = vadd.f32 %v2546, %v2706
      %v2708 = vpop.f32.mrf.mxu0
      %2709 = vmatprep.mubr.f32.mxu0 0.0
      %2710 = vmatmul.mubr.f32.gmra.mxu0 %v356
      %v2711 = vpop.f32.mrf.mxu0
      %v2712 = vadd.f32 %v2551, %v2711
      %v2713 = vpop.f32.mrf.mxu0
      %2714 = vmatprep.mubr.f32.mxu0 0.0
      %2715 = vmatmul.mubr.f32.gmra.mxu0 %v357
      %v2716 = vpop.f32.mrf.mxu0
      %v2717 = vadd.f32 %v2556, %v2716
      %v2718 = vpop.f32.mrf.mxu0
      %2719 = vmatprep.mubr.f32.mxu0 0.0
      %2720 = vmatmul.mubr.f32.gmra.mxu0 %v358
      %v2721 = vpop.f32.mrf.mxu0
      %v2722 = vadd.f32 %v2561, %v2721
      %v2723 = vpop.f32.mrf.mxu0
      %2724 = vmatprep.mubr.f32.mxu0 0.0
      %2725 = vmatmul.mubr.f32.gmra.mxu0 %v359
      %v2726 = vpop.f32.mrf.mxu0
      %v2727 = vadd.f32 %v2566, %v2726
      %v2728 = vpop.f32.mrf.mxu0
      %2729 = vmatprep.mubr.f32.mxu0 0.0
      %2730 = vmatmul.mubr.f32.gmra.mxu0 %v360
      %v2731 = vpop.f32.mrf.mxu0
      %v2732 = vadd.f32 %v2571, %v2731
      %v2733 = vpop.f32.mrf.mxu0
      %2734 = vmatprep.mubr.f32.mxu0 0.0
      %2735 = vmatmul.mubr.f32.gmra.mxu0 %v361
      %v2736 = vpop.f32.mrf.mxu0
      %v2737 = vadd.f32 %v2576, %v2736
      %v2738 = vpop.f32.mrf.mxu0
      %2739 = vmatprep.mubr.f32.mxu0 0.0
      %2740 = vmatmul.mubr.f32.gmra.mxu0 %v362
      %v2741 = vpop.f32.mrf.mxu0
      %v2742 = vadd.f32 %v2581, %v2741
      %v2743 = vpop.f32.mrf.mxu0
      %2744 = vmatprep.mubr.f32.mxu0 0.0
      %2745 = vmatmul.mubr.f32.gmra.mxu0 %v363
      %v2746 = vpop.f32.mrf.mxu0
      %v2747 = vadd.f32 %v2586, %v2746
      %v2748 = vpop.f32.mrf.mxu0
      %2749 = vdwg.mxu0
      %2766 = vrot.lane.b32.xlu0 %v364, 32
      %v2767 = vpop.permute.xlu0 %2766
      %2768 = vrot.lane.b32.xlu0 %v365, 32
      %v2769 = vpop.permute.xlu0 %2768
      %2770 = vrot.lane.b32.xlu0 %v366, 32
      %v2771 = vpop.permute.xlu0 %2770
      %2772 = vrot.lane.b32.xlu0 %v367, 32
      %v2773 = vpop.permute.xlu0 %2772
      %2774 = vrot.lane.b32.xlu0 %v368, 32
      %v2775 = vpop.permute.xlu0 %2774
      %2776 = vrot.lane.b32.xlu0 %v369, 32
      %v2777 = vpop.permute.xlu0 %2776
      %2778 = vrot.lane.b32.xlu0 %v370, 32
      %v2779 = vpop.permute.xlu0 %2778
      %2780 = vrot.lane.b32.xlu0 %v371, 32
      %v2781 = vpop.permute.xlu0 %2780
      %2782 = vrot.lane.b32.xlu0 %v372, 32
      %v2783 = vpop.permute.xlu0 %2782
      %2784 = vrot.lane.b32.xlu0 %v373, 32
      %v2785 = vpop.permute.xlu0 %2784
      %2786 = vrot.lane.b32.xlu0 %v374, 32
      %v2787 = vpop.permute.xlu0 %2786
      %2788 = vrot.lane.b32.xlu0 %v375, 32
      %v2789 = vpop.permute.xlu0 %2788
      %2790 = vrot.lane.b32.xlu0 %v376, 32
      %v2791 = vpop.permute.xlu0 %2790
      %2792 = vrot.lane.b32.xlu0 %v377, 32
      %v2793 = vpop.permute.xlu0 %2792
      %2794 = vrot.lane.b32.xlu0 %v378, 32
      %v2795 = vpop.permute.xlu0 %2794
      %2796 = vrot.lane.b32.xlu0 %v379, 32
      %v2797 = vpop.permute.xlu0 %2796
      %vm2814 = vcmask 261120
      %v2815 = vsel %vm2814, %v2672, %v2767
      %v2816 = vsel %vm2814, %v2677, %v2769
      %v2817 = vsel %vm2814, %v2682, %v2771
      %v2818 = vsel %vm2814, %v2687, %v2773
      %v2819 = vsel %vm2814, %v2692, %v2775
      %v2820 = vsel %vm2814, %v2697, %v2777
      %v2821 = vsel %vm2814, %v2702, %v2779
      %v2822 = vsel %vm2814, %v2707, %v2781
      %v2823 = vsel %vm2814, %v2712, %v2783
      %v2824 = vsel %vm2814, %v2717, %v2785
      %v2825 = vsel %vm2814, %v2722, %v2787
      %v2826 = vsel %vm2814, %v2727, %v2789
      %v2827 = vsel %vm2814, %v2732, %v2791
      %v2828 = vsel %vm2814, %v2737, %v2793
      %v2829 = vsel %vm2814, %v2742, %v2795
      %v2830 = vsel %vm2814, %v2747, %v2797
      %vm2831 = vcmask 523264
      %v2833 = vsel %vm2831, %v2815, 0
      %v2836 = vsel %vm2831, %v2816, 0
      %v2839 = vsel %vm2831, %v2817, 0
      %v2842 = vsel %vm2831, %v2818, 0
      %v2845 = vsel %vm2831, %v2819, 0
      %v2848 = vsel %vm2831, %v2820, 0
      %v2851 = vsel %vm2831, %v2821, 0
      %v2854 = vsel %vm2831, %v2822, 0
      %v2857 = vsel %vm2831, %v2823, 0
      %v2860 = vsel %vm2831, %v2824, 0
      %v2863 = vsel %vm2831, %v2825, 0
      %v2866 = vsel %vm2831, %v2826, 0
      %v2869 = vsel %vm2831, %v2827, 0
      %v2872 = vsel %vm2831, %v2828, 0
      %v2875 = vsel %vm2831, %v2829, 0
      %v2878 = vsel %vm2831, %v2830, 0
      %2880 = vmatprep.subr.mxu0 0.0
      %2881 = vmatpush1.msra.mxu0 0.0
      %2882 = vmatprep.subr.mxu0 0.0
      %2883 = vmatpush1.msra.mxu0 0.0
      %2884 = vmatprep.subr.mxu0 0.0
      %2885 = vmatpush1.msra.mxu0 0.0
      %2886 = vmatprep.subr.mxu0 0.0
      %2887 = vmatpush1.msra.mxu0 0.0
      %2888 = vmatprep.subr.mxu0 0.0
      %2889 = vmatpush1.msra.mxu0 0.0
      %2890 = vmatprep.subr.mxu0 0.0
      %2891 = vmatpush1.msra.mxu0 0.0
      %2892 = vmatprep.subr.mxu0 0.0
      %2893 = vmatpush1.msra.mxu0 0.0
      %2894 = vmatprep.subr.mxu0 0.0
      %2895 = vmatpush1.msra.mxu0 0.0
      %2896 = vmatprep.subr.mxu0 0.0
      %v2897 = vand.u32 %v1558, 4294901760
      %2898 = vmatpush1.msra.mxu0 %v2897
      %2899 = vmatprep.subr.mxu0 0.0
      %v2900 = vand.u32 %v1557, 4294901760
      %2901 = vmatpush1.msra.mxu0 %v2900
      %2902 = vmatprep.subr.mxu0 0.0
      %v2903 = vand.u32 %v1556, 4294901760
      %2904 = vmatpush1.msra.mxu0 %v2903
      %2905 = vmatprep.subr.mxu0 0.0
      %v2906 = vand.u32 %v1555, 4294901760
      %2907 = vmatpush1.msra.mxu0 %v2906
      %2908 = vmatprep.subr.mxu0 0.0
      %v2909 = vand.u32 %v1554, 4294901760
      %2910 = vmatpush1.msra.mxu0 %v2909
      %2911 = vmatprep.subr.mxu0 0.0
      %v2912 = vand.u32 %v1553, 4294901760
      %2913 = vmatpush1.msra.mxu0 %v2912
      %2914 = vmatprep.subr.mxu0 0.0
      %v2915 = vand.u32 %v1552, 4294901760
      %2916 = vmatpush1.msra.mxu0 %v2915
      %2917 = vmatprep.subr.mxu0 0.0
      %v2918 = vand.u32 %v1551, 4294901760
      %2919 = vmatpush1.msra.mxu0 %v2918
      %2920 = vmatprep.subr.mxu0 0.0
      %2921 = vmatpush2.msra.mxu0 0.0
      %2922 = vmatprep.subr.mxu0 0.0
      %2923 = vmatpush2.msra.mxu0 0.0
      %2924 = vmatprep.subr.mxu0 0.0
      %2925 = vmatpush2.msra.mxu0 0.0
      %2926 = vmatprep.subr.mxu0 0.0
      %2927 = vmatpush2.msra.mxu0 0.0
      %2928 = vmatprep.subr.mxu0 0.0
      %2929 = vmatpush2.msra.mxu0 0.0
      %2930 = vmatprep.subr.mxu0 0.0
      %2931 = vmatpush2.msra.mxu0 0.0
      %2932 = vmatprep.subr.mxu0 0.0
      %2933 = vmatpush2.msra.mxu0 0.0
      %2934 = vmatprep.subr.mxu0 0.0
      %2935 = vmatpush2.msra.mxu0 0.0
      %2936 = vmatprep.subr.mxu0 0.0
      %2937 = vmatpush2.msra.mxu0 0.0
      %2938 = vmatprep.subr.mxu0 0.0
      %2939 = vmatpush2.msra.mxu0 0.0
      %2940 = vmatprep.subr.mxu0 0.0
      %2941 = vmatpush2.msra.mxu0 0.0
      %2942 = vmatprep.subr.mxu0 0.0
      %2943 = vmatpush2.msra.mxu0 0.0
      %2944 = vmatprep.subr.mxu0 0.0
      %2945 = vmatpush2.msra.mxu0 0.0
      %2946 = vmatprep.subr.mxu0 0.0
      %2947 = vmatpush2.msra.mxu0 0.0
      %2948 = vmatprep.subr.mxu0 0.0
      %2949 = vmatpush2.msra.mxu0 0.0
      %2950 = vmatprep.subr.mxu0 0.0
      %2951 = vmatpush2.msra.mxu0 0.0
      %2952 = vmatprep.mubr.f32.mxu0 0.0
      %v2953 = vand.u32 %v2833, 4294901760
      %v2954 = vsub.f32 %v2833, %v2953
      %v2955 = vand.u32 %v2954, 4294901760
      %v2956 = vsub.f32 %v2954, %v2955
      %v2957 = vand.u32 %v2956, 4294901760
      %2958 = vmatmul.mubr.f32.gmra.mxu0 %v2957
      %v2959 = vpop.f32.mrf.mxu0
      %v2960 = vadd.f32 %v1458, %v2959
      %v2961 = vpop.f32.mrf.mxu0
      %2962 = vmatprep.mubr.f32.mxu0 0.0
      %v2963 = vand.u32 %v2836, 4294901760
      %v2964 = vsub.f32 %v2836, %v2963
      %v2965 = vand.u32 %v2964, 4294901760
      %v2966 = vsub.f32 %v2964, %v2965
      %v2967 = vand.u32 %v2966, 4294901760
      %2968 = vmatmul.mubr.f32.gmra.mxu0 %v2967
      %v2969 = vpop.f32.mrf.mxu0
      %v2970 = vadd.f32 %v1464, %v2969
      %v2971 = vpop.f32.mrf.mxu0
      %2972 = vmatprep.mubr.f32.mxu0 0.0
      %v2973 = vand.u32 %v2839, 4294901760
      %v2974 = vsub.f32 %v2839, %v2973
      %v2975 = vand.u32 %v2974, 4294901760
      %v2976 = vsub.f32 %v2974, %v2975
      %v2977 = vand.u32 %v2976, 4294901760
      %2978 = vmatmul.mubr.f32.gmra.mxu0 %v2977
      %v2979 = vpop.f32.mrf.mxu0
      %v2980 = vadd.f32 %v1470, %v2979
      %v2981 = vpop.f32.mrf.mxu0
      %2982 = vmatprep.mubr.f32.mxu0 0.0
      %v2983 = vand.u32 %v2842, 4294901760
      %v2984 = vsub.f32 %v2842, %v2983
      %v2985 = vand.u32 %v2984, 4294901760
      %v2986 = vsub.f32 %v2984, %v2985
      %v2987 = vand.u32 %v2986, 4294901760
      %2988 = vmatmul.mubr.f32.gmra.mxu0 %v2987
      %v2989 = vpop.f32.mrf.mxu0
      %v2990 = vadd.f32 %v1476, %v2989
      %v2991 = vpop.f32.mrf.mxu0
      %2992 = vmatprep.mubr.f32.mxu0 0.0
      %v2993 = vand.u32 %v2845, 4294901760
      %v2994 = vsub.f32 %v2845, %v2993
      %v2995 = vand.u32 %v2994, 4294901760
      %v2996 = vsub.f32 %v2994, %v2995
      %v2997 = vand.u32 %v2996, 4294901760
      %2998 = vmatmul.mubr.f32.gmra.mxu0 %v2997
      %v2999 = vpop.f32.mrf.mxu0
      %v3000 = vadd.f32 %v1482, %v2999
      %v3001 = vpop.f32.mrf.mxu0
      %3002 = vmatprep.mubr.f32.mxu0 0.0
      %v3003 = vand.u32 %v2848, 4294901760
      %v3004 = vsub.f32 %v2848, %v3003
      %v3005 = vand.u32 %v3004, 4294901760
      %v3006 = vsub.f32 %v3004, %v3005
      %v3007 = vand.u32 %v3006, 4294901760
      %3008 = vmatmul.mubr.f32.gmra.mxu0 %v3007
      %v3009 = vpop.f32.mrf.mxu0
      %v3010 = vadd.f32 %v1488, %v3009
      %v3011 = vpop.f32.mrf.mxu0
      %3012 = vmatprep.mubr.f32.mxu0 0.0
      %v3013 = vand.u32 %v2851, 4294901760
      %v3014 = vsub.f32 %v2851, %v3013
      %v3015 = vand.u32 %v3014, 4294901760
      %v3016 = vsub.f32 %v3014, %v3015
      %v3017 = vand.u32 %v3016, 4294901760
      %3018 = vmatmul.mubr.f32.gmra.mxu0 %v3017
      %v3019 = vpop.f32.mrf.mxu0
      %v3020 = vadd.f32 %v1494, %v3019
      %v3021 = vpop.f32.mrf.mxu0
      %3022 = vmatprep.mubr.f32.mxu0 0.0
      %v3023 = vand.u32 %v2854, 4294901760
      %v3024 = vsub.f32 %v2854, %v3023
      %v3025 = vand.u32 %v3024, 4294901760
      %v3026 = vsub.f32 %v3024, %v3025
      %v3027 = vand.u32 %v3026, 4294901760
      %3028 = vmatmul.mubr.f32.gmra.mxu0 %v3027
      %v3029 = vpop.f32.mrf.mxu0
      %v3030 = vadd.f32 %v1500, %v3029
      %v3031 = vpop.f32.mrf.mxu0
      %3032 = vmatprep.mubr.f32.mxu0 0.0
      %v3033 = vand.u32 %v2857, 4294901760
      %v3034 = vsub.f32 %v2857, %v3033
      %v3035 = vand.u32 %v3034, 4294901760
      %v3036 = vsub.f32 %v3034, %v3035
      %v3037 = vand.u32 %v3036, 4294901760
      %3038 = vmatmul.mubr.f32.gmra.mxu0 %v3037
      %v3039 = vpop.f32.mrf.mxu0
      %v3040 = vadd.f32 %v1506, %v3039
      %v3041 = vpop.f32.mrf.mxu0
      %3042 = vmatprep.mubr.f32.mxu0 0.0
      %v3043 = vand.u32 %v2860, 4294901760
      %v3044 = vsub.f32 %v2860, %v3043
      %v3045 = vand.u32 %v3044, 4294901760
      %v3046 = vsub.f32 %v3044, %v3045
      %v3047 = vand.u32 %v3046, 4294901760
      %3048 = vmatmul.mubr.f32.gmra.mxu0 %v3047
      %v3049 = vpop.f32.mrf.mxu0
      %v3050 = vadd.f32 %v1512, %v3049
      %v3051 = vpop.f32.mrf.mxu0
      %3052 = vmatprep.mubr.f32.mxu0 0.0
      %v3053 = vand.u32 %v2863, 4294901760
      %v3054 = vsub.f32 %v2863, %v3053
      %v3055 = vand.u32 %v3054, 4294901760
      %v3056 = vsub.f32 %v3054, %v3055
      %v3057 = vand.u32 %v3056, 4294901760
      %3058 = vmatmul.mubr.f32.gmra.mxu0 %v3057
      %v3059 = vpop.f32.mrf.mxu0
      %v3060 = vadd.f32 %v1518, %v3059
      %v3061 = vpop.f32.mrf.mxu0
      %3062 = vmatprep.mubr.f32.mxu0 0.0
      %v3063 = vand.u32 %v2866, 4294901760
      %v3064 = vsub.f32 %v2866, %v3063
      %v3065 = vand.u32 %v3064, 4294901760
      %v3066 = vsub.f32 %v3064, %v3065
      %v3067 = vand.u32 %v3066, 4294901760
      %3068 = vmatmul.mubr.f32.gmra.mxu0 %v3067
      %v3069 = vpop.f32.mrf.mxu0
      %v3070 = vadd.f32 %v1524, %v3069
      %v3071 = vpop.f32.mrf.mxu0
      %3072 = vmatprep.mubr.f32.mxu0 0.0
      %v3073 = vand.u32 %v2869, 4294901760
      %v3074 = vsub.f32 %v2869, %v3073
      %v3075 = vand.u32 %v3074, 4294901760
      %v3076 = vsub.f32 %v3074, %v3075
      %v3077 = vand.u32 %v3076, 4294901760
      %3078 = vmatmul.mubr.f32.gmra.mxu0 %v3077
      %v3079 = vpop.f32.mrf.mxu0
      %v3080 = vadd.f32 %v1530, %v3079
      %v3081 = vpop.f32.mrf.mxu0
      %3082 = vmatprep.mubr.f32.mxu0 0.0
      %v3083 = vand.u32 %v2872, 4294901760
      %v3084 = vsub.f32 %v2872, %v3083
      %v3085 = vand.u32 %v3084, 4294901760
      %v3086 = vsub.f32 %v3084, %v3085
      %v3087 = vand.u32 %v3086, 4294901760
      %3088 = vmatmul.mubr.f32.gmra.mxu0 %v3087
      %v3089 = vpop.f32.mrf.mxu0
      %v3090 = vadd.f32 %v1536, %v3089
      %v3091 = vpop.f32.mrf.mxu0
      %3092 = vmatprep.mubr.f32.mxu0 0.0
      %v3093 = vand.u32 %v2875, 4294901760
      %v3094 = vsub.f32 %v2875, %v3093
      %v3095 = vand.u32 %v3094, 4294901760
      %v3096 = vsub.f32 %v3094, %v3095
      %v3097 = vand.u32 %v3096, 4294901760
      %3098 = vmatmul.mubr.f32.gmra.mxu0 %v3097
      %v3099 = vpop.f32.mrf.mxu0
      %v3100 = vadd.f32 %v1542, %v3099
      %v3101 = vpop.f32.mrf.mxu0
      %3102 = vmatprep.mubr.f32.mxu0 0.0
      %v3103 = vand.u32 %v2878, 4294901760
      %v3104 = vsub.f32 %v2878, %v3103
      %v3105 = vand.u32 %v3104, 4294901760
      %v3106 = vsub.f32 %v3104, %v3105
      %v3107 = vand.u32 %v3106, 4294901760
      %3108 = vmatmul.mubr.f32.gmra.mxu0 %v3107
      %v3109 = vpop.f32.mrf.mxu0
      %v3110 = vadd.f32 %v1548, %v3109
      %v3111 = vpop.f32.mrf.mxu0
      %3112 = vdwg.mxu0
      %3113 = vmatprep.subr.mxu0 0.0
      %3114 = vmatpush1.msra.mxu0 0.0
      %3115 = vmatprep.subr.mxu0 0.0
      %3116 = vmatpush1.msra.mxu0 0.0
      %3117 = vmatprep.subr.mxu0 0.0
      %3118 = vmatpush1.msra.mxu0 0.0
      %3119 = vmatprep.subr.mxu0 0.0
      %3120 = vmatpush1.msra.mxu0 0.0
      %3121 = vmatprep.subr.mxu0 0.0
      %3122 = vmatpush1.msra.mxu0 0.0
      %3123 = vmatprep.subr.mxu0 0.0
      %3124 = vmatpush1.msra.mxu0 0.0
      %3125 = vmatprep.subr.mxu0 0.0
      %3126 = vmatpush1.msra.mxu0 0.0
      %3127 = vmatprep.subr.mxu0 0.0
      %3128 = vmatpush1.msra.mxu0 0.0
      %3129 = vmatprep.subr.mxu0 0.0
      %v3130 = vand.u32 %v1558, 4294901760
      %v3131 = vsub.f32 %v1558, %v3130
      %v3132 = vand.u32 %v3131, 4294901760
      %v3133 = vsub.f32 %v3131, %v3132
      %v3134 = vand.u32 %v3133, 4294901760
      %3135 = vmatpush1.msra.mxu0 %v3134
      %3136 = vmatprep.subr.mxu0 0.0
      %v3137 = vand.u32 %v1557, 4294901760
      %v3138 = vsub.f32 %v1557, %v3137
      %v3139 = vand.u32 %v3138, 4294901760
      %v3140 = vsub.f32 %v3138, %v3139
      %v3141 = vand.u32 %v3140, 4294901760
      %3142 = vmatpush1.msra.mxu0 %v3141
      %3143 = vmatprep.subr.mxu0 0.0
      %v3144 = vand.u32 %v1556, 4294901760
      %v3145 = vsub.f32 %v1556, %v3144
      %v3146 = vand.u32 %v3145, 4294901760
      %v3147 = vsub.f32 %v3145, %v3146
      %v3148 = vand.u32 %v3147, 4294901760
      %3149 = vmatpush1.msra.mxu0 %v3148
      %3150 = vmatprep.subr.mxu0 0.0
      %v3151 = vand.u32 %v1555, 4294901760
      %v3152 = vsub.f32 %v1555, %v3151
      %v3153 = vand.u32 %v3152, 4294901760
      %v3154 = vsub.f32 %v3152, %v3153
      %v3155 = vand.u32 %v3154, 4294901760
      %3156 = vmatpush1.msra.mxu0 %v3155
      %3157 = vmatprep.subr.mxu0 0.0
      %v3158 = vand.u32 %v1554, 4294901760
      %v3159 = vsub.f32 %v1554, %v3158
      %v3160 = vand.u32 %v3159, 4294901760
      %v3161 = vsub.f32 %v3159, %v3160
      %v3162 = vand.u32 %v3161, 4294901760
      %3163 = vmatpush1.msra.mxu0 %v3162
      %3164 = vmatprep.subr.mxu0 0.0
      %v3165 = vand.u32 %v1553, 4294901760
      %v3166 = vsub.f32 %v1553, %v3165
      %v3167 = vand.u32 %v3166, 4294901760
      %v3168 = vsub.f32 %v3166, %v3167
      %v3169 = vand.u32 %v3168, 4294901760
      %3170 = vmatpush1.msra.mxu0 %v3169
      %3171 = vmatprep.subr.mxu0 0.0
      %v3172 = vand.u32 %v1552, 4294901760
      %v3173 = vsub.f32 %v1552, %v3172
      %v3174 = vand.u32 %v3173, 4294901760
      %v3175 = vsub.f32 %v3173, %v3174
      %v3176 = vand.u32 %v3175, 4294901760
      %3177 = vmatpush1.msra.mxu0 %v3176
      %3178 = vmatprep.subr.mxu0 0.0
      %v3179 = vand.u32 %v1551, 4294901760
      %v3180 = vsub.f32 %v1551, %v3179
      %v3181 = vand.u32 %v3180, 4294901760
      %v3182 = vsub.f32 %v3180, %v3181
      %v3183 = vand.u32 %v3182, 4294901760
      %3184 = vmatpush1.msra.mxu0 %v3183
      %3185 = vmatprep.subr.mxu0 0.0
      %3186 = vmatpush2.msra.mxu0 0.0
      %3187 = vmatprep.subr.mxu0 0.0
      %3188 = vmatpush2.msra.mxu0 0.0
      %3189 = vmatprep.subr.mxu0 0.0
      %3190 = vmatpush2.msra.mxu0 0.0
      %3191 = vmatprep.subr.mxu0 0.0
      %3192 = vmatpush2.msra.mxu0 0.0
      %3193 = vmatprep.subr.mxu0 0.0
      %3194 = vmatpush2.msra.mxu0 0.0
      %3195 = vmatprep.subr.mxu0 0.0
      %3196 = vmatpush2.msra.mxu0 0.0
      %3197 = vmatprep.subr.mxu0 0.0
      %3198 = vmatpush2.msra.mxu0 0.0
      %3199 = vmatprep.subr.mxu0 0.0
      %3200 = vmatpush2.msra.mxu0 0.0
      %3201 = vmatprep.subr.mxu0 0.0
      %3202 = vmatpush2.msra.mxu0 0.0
      %3203 = vmatprep.subr.mxu0 0.0
      %3204 = vmatpush2.msra.mxu0 0.0
      %3205 = vmatprep.subr.mxu0 0.0
      %3206 = vmatpush2.msra.mxu0 0.0
      %3207 = vmatprep.subr.mxu0 0.0
      %3208 = vmatpush2.msra.mxu0 0.0
      %3209 = vmatprep.subr.mxu0 0.0
      %3210 = vmatpush2.msra.mxu0 0.0
      %3211 = vmatprep.subr.mxu0 0.0
      %3212 = vmatpush2.msra.mxu0 0.0
      %3213 = vmatprep.subr.mxu0 0.0
      %3214 = vmatpush2.msra.mxu0 0.0
      %3215 = vmatprep.subr.mxu0 0.0
      %3216 = vmatpush2.msra.mxu0 0.0
      %3217 = vmatprep.mubr.f32.mxu0 0.0
      %v3218 = vand.u32 %v2833, 4294901760
      %3219 = vmatmul.mubr.f32.gmra.mxu0 %v3218
      %v3220 = vpop.f32.mrf.mxu0
      %v3221 = vadd.f32 %v2960, %v3220
      %v3222 = vpop.f32.mrf.mxu0
      %3223 = vmatprep.mubr.f32.mxu0 0.0
      %v3224 = vand.u32 %v2836, 4294901760
      %3225 = vmatmul.mubr.f32.gmra.mxu0 %v3224
      %v3226 = vpop.f32.mrf.mxu0
      %v3227 = vadd.f32 %v2970, %v3226
      %v3228 = vpop.f32.mrf.mxu0
      %3229 = vmatprep.mubr.f32.mxu0 0.0
      %v3230 = vand.u32 %v2839, 4294901760
      %3231 = vmatmul.mubr.f32.gmra.mxu0 %v3230
      %v3232 = vpop.f32.mrf.mxu0
      %v3233 = vadd.f32 %v2980, %v3232
      %v3234 = vpop.f32.mrf.mxu0
      %3235 = vmatprep.mubr.f32.mxu0 0.0
      %v3236 = vand.u32 %v2842, 4294901760
      %3237 = vmatmul.mubr.f32.gmra.mxu0 %v3236
      %v3238 = vpop.f32.mrf.mxu0
      %v3239 = vadd.f32 %v2990, %v3238
      %v3240 = vpop.f32.mrf.mxu0
      %3241 = vmatprep.mubr.f32.mxu0 0.0
      %v3242 = vand.u32 %v2845, 4294901760
      %3243 = vmatmul.mubr.f32.gmra.mxu0 %v3242
      %v3244 = vpop.f32.mrf.mxu0
      %v3245 = vadd.f32 %v3000, %v3244
      %v3246 = vpop.f32.mrf.mxu0
      %3247 = vmatprep.mubr.f32.mxu0 0.0
      %v3248 = vand.u32 %v2848, 4294901760
      %3249 = vmatmul.mubr.f32.gmra.mxu0 %v3248
      %v3250 = vpop.f32.mrf.mxu0
      %v3251 = vadd.f32 %v3010, %v3250
      %v3252 = vpop.f32.mrf.mxu0
      %3253 = vmatprep.mubr.f32.mxu0 0.0
      %v3254 = vand.u32 %v2851, 4294901760
      %3255 = vmatmul.mubr.f32.gmra.mxu0 %v3254
      %v3256 = vpop.f32.mrf.mxu0
      %v3257 = vadd.f32 %v3020, %v3256
      %v3258 = vpop.f32.mrf.mxu0
      %3259 = vmatprep.mubr.f32.mxu0 0.0
      %v3260 = vand.u32 %v2854, 4294901760
      %3261 = vmatmul.mubr.f32.gmra.mxu0 %v3260
      %v3262 = vpop.f32.mrf.mxu0
      %v3263 = vadd.f32 %v3030, %v3262
      %v3264 = vpop.f32.mrf.mxu0
      %3265 = vmatprep.mubr.f32.mxu0 0.0
      %v3266 = vand.u32 %v2857, 4294901760
      %3267 = vmatmul.mubr.f32.gmra.mxu0 %v3266
      %v3268 = vpop.f32.mrf.mxu0
      %v3269 = vadd.f32 %v3040, %v3268
      %v3270 = vpop.f32.mrf.mxu0
      %3271 = vmatprep.mubr.f32.mxu0 0.0
      %v3272 = vand.u32 %v2860, 4294901760
      %3273 = vmatmul.mubr.f32.gmra.mxu0 %v3272
      %v3274 = vpop.f32.mrf.mxu0
      %v3275 = vadd.f32 %v3050, %v3274
      %v3276 = vpop.f32.mrf.mxu0
      %3277 = vmatprep.mubr.f32.mxu0 0.0
      %v3278 = vand.u32 %v2863, 4294901760
      %3279 = vmatmul.mubr.f32.gmra.mxu0 %v3278
      %v3280 = vpop.f32.mrf.mxu0
      %v3281 = vadd.f32 %v3060, %v3280
      %v3282 = vpop.f32.mrf.mxu0
      %3283 = vmatprep.mubr.f32.mxu0 0.0
      %v3284 = vand.u32 %v2866, 4294901760
      %3285 = vmatmul.mubr.f32.gmra.mxu0 %v3284
      %v3286 = vpop.f32.mrf.mxu0
      %v3287 = vadd.f32 %v3070, %v3286
      %v3288 = vpop.f32.mrf.mxu0
      %3289 = vmatprep.mubr.f32.mxu0 0.0
      %v3290 = vand.u32 %v2869, 4294901760
      %3291 = vmatmul.mubr.f32.gmra.mxu0 %v3290
      %v3292 = vpop.f32.mrf.mxu0
      %v3293 = vadd.f32 %v3080, %v3292
      %v3294 = vpop.f32.mrf.mxu0
      %3295 = vmatprep.mubr.f32.mxu0 0.0
      %v3296 = vand.u32 %v2872, 4294901760
      %3297 = vmatmul.mubr.f32.gmra.mxu0 %v3296
      %v3298 = vpop.f32.mrf.mxu0
      %v3299 = vadd.f32 %v3090, %v3298
      %v3300 = vpop.f32.mrf.mxu0
      %3301 = vmatprep.mubr.f32.mxu0 0.0
      %v3302 = vand.u32 %v2875, 4294901760
      %3303 = vmatmul.mubr.f32.gmra.mxu0 %v3302
      %v3304 = vpop.f32.mrf.mxu0
      %v3305 = vadd.f32 %v3100, %v3304
      %v3306 = vpop.f32.mrf.mxu0
      %3307 = vmatprep.mubr.f32.mxu0 0.0
      %v3308 = vand.u32 %v2878, 4294901760
      %3309 = vmatmul.mubr.f32.gmra.mxu0 %v3308
      %v3310 = vpop.f32.mrf.mxu0
      %v3311 = vadd.f32 %v3110, %v3310
      %v3312 = vpop.f32.mrf.mxu0
      %3313 = vdwg.mxu0
      %3314 = vmatprep.subr.mxu0 0.0
      %3315 = vmatpush1.msra.mxu0 0.0
      %3316 = vmatprep.subr.mxu0 0.0
      %3317 = vmatpush1.msra.mxu0 0.0
      %3318 = vmatprep.subr.mxu0 0.0
      %3319 = vmatpush1.msra.mxu0 0.0
      %3320 = vmatprep.subr.mxu0 0.0
      %3321 = vmatpush1.msra.mxu0 0.0
      %3322 = vmatprep.subr.mxu0 0.0
      %3323 = vmatpush1.msra.mxu0 0.0
      %3324 = vmatprep.subr.mxu0 0.0
      %3325 = vmatpush1.msra.mxu0 0.0
      %3326 = vmatprep.subr.mxu0 0.0
      %3327 = vmatpush1.msra.mxu0 0.0
      %3328 = vmatprep.subr.mxu0 0.0
      %3329 = vmatpush1.msra.mxu0 0.0
      %3330 = vmatprep.subr.mxu0 0.0
      %v3331 = vand.u32 %v1558, 4294901760
      %v3332 = vsub.f32 %v1558, %v3331
      %3333 = vmatpush1.msra.mxu0 %v3332
      %3334 = vmatprep.subr.mxu0 0.0
      %v3335 = vand.u32 %v1557, 4294901760
      %v3336 = vsub.f32 %v1557, %v3335
      %3337 = vmatpush1.msra.mxu0 %v3336
      %3338 = vmatprep.subr.mxu0 0.0
      %v3339 = vand.u32 %v1556, 4294901760
      %v3340 = vsub.f32 %v1556, %v3339
      %3341 = vmatpush1.msra.mxu0 %v3340
      %3342 = vmatprep.subr.mxu0 0.0
      %v3343 = vand.u32 %v1555, 4294901760
      %v3344 = vsub.f32 %v1555, %v3343
      %3345 = vmatpush1.msra.mxu0 %v3344
      %3346 = vmatprep.subr.mxu0 0.0
      %v3347 = vand.u32 %v1554, 4294901760
      %v3348 = vsub.f32 %v1554, %v3347
      %3349 = vmatpush1.msra.mxu0 %v3348
      %3350 = vmatprep.subr.mxu0 0.0
      %v3351 = vand.u32 %v1553, 4294901760
      %v3352 = vsub.f32 %v1553, %v3351
      %3353 = vmatpush1.msra.mxu0 %v3352
      %3354 = vmatprep.subr.mxu0 0.0
      %v3355 = vand.u32 %v1552, 4294901760
      %v3356 = vsub.f32 %v1552, %v3355
      %3357 = vmatpush1.msra.mxu0 %v3356
      %3358 = vmatprep.subr.mxu0 0.0
      %v3359 = vand.u32 %v1551, 4294901760
      %v3360 = vsub.f32 %v1551, %v3359
      %3361 = vmatpush1.msra.mxu0 %v3360
      %3362 = vmatprep.subr.mxu0 0.0
      %3363 = vmatpush2.msra.mxu0 0.0
      %3364 = vmatprep.subr.mxu0 0.0
      %3365 = vmatpush2.msra.mxu0 0.0
      %3366 = vmatprep.subr.mxu0 0.0
      %3367 = vmatpush2.msra.mxu0 0.0
      %3368 = vmatprep.subr.mxu0 0.0
      %3369 = vmatpush2.msra.mxu0 0.0
      %3370 = vmatprep.subr.mxu0 0.0
      %3371 = vmatpush2.msra.mxu0 0.0
      %3372 = vmatprep.subr.mxu0 0.0
      %3373 = vmatpush2.msra.mxu0 0.0
      %3374 = vmatprep.subr.mxu0 0.0
      %3375 = vmatpush2.msra.mxu0 0.0
      %3376 = vmatprep.subr.mxu0 0.0
      %3377 = vmatpush2.msra.mxu0 0.0
      %3378 = vmatprep.subr.mxu0 0.0
      %3379 = vmatpush2.msra.mxu0 0.0
      %3380 = vmatprep.subr.mxu0 0.0
      %3381 = vmatpush2.msra.mxu0 0.0
      %3382 = vmatprep.subr.mxu0 0.0
      %3383 = vmatpush2.msra.mxu0 0.0
      %3384 = vmatprep.subr.mxu0 0.0
      %3385 = vmatpush2.msra.mxu0 0.0
      %3386 = vmatprep.subr.mxu0 0.0
      %3387 = vmatpush2.msra.mxu0 0.0
      %3388 = vmatprep.subr.mxu0 0.0
      %3389 = vmatpush2.msra.mxu0 0.0
      %3390 = vmatprep.subr.mxu0 0.0
      %3391 = vmatpush2.msra.mxu0 0.0
      %3392 = vmatprep.subr.mxu0 0.0
      %3393 = vmatpush2.msra.mxu0 0.0
      %3394 = vmatprep.mubr.f32.mxu0 0.0
      %v3395 = vand.u32 %v2833, 4294901760
      %v3396 = vsub.f32 %v2833, %v3395
      %3397 = vmatmul.mubr.f32.gmra.mxu0 %v3396
      %v3398 = vpop.f32.mrf.mxu0
      %v3399 = vadd.f32 %v3221, %v3398
      %v3400 = vpop.f32.mrf.mxu0
      %3401 = vmatprep.mubr.f32.mxu0 0.0
      %v3402 = vand.u32 %v2836, 4294901760
      %v3403 = vsub.f32 %v2836, %v3402
      %3404 = vmatmul.mubr.f32.gmra.mxu0 %v3403
      %v3405 = vpop.f32.mrf.mxu0
      %v3406 = vadd.f32 %v3227, %v3405
      %v3407 = vpop.f32.mrf.mxu0
      %3408 = vmatprep.mubr.f32.mxu0 0.0
      %v3409 = vand.u32 %v2839, 4294901760
      %v3410 = vsub.f32 %v2839, %v3409
      %3411 = vmatmul.mubr.f32.gmra.mxu0 %v3410
      %v3412 = vpop.f32.mrf.mxu0
      %v3413 = vadd.f32 %v3233, %v3412
      %v3414 = vpop.f32.mrf.mxu0
      %3415 = vmatprep.mubr.f32.mxu0 0.0
      %v3416 = vand.u32 %v2842, 4294901760
      %v3417 = vsub.f32 %v2842, %v3416
      %3418 = vmatmul.mubr.f32.gmra.mxu0 %v3417
      %v3419 = vpop.f32.mrf.mxu0
      %v3420 = vadd.f32 %v3239, %v3419
      %v3421 = vpop.f32.mrf.mxu0
      %3422 = vmatprep.mubr.f32.mxu0 0.0
      %v3423 = vand.u32 %v2845, 4294901760
      %v3424 = vsub.f32 %v2845, %v3423
      %3425 = vmatmul.mubr.f32.gmra.mxu0 %v3424
      %v3426 = vpop.f32.mrf.mxu0
      %v3427 = vadd.f32 %v3245, %v3426
      %v3428 = vpop.f32.mrf.mxu0
      %3429 = vmatprep.mubr.f32.mxu0 0.0
      %v3430 = vand.u32 %v2848, 4294901760
      %v3431 = vsub.f32 %v2848, %v3430
      %3432 = vmatmul.mubr.f32.gmra.mxu0 %v3431
      %v3433 = vpop.f32.mrf.mxu0
      %v3434 = vadd.f32 %v3251, %v3433
      %v3435 = vpop.f32.mrf.mxu0
      %3436 = vmatprep.mubr.f32.mxu0 0.0
      %v3437 = vand.u32 %v2851, 4294901760
      %v3438 = vsub.f32 %v2851, %v3437
      %3439 = vmatmul.mubr.f32.gmra.mxu0 %v3438
      %v3440 = vpop.f32.mrf.mxu0
      %v3441 = vadd.f32 %v3257, %v3440
      %v3442 = vpop.f32.mrf.mxu0
      %3443 = vmatprep.mubr.f32.mxu0 0.0
      %v3444 = vand.u32 %v2854, 4294901760
      %v3445 = vsub.f32 %v2854, %v3444
      %3446 = vmatmul.mubr.f32.gmra.mxu0 %v3445
      %v3447 = vpop.f32.mrf.mxu0
      %v3448 = vadd.f32 %v3263, %v3447
      %v3449 = vpop.f32.mrf.mxu0
      %3450 = vmatprep.mubr.f32.mxu0 0.0
      %v3451 = vand.u32 %v2857, 4294901760
      %v3452 = vsub.f32 %v2857, %v3451
      %3453 = vmatmul.mubr.f32.gmra.mxu0 %v3452
      %v3454 = vpop.f32.mrf.mxu0
      %v3455 = vadd.f32 %v3269, %v3454
      %v3456 = vpop.f32.mrf.mxu0
      %3457 = vmatprep.mubr.f32.mxu0 0.0
      %v3458 = vand.u32 %v2860, 4294901760
      %v3459 = vsub.f32 %v2860, %v3458
      %3460 = vmatmul.mubr.f32.gmra.mxu0 %v3459
      %v3461 = vpop.f32.mrf.mxu0
      %v3462 = vadd.f32 %v3275, %v3461
      %v3463 = vpop.f32.mrf.mxu0
      %3464 = vmatprep.mubr.f32.mxu0 0.0
      %v3465 = vand.u32 %v2863, 4294901760
      %v3466 = vsub.f32 %v2863, %v3465
      %3467 = vmatmul.mubr.f32.gmra.mxu0 %v3466
      %v3468 = vpop.f32.mrf.mxu0
      %v3469 = vadd.f32 %v3281, %v3468
      %v3470 = vpop.f32.mrf.mxu0
      %3471 = vmatprep.mubr.f32.mxu0 0.0
      %v3472 = vand.u32 %v2866, 4294901760
      %v3473 = vsub.f32 %v2866, %v3472
      %3474 = vmatmul.mubr.f32.gmra.mxu0 %v3473
      %v3475 = vpop.f32.mrf.mxu0
      %v3476 = vadd.f32 %v3287, %v3475
      %v3477 = vpop.f32.mrf.mxu0
      %3478 = vmatprep.mubr.f32.mxu0 0.0
      %v3479 = vand.u32 %v2869, 4294901760
      %v3480 = vsub.f32 %v2869, %v3479
      %3481 = vmatmul.mubr.f32.gmra.mxu0 %v3480
      %v3482 = vpop.f32.mrf.mxu0
      %v3483 = vadd.f32 %v3293, %v3482
      %v3484 = vpop.f32.mrf.mxu0
      %3485 = vmatprep.mubr.f32.mxu0 0.0
      %v3486 = vand.u32 %v2872, 4294901760
      %v3487 = vsub.f32 %v2872, %v3486
      %3488 = vmatmul.mubr.f32.gmra.mxu0 %v3487
      %v3489 = vpop.f32.mrf.mxu0
      %v3490 = vadd.f32 %v3299, %v3489
      %v3491 = vpop.f32.mrf.mxu0
      %3492 = vmatprep.mubr.f32.mxu0 0.0
      %v3493 = vand.u32 %v2875, 4294901760
      %v3494 = vsub.f32 %v2875, %v3493
      %3495 = vmatmul.mubr.f32.gmra.mxu0 %v3494
      %v3496 = vpop.f32.mrf.mxu0
      %v3497 = vadd.f32 %v3305, %v3496
      %v3498 = vpop.f32.mrf.mxu0
      %3499 = vmatprep.mubr.f32.mxu0 0.0
      %v3500 = vand.u32 %v2878, 4294901760
      %v3501 = vsub.f32 %v2878, %v3500
      %3502 = vmatmul.mubr.f32.gmra.mxu0 %v3501
      %v3503 = vpop.f32.mrf.mxu0
      %v3504 = vadd.f32 %v3311, %v3503
      %v3505 = vpop.f32.mrf.mxu0
      %3506 = vdwg.mxu0
      %3507 = vmatprep.subr.mxu0 0.0
      %3508 = vmatpush1.msra.mxu0 0.0
      %3509 = vmatprep.subr.mxu0 0.0
      %3510 = vmatpush1.msra.mxu0 0.0
      %3511 = vmatprep.subr.mxu0 0.0
      %3512 = vmatpush1.msra.mxu0 0.0
      %3513 = vmatprep.subr.mxu0 0.0
      %3514 = vmatpush1.msra.mxu0 0.0
      %3515 = vmatprep.subr.mxu0 0.0
      %3516 = vmatpush1.msra.mxu0 0.0
      %3517 = vmatprep.subr.mxu0 0.0
      %3518 = vmatpush1.msra.mxu0 0.0
      %3519 = vmatprep.subr.mxu0 0.0
      %3520 = vmatpush1.msra.mxu0 0.0
      %3521 = vmatprep.subr.mxu0 0.0
      %3522 = vmatpush1.msra.mxu0 0.0
      %3523 = vmatprep.subr.mxu0 0.0
      %v3524 = vand.u32 %v1558, 4294901760
      %3525 = vmatpush1.msra.mxu0 %v3524
      %3526 = vmatprep.subr.mxu0 0.0
      %v3527 = vand.u32 %v1557, 4294901760
      %3528 = vmatpush1.msra.mxu0 %v3527
      %3529 = vmatprep.subr.mxu0 0.0
      %v3530 = vand.u32 %v1556, 4294901760
      %3531 = vmatpush1.msra.mxu0 %v3530
      %3532 = vmatprep.subr.mxu0 0.0
      %v3533 = vand.u32 %v1555, 4294901760
      %3534 = vmatpush1.msra.mxu0 %v3533
      %3535 = vmatprep.subr.mxu0 0.0
      %v3536 = vand.u32 %v1554, 4294901760
      %3537 = vmatpush1.msra.mxu0 %v3536
      %3538 = vmatprep.subr.mxu0 0.0
      %v3539 = vand.u32 %v1553, 4294901760
      %3540 = vmatpush1.msra.mxu0 %v3539
      %3541 = vmatprep.subr.mxu0 0.0
      %v3542 = vand.u32 %v1552, 4294901760
      %3543 = vmatpush1.msra.mxu0 %v3542
      %3544 = vmatprep.subr.mxu0 0.0
      %v3545 = vand.u32 %v1551, 4294901760
      %3546 = vmatpush1.msra.mxu0 %v3545
      %3547 = vmatprep.subr.mxu0 0.0
      %3548 = vmatpush2.msra.mxu0 0.0
      %3549 = vmatprep.subr.mxu0 0.0
      %3550 = vmatpush2.msra.mxu0 0.0
      %3551 = vmatprep.subr.mxu0 0.0
      %3552 = vmatpush2.msra.mxu0 0.0
      %3553 = vmatprep.subr.mxu0 0.0
      %3554 = vmatpush2.msra.mxu0 0.0
      %3555 = vmatprep.subr.mxu0 0.0
      %3556 = vmatpush2.msra.mxu0 0.0
      %3557 = vmatprep.subr.mxu0 0.0
      %3558 = vmatpush2.msra.mxu0 0.0
      %3559 = vmatprep.subr.mxu0 0.0
      %3560 = vmatpush2.msra.mxu0 0.0
      %3561 = vmatprep.subr.mxu0 0.0
      %3562 = vmatpush2.msra.mxu0 0.0
      %3563 = vmatprep.subr.mxu0 0.0
      %3564 = vmatpush2.msra.mxu0 0.0
      %3565 = vmatprep.subr.mxu0 0.0
      %3566 = vmatpush2.msra.mxu0 0.0
      %3567 = vmatprep.subr.mxu0 0.0
      %3568 = vmatpush2.msra.mxu0 0.0
      %3569 = vmatprep.subr.mxu0 0.0
      %3570 = vmatpush2.msra.mxu0 0.0
      %3571 = vmatprep.subr.mxu0 0.0
      %3572 = vmatpush2.msra.mxu0 0.0
      %3573 = vmatprep.subr.mxu0 0.0
      %3574 = vmatpush2.msra.mxu0 0.0
      %3575 = vmatprep.subr.mxu0 0.0
      %3576 = vmatpush2.msra.mxu0 0.0
      %3577 = vmatprep.subr.mxu0 0.0
      %3578 = vmatpush2.msra.mxu0 0.0
      %3579 = vmatprep.mubr.f32.mxu0 0.0
      %v3580 = vand.u32 %v2833, 4294901760
      %v3581 = vsub.f32 %v2833, %v3580
      %v3582 = vand.u32 %v3581, 4294901760
      %3583 = vmatmul.mubr.f32.gmra.mxu0 %v3582
      %v3584 = vpop.f32.mrf.mxu0
      %v3585 = vadd.f32 %v3399, %v3584
      %v3586 = vpop.f32.mrf.mxu0
      %3587 = vmatprep.mubr.f32.mxu0 0.0
      %v3588 = vand.u32 %v2836, 4294901760
      %v3589 = vsub.f32 %v2836, %v3588
      %v3590 = vand.u32 %v3589, 4294901760
      %3591 = vmatmul.mubr.f32.gmra.mxu0 %v3590
      %v3592 = vpop.f32.mrf.mxu0
      %v3593 = vadd.f32 %v3406, %v3592
      %v3594 = vpop.f32.mrf.mxu0
      %3595 = vmatprep.mubr.f32.mxu0 0.0
      %v3596 = vand.u32 %v2839, 4294901760
      %v3597 = vsub.f32 %v2839, %v3596
      %v3598 = vand.u32 %v3597, 4294901760
      %3599 = vmatmul.mubr.f32.gmra.mxu0 %v3598
      %v3600 = vpop.f32.mrf.mxu0
      %v3601 = vadd.f32 %v3413, %v3600
      %v3602 = vpop.f32.mrf.mxu0
      %3603 = vmatprep.mubr.f32.mxu0 0.0
      %v3604 = vand.u32 %v2842, 4294901760
      %v3605 = vsub.f32 %v2842, %v3604
      %v3606 = vand.u32 %v3605, 4294901760
      %3607 = vmatmul.mubr.f32.gmra.mxu0 %v3606
      %v3608 = vpop.f32.mrf.mxu0
      %v3609 = vadd.f32 %v3420, %v3608
      %v3610 = vpop.f32.mrf.mxu0
      %3611 = vmatprep.mubr.f32.mxu0 0.0
      %v3612 = vand.u32 %v2845, 4294901760
      %v3613 = vsub.f32 %v2845, %v3612
      %v3614 = vand.u32 %v3613, 4294901760
      %3615 = vmatmul.mubr.f32.gmra.mxu0 %v3614
      %v3616 = vpop.f32.mrf.mxu0
      %v3617 = vadd.f32 %v3427, %v3616
      %v3618 = vpop.f32.mrf.mxu0
      %3619 = vmatprep.mubr.f32.mxu0 0.0
      %v3620 = vand.u32 %v2848, 4294901760
      %v3621 = vsub.f32 %v2848, %v3620
      %v3622 = vand.u32 %v3621, 4294901760
      %3623 = vmatmul.mubr.f32.gmra.mxu0 %v3622
      %v3624 = vpop.f32.mrf.mxu0
      %v3625 = vadd.f32 %v3434, %v3624
      %v3626 = vpop.f32.mrf.mxu0
      %3627 = vmatprep.mubr.f32.mxu0 0.0
      %v3628 = vand.u32 %v2851, 4294901760
      %v3629 = vsub.f32 %v2851, %v3628
      %v3630 = vand.u32 %v3629, 4294901760
      %3631 = vmatmul.mubr.f32.gmra.mxu0 %v3630
      %v3632 = vpop.f32.mrf.mxu0
      %v3633 = vadd.f32 %v3441, %v3632
      %v3634 = vpop.f32.mrf.mxu0
      %3635 = vmatprep.mubr.f32.mxu0 0.0
      %v3636 = vand.u32 %v2854, 4294901760
      %v3637 = vsub.f32 %v2854, %v3636
      %v3638 = vand.u32 %v3637, 4294901760
      %3639 = vmatmul.mubr.f32.gmra.mxu0 %v3638
      %v3640 = vpop.f32.mrf.mxu0
      %v3641 = vadd.f32 %v3448, %v3640
      %v3642 = vpop.f32.mrf.mxu0
      %3643 = vmatprep.mubr.f32.mxu0 0.0
      %v3644 = vand.u32 %v2857, 4294901760
      %v3645 = vsub.f32 %v2857, %v3644
      %v3646 = vand.u32 %v3645, 4294901760
      %3647 = vmatmul.mubr.f32.gmra.mxu0 %v3646
      %v3648 = vpop.f32.mrf.mxu0
      %v3649 = vadd.f32 %v3455, %v3648
      %v3650 = vpop.f32.mrf.mxu0
      %3651 = vmatprep.mubr.f32.mxu0 0.0
      %v3652 = vand.u32 %v2860, 4294901760
      %v3653 = vsub.f32 %v2860, %v3652
      %v3654 = vand.u32 %v3653, 4294901760
      %3655 = vmatmul.mubr.f32.gmra.mxu0 %v3654
      %v3656 = vpop.f32.mrf.mxu0
      %v3657 = vadd.f32 %v3462, %v3656
      %v3658 = vpop.f32.mrf.mxu0
      %3659 = vmatprep.mubr.f32.mxu0 0.0
      %v3660 = vand.u32 %v2863, 4294901760
      %v3661 = vsub.f32 %v2863, %v3660
      %v3662 = vand.u32 %v3661, 4294901760
      %3663 = vmatmul.mubr.f32.gmra.mxu0 %v3662
      %v3664 = vpop.f32.mrf.mxu0
      %v3665 = vadd.f32 %v3469, %v3664
      %v3666 = vpop.f32.mrf.mxu0
      %3667 = vmatprep.mubr.f32.mxu0 0.0
      %v3668 = vand.u32 %v2866, 4294901760
      %v3669 = vsub.f32 %v2866, %v3668
      %v3670 = vand.u32 %v3669, 4294901760
      %3671 = vmatmul.mubr.f32.gmra.mxu0 %v3670
      %v3672 = vpop.f32.mrf.mxu0
      %v3673 = vadd.f32 %v3476, %v3672
      %v3674 = vpop.f32.mrf.mxu0
      %3675 = vmatprep.mubr.f32.mxu0 0.0
      %v3676 = vand.u32 %v2869, 4294901760
      %v3677 = vsub.f32 %v2869, %v3676
      %v3678 = vand.u32 %v3677, 4294901760
      %3679 = vmatmul.mubr.f32.gmra.mxu0 %v3678
      %v3680 = vpop.f32.mrf.mxu0
      %v3681 = vadd.f32 %v3483, %v3680
      %v3682 = vpop.f32.mrf.mxu0
      %3683 = vmatprep.mubr.f32.mxu0 0.0
      %v3684 = vand.u32 %v2872, 4294901760
      %v3685 = vsub.f32 %v2872, %v3684
      %v3686 = vand.u32 %v3685, 4294901760
      %3687 = vmatmul.mubr.f32.gmra.mxu0 %v3686
      %v3688 = vpop.f32.mrf.mxu0
      %v3689 = vadd.f32 %v3490, %v3688
      %v3690 = vpop.f32.mrf.mxu0
      %3691 = vmatprep.mubr.f32.mxu0 0.0
      %v3692 = vand.u32 %v2875, 4294901760
      %v3693 = vsub.f32 %v2875, %v3692
      %v3694 = vand.u32 %v3693, 4294901760
      %3695 = vmatmul.mubr.f32.gmra.mxu0 %v3694
      %v3696 = vpop.f32.mrf.mxu0
      %v3697 = vadd.f32 %v3497, %v3696
      %v3698 = vpop.f32.mrf.mxu0
      %3699 = vmatprep.mubr.f32.mxu0 0.0
      %v3700 = vand.u32 %v2878, 4294901760
      %v3701 = vsub.f32 %v2878, %v3700
      %v3702 = vand.u32 %v3701, 4294901760
      %3703 = vmatmul.mubr.f32.gmra.mxu0 %v3702
      %v3704 = vpop.f32.mrf.mxu0
      %v3705 = vadd.f32 %v3504, %v3704
      %v3706 = vpop.f32.mrf.mxu0
      %3707 = vdwg.mxu0
      %3708 = vmatprep.subr.mxu0 0.0
      %3709 = vmatpush1.msra.mxu0 0.0
      %3710 = vmatprep.subr.mxu0 0.0
      %3711 = vmatpush1.msra.mxu0 0.0
      %3712 = vmatprep.subr.mxu0 0.0
      %3713 = vmatpush1.msra.mxu0 0.0
      %3714 = vmatprep.subr.mxu0 0.0
      %3715 = vmatpush1.msra.mxu0 0.0
      %3716 = vmatprep.subr.mxu0 0.0
      %3717 = vmatpush1.msra.mxu0 0.0
      %3718 = vmatprep.subr.mxu0 0.0
      %3719 = vmatpush1.msra.mxu0 0.0
      %3720 = vmatprep.subr.mxu0 0.0
      %3721 = vmatpush1.msra.mxu0 0.0
      %3722 = vmatprep.subr.mxu0 0.0
      %3723 = vmatpush1.msra.mxu0 0.0
      %3724 = vmatprep.subr.mxu0 0.0
      %v3725 = vand.u32 %v1558, 4294901760
      %v3726 = vsub.f32 %v1558, %v3725
      %v3727 = vand.u32 %v3726, 4294901760
      %3728 = vmatpush1.msra.mxu0 %v3727
      %3729 = vmatprep.subr.mxu0 0.0
      %v3730 = vand.u32 %v1557, 4294901760
      %v3731 = vsub.f32 %v1557, %v3730
      %v3732 = vand.u32 %v3731, 4294901760
      %3733 = vmatpush1.msra.mxu0 %v3732
      %3734 = vmatprep.subr.mxu0 0.0
      %v3735 = vand.u32 %v1556, 4294901760
      %v3736 = vsub.f32 %v1556, %v3735
      %v3737 = vand.u32 %v3736, 4294901760
      %3738 = vmatpush1.msra.mxu0 %v3737
      %3739 = vmatprep.subr.mxu0 0.0
      %v3740 = vand.u32 %v1555, 4294901760
      %v3741 = vsub.f32 %v1555, %v3740
      %v3742 = vand.u32 %v3741, 4294901760
      %3743 = vmatpush1.msra.mxu0 %v3742
      %3744 = vmatprep.subr.mxu0 0.0
      %v3745 = vand.u32 %v1554, 4294901760
      %v3746 = vsub.f32 %v1554, %v3745
      %v3747 = vand.u32 %v3746, 4294901760
      %3748 = vmatpush1.msra.mxu0 %v3747
      %3749 = vmatprep.subr.mxu0 0.0
      %v3750 = vand.u32 %v1553, 4294901760
      %v3751 = vsub.f32 %v1553, %v3750
      %v3752 = vand.u32 %v3751, 4294901760
      %3753 = vmatpush1.msra.mxu0 %v3752
      %3754 = vmatprep.subr.mxu0 0.0
      %v3755 = vand.u32 %v1552, 4294901760
      %v3756 = vsub.f32 %v1552, %v3755
      %v3757 = vand.u32 %v3756, 4294901760
      %3758 = vmatpush1.msra.mxu0 %v3757
      %3759 = vmatprep.subr.mxu0 0.0
      %v3760 = vand.u32 %v1551, 4294901760
      %v3761 = vsub.f32 %v1551, %v3760
      %v3762 = vand.u32 %v3761, 4294901760
      %3763 = vmatpush1.msra.mxu0 %v3762
      %3764 = vmatprep.subr.mxu0 0.0
      %3765 = vmatpush2.msra.mxu0 0.0
      %3766 = vmatprep.subr.mxu0 0.0
      %3767 = vmatpush2.msra.mxu0 0.0
      %3768 = vmatprep.subr.mxu0 0.0
      %3769 = vmatpush2.msra.mxu0 0.0
      %3770 = vmatprep.subr.mxu0 0.0
      %3771 = vmatpush2.msra.mxu0 0.0
      %3772 = vmatprep.subr.mxu0 0.0
      %3773 = vmatpush2.msra.mxu0 0.0
      %3774 = vmatprep.subr.mxu0 0.0
      %3775 = vmatpush2.msra.mxu0 0.0
      %3776 = vmatprep.subr.mxu0 0.0
      %3777 = vmatpush2.msra.mxu0 0.0
      %3778 = vmatprep.subr.mxu0 0.0
      %3779 = vmatpush2.msra.mxu0 0.0
      %3780 = vmatprep.subr.mxu0 0.0
      %3781 = vmatpush2.msra.mxu0 0.0
      %3782 = vmatprep.subr.mxu0 0.0
      %3783 = vmatpush2.msra.mxu0 0.0
      %3784 = vmatprep.subr.mxu0 0.0
      %3785 = vmatpush2.msra.mxu0 0.0
      %3786 = vmatprep.subr.mxu0 0.0
      %3787 = vmatpush2.msra.mxu0 0.0
      %3788 = vmatprep.subr.mxu0 0.0
      %3789 = vmatpush2.msra.mxu0 0.0
      %3790 = vmatprep.subr.mxu0 0.0
      %3791 = vmatpush2.msra.mxu0 0.0
      %3792 = vmatprep.subr.mxu0 0.0
      %3793 = vmatpush2.msra.mxu0 0.0
      %3794 = vmatprep.subr.mxu0 0.0
      %3795 = vmatpush2.msra.mxu0 0.0
      %3796 = vmatprep.mubr.f32.mxu0 0.0
      %v3797 = vand.u32 %v2833, 4294901760
      %3798 = vmatmul.mubr.f32.gmra.mxu0 %v3797
      %v3799 = vpop.f32.mrf.mxu0
      %v3800 = vadd.f32 %v3585, %v3799
      %v3801 = vpop.f32.mrf.mxu0
      %3802 = vmatprep.mubr.f32.mxu0 0.0
      %v3803 = vand.u32 %v2836, 4294901760
      %3804 = vmatmul.mubr.f32.gmra.mxu0 %v3803
      %v3805 = vpop.f32.mrf.mxu0
      %v3806 = vadd.f32 %v3593, %v3805
      %v3807 = vpop.f32.mrf.mxu0
      %3808 = vmatprep.mubr.f32.mxu0 0.0
      %v3809 = vand.u32 %v2839, 4294901760
      %3810 = vmatmul.mubr.f32.gmra.mxu0 %v3809
      %v3811 = vpop.f32.mrf.mxu0
      %v3812 = vadd.f32 %v3601, %v3811
      %v3813 = vpop.f32.mrf.mxu0
      %3814 = vmatprep.mubr.f32.mxu0 0.0
      %v3815 = vand.u32 %v2842, 4294901760
      %3816 = vmatmul.mubr.f32.gmra.mxu0 %v3815
      %v3817 = vpop.f32.mrf.mxu0
      %v3818 = vadd.f32 %v3609, %v3817
      %v3819 = vpop.f32.mrf.mxu0
      %3820 = vmatprep.mubr.f32.mxu0 0.0
      %v3821 = vand.u32 %v2845, 4294901760
      %3822 = vmatmul.mubr.f32.gmra.mxu0 %v3821
      %v3823 = vpop.f32.mrf.mxu0
      %v3824 = vadd.f32 %v3617, %v3823
      %v3825 = vpop.f32.mrf.mxu0
      %3826 = vmatprep.mubr.f32.mxu0 0.0
      %v3827 = vand.u32 %v2848, 4294901760
      %3828 = vmatmul.mubr.f32.gmra.mxu0 %v3827
      %v3829 = vpop.f32.mrf.mxu0
      %v3830 = vadd.f32 %v3625, %v3829
      %v3831 = vpop.f32.mrf.mxu0
      %3832 = vmatprep.mubr.f32.mxu0 0.0
      %v3833 = vand.u32 %v2851, 4294901760
      %3834 = vmatmul.mubr.f32.gmra.mxu0 %v3833
      %v3835 = vpop.f32.mrf.mxu0
      %v3836 = vadd.f32 %v3633, %v3835
      %v3837 = vpop.f32.mrf.mxu0
      %3838 = vmatprep.mubr.f32.mxu0 0.0
      %v3839 = vand.u32 %v2854, 4294901760
      %3840 = vmatmul.mubr.f32.gmra.mxu0 %v3839
      %v3841 = vpop.f32.mrf.mxu0
      %v3842 = vadd.f32 %v3641, %v3841
      %v3843 = vpop.f32.mrf.mxu0
      %3844 = vmatprep.mubr.f32.mxu0 0.0
      %v3845 = vand.u32 %v2857, 4294901760
      %3846 = vmatmul.mubr.f32.gmra.mxu0 %v3845
      %v3847 = vpop.f32.mrf.mxu0
      %v3848 = vadd.f32 %v3649, %v3847
      %v3849 = vpop.f32.mrf.mxu0
      %3850 = vmatprep.mubr.f32.mxu0 0.0
      %v3851 = vand.u32 %v2860, 4294901760
      %3852 = vmatmul.mubr.f32.gmra.mxu0 %v3851
      %v3853 = vpop.f32.mrf.mxu0
      %v3854 = vadd.f32 %v3657, %v3853
      %v3855 = vpop.f32.mrf.mxu0
      %3856 = vmatprep.mubr.f32.mxu0 0.0
      %v3857 = vand.u32 %v2863, 4294901760
      %3858 = vmatmul.mubr.f32.gmra.mxu0 %v3857
      %v3859 = vpop.f32.mrf.mxu0
      %v3860 = vadd.f32 %v3665, %v3859
      %v3861 = vpop.f32.mrf.mxu0
      %3862 = vmatprep.mubr.f32.mxu0 0.0
      %v3863 = vand.u32 %v2866, 4294901760
      %3864 = vmatmul.mubr.f32.gmra.mxu0 %v3863
      %v3865 = vpop.f32.mrf.mxu0
      %v3866 = vadd.f32 %v3673, %v3865
      %v3867 = vpop.f32.mrf.mxu0
      %3868 = vmatprep.mubr.f32.mxu0 0.0
      %v3869 = vand.u32 %v2869, 4294901760
      %3870 = vmatmul.mubr.f32.gmra.mxu0 %v3869
      %v3871 = vpop.f32.mrf.mxu0
      %v3872 = vadd.f32 %v3681, %v3871
      %v3873 = vpop.f32.mrf.mxu0
      %3874 = vmatprep.mubr.f32.mxu0 0.0
      %v3875 = vand.u32 %v2872, 4294901760
      %3876 = vmatmul.mubr.f32.gmra.mxu0 %v3875
      %v3877 = vpop.f32.mrf.mxu0
      %v3878 = vadd.f32 %v3689, %v3877
      %v3879 = vpop.f32.mrf.mxu0
      %3880 = vmatprep.mubr.f32.mxu0 0.0
      %v3881 = vand.u32 %v2875, 4294901760
      %3882 = vmatmul.mubr.f32.gmra.mxu0 %v3881
      %v3883 = vpop.f32.mrf.mxu0
      %v3884 = vadd.f32 %v3697, %v3883
      %v3885 = vpop.f32.mrf.mxu0
      %3886 = vmatprep.mubr.f32.mxu0 0.0
      %v3887 = vand.u32 %v2878, 4294901760
      %3888 = vmatmul.mubr.f32.gmra.mxu0 %v3887
      %v3889 = vpop.f32.mrf.mxu0
      %v3890 = vadd.f32 %v3705, %v3889
      %v3891 = vpop.f32.mrf.mxu0
      %3892 = vdwg.mxu0
      %3893 = vmatprep.subr.mxu0 0.0
      %3894 = vmatpush1.msra.mxu0 0.0
      %3895 = vmatprep.subr.mxu0 0.0
      %3896 = vmatpush1.msra.mxu0 0.0
      %3897 = vmatprep.subr.mxu0 0.0
      %3898 = vmatpush1.msra.mxu0 0.0
      %3899 = vmatprep.subr.mxu0 0.0
      %3900 = vmatpush1.msra.mxu0 0.0
      %3901 = vmatprep.subr.mxu0 0.0
      %3902 = vmatpush1.msra.mxu0 0.0
      %3903 = vmatprep.subr.mxu0 0.0
      %3904 = vmatpush1.msra.mxu0 0.0
      %3905 = vmatprep.subr.mxu0 0.0
      %3906 = vmatpush1.msra.mxu0 0.0
      %3907 = vmatprep.subr.mxu0 0.0
      %3908 = vmatpush1.msra.mxu0 0.0
      %3909 = vmatprep.subr.mxu0 0.0
      %v3910 = vand.u32 %v1558, 4294901760
      %3911 = vmatpush1.msra.mxu0 %v3910
      %3912 = vmatprep.subr.mxu0 0.0
      %v3913 = vand.u32 %v1557, 4294901760
      %3914 = vmatpush1.msra.mxu0 %v3913
      %3915 = vmatprep.subr.mxu0 0.0
      %v3916 = vand.u32 %v1556, 4294901760
      %3917 = vmatpush1.msra.mxu0 %v3916
      %3918 = vmatprep.subr.mxu0 0.0
      %v3919 = vand.u32 %v1555, 4294901760
      %3920 = vmatpush1.msra.mxu0 %v3919
      %3921 = vmatprep.subr.mxu0 0.0
      %v3922 = vand.u32 %v1554, 4294901760
      %3923 = vmatpush1.msra.mxu0 %v3922
      %3924 = vmatprep.subr.mxu0 0.0
      %v3925 = vand.u32 %v1553, 4294901760
      %3926 = vmatpush1.msra.mxu0 %v3925
      %3927 = vmatprep.subr.mxu0 0.0
      %v3928 = vand.u32 %v1552, 4294901760
      %3929 = vmatpush1.msra.mxu0 %v3928
      %3930 = vmatprep.subr.mxu0 0.0
      %v3931 = vand.u32 %v1551, 4294901760
      %3932 = vmatpush1.msra.mxu0 %v3931
      %3933 = vmatprep.subr.mxu0 0.0
      %3934 = vmatpush2.msra.mxu0 0.0
      %3935 = vmatprep.subr.mxu0 0.0
      %3936 = vmatpush2.msra.mxu0 0.0
      %3937 = vmatprep.subr.mxu0 0.0
      %3938 = vmatpush2.msra.mxu0 0.0
      %3939 = vmatprep.subr.mxu0 0.0
      %3940 = vmatpush2.msra.mxu0 0.0
      %3941 = vmatprep.subr.mxu0 0.0
      %3942 = vmatpush2.msra.mxu0 0.0
      %3943 = vmatprep.subr.mxu0 0.0
      %3944 = vmatpush2.msra.mxu0 0.0
      %3945 = vmatprep.subr.mxu0 0.0
      %3946 = vmatpush2.msra.mxu0 0.0
      %3947 = vmatprep.subr.mxu0 0.0
      %3948 = vmatpush2.msra.mxu0 0.0
      %3949 = vmatprep.subr.mxu0 0.0
      %3950 = vmatpush2.msra.mxu0 0.0
      %3951 = vmatprep.subr.mxu0 0.0
      %3952 = vmatpush2.msra.mxu0 0.0
      %3953 = vmatprep.subr.mxu0 0.0
      %3954 = vmatpush2.msra.mxu0 0.0
      %3955 = vmatprep.subr.mxu0 0.0
      %3956 = vmatpush2.msra.mxu0 0.0
      %3957 = vmatprep.subr.mxu0 0.0
      %3958 = vmatpush2.msra.mxu0 0.0
      %3959 = vmatprep.subr.mxu0 0.0
      %3960 = vmatpush2.msra.mxu0 0.0
      %3961 = vmatprep.subr.mxu0 0.0
      %3962 = vmatpush2.msra.mxu0 0.0
      %3963 = vmatprep.subr.mxu0 0.0
      %3964 = vmatpush2.msra.mxu0 0.0
      %3965 = vmatprep.mubr.f32.mxu0 0.0
      %v3966 = vand.u32 %v2833, 4294901760
      %3967 = vmatmul.mubr.f32.gmra.mxu0 %v3966
      %v3968 = vpop.f32.mrf.mxu0
      %v3969 = vadd.f32 %v3800, %v3968
      %v3970 = vpop.f32.mrf.mxu0
      %3971 = vmatprep.mubr.f32.mxu0 0.0
      %v3972 = vand.u32 %v2836, 4294901760
      %3973 = vmatmul.mubr.f32.gmra.mxu0 %v3972
      %v3974 = vpop.f32.mrf.mxu0
      %v3975 = vadd.f32 %v3806, %v3974
      %v3976 = vpop.f32.mrf.mxu0
      %3977 = vmatprep.mubr.f32.mxu0 0.0
      %v3978 = vand.u32 %v2839, 4294901760
      %3979 = vmatmul.mubr.f32.gmra.mxu0 %v3978
      %v3980 = vpop.f32.mrf.mxu0
      %v3981 = vadd.f32 %v3812, %v3980
      %v3982 = vpop.f32.mrf.mxu0
      %3983 = vmatprep.mubr.f32.mxu0 0.0
      %v3984 = vand.u32 %v2842, 4294901760
      %3985 = vmatmul.mubr.f32.gmra.mxu0 %v3984
      %v3986 = vpop.f32.mrf.mxu0
      %v3987 = vadd.f32 %v3818, %v3986
      %v3988 = vpop.f32.mrf.mxu0
      %3989 = vmatprep.mubr.f32.mxu0 0.0
      %v3990 = vand.u32 %v2845, 4294901760
      %3991 = vmatmul.mubr.f32.gmra.mxu0 %v3990
      %v3992 = vpop.f32.mrf.mxu0
      %v3993 = vadd.f32 %v3824, %v3992
      %v3994 = vpop.f32.mrf.mxu0
      %3995 = vmatprep.mubr.f32.mxu0 0.0
      %v3996 = vand.u32 %v2848, 4294901760
      %3997 = vmatmul.mubr.f32.gmra.mxu0 %v3996
      %v3998 = vpop.f32.mrf.mxu0
      %v3999 = vadd.f32 %v3830, %v3998
      %v4000 = vpop.f32.mrf.mxu0
      %4001 = vmatprep.mubr.f32.mxu0 0.0
      %v4002 = vand.u32 %v2851, 4294901760
      %4003 = vmatmul.mubr.f32.gmra.mxu0 %v4002
      %v4004 = vpop.f32.mrf.mxu0
      %v4005 = vadd.f32 %v3836, %v4004
      %v4006 = vpop.f32.mrf.mxu0
      %4007 = vmatprep.mubr.f32.mxu0 0.0
      %v4008 = vand.u32 %v2854, 4294901760
      %4009 = vmatmul.mubr.f32.gmra.mxu0 %v4008
      %v4010 = vpop.f32.mrf.mxu0
      %v4011 = vadd.f32 %v3842, %v4010
      %v4012 = vpop.f32.mrf.mxu0
      %4013 = vmatprep.mubr.f32.mxu0 0.0
      %v4014 = vand.u32 %v2857, 4294901760
      %4015 = vmatmul.mubr.f32.gmra.mxu0 %v4014
      %v4016 = vpop.f32.mrf.mxu0
      %v4017 = vadd.f32 %v3848, %v4016
      %v4018 = vpop.f32.mrf.mxu0
      %4019 = vmatprep.mubr.f32.mxu0 0.0
      %v4020 = vand.u32 %v2860, 4294901760
      %4021 = vmatmul.mubr.f32.gmra.mxu0 %v4020
      %v4022 = vpop.f32.mrf.mxu0
      %v4023 = vadd.f32 %v3854, %v4022
      %v4024 = vpop.f32.mrf.mxu0
      %4025 = vmatprep.mubr.f32.mxu0 0.0
      %v4026 = vand.u32 %v2863, 4294901760
      %4027 = vmatmul.mubr.f32.gmra.mxu0 %v4026
      %v4028 = vpop.f32.mrf.mxu0
      %v4029 = vadd.f32 %v3860, %v4028
      %v4030 = vpop.f32.mrf.mxu0
      %4031 = vmatprep.mubr.f32.mxu0 0.0
      %v4032 = vand.u32 %v2866, 4294901760
      %4033 = vmatmul.mubr.f32.gmra.mxu0 %v4032
      %v4034 = vpop.f32.mrf.mxu0
      %v4035 = vadd.f32 %v3866, %v4034
      %v4036 = vpop.f32.mrf.mxu0
      %4037 = vmatprep.mubr.f32.mxu0 0.0
      %v4038 = vand.u32 %v2869, 4294901760
      %4039 = vmatmul.mubr.f32.gmra.mxu0 %v4038
      %v4040 = vpop.f32.mrf.mxu0
      %v4041 = vadd.f32 %v3872, %v4040
      %v4042 = vpop.f32.mrf.mxu0
      %4043 = vmatprep.mubr.f32.mxu0 0.0
      %v4044 = vand.u32 %v2872, 4294901760
      %4045 = vmatmul.mubr.f32.gmra.mxu0 %v4044
      %v4046 = vpop.f32.mrf.mxu0
      %v4047 = vadd.f32 %v3878, %v4046
      %v4048 = vpop.f32.mrf.mxu0
      %4049 = vmatprep.mubr.f32.mxu0 0.0
      %v4050 = vand.u32 %v2875, 4294901760
      %4051 = vmatmul.mubr.f32.gmra.mxu0 %v4050
      %v4052 = vpop.f32.mrf.mxu0
      %v4053 = vadd.f32 %v3884, %v4052
      %v4054 = vpop.f32.mrf.mxu0
      %4055 = vmatprep.mubr.f32.mxu0 0.0
      %v4056 = vand.u32 %v2878, 4294901760
      %4057 = vmatmul.mubr.f32.gmra.mxu0 %v4056
      %v4058 = vpop.f32.mrf.mxu0
      %v4059 = vadd.f32 %v3890, %v4058
      %v4060 = vpop.f32.mrf.mxu0
      %4061 = vdwg.mxu0
      %v4062 = vlaneseq
      %v4063 = vshrl.u32 %v4062, 7
      %v4064 = vsub.s32 0, %v4063
      %v4065 = vrot.slane %v1559, %v4064
      %v4066 = vadd.f32 %v3969, %v4065
      %v4067 = vadd.f32 %v3975, %v4065
      %v4068 = vadd.f32 %v3981, %v4065
      %v4069 = vadd.f32 %v3987, %v4065
      %v4070 = vadd.f32 %v3993, %v4065
      %v4071 = vadd.f32 %v3999, %v4065
      %v4072 = vadd.f32 %v4005, %v4065
      %v4073 = vadd.f32 %v4011, %v4065
      %v4074 = vadd.f32 %v4017, %v4065
      %v4075 = vadd.f32 %v4023, %v4065
      %v4076 = vadd.f32 %v4029, %v4065
      %v4077 = vadd.f32 %v4035, %v4065
      %v4078 = vadd.f32 %v4041, %v4065
      %v4079 = vadd.f32 %v4047, %v4065
      %v4080 = vadd.f32 %v4053, %v4065
      %v4081 = vadd.f32 %v4059, %v4065
      %v4082 = vmax.f32 %v4066, 0.0
      %v4083 = vmax.f32 %v4067, 0.0
      %v4084 = vmax.f32 %v4068, 0.0
      %v4085 = vmax.f32 %v4069, 0.0
      %v4086 = vmax.f32 %v4070, 0.0
      %v4087 = vmax.f32 %v4071, 0.0
      %v4088 = vmax.f32 %v4072, 0.0
      %v4089 = vmax.f32 %v4073, 0.0
      %v4090 = vmax.f32 %v4074, 0.0
      %v4091 = vmax.f32 %v4075, 0.0
      %v4092 = vmax.f32 %v4076, 0.0
      %v4093 = vmax.f32 %v4077, 0.0
      %v4094 = vmax.f32 %v4078, 0.0
      %v4095 = vmax.f32 %v4079, 0.0
      %v4096 = vmax.f32 %v4080, 0.0
      %v4097 = vmax.f32 %v4081, 0.0
      %v4098 = vadd.f32 %v364, %v4082
      %v4099 = vadd.f32 %v365, %v4083
      %v4100 = vadd.f32 %v366, %v4084
      %v4101 = vadd.f32 %v367, %v4085
      %v4102 = vadd.f32 %v368, %v4086
      %v4103 = vadd.f32 %v369, %v4087
      %v4104 = vadd.f32 %v370, %v4088
      %v4105 = vadd.f32 %v371, %v4089
      %v4106 = vadd.f32 %v372, %v4090
      %v4107 = vadd.f32 %v373, %v4091
      %v4108 = vadd.f32 %v374, %v4092
      %v4109 = vadd.f32 %v375, %v4093
      %v4110 = vadd.f32 %v376, %v4094
      %v4111 = vadd.f32 %v377, %v4095
      %v4112 = vadd.f32 %v378, %v4096
      %v4113 = vadd.f32 %v379, %v4097
      %v4114 = vld [vmem:[%s5 + $0x58] sm:$0xff]
      %v4115 = vld [vmem:[%s5 + $0x60] sm:$0xff]
      %v4116 = vld [vmem:[%s5 + $0x68] sm:$0xff]
      %v4117 = vld [vmem:[%s5 + $0x70] sm:$0xff]
      %v4118 = vld [vmem:[%s5 + $0x78] sm:$0xff]
      %v4119 = vld [vmem:[%s5 + $0x80] sm:$0xff]
      %v4120 = vld [vmem:[%s5 + $0x88] sm:$0xff]
      %v4121 = vld [vmem:[%s5 + $0x90] sm:$0xff]
      %v4122 = vld [vmem:[%s5 + $0x98] sm:$0x1]
      %4123 = vmatprep.subr.mxu0 0.0
      %v4124 = vand.u32 %v4113, 4294901760
      %4125 = vmatpush1.msra.mxu0 %v4124
      %4126 = vmatprep.subr.mxu0 0.0
      %v4127 = vand.u32 %v4112, 4294901760
      %4128 = vmatpush1.msra.mxu0 %v4127
      %4129 = vmatprep.subr.mxu0 0.0
      %v4130 = vand.u32 %v4111, 4294901760
      %4131 = vmatpush1.msra.mxu0 %v4130
      %4132 = vmatprep.subr.mxu0 0.0
      %v4133 = vand.u32 %v4110, 4294901760
      %4134 = vmatpush1.msra.mxu0 %v4133
      %4135 = vmatprep.subr.mxu0 0.0
      %v4136 = vand.u32 %v4109, 4294901760
      %4137 = vmatpush1.msra.mxu0 %v4136
      %4138 = vmatprep.subr.mxu0 0.0
      %v4139 = vand.u32 %v4108, 4294901760
      %4140 = vmatpush1.msra.mxu0 %v4139
      %4141 = vmatprep.subr.mxu0 0.0
      %v4142 = vand.u32 %v4107, 4294901760
      %4143 = vmatpush1.msra.mxu0 %v4142
      %4144 = vmatprep.subr.mxu0 0.0
      %v4145 = vand.u32 %v4106, 4294901760
      %4146 = vmatpush1.msra.mxu0 %v4145
      %4147 = vmatprep.subr.mxu0 0.0
      %v4148 = vand.u32 %v4105, 4294901760
      %4149 = vmatpush1.msra.mxu0 %v4148
      %4150 = vmatprep.subr.mxu0 0.0
      %v4151 = vand.u32 %v4104, 4294901760
      %4152 = vmatpush1.msra.mxu0 %v4151
      %4153 = vmatprep.subr.mxu0 0.0
      %v4154 = vand.u32 %v4103, 4294901760
      %4155 = vmatpush1.msra.mxu0 %v4154
      %4156 = vmatprep.subr.mxu0 0.0
      %v4157 = vand.u32 %v4102, 4294901760
      %4158 = vmatpush1.msra.mxu0 %v4157
      %4159 = vmatprep.subr.mxu0 0.0
      %v4160 = vand.u32 %v4101, 4294901760
      %4161 = vmatpush1.msra.mxu0 %v4160
      %4162 = vmatprep.subr.mxu0 0.0
      %v4163 = vand.u32 %v4100, 4294901760
      %4164 = vmatpush1.msra.mxu0 %v4163
      %4165 = vmatprep.subr.mxu0 0.0
      %v4166 = vand.u32 %v4099, 4294901760
      %4167 = vmatpush1.msra.mxu0 %v4166
      %4168 = vmatprep.subr.mxu0 0.0
      %v4169 = vand.u32 %v4098, 4294901760
      %4170 = vmatpush1.msra.mxu0 %v4169
      %4171 = vmatprep.subr.mxu0 0.0
      %4172 = vmatpush2.msra.mxu0 0.0
      %4173 = vmatprep.subr.mxu0 0.0
      %4174 = vmatpush2.msra.mxu0 0.0
      %4175 = vmatprep.subr.mxu0 0.0
      %4176 = vmatpush2.msra.mxu0 0.0
      %4177 = vmatprep.subr.mxu0 0.0
      %4178 = vmatpush2.msra.mxu0 0.0
      %4179 = vmatprep.subr.mxu0 0.0
      %4180 = vmatpush2.msra.mxu0 0.0
      %4181 = vmatprep.subr.mxu0 0.0
      %4182 = vmatpush2.msra.mxu0 0.0
      %4183 = vmatprep.subr.mxu0 0.0
      %4184 = vmatpush2.msra.mxu0 0.0
      %4185 = vmatprep.subr.mxu0 0.0
      %4186 = vmatpush2.msra.mxu0 0.0
      %4187 = vmatprep.subr.mxu0 0.0
      %4188 = vmatpush2.msra.mxu0 0.0
      %4189 = vmatprep.subr.mxu0 0.0
      %4190 = vmatpush2.msra.mxu0 0.0
      %4191 = vmatprep.subr.mxu0 0.0
      %4192 = vmatpush2.msra.mxu0 0.0
      %4193 = vmatprep.subr.mxu0 0.0
      %4194 = vmatpush2.msra.mxu0 0.0
      %4195 = vmatprep.subr.mxu0 0.0
      %4196 = vmatpush2.msra.mxu0 0.0
      %4197 = vmatprep.subr.mxu0 0.0
      %4198 = vmatpush2.msra.mxu0 0.0
      %4199 = vmatprep.subr.mxu0 0.0
      %4200 = vmatpush2.msra.mxu0 0.0
      %4201 = vmatprep.subr.mxu0 0.0
      %4202 = vmatpush2.msra.mxu0 0.0
      %4203 = vmatprep.mubr.f32.mxu0 0.0
      %v4204 = vsub.f32 %v348, %v348
      %v4205 = vand.u32 %v4204, 4294901760
      %v4206 = vsub.f32 %v4204, %v4205
      %v4207 = vand.u32 %v4206, 4294901760
      %4208 = vmatmul.mubr.f32.gmra.mxu0 %v4207
      %v4209 = vpop.f32.mrf.mxu0
      %v4210 = vadd.f32 0.0, %v4209
      %v4211 = vpop.f32.mrf.mxu0
      %4212 = vmatprep.mubr.f32.mxu0 0.0
      %v4213 = vsub.f32 %v349, %v349
      %v4214 = vand.u32 %v4213, 4294901760
      %v4215 = vsub.f32 %v4213, %v4214
      %v4216 = vand.u32 %v4215, 4294901760
      %4217 = vmatmul.mubr.f32.gmra.mxu0 %v4216
      %v4218 = vpop.f32.mrf.mxu0
      %v4219 = vadd.f32 0.0, %v4218
      %v4220 = vpop.f32.mrf.mxu0
      %4221 = vmatprep.mubr.f32.mxu0 0.0
      %v4222 = vsub.f32 %v350, %v350
      %v4223 = vand.u32 %v4222, 4294901760
      %v4224 = vsub.f32 %v4222, %v4223
      %v4225 = vand.u32 %v4224, 4294901760
      %4226 = vmatmul.mubr.f32.gmra.mxu0 %v4225
      %v4227 = vpop.f32.mrf.mxu0
      %v4228 = vadd.f32 0.0, %v4227
      %v4229 = vpop.f32.mrf.mxu0
      %4230 = vmatprep.mubr.f32.mxu0 0.0
      %v4231 = vsub.f32 %v351, %v351
      %v4232 = vand.u32 %v4231, 4294901760
      %v4233 = vsub.f32 %v4231, %v4232
      %v4234 = vand.u32 %v4233, 4294901760
      %4235 = vmatmul.mubr.f32.gmra.mxu0 %v4234
      %v4236 = vpop.f32.mrf.mxu0
      %v4237 = vadd.f32 0.0, %v4236
      %v4238 = vpop.f32.mrf.mxu0
      %4239 = vmatprep.mubr.f32.mxu0 0.0
      %v4240 = vsub.f32 %v352, %v352
      %v4241 = vand.u32 %v4240, 4294901760
      %v4242 = vsub.f32 %v4240, %v4241
      %v4243 = vand.u32 %v4242, 4294901760
      %4244 = vmatmul.mubr.f32.gmra.mxu0 %v4243
      %v4245 = vpop.f32.mrf.mxu0
      %v4246 = vadd.f32 0.0, %v4245
      %v4247 = vpop.f32.mrf.mxu0
      %4248 = vmatprep.mubr.f32.mxu0 0.0
      %v4249 = vsub.f32 %v353, %v353
      %v4250 = vand.u32 %v4249, 4294901760
      %v4251 = vsub.f32 %v4249, %v4250
      %v4252 = vand.u32 %v4251, 4294901760
      %4253 = vmatmul.mubr.f32.gmra.mxu0 %v4252
      %v4254 = vpop.f32.mrf.mxu0
      %v4255 = vadd.f32 0.0, %v4254
      %v4256 = vpop.f32.mrf.mxu0
      %4257 = vmatprep.mubr.f32.mxu0 0.0
      %v4258 = vsub.f32 %v354, %v354
      %v4259 = vand.u32 %v4258, 4294901760
      %v4260 = vsub.f32 %v4258, %v4259
      %v4261 = vand.u32 %v4260, 4294901760
      %4262 = vmatmul.mubr.f32.gmra.mxu0 %v4261
      %v4263 = vpop.f32.mrf.mxu0
      %v4264 = vadd.f32 0.0, %v4263
      %v4265 = vpop.f32.mrf.mxu0
      %4266 = vmatprep.mubr.f32.mxu0 0.0
      %v4267 = vsub.f32 %v355, %v355
      %v4268 = vand.u32 %v4267, 4294901760
      %v4269 = vsub.f32 %v4267, %v4268
      %v4270 = vand.u32 %v4269, 4294901760
      %4271 = vmatmul.mubr.f32.gmra.mxu0 %v4270
      %v4272 = vpop.f32.mrf.mxu0
      %v4273 = vadd.f32 0.0, %v4272
      %v4274 = vpop.f32.mrf.mxu0
      %4275 = vmatprep.mubr.f32.mxu0 0.0
      %v4276 = vsub.f32 %v356, %v356
      %v4277 = vand.u32 %v4276, 4294901760
      %v4278 = vsub.f32 %v4276, %v4277
      %v4279 = vand.u32 %v4278, 4294901760
      %4280 = vmatmul.mubr.f32.gmra.mxu0 %v4279
      %v4281 = vpop.f32.mrf.mxu0
      %v4282 = vadd.f32 0.0, %v4281
      %v4283 = vpop.f32.mrf.mxu0
      %4284 = vmatprep.mubr.f32.mxu0 0.0
      %v4285 = vsub.f32 %v357, %v357
      %v4286 = vand.u32 %v4285, 4294901760
      %v4287 = vsub.f32 %v4285, %v4286
      %v4288 = vand.u32 %v4287, 4294901760
      %4289 = vmatmul.mubr.f32.gmra.mxu0 %v4288
      %v4290 = vpop.f32.mrf.mxu0
      %v4291 = vadd.f32 0.0, %v4290
      %v4292 = vpop.f32.mrf.mxu0
      %4293 = vmatprep.mubr.f32.mxu0 0.0
      %v4294 = vsub.f32 %v358, %v358
      %v4295 = vand.u32 %v4294, 4294901760
      %v4296 = vsub.f32 %v4294, %v4295
      %v4297 = vand.u32 %v4296, 4294901760
      %4298 = vmatmul.mubr.f32.gmra.mxu0 %v4297
      %v4299 = vpop.f32.mrf.mxu0
      %v4300 = vadd.f32 0.0, %v4299
      %v4301 = vpop.f32.mrf.mxu0
      %4302 = vmatprep.mubr.f32.mxu0 0.0
      %v4303 = vsub.f32 %v359, %v359
      %v4304 = vand.u32 %v4303, 4294901760
      %v4305 = vsub.f32 %v4303, %v4304
      %v4306 = vand.u32 %v4305, 4294901760
      %4307 = vmatmul.mubr.f32.gmra.mxu0 %v4306
      %v4308 = vpop.f32.mrf.mxu0
      %v4309 = vadd.f32 0.0, %v4308
      %v4310 = vpop.f32.mrf.mxu0
      %4311 = vmatprep.mubr.f32.mxu0 0.0
      %v4312 = vsub.f32 %v360, %v360
      %v4313 = vand.u32 %v4312, 4294901760
      %v4314 = vsub.f32 %v4312, %v4313
      %v4315 = vand.u32 %v4314, 4294901760
      %4316 = vmatmul.mubr.f32.gmra.mxu0 %v4315
      %v4317 = vpop.f32.mrf.mxu0
      %v4318 = vadd.f32 0.0, %v4317
      %v4319 = vpop.f32.mrf.mxu0
      %4320 = vmatprep.mubr.f32.mxu0 0.0
      %v4321 = vsub.f32 %v361, %v361
      %v4322 = vand.u32 %v4321, 4294901760
      %v4323 = vsub.f32 %v4321, %v4322
      %v4324 = vand.u32 %v4323, 4294901760
      %4325 = vmatmul.mubr.f32.gmra.mxu0 %v4324
      %v4326 = vpop.f32.mrf.mxu0
      %v4327 = vadd.f32 0.0, %v4326
      %v4328 = vpop.f32.mrf.mxu0
      %4329 = vmatprep.mubr.f32.mxu0 0.0
      %v4330 = vsub.f32 %v362, %v362
      %v4331 = vand.u32 %v4330, 4294901760
      %v4332 = vsub.f32 %v4330, %v4331
      %v4333 = vand.u32 %v4332, 4294901760
      %4334 = vmatmul.mubr.f32.gmra.mxu0 %v4333
      %v4335 = vpop.f32.mrf.mxu0
      %v4336 = vadd.f32 0.0, %v4335
      %v4337 = vpop.f32.mrf.mxu0
      %4338 = vmatprep.mubr.f32.mxu0 0.0
      %v4339 = vsub.f32 %v363, %v363
      %v4340 = vand.u32 %v4339, 4294901760
      %v4341 = vsub.f32 %v4339, %v4340
      %v4342 = vand.u32 %v4341, 4294901760
      %4343 = vmatmul.mubr.f32.gmra.mxu0 %v4342
      %v4344 = vpop.f32.mrf.mxu0
      %v4345 = vadd.f32 0.0, %v4344
      %v4346 = vpop.f32.mrf.mxu0
      %4347 = vdwg.mxu0
      %4348 = vmatprep.subr.mxu0 0.0
      %v4349 = vand.u32 %v4113, 4294901760
      %v4350 = vsub.f32 %v4113, %v4349
      %v4351 = vand.u32 %v4350, 4294901760
      %v4352 = vsub.f32 %v4350, %v4351
      %v4353 = vand.u32 %v4352, 4294901760
      %4354 = vmatpush1.msra.mxu0 %v4353
      %4355 = vmatprep.subr.mxu0 0.0
      %v4356 = vand.u32 %v4112, 4294901760
      %v4357 = vsub.f32 %v4112, %v4356
      %v4358 = vand.u32 %v4357, 4294901760
      %v4359 = vsub.f32 %v4357, %v4358
      %v4360 = vand.u32 %v4359, 4294901760
      %4361 = vmatpush1.msra.mxu0 %v4360
      %4362 = vmatprep.subr.mxu0 0.0
      %v4363 = vand.u32 %v4111, 4294901760
      %v4364 = vsub.f32 %v4111, %v4363
      %v4365 = vand.u32 %v4364, 4294901760
      %v4366 = vsub.f32 %v4364, %v4365
      %v4367 = vand.u32 %v4366, 4294901760
      %4368 = vmatpush1.msra.mxu0 %v4367
      %4369 = vmatprep.subr.mxu0 0.0
      %v4370 = vand.u32 %v4110, 4294901760
      %v4371 = vsub.f32 %v4110, %v4370
      %v4372 = vand.u32 %v4371, 4294901760
      %v4373 = vsub.f32 %v4371, %v4372
      %v4374 = vand.u32 %v4373, 4294901760
      %4375 = vmatpush1.msra.mxu0 %v4374
      %4376 = vmatprep.subr.mxu0 0.0
      %v4377 = vand.u32 %v4109, 4294901760
      %v4378 = vsub.f32 %v4109, %v4377
      %v4379 = vand.u32 %v4378, 4294901760
      %v4380 = vsub.f32 %v4378, %v4379
      %v4381 = vand.u32 %v4380, 4294901760
      %4382 = vmatpush1.msra.mxu0 %v4381
      %4383 = vmatprep.subr.mxu0 0.0
      %v4384 = vand.u32 %v4108, 4294901760
      %v4385 = vsub.f32 %v4108, %v4384
      %v4386 = vand.u32 %v4385, 4294901760
      %v4387 = vsub.f32 %v4385, %v4386
      %v4388 = vand.u32 %v4387, 4294901760
      %4389 = vmatpush1.msra.mxu0 %v4388
      %4390 = vmatprep.subr.mxu0 0.0
      %v4391 = vand.u32 %v4107, 4294901760
      %v4392 = vsub.f32 %v4107, %v4391
      %v4393 = vand.u32 %v4392, 4294901760
      %v4394 = vsub.f32 %v4392, %v4393
      %v4395 = vand.u32 %v4394, 4294901760
      %4396 = vmatpush1.msra.mxu0 %v4395
      %4397 = vmatprep.subr.mxu0 0.0
      %v4398 = vand.u32 %v4106, 4294901760
      %v4399 = vsub.f32 %v4106, %v4398
      %v4400 = vand.u32 %v4399, 4294901760
      %v4401 = vsub.f32 %v4399, %v4400
      %v4402 = vand.u32 %v4401, 4294901760
      %4403 = vmatpush1.msra.mxu0 %v4402
      %4404 = vmatprep.subr.mxu0 0.0
      %v4405 = vand.u32 %v4105, 4294901760
      %v4406 = vsub.f32 %v4105, %v4405
      %v4407 = vand.u32 %v4406, 4294901760
      %v4408 = vsub.f32 %v4406, %v4407
      %v4409 = vand.u32 %v4408, 4294901760
      %4410 = vmatpush1.msra.mxu0 %v4409
      %4411 = vmatprep.subr.mxu0 0.0
      %v4412 = vand.u32 %v4104, 4294901760
      %v4413 = vsub.f32 %v4104, %v4412
      %v4414 = vand.u32 %v4413, 4294901760
      %v4415 = vsub.f32 %v4413, %v4414
      %v4416 = vand.u32 %v4415, 4294901760
      %4417 = vmatpush1.msra.mxu0 %v4416
      %4418 = vmatprep.subr.mxu0 0.0
      %v4419 = vand.u32 %v4103, 4294901760
      %v4420 = vsub.f32 %v4103, %v4419
      %v4421 = vand.u32 %v4420, 4294901760
      %v4422 = vsub.f32 %v4420, %v4421
      %v4423 = vand.u32 %v4422, 4294901760
      %4424 = vmatpush1.msra.mxu0 %v4423
      %4425 = vmatprep.subr.mxu0 0.0
      %v4426 = vand.u32 %v4102, 4294901760
      %v4427 = vsub.f32 %v4102, %v4426
      %v4428 = vand.u32 %v4427, 4294901760
      %v4429 = vsub.f32 %v4427, %v4428
      %v4430 = vand.u32 %v4429, 4294901760
      %4431 = vmatpush1.msra.mxu0 %v4430
      %4432 = vmatprep.subr.mxu0 0.0
      %v4433 = vand.u32 %v4101, 4294901760
      %v4434 = vsub.f32 %v4101, %v4433
      %v4435 = vand.u32 %v4434, 4294901760
      %v4436 = vsub.f32 %v4434, %v4435
      %v4437 = vand.u32 %v4436, 4294901760
      %4438 = vmatpush1.msra.mxu0 %v4437
      %4439 = vmatprep.subr.mxu0 0.0
      %v4440 = vand.u32 %v4100, 4294901760
      %v4441 = vsub.f32 %v4100, %v4440
      %v4442 = vand.u32 %v4441, 4294901760
      %v4443 = vsub.f32 %v4441, %v4442
      %v4444 = vand.u32 %v4443, 4294901760
      %4445 = vmatpush1.msra.mxu0 %v4444
      %4446 = vmatprep.subr.mxu0 0.0
      %v4447 = vand.u32 %v4099, 4294901760
      %v4448 = vsub.f32 %v4099, %v4447
      %v4449 = vand.u32 %v4448, 4294901760
      %v4450 = vsub.f32 %v4448, %v4449
      %v4451 = vand.u32 %v4450, 4294901760
      %4452 = vmatpush1.msra.mxu0 %v4451
      %4453 = vmatprep.subr.mxu0 0.0
      %v4454 = vand.u32 %v4098, 4294901760
      %v4455 = vsub.f32 %v4098, %v4454
      %v4456 = vand.u32 %v4455, 4294901760
      %v4457 = vsub.f32 %v4455, %v4456
      %v4458 = vand.u32 %v4457, 4294901760
      %4459 = vmatpush1.msra.mxu0 %v4458
      %4460 = vmatprep.subr.mxu0 0.0
      %4461 = vmatpush2.msra.mxu0 0.0
      %4462 = vmatprep.subr.mxu0 0.0
      %4463 = vmatpush2.msra.mxu0 0.0
      %4464 = vmatprep.subr.mxu0 0.0
      %4465 = vmatpush2.msra.mxu0 0.0
      %4466 = vmatprep.subr.mxu0 0.0
      %4467 = vmatpush2.msra.mxu0 0.0
      %4468 = vmatprep.subr.mxu0 0.0
      %4469 = vmatpush2.msra.mxu0 0.0
      %4470 = vmatprep.subr.mxu0 0.0
      %4471 = vmatpush2.msra.mxu0 0.0
      %4472 = vmatprep.subr.mxu0 0.0
      %4473 = vmatpush2.msra.mxu0 0.0
      %4474 = vmatprep.subr.mxu0 0.0
      %4475 = vmatpush2.msra.mxu0 0.0
      %4476 = vmatprep.subr.mxu0 0.0
      %4477 = vmatpush2.msra.mxu0 0.0
      %4478 = vmatprep.subr.mxu0 0.0
      %4479 = vmatpush2.msra.mxu0 0.0
      %4480 = vmatprep.subr.mxu0 0.0
      %4481 = vmatpush2.msra.mxu0 0.0
      %4482 = vmatprep.subr.mxu0 0.0
      %4483 = vmatpush2.msra.mxu0 0.0
      %4484 = vmatprep.subr.mxu0 0.0
      %4485 = vmatpush2.msra.mxu0 0.0
      %4486 = vmatprep.subr.mxu0 0.0
      %4487 = vmatpush2.msra.mxu0 0.0
      %4488 = vmatprep.subr.mxu0 0.0
      %4489 = vmatpush2.msra.mxu0 0.0
      %4490 = vmatprep.subr.mxu0 0.0
      %4491 = vmatpush2.msra.mxu0 0.0
      %4492 = vmatprep.mubr.f32.mxu0 0.0
      %4493 = vmatmul.mubr.f32.gmra.mxu0 %v348
      %v4494 = vpop.f32.mrf.mxu0
      %v4495 = vadd.f32 %v4210, %v4494
      %v4496 = vpop.f32.mrf.mxu0
      %4497 = vmatprep.mubr.f32.mxu0 0.0
      %4498 = vmatmul.mubr.f32.gmra.mxu0 %v349
      %v4499 = vpop.f32.mrf.mxu0
      %v4500 = vadd.f32 %v4219, %v4499
      %v4501 = vpop.f32.mrf.mxu0
      %4502 = vmatprep.mubr.f32.mxu0 0.0
      %4503 = vmatmul.mubr.f32.gmra.mxu0 %v350
      %v4504 = vpop.f32.mrf.mxu0
      %v4505 = vadd.f32 %v4228, %v4504
      %v4506 = vpop.f32.mrf.mxu0
      %4507 = vmatprep.mubr.f32.mxu0 0.0
      %4508 = vmatmul.mubr.f32.gmra.mxu0 %v351
      %v4509 = vpop.f32.mrf.mxu0
      %v4510 = vadd.f32 %v4237, %v4509
      %v4511 = vpop.f32.mrf.mxu0
      %4512 = vmatprep.mubr.f32.mxu0 0.0
      %4513 = vmatmul.mubr.f32.gmra.mxu0 %v352
      %v4514 = vpop.f32.mrf.mxu0
      %v4515 = vadd.f32 %v4246, %v4514
      %v4516 = vpop.f32.mrf.mxu0
      %4517 = vmatprep.mubr.f32.mxu0 0.0
      %4518 = vmatmul.mubr.f32.gmra.mxu0 %v353
      %v4519 = vpop.f32.mrf.mxu0
      %v4520 = vadd.f32 %v4255, %v4519
      %v4521 = vpop.f32.mrf.mxu0
      %4522 = vmatprep.mubr.f32.mxu0 0.0
      %4523 = vmatmul.mubr.f32.gmra.mxu0 %v354
      %v4524 = vpop.f32.mrf.mxu0
      %v4525 = vadd.f32 %v4264, %v4524
      %v4526 = vpop.f32.mrf.mxu0
      %4527 = vmatprep.mubr.f32.mxu0 0.0
      %4528 = vmatmul.mubr.f32.gmra.mxu0 %v355
      %v4529 = vpop.f32.mrf.mxu0
      %v4530 = vadd.f32 %v4273, %v4529
      %v4531 = vpop.f32.mrf.mxu0
      %4532 = vmatprep.mubr.f32.mxu0 0.0
      %4533 = vmatmul.mubr.f32.gmra.mxu0 %v356
      %v4534 = vpop.f32.mrf.mxu0
      %v4535 = vadd.f32 %v4282, %v4534
      %v4536 = vpop.f32.mrf.mxu0
      %4537 = vmatprep.mubr.f32.mxu0 0.0
      %4538 = vmatmul.mubr.f32.gmra.mxu0 %v357
      %v4539 = vpop.f32.mrf.mxu0
      %v4540 = vadd.f32 %v4291, %v4539
      %v4541 = vpop.f32.mrf.mxu0
      %4542 = vmatprep.mubr.f32.mxu0 0.0
      %4543 = vmatmul.mubr.f32.gmra.mxu0 %v358
      %v4544 = vpop.f32.mrf.mxu0
      %v4545 = vadd.f32 %v4300, %v4544
      %v4546 = vpop.f32.mrf.mxu0
      %4547 = vmatprep.mubr.f32.mxu0 0.0
      %4548 = vmatmul.mubr.f32.gmra.mxu0 %v359
      %v4549 = vpop.f32.mrf.mxu0
      %v4550 = vadd.f32 %v4309, %v4549
      %v4551 = vpop.f32.mrf.mxu0
      %4552 = vmatprep.mubr.f32.mxu0 0.0
      %4553 = vmatmul.mubr.f32.gmra.mxu0 %v360
      %v4554 = vpop.f32.mrf.mxu0
      %v4555 = vadd.f32 %v4318, %v4554
      %v4556 = vpop.f32.mrf.mxu0
      %4557 = vmatprep.mubr.f32.mxu0 0.0
      %4558 = vmatmul.mubr.f32.gmra.mxu0 %v361
      %v4559 = vpop.f32.mrf.mxu0
      %v4560 = vadd.f32 %v4327, %v4559
      %v4561 = vpop.f32.mrf.mxu0
      %4562 = vmatprep.mubr.f32.mxu0 0.0
      %4563 = vmatmul.mubr.f32.gmra.mxu0 %v362
      %v4564 = vpop.f32.mrf.mxu0
      %v4565 = vadd.f32 %v4336, %v4564
      %v4566 = vpop.f32.mrf.mxu0
      %4567 = vmatprep.mubr.f32.mxu0 0.0
      %4568 = vmatmul.mubr.f32.gmra.mxu0 %v363
      %v4569 = vpop.f32.mrf.mxu0
      %v4570 = vadd.f32 %v4345, %v4569
      %v4571 = vpop.f32.mrf.mxu0
      %4572 = vdwg.mxu0
      %4573 = vmatprep.subr.mxu0 0.0
      %v4574 = vand.u32 %v4113, 4294901760
      %v4575 = vsub.f32 %v4113, %v4574
      %4576 = vmatpush1.msra.mxu0 %v4575
      %4577 = vmatprep.subr.mxu0 0.0
      %v4578 = vand.u32 %v4112, 4294901760
      %v4579 = vsub.f32 %v4112, %v4578
      %4580 = vmatpush1.msra.mxu0 %v4579
      %4581 = vmatprep.subr.mxu0 0.0
      %v4582 = vand.u32 %v4111, 4294901760
      %v4583 = vsub.f32 %v4111, %v4582
      %4584 = vmatpush1.msra.mxu0 %v4583
      %4585 = vmatprep.subr.mxu0 0.0
      %v4586 = vand.u32 %v4110, 4294901760
      %v4587 = vsub.f32 %v4110, %v4586
      %4588 = vmatpush1.msra.mxu0 %v4587
      %4589 = vmatprep.subr.mxu0 0.0
      %v4590 = vand.u32 %v4109, 4294901760
      %v4591 = vsub.f32 %v4109, %v4590
      %4592 = vmatpush1.msra.mxu0 %v4591
      %4593 = vmatprep.subr.mxu0 0.0
      %v4594 = vand.u32 %v4108, 4294901760
      %v4595 = vsub.f32 %v4108, %v4594
      %4596 = vmatpush1.msra.mxu0 %v4595
      %4597 = vmatprep.subr.mxu0 0.0
      %v4598 = vand.u32 %v4107, 4294901760
      %v4599 = vsub.f32 %v4107, %v4598
      %4600 = vmatpush1.msra.mxu0 %v4599
      %4601 = vmatprep.subr.mxu0 0.0
      %v4602 = vand.u32 %v4106, 4294901760
      %v4603 = vsub.f32 %v4106, %v4602
      %4604 = vmatpush1.msra.mxu0 %v4603
      %4605 = vmatprep.subr.mxu0 0.0
      %v4606 = vand.u32 %v4105, 4294901760
      %v4607 = vsub.f32 %v4105, %v4606
      %4608 = vmatpush1.msra.mxu0 %v4607
      %4609 = vmatprep.subr.mxu0 0.0
      %v4610 = vand.u32 %v4104, 4294901760
      %v4611 = vsub.f32 %v4104, %v4610
      %4612 = vmatpush1.msra.mxu0 %v4611
      %4613 = vmatprep.subr.mxu0 0.0
      %v4614 = vand.u32 %v4103, 4294901760
      %v4615 = vsub.f32 %v4103, %v4614
      %4616 = vmatpush1.msra.mxu0 %v4615
      %4617 = vmatprep.subr.mxu0 0.0
      %v4618 = vand.u32 %v4102, 4294901760
      %v4619 = vsub.f32 %v4102, %v4618
      %4620 = vmatpush1.msra.mxu0 %v4619
      %4621 = vmatprep.subr.mxu0 0.0
      %v4622 = vand.u32 %v4101, 4294901760
      %v4623 = vsub.f32 %v4101, %v4622
      %4624 = vmatpush1.msra.mxu0 %v4623
      %4625 = vmatprep.subr.mxu0 0.0
      %v4626 = vand.u32 %v4100, 4294901760
      %v4627 = vsub.f32 %v4100, %v4626
      %4628 = vmatpush1.msra.mxu0 %v4627
      %4629 = vmatprep.subr.mxu0 0.0
      %v4630 = vand.u32 %v4099, 4294901760
      %v4631 = vsub.f32 %v4099, %v4630
      %4632 = vmatpush1.msra.mxu0 %v4631
      %4633 = vmatprep.subr.mxu0 0.0
      %v4634 = vand.u32 %v4098, 4294901760
      %v4635 = vsub.f32 %v4098, %v4634
      %4636 = vmatpush1.msra.mxu0 %v4635
      %4637 = vmatprep.subr.mxu0 0.0
      %4638 = vmatpush2.msra.mxu0 0.0
      %4639 = vmatprep.subr.mxu0 0.0
      %4640 = vmatpush2.msra.mxu0 0.0
      %4641 = vmatprep.subr.mxu0 0.0
      %4642 = vmatpush2.msra.mxu0 0.0
      %4643 = vmatprep.subr.mxu0 0.0
      %4644 = vmatpush2.msra.mxu0 0.0
      %4645 = vmatprep.subr.mxu0 0.0
      %4646 = vmatpush2.msra.mxu0 0.0
      %4647 = vmatprep.subr.mxu0 0.0
      %4648 = vmatpush2.msra.mxu0 0.0
      %4649 = vmatprep.subr.mxu0 0.0
      %4650 = vmatpush2.msra.mxu0 0.0
      %4651 = vmatprep.subr.mxu0 0.0
      %4652 = vmatpush2.msra.mxu0 0.0
      %4653 = vmatprep.subr.mxu0 0.0
      %4654 = vmatpush2.msra.mxu0 0.0
      %4655 = vmatprep.subr.mxu0 0.0
      %4656 = vmatpush2.msra.mxu0 0.0
      %4657 = vmatprep.subr.mxu0 0.0
      %4658 = vmatpush2.msra.mxu0 0.0
      %4659 = vmatprep.subr.mxu0 0.0
      %4660 = vmatpush2.msra.mxu0 0.0
      %4661 = vmatprep.subr.mxu0 0.0
      %4662 = vmatpush2.msra.mxu0 0.0
      %4663 = vmatprep.subr.mxu0 0.0
      %4664 = vmatpush2.msra.mxu0 0.0
      %4665 = vmatprep.subr.mxu0 0.0
      %4666 = vmatpush2.msra.mxu0 0.0
      %4667 = vmatprep.subr.mxu0 0.0
      %4668 = vmatpush2.msra.mxu0 0.0
      %4669 = vmatprep.mubr.f32.mxu0 0.0
      %v4670 = vsub.f32 %v348, %v348
      %4671 = vmatmul.mubr.f32.gmra.mxu0 %v4670
      %v4672 = vpop.f32.mrf.mxu0
      %v4673 = vadd.f32 %v4495, %v4672
      %v4674 = vpop.f32.mrf.mxu0
      %4675 = vmatprep.mubr.f32.mxu0 0.0
      %v4676 = vsub.f32 %v349, %v349
      %4677 = vmatmul.mubr.f32.gmra.mxu0 %v4676
      %v4678 = vpop.f32.mrf.mxu0
      %v4679 = vadd.f32 %v4500, %v4678
      %v4680 = vpop.f32.mrf.mxu0
      %4681 = vmatprep.mubr.f32.mxu0 0.0
      %v4682 = vsub.f32 %v350, %v350
      %4683 = vmatmul.mubr.f32.gmra.mxu0 %v4682
      %v4684 = vpop.f32.mrf.mxu0
      %v4685 = vadd.f32 %v4505, %v4684
      %v4686 = vpop.f32.mrf.mxu0
      %4687 = vmatprep.mubr.f32.mxu0 0.0
      %v4688 = vsub.f32 %v351, %v351
      %4689 = vmatmul.mubr.f32.gmra.mxu0 %v4688
      %v4690 = vpop.f32.mrf.mxu0
      %v4691 = vadd.f32 %v4510, %v4690
      %v4692 = vpop.f32.mrf.mxu0
      %4693 = vmatprep.mubr.f32.mxu0 0.0
      %v4694 = vsub.f32 %v352, %v352
      %4695 = vmatmul.mubr.f32.gmra.mxu0 %v4694
      %v4696 = vpop.f32.mrf.mxu0
      %v4697 = vadd.f32 %v4515, %v4696
      %v4698 = vpop.f32.mrf.mxu0
      %4699 = vmatprep.mubr.f32.mxu0 0.0
      %v4700 = vsub.f32 %v353, %v353
      %4701 = vmatmul.mubr.f32.gmra.mxu0 %v4700
      %v4702 = vpop.f32.mrf.mxu0
      %v4703 = vadd.f32 %v4520, %v4702
      %v4704 = vpop.f32.mrf.mxu0
      %4705 = vmatprep.mubr.f32.mxu0 0.0
      %v4706 = vsub.f32 %v354, %v354
      %4707 = vmatmul.mubr.f32.gmra.mxu0 %v4706
      %v4708 = vpop.f32.mrf.mxu0
      %v4709 = vadd.f32 %v4525, %v4708
      %v4710 = vpop.f32.mrf.mxu0
      %4711 = vmatprep.mubr.f32.mxu0 0.0
      %v4712 = vsub.f32 %v355, %v355
      %4713 = vmatmul.mubr.f32.gmra.mxu0 %v4712
      %v4714 = vpop.f32.mrf.mxu0
      %v4715 = vadd.f32 %v4530, %v4714
      %v4716 = vpop.f32.mrf.mxu0
      %4717 = vmatprep.mubr.f32.mxu0 0.0
      %v4718 = vsub.f32 %v356, %v356
      %4719 = vmatmul.mubr.f32.gmra.mxu0 %v4718
      %v4720 = vpop.f32.mrf.mxu0
      %v4721 = vadd.f32 %v4535, %v4720
      %v4722 = vpop.f32.mrf.mxu0
      %4723 = vmatprep.mubr.f32.mxu0 0.0
      %v4724 = vsub.f32 %v357, %v357
      %4725 = vmatmul.mubr.f32.gmra.mxu0 %v4724
      %v4726 = vpop.f32.mrf.mxu0
      %v4727 = vadd.f32 %v4540, %v4726
      %v4728 = vpop.f32.mrf.mxu0
      %4729 = vmatprep.mubr.f32.mxu0 0.0
      %v4730 = vsub.f32 %v358, %v358
      %4731 = vmatmul.mubr.f32.gmra.mxu0 %v4730
      %v4732 = vpop.f32.mrf.mxu0
      %v4733 = vadd.f32 %v4545, %v4732
      %v4734 = vpop.f32.mrf.mxu0
      %4735 = vmatprep.mubr.f32.mxu0 0.0
      %v4736 = vsub.f32 %v359, %v359
      %4737 = vmatmul.mubr.f32.gmra.mxu0 %v4736
      %v4738 = vpop.f32.mrf.mxu0
      %v4739 = vadd.f32 %v4550, %v4738
      %v4740 = vpop.f32.mrf.mxu0
      %4741 = vmatprep.mubr.f32.mxu0 0.0
      %v4742 = vsub.f32 %v360, %v360
      %4743 = vmatmul.mubr.f32.gmra.mxu0 %v4742
      %v4744 = vpop.f32.mrf.mxu0
      %v4745 = vadd.f32 %v4555, %v4744
      %v4746 = vpop.f32.mrf.mxu0
      %4747 = vmatprep.mubr.f32.mxu0 0.0
      %v4748 = vsub.f32 %v361, %v361
      %4749 = vmatmul.mubr.f32.gmra.mxu0 %v4748
      %v4750 = vpop.f32.mrf.mxu0
      %v4751 = vadd.f32 %v4560, %v4750
      %v4752 = vpop.f32.mrf.mxu0
      %4753 = vmatprep.mubr.f32.mxu0 0.0
      %v4754 = vsub.f32 %v362, %v362
      %4755 = vmatmul.mubr.f32.gmra.mxu0 %v4754
      %v4756 = vpop.f32.mrf.mxu0
      %v4757 = vadd.f32 %v4565, %v4756
      %v4758 = vpop.f32.mrf.mxu0
      %4759 = vmatprep.mubr.f32.mxu0 0.0
      %v4760 = vsub.f32 %v363, %v363
      %4761 = vmatmul.mubr.f32.gmra.mxu0 %v4760
      %v4762 = vpop.f32.mrf.mxu0
      %v4763 = vadd.f32 %v4570, %v4762
      %v4764 = vpop.f32.mrf.mxu0
      %4765 = vdwg.mxu0
      %4766 = vmatprep.subr.mxu0 0.0
      %v4767 = vand.u32 %v4113, 4294901760
      %4768 = vmatpush1.msra.mxu0 %v4767
      %4769 = vmatprep.subr.mxu0 0.0
      %v4770 = vand.u32 %v4112, 4294901760
      %4771 = vmatpush1.msra.mxu0 %v4770
      %4772 = vmatprep.subr.mxu0 0.0
      %v4773 = vand.u32 %v4111, 4294901760
      %4774 = vmatpush1.msra.mxu0 %v4773
      %4775 = vmatprep.subr.mxu0 0.0
      %v4776 = vand.u32 %v4110, 4294901760
      %4777 = vmatpush1.msra.mxu0 %v4776
      %4778 = vmatprep.subr.mxu0 0.0
      %v4779 = vand.u32 %v4109, 4294901760
      %4780 = vmatpush1.msra.mxu0 %v4779
      %4781 = vmatprep.subr.mxu0 0.0
      %v4782 = vand.u32 %v4108, 4294901760
      %4783 = vmatpush1.msra.mxu0 %v4782
      %4784 = vmatprep.subr.mxu0 0.0
      %v4785 = vand.u32 %v4107, 4294901760
      %4786 = vmatpush1.msra.mxu0 %v4785
      %4787 = vmatprep.subr.mxu0 0.0
      %v4788 = vand.u32 %v4106, 4294901760
      %4789 = vmatpush1.msra.mxu0 %v4788
      %4790 = vmatprep.subr.mxu0 0.0
      %v4791 = vand.u32 %v4105, 4294901760
      %4792 = vmatpush1.msra.mxu0 %v4791
      %4793 = vmatprep.subr.mxu0 0.0
      %v4794 = vand.u32 %v4104, 4294901760
      %4795 = vmatpush1.msra.mxu0 %v4794
      %4796 = vmatprep.subr.mxu0 0.0
      %v4797 = vand.u32 %v4103, 4294901760
      %4798 = vmatpush1.msra.mxu0 %v4797
      %4799 = vmatprep.subr.mxu0 0.0
      %v4800 = vand.u32 %v4102, 4294901760
      %4801 = vmatpush1.msra.mxu0 %v4800
      %4802 = vmatprep.subr.mxu0 0.0
      %v4803 = vand.u32 %v4101, 4294901760
      %4804 = vmatpush1.msra.mxu0 %v4803
      %4805 = vmatprep.subr.mxu0 0.0
      %v4806 = vand.u32 %v4100, 4294901760
      %4807 = vmatpush1.msra.mxu0 %v4806
      %4808 = vmatprep.subr.mxu0 0.0
      %v4809 = vand.u32 %v4099, 4294901760
      %4810 = vmatpush1.msra.mxu0 %v4809
      %4811 = vmatprep.subr.mxu0 0.0
      %v4812 = vand.u32 %v4098, 4294901760
      %4813 = vmatpush1.msra.mxu0 %v4812
      %4814 = vmatprep.subr.mxu0 0.0
      %4815 = vmatpush2.msra.mxu0 0.0
      %4816 = vmatprep.subr.mxu0 0.0
      %4817 = vmatpush2.msra.mxu0 0.0
      %4818 = vmatprep.subr.mxu0 0.0
      %4819 = vmatpush2.msra.mxu0 0.0
      %4820 = vmatprep.subr.mxu0 0.0
      %4821 = vmatpush2.msra.mxu0 0.0
      %4822 = vmatprep.subr.mxu0 0.0
      %4823 = vmatpush2.msra.mxu0 0.0
      %4824 = vmatprep.subr.mxu0 0.0
      %4825 = vmatpush2.msra.mxu0 0.0
      %4826 = vmatprep.subr.mxu0 0.0
      %4827 = vmatpush2.msra.mxu0 0.0
      %4828 = vmatprep.subr.mxu0 0.0
      %4829 = vmatpush2.msra.mxu0 0.0
      %4830 = vmatprep.subr.mxu0 0.0
      %4831 = vmatpush2.msra.mxu0 0.0
      %4832 = vmatprep.subr.mxu0 0.0
      %4833 = vmatpush2.msra.mxu0 0.0
      %4834 = vmatprep.subr.mxu0 0.0
      %4835 = vmatpush2.msra.mxu0 0.0
      %4836 = vmatprep.subr.mxu0 0.0
      %4837 = vmatpush2.msra.mxu0 0.0
      %4838 = vmatprep.subr.mxu0 0.0
      %4839 = vmatpush2.msra.mxu0 0.0
      %4840 = vmatprep.subr.mxu0 0.0
      %4841 = vmatpush2.msra.mxu0 0.0
      %4842 = vmatprep.subr.mxu0 0.0
      %4843 = vmatpush2.msra.mxu0 0.0
      %4844 = vmatprep.subr.mxu0 0.0
      %4845 = vmatpush2.msra.mxu0 0.0
      %4846 = vmatprep.mubr.f32.mxu0 0.0
      %v4847 = vsub.f32 %v348, %v348
      %v4848 = vand.u32 %v4847, 4294901760
      %4849 = vmatmul.mubr.f32.gmra.mxu0 %v4848
      %v4850 = vpop.f32.mrf.mxu0
      %v4851 = vadd.f32 %v4673, %v4850
      %v4852 = vpop.f32.mrf.mxu0
      %4853 = vmatprep.mubr.f32.mxu0 0.0
      %v4854 = vsub.f32 %v349, %v349
      %v4855 = vand.u32 %v4854, 4294901760
      %4856 = vmatmul.mubr.f32.gmra.mxu0 %v4855
      %v4857 = vpop.f32.mrf.mxu0
      %v4858 = vadd.f32 %v4679, %v4857
      %v4859 = vpop.f32.mrf.mxu0
      %4860 = vmatprep.mubr.f32.mxu0 0.0
      %v4861 = vsub.f32 %v350, %v350
      %v4862 = vand.u32 %v4861, 4294901760
      %4863 = vmatmul.mubr.f32.gmra.mxu0 %v4862
      %v4864 = vpop.f32.mrf.mxu0
      %v4865 = vadd.f32 %v4685, %v4864
      %v4866 = vpop.f32.mrf.mxu0
      %4867 = vmatprep.mubr.f32.mxu0 0.0
      %v4868 = vsub.f32 %v351, %v351
      %v4869 = vand.u32 %v4868, 4294901760
      %4870 = vmatmul.mubr.f32.gmra.mxu0 %v4869
      %v4871 = vpop.f32.mrf.mxu0
      %v4872 = vadd.f32 %v4691, %v4871
      %v4873 = vpop.f32.mrf.mxu0
      %4874 = vmatprep.mubr.f32.mxu0 0.0
      %v4875 = vsub.f32 %v352, %v352
      %v4876 = vand.u32 %v4875, 4294901760
      %4877 = vmatmul.mubr.f32.gmra.mxu0 %v4876
      %v4878 = vpop.f32.mrf.mxu0
      %v4879 = vadd.f32 %v4697, %v4878
      %v4880 = vpop.f32.mrf.mxu0
      %4881 = vmatprep.mubr.f32.mxu0 0.0
      %v4882 = vsub.f32 %v353, %v353
      %v4883 = vand.u32 %v4882, 4294901760
      %4884 = vmatmul.mubr.f32.gmra.mxu0 %v4883
      %v4885 = vpop.f32.mrf.mxu0
      %v4886 = vadd.f32 %v4703, %v4885
      %v4887 = vpop.f32.mrf.mxu0
      %4888 = vmatprep.mubr.f32.mxu0 0.0
      %v4889 = vsub.f32 %v354, %v354
      %v4890 = vand.u32 %v4889, 4294901760
      %4891 = vmatmul.mubr.f32.gmra.mxu0 %v4890
      %v4892 = vpop.f32.mrf.mxu0
      %v4893 = vadd.f32 %v4709, %v4892
      %v4894 = vpop.f32.mrf.mxu0
      %4895 = vmatprep.mubr.f32.mxu0 0.0
      %v4896 = vsub.f32 %v355, %v355
      %v4897 = vand.u32 %v4896, 4294901760
      %4898 = vmatmul.mubr.f32.gmra.mxu0 %v4897
      %v4899 = vpop.f32.mrf.mxu0
      %v4900 = vadd.f32 %v4715, %v4899
      %v4901 = vpop.f32.mrf.mxu0
      %4902 = vmatprep.mubr.f32.mxu0 0.0
      %v4903 = vsub.f32 %v356, %v356
      %v4904 = vand.u32 %v4903, 4294901760
      %4905 = vmatmul.mubr.f32.gmra.mxu0 %v4904
      %v4906 = vpop.f32.mrf.mxu0
      %v4907 = vadd.f32 %v4721, %v4906
      %v4908 = vpop.f32.mrf.mxu0
      %4909 = vmatprep.mubr.f32.mxu0 0.0
      %v4910 = vsub.f32 %v357, %v357
      %v4911 = vand.u32 %v4910, 4294901760
      %4912 = vmatmul.mubr.f32.gmra.mxu0 %v4911
      %v4913 = vpop.f32.mrf.mxu0
      %v4914 = vadd.f32 %v4727, %v4913
      %v4915 = vpop.f32.mrf.mxu0
      %4916 = vmatprep.mubr.f32.mxu0 0.0
      %v4917 = vsub.f32 %v358, %v358
      %v4918 = vand.u32 %v4917, 4294901760
      %4919 = vmatmul.mubr.f32.gmra.mxu0 %v4918
      %v4920 = vpop.f32.mrf.mxu0
      %v4921 = vadd.f32 %v4733, %v4920
      %v4922 = vpop.f32.mrf.mxu0
      %4923 = vmatprep.mubr.f32.mxu0 0.0
      %v4924 = vsub.f32 %v359, %v359
      %v4925 = vand.u32 %v4924, 4294901760
      %4926 = vmatmul.mubr.f32.gmra.mxu0 %v4925
      %v4927 = vpop.f32.mrf.mxu0
      %v4928 = vadd.f32 %v4739, %v4927
      %v4929 = vpop.f32.mrf.mxu0
      %4930 = vmatprep.mubr.f32.mxu0 0.0
      %v4931 = vsub.f32 %v360, %v360
      %v4932 = vand.u32 %v4931, 4294901760
      %4933 = vmatmul.mubr.f32.gmra.mxu0 %v4932
      %v4934 = vpop.f32.mrf.mxu0
      %v4935 = vadd.f32 %v4745, %v4934
      %v4936 = vpop.f32.mrf.mxu0
      %4937 = vmatprep.mubr.f32.mxu0 0.0
      %v4938 = vsub.f32 %v361, %v361
      %v4939 = vand.u32 %v4938, 4294901760
      %4940 = vmatmul.mubr.f32.gmra.mxu0 %v4939
      %v4941 = vpop.f32.mrf.mxu0
      %v4942 = vadd.f32 %v4751, %v4941
      %v4943 = vpop.f32.mrf.mxu0
      %4944 = vmatprep.mubr.f32.mxu0 0.0
      %v4945 = vsub.f32 %v362, %v362
      %v4946 = vand.u32 %v4945, 4294901760
      %4947 = vmatmul.mubr.f32.gmra.mxu0 %v4946
      %v4948 = vpop.f32.mrf.mxu0
      %v4949 = vadd.f32 %v4757, %v4948
      %v4950 = vpop.f32.mrf.mxu0
      %4951 = vmatprep.mubr.f32.mxu0 0.0
      %v4952 = vsub.f32 %v363, %v363
      %v4953 = vand.u32 %v4952, 4294901760
      %4954 = vmatmul.mubr.f32.gmra.mxu0 %v4953
      %v4955 = vpop.f32.mrf.mxu0
      %v4956 = vadd.f32 %v4763, %v4955
      %v4957 = vpop.f32.mrf.mxu0
      %4958 = vdwg.mxu0
      %4959 = vmatprep.subr.mxu0 0.0
      %v4960 = vand.u32 %v4113, 4294901760
      %v4961 = vsub.f32 %v4113, %v4960
      %v4962 = vand.u32 %v4961, 4294901760
      %4963 = vmatpush1.msra.mxu0 %v4962
      %4964 = vmatprep.subr.mxu0 0.0
      %v4965 = vand.u32 %v4112, 4294901760
      %v4966 = vsub.f32 %v4112, %v4965
      %v4967 = vand.u32 %v4966, 4294901760
      %4968 = vmatpush1.msra.mxu0 %v4967
      %4969 = vmatprep.subr.mxu0 0.0
      %v4970 = vand.u32 %v4111, 4294901760
      %v4971 = vsub.f32 %v4111, %v4970
      %v4972 = vand.u32 %v4971, 4294901760
      %4973 = vmatpush1.msra.mxu0 %v4972
      %4974 = vmatprep.subr.mxu0 0.0
      %v4975 = vand.u32 %v4110, 4294901760
      %v4976 = vsub.f32 %v4110, %v4975
      %v4977 = vand.u32 %v4976, 4294901760
      %4978 = vmatpush1.msra.mxu0 %v4977
      %4979 = vmatprep.subr.mxu0 0.0
      %v4980 = vand.u32 %v4109, 4294901760
      %v4981 = vsub.f32 %v4109, %v4980
      %v4982 = vand.u32 %v4981, 4294901760
      %4983 = vmatpush1.msra.mxu0 %v4982
      %4984 = vmatprep.subr.mxu0 0.0
      %v4985 = vand.u32 %v4108, 4294901760
      %v4986 = vsub.f32 %v4108, %v4985
      %v4987 = vand.u32 %v4986, 4294901760
      %4988 = vmatpush1.msra.mxu0 %v4987
      %4989 = vmatprep.subr.mxu0 0.0
      %v4990 = vand.u32 %v4107, 4294901760
      %v4991 = vsub.f32 %v4107, %v4990
      %v4992 = vand.u32 %v4991, 4294901760
      %4993 = vmatpush1.msra.mxu0 %v4992
      %4994 = vmatprep.subr.mxu0 0.0
      %v4995 = vand.u32 %v4106, 4294901760
      %v4996 = vsub.f32 %v4106, %v4995
      %v4997 = vand.u32 %v4996, 4294901760
      %4998 = vmatpush1.msra.mxu0 %v4997
      %4999 = vmatprep.subr.mxu0 0.0
      %v5000 = vand.u32 %v4105, 4294901760
      %v5001 = vsub.f32 %v4105, %v5000
      %v5002 = vand.u32 %v5001, 4294901760
      %5003 = vmatpush1.msra.mxu0 %v5002
      %5004 = vmatprep.subr.mxu0 0.0
      %v5005 = vand.u32 %v4104, 4294901760
      %v5006 = vsub.f32 %v4104, %v5005
      %v5007 = vand.u32 %v5006, 4294901760
      %5008 = vmatpush1.msra.mxu0 %v5007
      %5009 = vmatprep.subr.mxu0 0.0
      %v5010 = vand.u32 %v4103, 4294901760
      %v5011 = vsub.f32 %v4103, %v5010
      %v5012 = vand.u32 %v5011, 4294901760
      %5013 = vmatpush1.msra.mxu0 %v5012
      %5014 = vmatprep.subr.mxu0 0.0
      %v5015 = vand.u32 %v4102, 4294901760
      %v5016 = vsub.f32 %v4102, %v5015
      %v5017 = vand.u32 %v5016, 4294901760
      %5018 = vmatpush1.msra.mxu0 %v5017
      %5019 = vmatprep.subr.mxu0 0.0
      %v5020 = vand.u32 %v4101, 4294901760
      %v5021 = vsub.f32 %v4101, %v5020
      %v5022 = vand.u32 %v5021, 4294901760
      %5023 = vmatpush1.msra.mxu0 %v5022
      %5024 = vmatprep.subr.mxu0 0.0
      %v5025 = vand.u32 %v4100, 4294901760
      %v5026 = vsub.f32 %v4100, %v5025
      %v5027 = vand.u32 %v5026, 4294901760
      %5028 = vmatpush1.msra.mxu0 %v5027
      %5029 = vmatprep.subr.mxu0 0.0
      %v5030 = vand.u32 %v4099, 4294901760
      %v5031 = vsub.f32 %v4099, %v5030
      %v5032 = vand.u32 %v5031, 4294901760
      %5033 = vmatpush1.msra.mxu0 %v5032
      %5034 = vmatprep.subr.mxu0 0.0
      %v5035 = vand.u32 %v4098, 4294901760
      %v5036 = vsub.f32 %v4098, %v5035
      %v5037 = vand.u32 %v5036, 4294901760
      %5038 = vmatpush1.msra.mxu0 %v5037
      %5039 = vmatprep.subr.mxu0 0.0
      %5040 = vmatpush2.msra.mxu0 0.0
      %5041 = vmatprep.subr.mxu0 0.0
      %5042 = vmatpush2.msra.mxu0 0.0
      %5043 = vmatprep.subr.mxu0 0.0
      %5044 = vmatpush2.msra.mxu0 0.0
      %5045 = vmatprep.subr.mxu0 0.0
      %5046 = vmatpush2.msra.mxu0 0.0
      %5047 = vmatprep.subr.mxu0 0.0
      %5048 = vmatpush2.msra.mxu0 0.0
      %5049 = vmatprep.subr.mxu0 0.0
      %5050 = vmatpush2.msra.mxu0 0.0
      %5051 = vmatprep.subr.mxu0 0.0
      %5052 = vmatpush2.msra.mxu0 0.0
      %5053 = vmatprep.subr.mxu0 0.0
      %5054 = vmatpush2.msra.mxu0 0.0
      %5055 = vmatprep.subr.mxu0 0.0
      %5056 = vmatpush2.msra.mxu0 0.0
      %5057 = vmatprep.subr.mxu0 0.0
      %5058 = vmatpush2.msra.mxu0 0.0
      %5059 = vmatprep.subr.mxu0 0.0
      %5060 = vmatpush2.msra.mxu0 0.0
      %5061 = vmatprep.subr.mxu0 0.0
      %5062 = vmatpush2.msra.mxu0 0.0
      %5063 = vmatprep.subr.mxu0 0.0
      %5064 = vmatpush2.msra.mxu0 0.0
      %5065 = vmatprep.subr.mxu0 0.0
      %5066 = vmatpush2.msra.mxu0 0.0
      %5067 = vmatprep.subr.mxu0 0.0
      %5068 = vmatpush2.msra.mxu0 0.0
      %5069 = vmatprep.subr.mxu0 0.0
      %5070 = vmatpush2.msra.mxu0 0.0
      %5071 = vmatprep.mubr.f32.mxu0 0.0
      %5072 = vmatmul.mubr.f32.gmra.mxu0 %v348
      %v5073 = vpop.f32.mrf.mxu0
      %v5074 = vadd.f32 %v4851, %v5073
      %v5075 = vpop.f32.mrf.mxu0
      %5076 = vmatprep.mubr.f32.mxu0 0.0
      %5077 = vmatmul.mubr.f32.gmra.mxu0 %v349
      %v5078 = vpop.f32.mrf.mxu0
      %v5079 = vadd.f32 %v4858, %v5078
      %v5080 = vpop.f32.mrf.mxu0
      %5081 = vmatprep.mubr.f32.mxu0 0.0
      %5082 = vmatmul.mubr.f32.gmra.mxu0 %v350
      %v5083 = vpop.f32.mrf.mxu0
      %v5084 = vadd.f32 %v4865, %v5083
      %v5085 = vpop.f32.mrf.mxu0
      %5086 = vmatprep.mubr.f32.mxu0 0.0
      %5087 = vmatmul.mubr.f32.gmra.mxu0 %v351
      %v5088 = vpop.f32.mrf.mxu0
      %v5089 = vadd.f32 %v4872, %v5088
      %v5090 = vpop.f32.mrf.mxu0
      %5091 = vmatprep.mubr.f32.mxu0 0.0
      %5092 = vmatmul.mubr.f32.gmra.mxu0 %v352
      %v5093 = vpop.f32.mrf.mxu0
      %v5094 = vadd.f32 %v4879, %v5093
      %v5095 = vpop.f32.mrf.mxu0
      %5096 = vmatprep.mubr.f32.mxu0 0.0
      %5097 = vmatmul.mubr.f32.gmra.mxu0 %v353
      %v5098 = vpop.f32.mrf.mxu0
      %v5099 = vadd.f32 %v4886, %v5098
      %v5100 = vpop.f32.mrf.mxu0
      %5101 = vmatprep.mubr.f32.mxu0 0.0
      %5102 = vmatmul.mubr.f32.gmra.mxu0 %v354
      %v5103 = vpop.f32.mrf.mxu0
      %v5104 = vadd.f32 %v4893, %v5103
      %v5105 = vpop.f32.mrf.mxu0
      %5106 = vmatprep.mubr.f32.mxu0 0.0
      %5107 = vmatmul.mubr.f32.gmra.mxu0 %v355
      %v5108 = vpop.f32.mrf.mxu0
      %v5109 = vadd.f32 %v4900, %v5108
      %v5110 = vpop.f32.mrf.mxu0
      %5111 = vmatprep.mubr.f32.mxu0 0.0
      %5112 = vmatmul.mubr.f32.gmra.mxu0 %v356
      %v5113 = vpop.f32.mrf.mxu0
      %v5114 = vadd.f32 %v4907, %v5113
      %v5115 = vpop.f32.mrf.mxu0
      %5116 = vmatprep.mubr.f32.mxu0 0.0
      %5117 = vmatmul.mubr.f32.gmra.mxu0 %v357
      %v5118 = vpop.f32.mrf.mxu0
      %v5119 = vadd.f32 %v4914, %v5118
      %v5120 = vpop.f32.mrf.mxu0
      %5121 = vmatprep.mubr.f32.mxu0 0.0
      %5122 = vmatmul.mubr.f32.gmra.mxu0 %v358
      %v5123 = vpop.f32.mrf.mxu0
      %v5124 = vadd.f32 %v4921, %v5123
      %v5125 = vpop.f32.mrf.mxu0
      %5126 = vmatprep.mubr.f32.mxu0 0.0
      %5127 = vmatmul.mubr.f32.gmra.mxu0 %v359
      %v5128 = vpop.f32.mrf.mxu0
      %v5129 = vadd.f32 %v4928, %v5128
      %v5130 = vpop.f32.mrf.mxu0
      %5131 = vmatprep.mubr.f32.mxu0 0.0
      %5132 = vmatmul.mubr.f32.gmra.mxu0 %v360
      %v5133 = vpop.f32.mrf.mxu0
      %v5134 = vadd.f32 %v4935, %v5133
      %v5135 = vpop.f32.mrf.mxu0
      %5136 = vmatprep.mubr.f32.mxu0 0.0
      %5137 = vmatmul.mubr.f32.gmra.mxu0 %v361
      %v5138 = vpop.f32.mrf.mxu0
      %v5139 = vadd.f32 %v4942, %v5138
      %v5140 = vpop.f32.mrf.mxu0
      %5141 = vmatprep.mubr.f32.mxu0 0.0
      %5142 = vmatmul.mubr.f32.gmra.mxu0 %v362
      %v5143 = vpop.f32.mrf.mxu0
      %v5144 = vadd.f32 %v4949, %v5143
      %v5145 = vpop.f32.mrf.mxu0
      %5146 = vmatprep.mubr.f32.mxu0 0.0
      %5147 = vmatmul.mubr.f32.gmra.mxu0 %v363
      %v5148 = vpop.f32.mrf.mxu0
      %v5149 = vadd.f32 %v4956, %v5148
      %v5150 = vpop.f32.mrf.mxu0
      %5151 = vdwg.mxu0
      %5152 = vmatprep.subr.mxu0 0.0
      %v5153 = vand.u32 %v4113, 4294901760
      %5154 = vmatpush1.msra.mxu0 %v5153
      %5155 = vmatprep.subr.mxu0 0.0
      %v5156 = vand.u32 %v4112, 4294901760
      %5157 = vmatpush1.msra.mxu0 %v5156
      %5158 = vmatprep.subr.mxu0 0.0
      %v5159 = vand.u32 %v4111, 4294901760
      %5160 = vmatpush1.msra.mxu0 %v5159
      %5161 = vmatprep.subr.mxu0 0.0
      %v5162 = vand.u32 %v4110, 4294901760
      %5163 = vmatpush1.msra.mxu0 %v5162
      %5164 = vmatprep.subr.mxu0 0.0
      %v5165 = vand.u32 %v4109, 4294901760
      %5166 = vmatpush1.msra.mxu0 %v5165
      %5167 = vmatprep.subr.mxu0 0.0
      %v5168 = vand.u32 %v4108, 4294901760
      %5169 = vmatpush1.msra.mxu0 %v5168
      %5170 = vmatprep.subr.mxu0 0.0
      %v5171 = vand.u32 %v4107, 4294901760
      %5172 = vmatpush1.msra.mxu0 %v5171
      %5173 = vmatprep.subr.mxu0 0.0
      %v5174 = vand.u32 %v4106, 4294901760
      %5175 = vmatpush1.msra.mxu0 %v5174
      %5176 = vmatprep.subr.mxu0 0.0
      %v5177 = vand.u32 %v4105, 4294901760
      %5178 = vmatpush1.msra.mxu0 %v5177
      %5179 = vmatprep.subr.mxu0 0.0
      %v5180 = vand.u32 %v4104, 4294901760
      %5181 = vmatpush1.msra.mxu0 %v5180
      %5182 = vmatprep.subr.mxu0 0.0
      %v5183 = vand.u32 %v4103, 4294901760
      %5184 = vmatpush1.msra.mxu0 %v5183
      %5185 = vmatprep.subr.mxu0 0.0
      %v5186 = vand.u32 %v4102, 4294901760
      %5187 = vmatpush1.msra.mxu0 %v5186
      %5188 = vmatprep.subr.mxu0 0.0
      %v5189 = vand.u32 %v4101, 4294901760
      %5190 = vmatpush1.msra.mxu0 %v5189
      %5191 = vmatprep.subr.mxu0 0.0
      %v5192 = vand.u32 %v4100, 4294901760
      %5193 = vmatpush1.msra.mxu0 %v5192
      %5194 = vmatprep.subr.mxu0 0.0
      %v5195 = vand.u32 %v4099, 4294901760
      %5196 = vmatpush1.msra.mxu0 %v5195
      %5197 = vmatprep.subr.mxu0 0.0
      %v5198 = vand.u32 %v4098, 4294901760
      %5199 = vmatpush1.msra.mxu0 %v5198
      %5200 = vmatprep.subr.mxu0 0.0
      %5201 = vmatpush2.msra.mxu0 0.0
      %5202 = vmatprep.subr.mxu0 0.0
      %5203 = vmatpush2.msra.mxu0 0.0
      %5204 = vmatprep.subr.mxu0 0.0
      %5205 = vmatpush2.msra.mxu0 0.0
      %5206 = vmatprep.subr.mxu0 0.0
      %5207 = vmatpush2.msra.mxu0 0.0
      %5208 = vmatprep.subr.mxu0 0.0
      %5209 = vmatpush2.msra.mxu0 0.0
      %5210 = vmatprep.subr.mxu0 0.0
      %5211 = vmatpush2.msra.mxu0 0.0
      %5212 = vmatprep.subr.mxu0 0.0
      %5213 = vmatpush2.msra.mxu0 0.0
      %5214 = vmatprep.subr.mxu0 0.0
      %5215 = vmatpush2.msra.mxu0 0.0
      %5216 = vmatprep.subr.mxu0 0.0
      %5217 = vmatpush2.msra.mxu0 0.0
      %5218 = vmatprep.subr.mxu0 0.0
      %5219 = vmatpush2.msra.mxu0 0.0
      %5220 = vmatprep.subr.mxu0 0.0
      %5221 = vmatpush2.msra.mxu0 0.0
      %5222 = vmatprep.subr.mxu0 0.0
      %5223 = vmatpush2.msra.mxu0 0.0
      %5224 = vmatprep.subr.mxu0 0.0
      %5225 = vmatpush2.msra.mxu0 0.0
      %5226 = vmatprep.subr.mxu0 0.0
      %5227 = vmatpush2.msra.mxu0 0.0
      %5228 = vmatprep.subr.mxu0 0.0
      %5229 = vmatpush2.msra.mxu0 0.0
      %5230 = vmatprep.subr.mxu0 0.0
      %5231 = vmatpush2.msra.mxu0 0.0
      %5232 = vmatprep.mubr.f32.mxu0 0.0
      %5233 = vmatmul.mubr.f32.gmra.mxu0 %v348
      %v5234 = vpop.f32.mrf.mxu0
      %v5235 = vadd.f32 %v5074, %v5234
      %v5236 = vpop.f32.mrf.mxu0
      %5237 = vmatprep.mubr.f32.mxu0 0.0
      %5238 = vmatmul.mubr.f32.gmra.mxu0 %v349
      %v5239 = vpop.f32.mrf.mxu0
      %v5240 = vadd.f32 %v5079, %v5239
      %v5241 = vpop.f32.mrf.mxu0
      %5242 = vmatprep.mubr.f32.mxu0 0.0
      %5243 = vmatmul.mubr.f32.gmra.mxu0 %v350
      %v5244 = vpop.f32.mrf.mxu0
      %v5245 = vadd.f32 %v5084, %v5244
      %v5246 = vpop.f32.mrf.mxu0
      %5247 = vmatprep.mubr.f32.mxu0 0.0
      %5248 = vmatmul.mubr.f32.gmra.mxu0 %v351
      %v5249 = vpop.f32.mrf.mxu0
      %v5250 = vadd.f32 %v5089, %v5249
      %v5251 = vpop.f32.mrf.mxu0
      %5252 = vmatprep.mubr.f32.mxu0 0.0
      %5253 = vmatmul.mubr.f32.gmra.mxu0 %v352
      %v5254 = vpop.f32.mrf.mxu0
      %v5255 = vadd.f32 %v5094, %v5254
      %v5256 = vpop.f32.mrf.mxu0
      %5257 = vmatprep.mubr.f32.mxu0 0.0
      %5258 = vmatmul.mubr.f32.gmra.mxu0 %v353
      %v5259 = vpop.f32.mrf.mxu0
      %v5260 = vadd.f32 %v5099, %v5259
      %v5261 = vpop.f32.mrf.mxu0
      %5262 = vmatprep.mubr.f32.mxu0 0.0
      %5263 = vmatmul.mubr.f32.gmra.mxu0 %v354
      %v5264 = vpop.f32.mrf.mxu0
      %v5265 = vadd.f32 %v5104, %v5264
      %v5266 = vpop.f32.mrf.mxu0
      %5267 = vmatprep.mubr.f32.mxu0 0.0
      %5268 = vmatmul.mubr.f32.gmra.mxu0 %v355
      %v5269 = vpop.f32.mrf.mxu0
      %v5270 = vadd.f32 %v5109, %v5269
      %v5271 = vpop.f32.mrf.mxu0
      %5272 = vmatprep.mubr.f32.mxu0 0.0
      %5273 = vmatmul.mubr.f32.gmra.mxu0 %v356
      %v5274 = vpop.f32.mrf.mxu0
      %v5275 = vadd.f32 %v5114, %v5274
      %v5276 = vpop.f32.mrf.mxu0
      %5277 = vmatprep.mubr.f32.mxu0 0.0
      %5278 = vmatmul.mubr.f32.gmra.mxu0 %v357
      %v5279 = vpop.f32.mrf.mxu0
      %v5280 = vadd.f32 %v5119, %v5279
      %v5281 = vpop.f32.mrf.mxu0
      %5282 = vmatprep.mubr.f32.mxu0 0.0
      %5283 = vmatmul.mubr.f32.gmra.mxu0 %v358
      %v5284 = vpop.f32.mrf.mxu0
      %v5285 = vadd.f32 %v5124, %v5284
      %v5286 = vpop.f32.mrf.mxu0
      %5287 = vmatprep.mubr.f32.mxu0 0.0
      %5288 = vmatmul.mubr.f32.gmra.mxu0 %v359
      %v5289 = vpop.f32.mrf.mxu0
      %v5290 = vadd.f32 %v5129, %v5289
      %v5291 = vpop.f32.mrf.mxu0
      %5292 = vmatprep.mubr.f32.mxu0 0.0
      %5293 = vmatmul.mubr.f32.gmra.mxu0 %v360
      %v5294 = vpop.f32.mrf.mxu0
      %v5295 = vadd.f32 %v5134, %v5294
      %v5296 = vpop.f32.mrf.mxu0
      %5297 = vmatprep.mubr.f32.mxu0 0.0
      %5298 = vmatmul.mubr.f32.gmra.mxu0 %v361
      %v5299 = vpop.f32.mrf.mxu0
      %v5300 = vadd.f32 %v5139, %v5299
      %v5301 = vpop.f32.mrf.mxu0
      %5302 = vmatprep.mubr.f32.mxu0 0.0
      %5303 = vmatmul.mubr.f32.gmra.mxu0 %v362
      %v5304 = vpop.f32.mrf.mxu0
      %v5305 = vadd.f32 %v5144, %v5304
      %v5306 = vpop.f32.mrf.mxu0
      %5307 = vmatprep.mubr.f32.mxu0 0.0
      %5308 = vmatmul.mubr.f32.gmra.mxu0 %v363
      %v5309 = vpop.f32.mrf.mxu0
      %v5310 = vadd.f32 %v5149, %v5309
      %v5311 = vpop.f32.mrf.mxu0
      %5312 = vdwg.mxu0
      %5329 = vrot.lane.b32.xlu0 %v4098, 32
      %v5330 = vpop.permute.xlu0 %5329
      %5331 = vrot.lane.b32.xlu0 %v4099, 32
      %v5332 = vpop.permute.xlu0 %5331
      %5333 = vrot.lane.b32.xlu0 %v4100, 32
      %v5334 = vpop.permute.xlu0 %5333
      %5335 = vrot.lane.b32.xlu0 %v4101, 32
      %v5336 = vpop.permute.xlu0 %5335
      %5337 = vrot.lane.b32.xlu0 %v4102, 32
      %v5338 = vpop.permute.xlu0 %5337
      %5339 = vrot.lane.b32.xlu0 %v4103, 32
      %v5340 = vpop.permute.xlu0 %5339
      %5341 = vrot.lane.b32.xlu0 %v4104, 32
      %v5342 = vpop.permute.xlu0 %5341
      %5343 = vrot.lane.b32.xlu0 %v4105, 32
      %v5344 = vpop.permute.xlu0 %5343
      %5345 = vrot.lane.b32.xlu0 %v4106, 32
      %v5346 = vpop.permute.xlu0 %5345
      %5347 = vrot.lane.b32.xlu0 %v4107, 32
      %v5348 = vpop.permute.xlu0 %5347
      %5349 = vrot.lane.b32.xlu0 %v4108, 32
      %v5350 = vpop.permute.xlu0 %5349
      %5351 = vrot.lane.b32.xlu0 %v4109, 32
      %v5352 = vpop.permute.xlu0 %5351
      %5353 = vrot.lane.b32.xlu0 %v4110, 32
      %v5354 = vpop.permute.xlu0 %5353
      %5355 = vrot.lane.b32.xlu0 %v4111, 32
      %v5356 = vpop.permute.xlu0 %5355
      %5357 = vrot.lane.b32.xlu0 %v4112, 32
      %v5358 = vpop.permute.xlu0 %5357
      %5359 = vrot.lane.b32.xlu0 %v4113, 32
      %v5360 = vpop.permute.xlu0 %5359
      %v5377 = vsel %vm2814, %v5235, %v5330
      %v5378 = vsel %vm2814, %v5240, %v5332
      %v5379 = vsel %vm2814, %v5245, %v5334
      %v5380 = vsel %vm2814, %v5250, %v5336
      %v5381 = vsel %vm2814, %v5255, %v5338
      %v5382 = vsel %vm2814, %v5260, %v5340
      %v5383 = vsel %vm2814, %v5265, %v5342
      %v5384 = vsel %vm2814, %v5270, %v5344
      %v5385 = vsel %vm2814, %v5275, %v5346
      %v5386 = vsel %vm2814, %v5280, %v5348
      %v5387 = vsel %vm2814, %v5285, %v5350
      %v5388 = vsel %vm2814, %v5290, %v5352
      %v5389 = vsel %vm2814, %v5295, %v5354
      %v5390 = vsel %vm2814, %v5300, %v5356
      %v5391 = vsel %vm2814, %v5305, %v5358
      %v5392 = vsel %vm2814, %v5310, %v5360
      %5409 = vrot.lane.b32.xlu0 %v1458, 96
      %v5410 = vpop.permute.xlu0 %5409
      %5411 = vrot.lane.b32.xlu0 %v1464, 96
      %v5412 = vpop.permute.xlu0 %5411
      %5413 = vrot.lane.b32.xlu0 %v1470, 96
      %v5414 = vpop.permute.xlu0 %5413
      %5415 = vrot.lane.b32.xlu0 %v1476, 96
      %v5416 = vpop.permute.xlu0 %5415
      %5417 = vrot.lane.b32.xlu0 %v1482, 96
      %v5418 = vpop.permute.xlu0 %5417
      %5419 = vrot.lane.b32.xlu0 %v1488, 96
      %v5420 = vpop.permute.xlu0 %5419
      %5421 = vrot.lane.b32.xlu0 %v1494, 96
      %v5422 = vpop.permute.xlu0 %5421
      %5423 = vrot.lane.b32.xlu0 %v1500, 96
      %v5424 = vpop.permute.xlu0 %5423
      %5425 = vrot.lane.b32.xlu0 %v1506, 96
      %v5426 = vpop.permute.xlu0 %5425
      %5427 = vrot.lane.b32.xlu0 %v1512, 96
      %v5428 = vpop.permute.xlu0 %5427
      %5429 = vrot.lane.b32.xlu0 %v1518, 96
      %v5430 = vpop.permute.xlu0 %5429
      %5431 = vrot.lane.b32.xlu0 %v1524, 96
      %v5432 = vpop.permute.xlu0 %5431
      %5433 = vrot.lane.b32.xlu0 %v1530, 96
      %v5434 = vpop.permute.xlu0 %5433
      %5435 = vrot.lane.b32.xlu0 %v1536, 96
      %v5436 = vpop.permute.xlu0 %5435
      %5437 = vrot.lane.b32.xlu0 %v1542, 96
      %v5438 = vpop.permute.xlu0 %5437
      %5439 = vrot.lane.b32.xlu0 %v1548, 96
      %v5440 = vpop.permute.xlu0 %5439
      %v5458 = vsel %vm2831, %v5377, 0
      %v5461 = vsel %vm2831, %v5378, 0
      %v5464 = vsel %vm2831, %v5379, 0
      %v5467 = vsel %vm2831, %v5380, 0
      %v5470 = vsel %vm2831, %v5381, 0
      %v5473 = vsel %vm2831, %v5382, 0
      %v5476 = vsel %vm2831, %v5383, 0
      %v5479 = vsel %vm2831, %v5384, 0
      %v5482 = vsel %vm2831, %v5385, 0
      %v5485 = vsel %vm2831, %v5386, 0
      %v5488 = vsel %vm2831, %v5387, 0
      %v5491 = vsel %vm2831, %v5388, 0
      %v5494 = vsel %vm2831, %v5389, 0
      %v5497 = vsel %vm2831, %v5390, 0
      %v5500 = vsel %vm2831, %v5391, 0
      %v5503 = vsel %vm2831, %v5392, 0
      %5505 = vmatprep.subr.mxu0 0.0
      %5506 = vmatpush1.msra.mxu0 0.0
      %5507 = vmatprep.subr.mxu0 0.0
      %5508 = vmatpush1.msra.mxu0 0.0
      %5509 = vmatprep.subr.mxu0 0.0
      %5510 = vmatpush1.msra.mxu0 0.0
      %5511 = vmatprep.subr.mxu0 0.0
      %5512 = vmatpush1.msra.mxu0 0.0
      %5513 = vmatprep.subr.mxu0 0.0
      %5514 = vmatpush1.msra.mxu0 0.0
      %5515 = vmatprep.subr.mxu0 0.0
      %5516 = vmatpush1.msra.mxu0 0.0
      %5517 = vmatprep.subr.mxu0 0.0
      %5518 = vmatpush1.msra.mxu0 0.0
      %5519 = vmatprep.subr.mxu0 0.0
      %5520 = vmatpush1.msra.mxu0 0.0
      %5521 = vmatprep.subr.mxu0 0.0
      %v5522 = vand.u32 %v4121, 4294901760
      %5523 = vmatpush1.msra.mxu0 %v5522
      %5524 = vmatprep.subr.mxu0 0.0
      %v5525 = vand.u32 %v4120, 4294901760
      %5526 = vmatpush1.msra.mxu0 %v5525
      %5527 = vmatprep.subr.mxu0 0.0
      %v5528 = vand.u32 %v4119, 4294901760
      %5529 = vmatpush1.msra.mxu0 %v5528
      %5530 = vmatprep.subr.mxu0 0.0
      %v5531 = vand.u32 %v4118, 4294901760
      %5532 = vmatpush1.msra.mxu0 %v5531
      %5533 = vmatprep.subr.mxu0 0.0
      %v5534 = vand.u32 %v4117, 4294901760
      %5535 = vmatpush1.msra.mxu0 %v5534
      %5536 = vmatprep.subr.mxu0 0.0
      %v5537 = vand.u32 %v4116, 4294901760
      %5538 = vmatpush1.msra.mxu0 %v5537
      %5539 = vmatprep.subr.mxu0 0.0
      %v5540 = vand.u32 %v4115, 4294901760
      %5541 = vmatpush1.msra.mxu0 %v5540
      %5542 = vmatprep.subr.mxu0 0.0
      %v5543 = vand.u32 %v4114, 4294901760
      %5544 = vmatpush1.msra.mxu0 %v5543
      %5545 = vmatprep.subr.mxu0 0.0
      %5546 = vmatpush2.msra.mxu0 0.0
      %5547 = vmatprep.subr.mxu0 0.0
      %5548 = vmatpush2.msra.mxu0 0.0
      %5549 = vmatprep.subr.mxu0 0.0
      %5550 = vmatpush2.msra.mxu0 0.0
      %5551 = vmatprep.subr.mxu0 0.0
      %5552 = vmatpush2.msra.mxu0 0.0
      %5553 = vmatprep.subr.mxu0 0.0
      %5554 = vmatpush2.msra.mxu0 0.0
      %5555 = vmatprep.subr.mxu0 0.0
      %5556 = vmatpush2.msra.mxu0 0.0
      %5557 = vmatprep.subr.mxu0 0.0
      %5558 = vmatpush2.msra.mxu0 0.0
      %5559 = vmatprep.subr.mxu0 0.0
      %5560 = vmatpush2.msra.mxu0 0.0
      %5561 = vmatprep.subr.mxu0 0.0
      %5562 = vmatpush2.msra.mxu0 0.0
      %5563 = vmatprep.subr.mxu0 0.0
      %5564 = vmatpush2.msra.mxu0 0.0
      %5565 = vmatprep.subr.mxu0 0.0
      %5566 = vmatpush2.msra.mxu0 0.0
      %5567 = vmatprep.subr.mxu0 0.0
      %5568 = vmatpush2.msra.mxu0 0.0
      %5569 = vmatprep.subr.mxu0 0.0
      %5570 = vmatpush2.msra.mxu0 0.0
      %5571 = vmatprep.subr.mxu0 0.0
      %5572 = vmatpush2.msra.mxu0 0.0
      %5573 = vmatprep.subr.mxu0 0.0
      %5574 = vmatpush2.msra.mxu0 0.0
      %5575 = vmatprep.subr.mxu0 0.0
      %5576 = vmatpush2.msra.mxu0 0.0
      %5577 = vmatprep.mubr.f32.mxu0 0.0
      %v5578 = vand.u32 %v5458, 4294901760
      %v5579 = vsub.f32 %v5458, %v5578
      %v5580 = vand.u32 %v5579, 4294901760
      %v5581 = vsub.f32 %v5579, %v5580
      %v5582 = vand.u32 %v5581, 4294901760
      %5583 = vmatmul.mubr.f32.gmra.mxu0 %v5582
      %v5584 = vpop.f32.mrf.mxu0
      %v5585 = vadd.f32 %v5410, %v5584
      %v5586 = vpop.f32.mrf.mxu0
      %5587 = vmatprep.mubr.f32.mxu0 0.0
      %v5588 = vand.u32 %v5461, 4294901760
      %v5589 = vsub.f32 %v5461, %v5588
      %v5590 = vand.u32 %v5589, 4294901760
      %v5591 = vsub.f32 %v5589, %v5590
      %v5592 = vand.u32 %v5591, 4294901760
      %5593 = vmatmul.mubr.f32.gmra.mxu0 %v5592
      %v5594 = vpop.f32.mrf.mxu0
      %v5595 = vadd.f32 %v5412, %v5594
      %v5596 = vpop.f32.mrf.mxu0
      %5597 = vmatprep.mubr.f32.mxu0 0.0
      %v5598 = vand.u32 %v5464, 4294901760
      %v5599 = vsub.f32 %v5464, %v5598
      %v5600 = vand.u32 %v5599, 4294901760
      %v5601 = vsub.f32 %v5599, %v5600
      %v5602 = vand.u32 %v5601, 4294901760
      %5603 = vmatmul.mubr.f32.gmra.mxu0 %v5602
      %v5604 = vpop.f32.mrf.mxu0
      %v5605 = vadd.f32 %v5414, %v5604
      %v5606 = vpop.f32.mrf.mxu0
      %5607 = vmatprep.mubr.f32.mxu0 0.0
      %v5608 = vand.u32 %v5467, 4294901760
      %v5609 = vsub.f32 %v5467, %v5608
      %v5610 = vand.u32 %v5609, 4294901760
      %v5611 = vsub.f32 %v5609, %v5610
      %v5612 = vand.u32 %v5611, 4294901760
      %5613 = vmatmul.mubr.f32.gmra.mxu0 %v5612
      %v5614 = vpop.f32.mrf.mxu0
      %v5615 = vadd.f32 %v5416, %v5614
      %v5616 = vpop.f32.mrf.mxu0
      %5617 = vmatprep.mubr.f32.mxu0 0.0
      %v5618 = vand.u32 %v5470, 4294901760
      %v5619 = vsub.f32 %v5470, %v5618
      %v5620 = vand.u32 %v5619, 4294901760
      %v5621 = vsub.f32 %v5619, %v5620
      %v5622 = vand.u32 %v5621, 4294901760
      %5623 = vmatmul.mubr.f32.gmra.mxu0 %v5622
      %v5624 = vpop.f32.mrf.mxu0
      %v5625 = vadd.f32 %v5418, %v5624
      %v5626 = vpop.f32.mrf.mxu0
      %5627 = vmatprep.mubr.f32.mxu0 0.0
      %v5628 = vand.u32 %v5473, 4294901760
      %v5629 = vsub.f32 %v5473, %v5628
      %v5630 = vand.u32 %v5629, 4294901760
      %v5631 = vsub.f32 %v5629, %v5630
      %v5632 = vand.u32 %v5631, 4294901760
      %5633 = vmatmul.mubr.f32.gmra.mxu0 %v5632
      %v5634 = vpop.f32.mrf.mxu0
      %v5635 = vadd.f32 %v5420, %v5634
      %v5636 = vpop.f32.mrf.mxu0
      %5637 = vmatprep.mubr.f32.mxu0 0.0
      %v5638 = vand.u32 %v5476, 4294901760
      %v5639 = vsub.f32 %v5476, %v5638
      %v5640 = vand.u32 %v5639, 4294901760
      %v5641 = vsub.f32 %v5639, %v5640
      %v5642 = vand.u32 %v5641, 4294901760
      %5643 = vmatmul.mubr.f32.gmra.mxu0 %v5642
      %v5644 = vpop.f32.mrf.mxu0
      %v5645 = vadd.f32 %v5422, %v5644
      %v5646 = vpop.f32.mrf.mxu0
      %5647 = vmatprep.mubr.f32.mxu0 0.0
      %v5648 = vand.u32 %v5479, 4294901760
      %v5649 = vsub.f32 %v5479, %v5648
      %v5650 = vand.u32 %v5649, 4294901760
      %v5651 = vsub.f32 %v5649, %v5650
      %v5652 = vand.u32 %v5651, 4294901760
      %5653 = vmatmul.mubr.f32.gmra.mxu0 %v5652
      %v5654 = vpop.f32.mrf.mxu0
      %v5655 = vadd.f32 %v5424, %v5654
      %v5656 = vpop.f32.mrf.mxu0
      %5657 = vmatprep.mubr.f32.mxu0 0.0
      %v5658 = vand.u32 %v5482, 4294901760
      %v5659 = vsub.f32 %v5482, %v5658
      %v5660 = vand.u32 %v5659, 4294901760
      %v5661 = vsub.f32 %v5659, %v5660
      %v5662 = vand.u32 %v5661, 4294901760
      %5663 = vmatmul.mubr.f32.gmra.mxu0 %v5662
      %v5664 = vpop.f32.mrf.mxu0
      %v5665 = vadd.f32 %v5426, %v5664
      %v5666 = vpop.f32.mrf.mxu0
      %5667 = vmatprep.mubr.f32.mxu0 0.0
      %v5668 = vand.u32 %v5485, 4294901760
      %v5669 = vsub.f32 %v5485, %v5668
      %v5670 = vand.u32 %v5669, 4294901760
      %v5671 = vsub.f32 %v5669, %v5670
      %v5672 = vand.u32 %v5671, 4294901760
      %5673 = vmatmul.mubr.f32.gmra.mxu0 %v5672
      %v5674 = vpop.f32.mrf.mxu0
      %v5675 = vadd.f32 %v5428, %v5674
      %v5676 = vpop.f32.mrf.mxu0
      %5677 = vmatprep.mubr.f32.mxu0 0.0
      %v5678 = vand.u32 %v5488, 4294901760
      %v5679 = vsub.f32 %v5488, %v5678
      %v5680 = vand.u32 %v5679, 4294901760
      %v5681 = vsub.f32 %v5679, %v5680
      %v5682 = vand.u32 %v5681, 4294901760
      %5683 = vmatmul.mubr.f32.gmra.mxu0 %v5682
      %v5684 = vpop.f32.mrf.mxu0
      %v5685 = vadd.f32 %v5430, %v5684
      %v5686 = vpop.f32.mrf.mxu0
      %5687 = vmatprep.mubr.f32.mxu0 0.0
      %v5688 = vand.u32 %v5491, 4294901760
      %v5689 = vsub.f32 %v5491, %v5688
      %v5690 = vand.u32 %v5689, 4294901760
      %v5691 = vsub.f32 %v5689, %v5690
      %v5692 = vand.u32 %v5691, 4294901760
      %5693 = vmatmul.mubr.f32.gmra.mxu0 %v5692
      %v5694 = vpop.f32.mrf.mxu0
      %v5695 = vadd.f32 %v5432, %v5694
      %v5696 = vpop.f32.mrf.mxu0
      %5697 = vmatprep.mubr.f32.mxu0 0.0
      %v5698 = vand.u32 %v5494, 4294901760
      %v5699 = vsub.f32 %v5494, %v5698
      %v5700 = vand.u32 %v5699, 4294901760
      %v5701 = vsub.f32 %v5699, %v5700
      %v5702 = vand.u32 %v5701, 4294901760
      %5703 = vmatmul.mubr.f32.gmra.mxu0 %v5702
      %v5704 = vpop.f32.mrf.mxu0
      %v5705 = vadd.f32 %v5434, %v5704
      %v5706 = vpop.f32.mrf.mxu0
      %5707 = vmatprep.mubr.f32.mxu0 0.0
      %v5708 = vand.u32 %v5497, 4294901760
      %v5709 = vsub.f32 %v5497, %v5708
      %v5710 = vand.u32 %v5709, 4294901760
      %v5711 = vsub.f32 %v5709, %v5710
      %v5712 = vand.u32 %v5711, 4294901760
      %5713 = vmatmul.mubr.f32.gmra.mxu0 %v5712
      %v5714 = vpop.f32.mrf.mxu0
      %v5715 = vadd.f32 %v5436, %v5714
      %v5716 = vpop.f32.mrf.mxu0
      %5717 = vmatprep.mubr.f32.mxu0 0.0
      %v5718 = vand.u32 %v5500, 4294901760
      %v5719 = vsub.f32 %v5500, %v5718
      %v5720 = vand.u32 %v5719, 4294901760
      %v5721 = vsub.f32 %v5719, %v5720
      %v5722 = vand.u32 %v5721, 4294901760
      %5723 = vmatmul.mubr.f32.gmra.mxu0 %v5722
      %v5724 = vpop.f32.mrf.mxu0
      %v5725 = vadd.f32 %v5438, %v5724
      %v5726 = vpop.f32.mrf.mxu0
      %5727 = vmatprep.mubr.f32.mxu0 0.0
      %v5728 = vand.u32 %v5503, 4294901760
      %v5729 = vsub.f32 %v5503, %v5728
      %v5730 = vand.u32 %v5729, 4294901760
      %v5731 = vsub.f32 %v5729, %v5730
      %v5732 = vand.u32 %v5731, 4294901760
      %5733 = vmatmul.mubr.f32.gmra.mxu0 %v5732
      %v5734 = vpop.f32.mrf.mxu0
      %v5735 = vadd.f32 %v5440, %v5734
      %v5736 = vpop.f32.mrf.mxu0
      %5737 = vdwg.mxu0
      %5738 = vmatprep.subr.mxu0 0.0
      %5739 = vmatpush1.msra.mxu0 0.0
      %5740 = vmatprep.subr.mxu0 0.0
      %5741 = vmatpush1.msra.mxu0 0.0
      %5742 = vmatprep.subr.mxu0 0.0
      %5743 = vmatpush1.msra.mxu0 0.0
      %5744 = vmatprep.subr.mxu0 0.0
      %5745 = vmatpush1.msra.mxu0 0.0
      %5746 = vmatprep.subr.mxu0 0.0
      %5747 = vmatpush1.msra.mxu0 0.0
      %5748 = vmatprep.subr.mxu0 0.0
      %5749 = vmatpush1.msra.mxu0 0.0
      %5750 = vmatprep.subr.mxu0 0.0
      %5751 = vmatpush1.msra.mxu0 0.0
      %5752 = vmatprep.subr.mxu0 0.0
      %5753 = vmatpush1.msra.mxu0 0.0
      %5754 = vmatprep.subr.mxu0 0.0
      %v5755 = vand.u32 %v4121, 4294901760
      %v5756 = vsub.f32 %v4121, %v5755
      %v5757 = vand.u32 %v5756, 4294901760
      %v5758 = vsub.f32 %v5756, %v5757
      %v5759 = vand.u32 %v5758, 4294901760
      %5760 = vmatpush1.msra.mxu0 %v5759
      %5761 = vmatprep.subr.mxu0 0.0
      %v5762 = vand.u32 %v4120, 4294901760
      %v5763 = vsub.f32 %v4120, %v5762
      %v5764 = vand.u32 %v5763, 4294901760
      %v5765 = vsub.f32 %v5763, %v5764
      %v5766 = vand.u32 %v5765, 4294901760
      %5767 = vmatpush1.msra.mxu0 %v5766
      %5768 = vmatprep.subr.mxu0 0.0
      %v5769 = vand.u32 %v4119, 4294901760
      %v5770 = vsub.f32 %v4119, %v5769
      %v5771 = vand.u32 %v5770, 4294901760
      %v5772 = vsub.f32 %v5770, %v5771
      %v5773 = vand.u32 %v5772, 4294901760
      %5774 = vmatpush1.msra.mxu0 %v5773
      %5775 = vmatprep.subr.mxu0 0.0
      %v5776 = vand.u32 %v4118, 4294901760
      %v5777 = vsub.f32 %v4118, %v5776
      %v5778 = vand.u32 %v5777, 4294901760
      %v5779 = vsub.f32 %v5777, %v5778
      %v5780 = vand.u32 %v5779, 4294901760
      %5781 = vmatpush1.msra.mxu0 %v5780
      %5782 = vmatprep.subr.mxu0 0.0
      %v5783 = vand.u32 %v4117, 4294901760
      %v5784 = vsub.f32 %v4117, %v5783
      %v5785 = vand.u32 %v5784, 4294901760
      %v5786 = vsub.f32 %v5784, %v5785
      %v5787 = vand.u32 %v5786, 4294901760
      %5788 = vmatpush1.msra.mxu0 %v5787
      %5789 = vmatprep.subr.mxu0 0.0
      %v5790 = vand.u32 %v4116, 4294901760
      %v5791 = vsub.f32 %v4116, %v5790
      %v5792 = vand.u32 %v5791, 4294901760
      %v5793 = vsub.f32 %v5791, %v5792
      %v5794 = vand.u32 %v5793, 4294901760
      %5795 = vmatpush1.msra.mxu0 %v5794
      %5796 = vmatprep.subr.mxu0 0.0
      %v5797 = vand.u32 %v4115, 4294901760
      %v5798 = vsub.f32 %v4115, %v5797
      %v5799 = vand.u32 %v5798, 4294901760
      %v5800 = vsub.f32 %v5798, %v5799
      %v5801 = vand.u32 %v5800, 4294901760
      %5802 = vmatpush1.msra.mxu0 %v5801
      %5803 = vmatprep.subr.mxu0 0.0
      %v5804 = vand.u32 %v4114, 4294901760
      %v5805 = vsub.f32 %v4114, %v5804
      %v5806 = vand.u32 %v5805, 4294901760
      %v5807 = vsub.f32 %v5805, %v5806
      %v5808 = vand.u32 %v5807, 4294901760
      %5809 = vmatpush1.msra.mxu0 %v5808
      %5810 = vmatprep.subr.mxu0 0.0
      %5811 = vmatpush2.msra.mxu0 0.0
      %5812 = vmatprep.subr.mxu0 0.0
      %5813 = vmatpush2.msra.mxu0 0.0
      %5814 = vmatprep.subr.mxu0 0.0
      %5815 = vmatpush2.msra.mxu0 0.0
      %5816 = vmatprep.subr.mxu0 0.0
      %5817 = vmatpush2.msra.mxu0 0.0
      %5818 = vmatprep.subr.mxu0 0.0
      %5819 = vmatpush2.msra.mxu0 0.0
      %5820 = vmatprep.subr.mxu0 0.0
      %5821 = vmatpush2.msra.mxu0 0.0
      %5822 = vmatprep.subr.mxu0 0.0
      %5823 = vmatpush2.msra.mxu0 0.0
      %5824 = vmatprep.subr.mxu0 0.0
      %5825 = vmatpush2.msra.mxu0 0.0
      %5826 = vmatprep.subr.mxu0 0.0
      %5827 = vmatpush2.msra.mxu0 0.0
      %5828 = vmatprep.subr.mxu0 0.0
      %5829 = vmatpush2.msra.mxu0 0.0
      %5830 = vmatprep.subr.mxu0 0.0
      %5831 = vmatpush2.msra.mxu0 0.0
      %5832 = vmatprep.subr.mxu0 0.0
      %5833 = vmatpush2.msra.mxu0 0.0
      %5834 = vmatprep.subr.mxu0 0.0
      %5835 = vmatpush2.msra.mxu0 0.0
      %5836 = vmatprep.subr.mxu0 0.0
      %5837 = vmatpush2.msra.mxu0 0.0
      %5838 = vmatprep.subr.mxu0 0.0
      %5839 = vmatpush2.msra.mxu0 0.0
      %5840 = vmatprep.subr.mxu0 0.0
      %5841 = vmatpush2.msra.mxu0 0.0
      %5842 = vmatprep.mubr.f32.mxu0 0.0
      %v5843 = vand.u32 %v5458, 4294901760
      %5844 = vmatmul.mubr.f32.gmra.mxu0 %v5843
      %v5845 = vpop.f32.mrf.mxu0
      %v5846 = vadd.f32 %v5585, %v5845
      %v5847 = vpop.f32.mrf.mxu0
      %5848 = vmatprep.mubr.f32.mxu0 0.0
      %v5849 = vand.u32 %v5461, 4294901760
      %5850 = vmatmul.mubr.f32.gmra.mxu0 %v5849
      %v5851 = vpop.f32.mrf.mxu0
      %v5852 = vadd.f32 %v5595, %v5851
      %v5853 = vpop.f32.mrf.mxu0
      %5854 = vmatprep.mubr.f32.mxu0 0.0
      %v5855 = vand.u32 %v5464, 4294901760
      %5856 = vmatmul.mubr.f32.gmra.mxu0 %v5855
      %v5857 = vpop.f32.mrf.mxu0
      %v5858 = vadd.f32 %v5605, %v5857
      %v5859 = vpop.f32.mrf.mxu0
      %5860 = vmatprep.mubr.f32.mxu0 0.0
      %v5861 = vand.u32 %v5467, 4294901760
      %5862 = vmatmul.mubr.f32.gmra.mxu0 %v5861
      %v5863 = vpop.f32.mrf.mxu0
      %v5864 = vadd.f32 %v5615, %v5863
      %v5865 = vpop.f32.mrf.mxu0
      %5866 = vmatprep.mubr.f32.mxu0 0.0
      %v5867 = vand.u32 %v5470, 4294901760
      %5868 = vmatmul.mubr.f32.gmra.mxu0 %v5867
      %v5869 = vpop.f32.mrf.mxu0
      %v5870 = vadd.f32 %v5625, %v5869
      %v5871 = vpop.f32.mrf.mxu0
      %5872 = vmatprep.mubr.f32.mxu0 0.0
      %v5873 = vand.u32 %v5473, 4294901760
      %5874 = vmatmul.mubr.f32.gmra.mxu0 %v5873
      %v5875 = vpop.f32.mrf.mxu0
      %v5876 = vadd.f32 %v5635, %v5875
      %v5877 = vpop.f32.mrf.mxu0
      %5878 = vmatprep.mubr.f32.mxu0 0.0
      %v5879 = vand.u32 %v5476, 4294901760
      %5880 = vmatmul.mubr.f32.gmra.mxu0 %v5879
      %v5881 = vpop.f32.mrf.mxu0
      %v5882 = vadd.f32 %v5645, %v5881
      %v5883 = vpop.f32.mrf.mxu0
      %5884 = vmatprep.mubr.f32.mxu0 0.0
      %v5885 = vand.u32 %v5479, 4294901760
      %5886 = vmatmul.mubr.f32.gmra.mxu0 %v5885
      %v5887 = vpop.f32.mrf.mxu0
      %v5888 = vadd.f32 %v5655, %v5887
      %v5889 = vpop.f32.mrf.mxu0
      %5890 = vmatprep.mubr.f32.mxu0 0.0
      %v5891 = vand.u32 %v5482, 4294901760
      %5892 = vmatmul.mubr.f32.gmra.mxu0 %v5891
      %v5893 = vpop.f32.mrf.mxu0
      %v5894 = vadd.f32 %v5665, %v5893
      %v5895 = vpop.f32.mrf.mxu0
      %5896 = vmatprep.mubr.f32.mxu0 0.0
      %v5897 = vand.u32 %v5485, 4294901760
      %5898 = vmatmul.mubr.f32.gmra.mxu0 %v5897
      %v5899 = vpop.f32.mrf.mxu0
      %v5900 = vadd.f32 %v5675, %v5899
      %v5901 = vpop.f32.mrf.mxu0
      %5902 = vmatprep.mubr.f32.mxu0 0.0
      %v5903 = vand.u32 %v5488, 4294901760
      %5904 = vmatmul.mubr.f32.gmra.mxu0 %v5903
      %v5905 = vpop.f32.mrf.mxu0
      %v5906 = vadd.f32 %v5685, %v5905
      %v5907 = vpop.f32.mrf.mxu0
      %5908 = vmatprep.mubr.f32.mxu0 0.0
      %v5909 = vand.u32 %v5491, 4294901760
      %5910 = vmatmul.mubr.f32.gmra.mxu0 %v5909
      %v5911 = vpop.f32.mrf.mxu0
      %v5912 = vadd.f32 %v5695, %v5911
      %v5913 = vpop.f32.mrf.mxu0
      %5914 = vmatprep.mubr.f32.mxu0 0.0
      %v5915 = vand.u32 %v5494, 4294901760
      %5916 = vmatmul.mubr.f32.gmra.mxu0 %v5915
      %v5917 = vpop.f32.mrf.mxu0
      %v5918 = vadd.f32 %v5705, %v5917
      %v5919 = vpop.f32.mrf.mxu0
      %5920 = vmatprep.mubr.f32.mxu0 0.0
      %v5921 = vand.u32 %v5497, 4294901760
      %5922 = vmatmul.mubr.f32.gmra.mxu0 %v5921
      %v5923 = vpop.f32.mrf.mxu0
      %v5924 = vadd.f32 %v5715, %v5923
      %v5925 = vpop.f32.mrf.mxu0
      %5926 = vmatprep.mubr.f32.mxu0 0.0
      %v5927 = vand.u32 %v5500, 4294901760
      %5928 = vmatmul.mubr.f32.gmra.mxu0 %v5927
      %v5929 = vpop.f32.mrf.mxu0
      %v5930 = vadd.f32 %v5725, %v5929
      %v5931 = vpop.f32.mrf.mxu0
      %5932 = vmatprep.mubr.f32.mxu0 0.0
      %v5933 = vand.u32 %v5503, 4294901760
      %5934 = vmatmul.mubr.f32.gmra.mxu0 %v5933
      %v5935 = vpop.f32.mrf.mxu0
      %v5936 = vadd.f32 %v5735, %v5935
      %v5937 = vpop.f32.mrf.mxu0
      %5938 = vdwg.mxu0
      %5939 = vmatprep.subr.mxu0 0.0
      %5940 = vmatpush1.msra.mxu0 0.0
      %5941 = vmatprep.subr.mxu0 0.0
      %5942 = vmatpush1.msra.mxu0 0.0
      %5943 = vmatprep.subr.mxu0 0.0
      %5944 = vmatpush1.msra.mxu0 0.0
      %5945 = vmatprep.subr.mxu0 0.0
      %5946 = vmatpush1.msra.mxu0 0.0
      %5947 = vmatprep.subr.mxu0 0.0
      %5948 = vmatpush1.msra.mxu0 0.0
      %5949 = vmatprep.subr.mxu0 0.0
      %5950 = vmatpush1.msra.mxu0 0.0
      %5951 = vmatprep.subr.mxu0 0.0
      %5952 = vmatpush1.msra.mxu0 0.0
      %5953 = vmatprep.subr.mxu0 0.0
      %5954 = vmatpush1.msra.mxu0 0.0
      %5955 = vmatprep.subr.mxu0 0.0
      %v5956 = vand.u32 %v4121, 4294901760
      %v5957 = vsub.f32 %v4121, %v5956
      %5958 = vmatpush1.msra.mxu0 %v5957
      %5959 = vmatprep.subr.mxu0 0.0
      %v5960 = vand.u32 %v4120, 4294901760
      %v5961 = vsub.f32 %v4120, %v5960
      %5962 = vmatpush1.msra.mxu0 %v5961
      %5963 = vmatprep.subr.mxu0 0.0
      %v5964 = vand.u32 %v4119, 4294901760
      %v5965 = vsub.f32 %v4119, %v5964
      %5966 = vmatpush1.msra.mxu0 %v5965
      %5967 = vmatprep.subr.mxu0 0.0
      %v5968 = vand.u32 %v4118, 4294901760
      %v5969 = vsub.f32 %v4118, %v5968
      %5970 = vmatpush1.msra.mxu0 %v5969
      %5971 = vmatprep.subr.mxu0 0.0
      %v5972 = vand.u32 %v4117, 4294901760
      %v5973 = vsub.f32 %v4117, %v5972
      %5974 = vmatpush1.msra.mxu0 %v5973
      %5975 = vmatprep.subr.mxu0 0.0
      %v5976 = vand.u32 %v4116, 4294901760
      %v5977 = vsub.f32 %v4116, %v5976
      %5978 = vmatpush1.msra.mxu0 %v5977
      %5979 = vmatprep.subr.mxu0 0.0
      %v5980 = vand.u32 %v4115, 4294901760
      %v5981 = vsub.f32 %v4115, %v5980
      %5982 = vmatpush1.msra.mxu0 %v5981
      %5983 = vmatprep.subr.mxu0 0.0
      %v5984 = vand.u32 %v4114, 4294901760
      %v5985 = vsub.f32 %v4114, %v5984
      %5986 = vmatpush1.msra.mxu0 %v5985
      %5987 = vmatprep.subr.mxu0 0.0
      %5988 = vmatpush2.msra.mxu0 0.0
      %5989 = vmatprep.subr.mxu0 0.0
      %5990 = vmatpush2.msra.mxu0 0.0
      %5991 = vmatprep.subr.mxu0 0.0
      %5992 = vmatpush2.msra.mxu0 0.0
      %5993 = vmatprep.subr.mxu0 0.0
      %5994 = vmatpush2.msra.mxu0 0.0
      %5995 = vmatprep.subr.mxu0 0.0
      %5996 = vmatpush2.msra.mxu0 0.0
      %5997 = vmatprep.subr.mxu0 0.0
      %5998 = vmatpush2.msra.mxu0 0.0
      %5999 = vmatprep.subr.mxu0 0.0
      %6000 = vmatpush2.msra.mxu0 0.0
      %6001 = vmatprep.subr.mxu0 0.0
      %6002 = vmatpush2.msra.mxu0 0.0
      %6003 = vmatprep.subr.mxu0 0.0
      %6004 = vmatpush2.msra.mxu0 0.0
      %6005 = vmatprep.subr.mxu0 0.0
      %6006 = vmatpush2.msra.mxu0 0.0
      %6007 = vmatprep.subr.mxu0 0.0
      %6008 = vmatpush2.msra.mxu0 0.0
      %6009 = vmatprep.subr.mxu0 0.0
      %6010 = vmatpush2.msra.mxu0 0.0
      %6011 = vmatprep.subr.mxu0 0.0
      %6012 = vmatpush2.msra.mxu0 0.0
      %6013 = vmatprep.subr.mxu0 0.0
      %6014 = vmatpush2.msra.mxu0 0.0
      %6015 = vmatprep.subr.mxu0 0.0
      %6016 = vmatpush2.msra.mxu0 0.0
      %6017 = vmatprep.subr.mxu0 0.0
      %6018 = vmatpush2.msra.mxu0 0.0
      %6019 = vmatprep.mubr.f32.mxu0 0.0
      %v6020 = vand.u32 %v5458, 4294901760
      %v6021 = vsub.f32 %v5458, %v6020
      %6022 = vmatmul.mubr.f32.gmra.mxu0 %v6021
      %v6023 = vpop.f32.mrf.mxu0
      %v6024 = vadd.f32 %v5846, %v6023
      %v6025 = vpop.f32.mrf.mxu0
      %6026 = vmatprep.mubr.f32.mxu0 0.0
      %v6027 = vand.u32 %v5461, 4294901760
      %v6028 = vsub.f32 %v5461, %v6027
      %6029 = vmatmul.mubr.f32.gmra.mxu0 %v6028
      %v6030 = vpop.f32.mrf.mxu0
      %v6031 = vadd.f32 %v5852, %v6030
      %v6032 = vpop.f32.mrf.mxu0
      %6033 = vmatprep.mubr.f32.mxu0 0.0
      %v6034 = vand.u32 %v5464, 4294901760
      %v6035 = vsub.f32 %v5464, %v6034
      %6036 = vmatmul.mubr.f32.gmra.mxu0 %v6035
      %v6037 = vpop.f32.mrf.mxu0
      %v6038 = vadd.f32 %v5858, %v6037
      %v6039 = vpop.f32.mrf.mxu0
      %6040 = vmatprep.mubr.f32.mxu0 0.0
      %v6041 = vand.u32 %v5467, 4294901760
      %v6042 = vsub.f32 %v5467, %v6041
      %6043 = vmatmul.mubr.f32.gmra.mxu0 %v6042
      %v6044 = vpop.f32.mrf.mxu0
      %v6045 = vadd.f32 %v5864, %v6044
      %v6046 = vpop.f32.mrf.mxu0
      %6047 = vmatprep.mubr.f32.mxu0 0.0
      %v6048 = vand.u32 %v5470, 4294901760
      %v6049 = vsub.f32 %v5470, %v6048
      %6050 = vmatmul.mubr.f32.gmra.mxu0 %v6049
      %v6051 = vpop.f32.mrf.mxu0
      %v6052 = vadd.f32 %v5870, %v6051
      %v6053 = vpop.f32.mrf.mxu0
      %6054 = vmatprep.mubr.f32.mxu0 0.0
      %v6055 = vand.u32 %v5473, 4294901760
      %v6056 = vsub.f32 %v5473, %v6055
      %6057 = vmatmul.mubr.f32.gmra.mxu0 %v6056
      %v6058 = vpop.f32.mrf.mxu0
      %v6059 = vadd.f32 %v5876, %v6058
      %v6060 = vpop.f32.mrf.mxu0
      %6061 = vmatprep.mubr.f32.mxu0 0.0
      %v6062 = vand.u32 %v5476, 4294901760
      %v6063 = vsub.f32 %v5476, %v6062
      %6064 = vmatmul.mubr.f32.gmra.mxu0 %v6063
      %v6065 = vpop.f32.mrf.mxu0
      %v6066 = vadd.f32 %v5882, %v6065
      %v6067 = vpop.f32.mrf.mxu0
      %6068 = vmatprep.mubr.f32.mxu0 0.0
      %v6069 = vand.u32 %v5479, 4294901760
      %v6070 = vsub.f32 %v5479, %v6069
      %6071 = vmatmul.mubr.f32.gmra.mxu0 %v6070
      %v6072 = vpop.f32.mrf.mxu0
      %v6073 = vadd.f32 %v5888, %v6072
      %v6074 = vpop.f32.mrf.mxu0
      %6075 = vmatprep.mubr.f32.mxu0 0.0
      %v6076 = vand.u32 %v5482, 4294901760
      %v6077 = vsub.f32 %v5482, %v6076
      %6078 = vmatmul.mubr.f32.gmra.mxu0 %v6077
      %v6079 = vpop.f32.mrf.mxu0
      %v6080 = vadd.f32 %v5894, %v6079
      %v6081 = vpop.f32.mrf.mxu0
      %6082 = vmatprep.mubr.f32.mxu0 0.0
      %v6083 = vand.u32 %v5485, 4294901760
      %v6084 = vsub.f32 %v5485, %v6083
      %6085 = vmatmul.mubr.f32.gmra.mxu0 %v6084
      %v6086 = vpop.f32.mrf.mxu0
      %v6087 = vadd.f32 %v5900, %v6086
      %v6088 = vpop.f32.mrf.mxu0
      %6089 = vmatprep.mubr.f32.mxu0 0.0
      %v6090 = vand.u32 %v5488, 4294901760
      %v6091 = vsub.f32 %v5488, %v6090
      %6092 = vmatmul.mubr.f32.gmra.mxu0 %v6091
      %v6093 = vpop.f32.mrf.mxu0
      %v6094 = vadd.f32 %v5906, %v6093
      %v6095 = vpop.f32.mrf.mxu0
      %6096 = vmatprep.mubr.f32.mxu0 0.0
      %v6097 = vand.u32 %v5491, 4294901760
      %v6098 = vsub.f32 %v5491, %v6097
      %6099 = vmatmul.mubr.f32.gmra.mxu0 %v6098
      %v6100 = vpop.f32.mrf.mxu0
      %v6101 = vadd.f32 %v5912, %v6100
      %v6102 = vpop.f32.mrf.mxu0
      %6103 = vmatprep.mubr.f32.mxu0 0.0
      %v6104 = vand.u32 %v5494, 4294901760
      %v6105 = vsub.f32 %v5494, %v6104
      %6106 = vmatmul.mubr.f32.gmra.mxu0 %v6105
      %v6107 = vpop.f32.mrf.mxu0
      %v6108 = vadd.f32 %v5918, %v6107
      %v6109 = vpop.f32.mrf.mxu0
      %6110 = vmatprep.mubr.f32.mxu0 0.0
      %v6111 = vand.u32 %v5497, 4294901760
      %v6112 = vsub.f32 %v5497, %v6111
      %6113 = vmatmul.mubr.f32.gmra.mxu0 %v6112
      %v6114 = vpop.f32.mrf.mxu0
      %v6115 = vadd.f32 %v5924, %v6114
      %v6116 = vpop.f32.mrf.mxu0
      %6117 = vmatprep.mubr.f32.mxu0 0.0
      %v6118 = vand.u32 %v5500, 4294901760
      %v6119 = vsub.f32 %v5500, %v6118
      %6120 = vmatmul.mubr.f32.gmra.mxu0 %v6119
      %v6121 = vpop.f32.mrf.mxu0
      %v6122 = vadd.f32 %v5930, %v6121
      %v6123 = vpop.f32.mrf.mxu0
      %6124 = vmatprep.mubr.f32.mxu0 0.0
      %v6125 = vand.u32 %v5503, 4294901760
      %v6126 = vsub.f32 %v5503, %v6125
      %6127 = vmatmul.mubr.f32.gmra.mxu0 %v6126
      %v6128 = vpop.f32.mrf.mxu0
      %v6129 = vadd.f32 %v5936, %v6128
      %v6130 = vpop.f32.mrf.mxu0
      %6131 = vdwg.mxu0
      %6132 = vmatprep.subr.mxu0 0.0
      %6133 = vmatpush1.msra.mxu0 0.0
      %6134 = vmatprep.subr.mxu0 0.0
      %6135 = vmatpush1.msra.mxu0 0.0
      %6136 = vmatprep.subr.mxu0 0.0
      %6137 = vmatpush1.msra.mxu0 0.0
      %6138 = vmatprep.subr.mxu0 0.0
      %6139 = vmatpush1.msra.mxu0 0.0
      %6140 = vmatprep.subr.mxu0 0.0
      %6141 = vmatpush1.msra.mxu0 0.0
      %6142 = vmatprep.subr.mxu0 0.0
      %6143 = vmatpush1.msra.mxu0 0.0
      %6144 = vmatprep.subr.mxu0 0.0
      %6145 = vmatpush1.msra.mxu0 0.0
      %6146 = vmatprep.subr.mxu0 0.0
      %6147 = vmatpush1.msra.mxu0 0.0
      %6148 = vmatprep.subr.mxu0 0.0
      %v6149 = vand.u32 %v4121, 4294901760
      %6150 = vmatpush1.msra.mxu0 %v6149
      %6151 = vmatprep.subr.mxu0 0.0
      %v6152 = vand.u32 %v4120, 4294901760
      %6153 = vmatpush1.msra.mxu0 %v6152
      %6154 = vmatprep.subr.mxu0 0.0
      %v6155 = vand.u32 %v4119, 4294901760
      %6156 = vmatpush1.msra.mxu0 %v6155
      %6157 = vmatprep.subr.mxu0 0.0
      %v6158 = vand.u32 %v4118, 4294901760
      %6159 = vmatpush1.msra.mxu0 %v6158
      %6160 = vmatprep.subr.mxu0 0.0
      %v6161 = vand.u32 %v4117, 4294901760
      %6162 = vmatpush1.msra.mxu0 %v6161
      %6163 = vmatprep.subr.mxu0 0.0
      %v6164 = vand.u32 %v4116, 4294901760
      %6165 = vmatpush1.msra.mxu0 %v6164
      %6166 = vmatprep.subr.mxu0 0.0
      %v6167 = vand.u32 %v4115, 4294901760
      %6168 = vmatpush1.msra.mxu0 %v6167
      %6169 = vmatprep.subr.mxu0 0.0
      %v6170 = vand.u32 %v4114, 4294901760
      %6171 = vmatpush1.msra.mxu0 %v6170
      %6172 = vmatprep.subr.mxu0 0.0
      %6173 = vmatpush2.msra.mxu0 0.0
      %6174 = vmatprep.subr.mxu0 0.0
      %6175 = vmatpush2.msra.mxu0 0.0
      %6176 = vmatprep.subr.mxu0 0.0
      %6177 = vmatpush2.msra.mxu0 0.0
      %6178 = vmatprep.subr.mxu0 0.0
      %6179 = vmatpush2.msra.mxu0 0.0
      %6180 = vmatprep.subr.mxu0 0.0
      %6181 = vmatpush2.msra.mxu0 0.0
      %6182 = vmatprep.subr.mxu0 0.0
      %6183 = vmatpush2.msra.mxu0 0.0
      %6184 = vmatprep.subr.mxu0 0.0
      %6185 = vmatpush2.msra.mxu0 0.0
      %6186 = vmatprep.subr.mxu0 0.0
      %6187 = vmatpush2.msra.mxu0 0.0
      %6188 = vmatprep.subr.mxu0 0.0
      %6189 = vmatpush2.msra.mxu0 0.0
      %6190 = vmatprep.subr.mxu0 0.0
      %6191 = vmatpush2.msra.mxu0 0.0
      %6192 = vmatprep.subr.mxu0 0.0
      %6193 = vmatpush2.msra.mxu0 0.0
      %6194 = vmatprep.subr.mxu0 0.0
      %6195 = vmatpush2.msra.mxu0 0.0
      %6196 = vmatprep.subr.mxu0 0.0
      %6197 = vmatpush2.msra.mxu0 0.0
      %6198 = vmatprep.subr.mxu0 0.0
      %6199 = vmatpush2.msra.mxu0 0.0
      %6200 = vmatprep.subr.mxu0 0.0
      %6201 = vmatpush2.msra.mxu0 0.0
      %6202 = vmatprep.subr.mxu0 0.0
      %6203 = vmatpush2.msra.mxu0 0.0
      %6204 = vmatprep.mubr.f32.mxu0 0.0
      %v6205 = vand.u32 %v5458, 4294901760
      %v6206 = vsub.f32 %v5458, %v6205
      %v6207 = vand.u32 %v6206, 4294901760
      %6208 = vmatmul.mubr.f32.gmra.mxu0 %v6207
      %v6209 = vpop.f32.mrf.mxu0
      %v6210 = vadd.f32 %v6024, %v6209
      %v6211 = vpop.f32.mrf.mxu0
      %6212 = vmatprep.mubr.f32.mxu0 0.0
      %v6213 = vand.u32 %v5461, 4294901760
      %v6214 = vsub.f32 %v5461, %v6213
      %v6215 = vand.u32 %v6214, 4294901760
      %6216 = vmatmul.mubr.f32.gmra.mxu0 %v6215
      %v6217 = vpop.f32.mrf.mxu0
      %v6218 = vadd.f32 %v6031, %v6217
      %v6219 = vpop.f32.mrf.mxu0
      %6220 = vmatprep.mubr.f32.mxu0 0.0
      %v6221 = vand.u32 %v5464, 4294901760
      %v6222 = vsub.f32 %v5464, %v6221
      %v6223 = vand.u32 %v6222, 4294901760
      %6224 = vmatmul.mubr.f32.gmra.mxu0 %v6223
      %v6225 = vpop.f32.mrf.mxu0
      %v6226 = vadd.f32 %v6038, %v6225
      %v6227 = vpop.f32.mrf.mxu0
      %6228 = vmatprep.mubr.f32.mxu0 0.0
      %v6229 = vand.u32 %v5467, 4294901760
      %v6230 = vsub.f32 %v5467, %v6229
      %v6231 = vand.u32 %v6230, 4294901760
      %6232 = vmatmul.mubr.f32.gmra.mxu0 %v6231
      %v6233 = vpop.f32.mrf.mxu0
      %v6234 = vadd.f32 %v6045, %v6233
      %v6235 = vpop.f32.mrf.mxu0
      %6236 = vmatprep.mubr.f32.mxu0 0.0
      %v6237 = vand.u32 %v5470, 4294901760
      %v6238 = vsub.f32 %v5470, %v6237
      %v6239 = vand.u32 %v6238, 4294901760
      %6240 = vmatmul.mubr.f32.gmra.mxu0 %v6239
      %v6241 = vpop.f32.mrf.mxu0
      %v6242 = vadd.f32 %v6052, %v6241
      %v6243 = vpop.f32.mrf.mxu0
      %6244 = vmatprep.mubr.f32.mxu0 0.0
      %v6245 = vand.u32 %v5473, 4294901760
      %v6246 = vsub.f32 %v5473, %v6245
      %v6247 = vand.u32 %v6246, 4294901760
      %6248 = vmatmul.mubr.f32.gmra.mxu0 %v6247
      %v6249 = vpop.f32.mrf.mxu0
      %v6250 = vadd.f32 %v6059, %v6249
      %v6251 = vpop.f32.mrf.mxu0
      %6252 = vmatprep.mubr.f32.mxu0 0.0
      %v6253 = vand.u32 %v5476, 4294901760
      %v6254 = vsub.f32 %v5476, %v6253
      %v6255 = vand.u32 %v6254, 4294901760
      %6256 = vmatmul.mubr.f32.gmra.mxu0 %v6255
      %v6257 = vpop.f32.mrf.mxu0
      %v6258 = vadd.f32 %v6066, %v6257
      %v6259 = vpop.f32.mrf.mxu0
      %6260 = vmatprep.mubr.f32.mxu0 0.0
      %v6261 = vand.u32 %v5479, 4294901760
      %v6262 = vsub.f32 %v5479, %v6261
      %v6263 = vand.u32 %v6262, 4294901760
      %6264 = vmatmul.mubr.f32.gmra.mxu0 %v6263
      %v6265 = vpop.f32.mrf.mxu0
      %v6266 = vadd.f32 %v6073, %v6265
      %v6267 = vpop.f32.mrf.mxu0
      %6268 = vmatprep.mubr.f32.mxu0 0.0
      %v6269 = vand.u32 %v5482, 4294901760
      %v6270 = vsub.f32 %v5482, %v6269
      %v6271 = vand.u32 %v6270, 4294901760
      %6272 = vmatmul.mubr.f32.gmra.mxu0 %v6271
      %v6273 = vpop.f32.mrf.mxu0
      %v6274 = vadd.f32 %v6080, %v6273
      %v6275 = vpop.f32.mrf.mxu0
      %6276 = vmatprep.mubr.f32.mxu0 0.0
      %v6277 = vand.u32 %v5485, 4294901760
      %v6278 = vsub.f32 %v5485, %v6277
      %v6279 = vand.u32 %v6278, 4294901760
      %6280 = vmatmul.mubr.f32.gmra.mxu0 %v6279
      %v6281 = vpop.f32.mrf.mxu0
      %v6282 = vadd.f32 %v6087, %v6281
      %v6283 = vpop.f32.mrf.mxu0
      %6284 = vmatprep.mubr.f32.mxu0 0.0
      %v6285 = vand.u32 %v5488, 4294901760
      %v6286 = vsub.f32 %v5488, %v6285
      %v6287 = vand.u32 %v6286, 4294901760
      %6288 = vmatmul.mubr.f32.gmra.mxu0 %v6287
      %v6289 = vpop.f32.mrf.mxu0
      %v6290 = vadd.f32 %v6094, %v6289
      %v6291 = vpop.f32.mrf.mxu0
      %6292 = vmatprep.mubr.f32.mxu0 0.0
      %v6293 = vand.u32 %v5491, 4294901760
      %v6294 = vsub.f32 %v5491, %v6293
      %v6295 = vand.u32 %v6294, 4294901760
      %6296 = vmatmul.mubr.f32.gmra.mxu0 %v6295
      %v6297 = vpop.f32.mrf.mxu0
      %v6298 = vadd.f32 %v6101, %v6297
      %v6299 = vpop.f32.mrf.mxu0
      %6300 = vmatprep.mubr.f32.mxu0 0.0
      %v6301 = vand.u32 %v5494, 4294901760
      %v6302 = vsub.f32 %v5494, %v6301
      %v6303 = vand.u32 %v6302, 4294901760
      %6304 = vmatmul.mubr.f32.gmra.mxu0 %v6303
      %v6305 = vpop.f32.mrf.mxu0
      %v6306 = vadd.f32 %v6108, %v6305
      %v6307 = vpop.f32.mrf.mxu0
      %6308 = vmatprep.mubr.f32.mxu0 0.0
      %v6309 = vand.u32 %v5497, 4294901760
      %v6310 = vsub.f32 %v5497, %v6309
      %v6311 = vand.u32 %v6310, 4294901760
      %6312 = vmatmul.mubr.f32.gmra.mxu0 %v6311
      %v6313 = vpop.f32.mrf.mxu0
      %v6314 = vadd.f32 %v6115, %v6313
      %v6315 = vpop.f32.mrf.mxu0
      %6316 = vmatprep.mubr.f32.mxu0 0.0
      %v6317 = vand.u32 %v5500, 4294901760
      %v6318 = vsub.f32 %v5500, %v6317
      %v6319 = vand.u32 %v6318, 4294901760
      %6320 = vmatmul.mubr.f32.gmra.mxu0 %v6319
      %v6321 = vpop.f32.mrf.mxu0
      %v6322 = vadd.f32 %v6122, %v6321
      %v6323 = vpop.f32.mrf.mxu0
      %6324 = vmatprep.mubr.f32.mxu0 0.0
      %v6325 = vand.u32 %v5503, 4294901760
      %v6326 = vsub.f32 %v5503, %v6325
      %v6327 = vand.u32 %v6326, 4294901760
      %6328 = vmatmul.mubr.f32.gmra.mxu0 %v6327
      %v6329 = vpop.f32.mrf.mxu0
      %v6330 = vadd.f32 %v6129, %v6329
      %v6331 = vpop.f32.mrf.mxu0
      %6332 = vdwg.mxu0
      %6333 = vmatprep.subr.mxu0 0.0
      %6334 = vmatpush1.msra.mxu0 0.0
      %6335 = vmatprep.subr.mxu0 0.0
      %6336 = vmatpush1.msra.mxu0 0.0
      %6337 = vmatprep.subr.mxu0 0.0
      %6338 = vmatpush1.msra.mxu0 0.0
      %6339 = vmatprep.subr.mxu0 0.0
      %6340 = vmatpush1.msra.mxu0 0.0
      %6341 = vmatprep.subr.mxu0 0.0
      %6342 = vmatpush1.msra.mxu0 0.0
      %6343 = vmatprep.subr.mxu0 0.0
      %6344 = vmatpush1.msra.mxu0 0.0
      %6345 = vmatprep.subr.mxu0 0.0
      %6346 = vmatpush1.msra.mxu0 0.0
      %6347 = vmatprep.subr.mxu0 0.0
      %6348 = vmatpush1.msra.mxu0 0.0
      %6349 = vmatprep.subr.mxu0 0.0
      %v6350 = vand.u32 %v4121, 4294901760
      %v6351 = vsub.f32 %v4121, %v6350
      %v6352 = vand.u32 %v6351, 4294901760
      %6353 = vmatpush1.msra.mxu0 %v6352
      %6354 = vmatprep.subr.mxu0 0.0
      %v6355 = vand.u32 %v4120, 4294901760
      %v6356 = vsub.f32 %v4120, %v6355
      %v6357 = vand.u32 %v6356, 4294901760
      %6358 = vmatpush1.msra.mxu0 %v6357
      %6359 = vmatprep.subr.mxu0 0.0
      %v6360 = vand.u32 %v4119, 4294901760
      %v6361 = vsub.f32 %v4119, %v6360
      %v6362 = vand.u32 %v6361, 4294901760
      %6363 = vmatpush1.msra.mxu0 %v6362
      %6364 = vmatprep.subr.mxu0 0.0
      %v6365 = vand.u32 %v4118, 4294901760
      %v6366 = vsub.f32 %v4118, %v6365
      %v6367 = vand.u32 %v6366, 4294901760
      %6368 = vmatpush1.msra.mxu0 %v6367
      %6369 = vmatprep.subr.mxu0 0.0
      %v6370 = vand.u32 %v4117, 4294901760
      %v6371 = vsub.f32 %v4117, %v6370
      %v6372 = vand.u32 %v6371, 4294901760
      %6373 = vmatpush1.msra.mxu0 %v6372
      %6374 = vmatprep.subr.mxu0 0.0
      %v6375 = vand.u32 %v4116, 4294901760
      %v6376 = vsub.f32 %v4116, %v6375
      %v6377 = vand.u32 %v6376, 4294901760
      %6378 = vmatpush1.msra.mxu0 %v6377
      %6379 = vmatprep.subr.mxu0 0.0
      %v6380 = vand.u32 %v4115, 4294901760
      %v6381 = vsub.f32 %v4115, %v6380
      %v6382 = vand.u32 %v6381, 4294901760
      %6383 = vmatpush1.msra.mxu0 %v6382
      %6384 = vmatprep.subr.mxu0 0.0
      %v6385 = vand.u32 %v4114, 4294901760
      %v6386 = vsub.f32 %v4114, %v6385
      %v6387 = vand.u32 %v6386, 4294901760
      %6388 = vmatpush1.msra.mxu0 %v6387
      %6389 = vmatprep.subr.mxu0 0.0
      %6390 = vmatpush2.msra.mxu0 0.0
      %6391 = vmatprep.subr.mxu0 0.0
      %6392 = vmatpush2.msra.mxu0 0.0
      %6393 = vmatprep.subr.mxu0 0.0
      %6394 = vmatpush2.msra.mxu0 0.0
      %6395 = vmatprep.subr.mxu0 0.0
      %6396 = vmatpush2.msra.mxu0 0.0
      %6397 = vmatprep.subr.mxu0 0.0
      %6398 = vmatpush2.msra.mxu0 0.0
      %6399 = vmatprep.subr.mxu0 0.0
      %6400 = vmatpush2.msra.mxu0 0.0
      %6401 = vmatprep.subr.mxu0 0.0
      %6402 = vmatpush2.msra.mxu0 0.0
      %6403 = vmatprep.subr.mxu0 0.0
      %6404 = vmatpush2.msra.mxu0 0.0
      %6405 = vmatprep.subr.mxu0 0.0
      %6406 = vmatpush2.msra.mxu0 0.0
      %6407 = vmatprep.subr.mxu0 0.0
      %6408 = vmatpush2.msra.mxu0 0.0
      %6409 = vmatprep.subr.mxu0 0.0
      %6410 = vmatpush2.msra.mxu0 0.0
      %6411 = vmatprep.subr.mxu0 0.0
      %6412 = vmatpush2.msra.mxu0 0.0
      %6413 = vmatprep.subr.mxu0 0.0
      %6414 = vmatpush2.msra.mxu0 0.0
      %6415 = vmatprep.subr.mxu0 0.0
      %6416 = vmatpush2.msra.mxu0 0.0
      %6417 = vmatprep.subr.mxu0 0.0
      %6418 = vmatpush2.msra.mxu0 0.0
      %6419 = vmatprep.subr.mxu0 0.0
      %6420 = vmatpush2.msra.mxu0 0.0
      %6421 = vmatprep.mubr.f32.mxu0 0.0
      %v6422 = vand.u32 %v5458, 4294901760
      %6423 = vmatmul.mubr.f32.gmra.mxu0 %v6422
      %v6424 = vpop.f32.mrf.mxu0
      %v6425 = vadd.f32 %v6210, %v6424
      %v6426 = vpop.f32.mrf.mxu0
      %6427 = vmatprep.mubr.f32.mxu0 0.0
      %v6428 = vand.u32 %v5461, 4294901760
      %6429 = vmatmul.mubr.f32.gmra.mxu0 %v6428
      %v6430 = vpop.f32.mrf.mxu0
      %v6431 = vadd.f32 %v6218, %v6430
      %v6432 = vpop.f32.mrf.mxu0
      %6433 = vmatprep.mubr.f32.mxu0 0.0
      %v6434 = vand.u32 %v5464, 4294901760
      %6435 = vmatmul.mubr.f32.gmra.mxu0 %v6434
      %v6436 = vpop.f32.mrf.mxu0
      %v6437 = vadd.f32 %v6226, %v6436
      %v6438 = vpop.f32.mrf.mxu0
      %6439 = vmatprep.mubr.f32.mxu0 0.0
      %v6440 = vand.u32 %v5467, 4294901760
      %6441 = vmatmul.mubr.f32.gmra.mxu0 %v6440
      %v6442 = vpop.f32.mrf.mxu0
      %v6443 = vadd.f32 %v6234, %v6442
      %v6444 = vpop.f32.mrf.mxu0
      %6445 = vmatprep.mubr.f32.mxu0 0.0
      %v6446 = vand.u32 %v5470, 4294901760
      %6447 = vmatmul.mubr.f32.gmra.mxu0 %v6446
      %v6448 = vpop.f32.mrf.mxu0
      %v6449 = vadd.f32 %v6242, %v6448
      %v6450 = vpop.f32.mrf.mxu0
      %6451 = vmatprep.mubr.f32.mxu0 0.0
      %v6452 = vand.u32 %v5473, 4294901760
      %6453 = vmatmul.mubr.f32.gmra.mxu0 %v6452
      %v6454 = vpop.f32.mrf.mxu0
      %v6455 = vadd.f32 %v6250, %v6454
      %v6456 = vpop.f32.mrf.mxu0
      %6457 = vmatprep.mubr.f32.mxu0 0.0
      %v6458 = vand.u32 %v5476, 4294901760
      %6459 = vmatmul.mubr.f32.gmra.mxu0 %v6458
      %v6460 = vpop.f32.mrf.mxu0
      %v6461 = vadd.f32 %v6258, %v6460
      %v6462 = vpop.f32.mrf.mxu0
      %6463 = vmatprep.mubr.f32.mxu0 0.0
      %v6464 = vand.u32 %v5479, 4294901760
      %6465 = vmatmul.mubr.f32.gmra.mxu0 %v6464
      %v6466 = vpop.f32.mrf.mxu0
      %v6467 = vadd.f32 %v6266, %v6466
      %v6468 = vpop.f32.mrf.mxu0
      %6469 = vmatprep.mubr.f32.mxu0 0.0
      %v6470 = vand.u32 %v5482, 4294901760
      %6471 = vmatmul.mubr.f32.gmra.mxu0 %v6470
      %v6472 = vpop.f32.mrf.mxu0
      %v6473 = vadd.f32 %v6274, %v6472
      %v6474 = vpop.f32.mrf.mxu0
      %6475 = vmatprep.mubr.f32.mxu0 0.0
      %v6476 = vand.u32 %v5485, 4294901760
      %6477 = vmatmul.mubr.f32.gmra.mxu0 %v6476
      %v6478 = vpop.f32.mrf.mxu0
      %v6479 = vadd.f32 %v6282, %v6478
      %v6480 = vpop.f32.mrf.mxu0
      %6481 = vmatprep.mubr.f32.mxu0 0.0
      %v6482 = vand.u32 %v5488, 4294901760
      %6483 = vmatmul.mubr.f32.gmra.mxu0 %v6482
      %v6484 = vpop.f32.mrf.mxu0
      %v6485 = vadd.f32 %v6290, %v6484
      %v6486 = vpop.f32.mrf.mxu0
      %6487 = vmatprep.mubr.f32.mxu0 0.0
      %v6488 = vand.u32 %v5491, 4294901760
      %6489 = vmatmul.mubr.f32.gmra.mxu0 %v6488
      %v6490 = vpop.f32.mrf.mxu0
      %v6491 = vadd.f32 %v6298, %v6490
      %v6492 = vpop.f32.mrf.mxu0
      %6493 = vmatprep.mubr.f32.mxu0 0.0
      %v6494 = vand.u32 %v5494, 4294901760
      %6495 = vmatmul.mubr.f32.gmra.mxu0 %v6494
      %v6496 = vpop.f32.mrf.mxu0
      %v6497 = vadd.f32 %v6306, %v6496
      %v6498 = vpop.f32.mrf.mxu0
      %6499 = vmatprep.mubr.f32.mxu0 0.0
      %v6500 = vand.u32 %v5497, 4294901760
      %6501 = vmatmul.mubr.f32.gmra.mxu0 %v6500
      %v6502 = vpop.f32.mrf.mxu0
      %v6503 = vadd.f32 %v6314, %v6502
      %v6504 = vpop.f32.mrf.mxu0
      %6505 = vmatprep.mubr.f32.mxu0 0.0
      %v6506 = vand.u32 %v5500, 4294901760
      %6507 = vmatmul.mubr.f32.gmra.mxu0 %v6506
      %v6508 = vpop.f32.mrf.mxu0
      %v6509 = vadd.f32 %v6322, %v6508
      %v6510 = vpop.f32.mrf.mxu0
      %6511 = vmatprep.mubr.f32.mxu0 0.0
      %v6512 = vand.u32 %v5503, 4294901760
      %6513 = vmatmul.mubr.f32.gmra.mxu0 %v6512
      %v6514 = vpop.f32.mrf.mxu0
      %v6515 = vadd.f32 %v6330, %v6514
      %v6516 = vpop.f32.mrf.mxu0
      %6517 = vdwg.mxu0
      %6518 = vmatprep.subr.mxu0 0.0
      %6519 = vmatpush1.msra.mxu0 0.0
      %6520 = vmatprep.subr.mxu0 0.0
      %6521 = vmatpush1.msra.mxu0 0.0
      %6522 = vmatprep.subr.mxu0 0.0
      %6523 = vmatpush1.msra.mxu0 0.0
      %6524 = vmatprep.subr.mxu0 0.0
      %6525 = vmatpush1.msra.mxu0 0.0
      %6526 = vmatprep.subr.mxu0 0.0
      %6527 = vmatpush1.msra.mxu0 0.0
      %6528 = vmatprep.subr.mxu0 0.0
      %6529 = vmatpush1.msra.mxu0 0.0
      %6530 = vmatprep.subr.mxu0 0.0
      %6531 = vmatpush1.msra.mxu0 0.0
      %6532 = vmatprep.subr.mxu0 0.0
      %6533 = vmatpush1.msra.mxu0 0.0
      %6534 = vmatprep.subr.mxu0 0.0
      %v6535 = vand.u32 %v4121, 4294901760
      %6536 = vmatpush1.msra.mxu0 %v6535
      %6537 = vmatprep.subr.mxu0 0.0
      %v6538 = vand.u32 %v4120, 4294901760
      %6539 = vmatpush1.msra.mxu0 %v6538
      %6540 = vmatprep.subr.mxu0 0.0
      %v6541 = vand.u32 %v4119, 4294901760
      %6542 = vmatpush1.msra.mxu0 %v6541
      %6543 = vmatprep.subr.mxu0 0.0
      %v6544 = vand.u32 %v4118, 4294901760
      %6545 = vmatpush1.msra.mxu0 %v6544
      %6546 = vmatprep.subr.mxu0 0.0
      %v6547 = vand.u32 %v4117, 4294901760
      %6548 = vmatpush1.msra.mxu0 %v6547
      %6549 = vmatprep.subr.mxu0 0.0
      %v6550 = vand.u32 %v4116, 4294901760
      %6551 = vmatpush1.msra.mxu0 %v6550
      %6552 = vmatprep.subr.mxu0 0.0
      %v6553 = vand.u32 %v4115, 4294901760
      %6554 = vmatpush1.msra.mxu0 %v6553
      %6555 = vmatprep.subr.mxu0 0.0
      %v6556 = vand.u32 %v4114, 4294901760
      %6557 = vmatpush1.msra.mxu0 %v6556
      %6558 = vmatprep.subr.mxu0 0.0
      %6559 = vmatpush2.msra.mxu0 0.0
      %6560 = vmatprep.subr.mxu0 0.0
      %6561 = vmatpush2.msra.mxu0 0.0
      %6562 = vmatprep.subr.mxu0 0.0
      %6563 = vmatpush2.msra.mxu0 0.0
      %6564 = vmatprep.subr.mxu0 0.0
      %6565 = vmatpush2.msra.mxu0 0.0
      %6566 = vmatprep.subr.mxu0 0.0
      %6567 = vmatpush2.msra.mxu0 0.0
      %6568 = vmatprep.subr.mxu0 0.0
      %6569 = vmatpush2.msra.mxu0 0.0
      %6570 = vmatprep.subr.mxu0 0.0
      %6571 = vmatpush2.msra.mxu0 0.0
      %6572 = vmatprep.subr.mxu0 0.0
      %6573 = vmatpush2.msra.mxu0 0.0
      %6574 = vmatprep.subr.mxu0 0.0
      %6575 = vmatpush2.msra.mxu0 0.0
      %6576 = vmatprep.subr.mxu0 0.0
      %6577 = vmatpush2.msra.mxu0 0.0
      %6578 = vmatprep.subr.mxu0 0.0
      %6579 = vmatpush2.msra.mxu0 0.0
      %6580 = vmatprep.subr.mxu0 0.0
      %6581 = vmatpush2.msra.mxu0 0.0
      %6582 = vmatprep.subr.mxu0 0.0
      %6583 = vmatpush2.msra.mxu0 0.0
      %6584 = vmatprep.subr.mxu0 0.0
      %6585 = vmatpush2.msra.mxu0 0.0
      %6586 = vmatprep.subr.mxu0 0.0
      %6587 = vmatpush2.msra.mxu0 0.0
      %6588 = vmatprep.subr.mxu0 0.0
      %6589 = vmatpush2.msra.mxu0 0.0
      %6590 = vmatprep.mubr.f32.mxu0 0.0
      %v6591 = vand.u32 %v5458, 4294901760
      %6592 = vmatmul.mubr.f32.gmra.mxu0 %v6591
      %v6593 = vpop.f32.mrf.mxu0
      %v6594 = vadd.f32 %v6425, %v6593
      %v6595 = vpop.f32.mrf.mxu0
      %6596 = vmatprep.mubr.f32.mxu0 0.0
      %v6597 = vand.u32 %v5461, 4294901760
      %6598 = vmatmul.mubr.f32.gmra.mxu0 %v6597
      %v6599 = vpop.f32.mrf.mxu0
      %v6600 = vadd.f32 %v6431, %v6599
      %v6601 = vpop.f32.mrf.mxu0
      %6602 = vmatprep.mubr.f32.mxu0 0.0
      %v6603 = vand.u32 %v5464, 4294901760
      %6604 = vmatmul.mubr.f32.gmra.mxu0 %v6603
      %v6605 = vpop.f32.mrf.mxu0
      %v6606 = vadd.f32 %v6437, %v6605
      %v6607 = vpop.f32.mrf.mxu0
      %6608 = vmatprep.mubr.f32.mxu0 0.0
      %v6609 = vand.u32 %v5467, 4294901760
      %6610 = vmatmul.mubr.f32.gmra.mxu0 %v6609
      %v6611 = vpop.f32.mrf.mxu0
      %v6612 = vadd.f32 %v6443, %v6611
      %v6613 = vpop.f32.mrf.mxu0
      %6614 = vmatprep.mubr.f32.mxu0 0.0
      %v6615 = vand.u32 %v5470, 4294901760
      %6616 = vmatmul.mubr.f32.gmra.mxu0 %v6615
      %v6617 = vpop.f32.mrf.mxu0
      %v6618 = vadd.f32 %v6449, %v6617
      %v6619 = vpop.f32.mrf.mxu0
      %6620 = vmatprep.mubr.f32.mxu0 0.0
      %v6621 = vand.u32 %v5473, 4294901760
      %6622 = vmatmul.mubr.f32.gmra.mxu0 %v6621
      %v6623 = vpop.f32.mrf.mxu0
      %v6624 = vadd.f32 %v6455, %v6623
      %v6625 = vpop.f32.mrf.mxu0
      %6626 = vmatprep.mubr.f32.mxu0 0.0
      %v6627 = vand.u32 %v5476, 4294901760
      %6628 = vmatmul.mubr.f32.gmra.mxu0 %v6627
      %v6629 = vpop.f32.mrf.mxu0
      %v6630 = vadd.f32 %v6461, %v6629
      %v6631 = vpop.f32.mrf.mxu0
      %6632 = vmatprep.mubr.f32.mxu0 0.0
      %v6633 = vand.u32 %v5479, 4294901760
      %6634 = vmatmul.mubr.f32.gmra.mxu0 %v6633
      %v6635 = vpop.f32.mrf.mxu0
      %v6636 = vadd.f32 %v6467, %v6635
      %v6637 = vpop.f32.mrf.mxu0
      %6638 = vmatprep.mubr.f32.mxu0 0.0
      %v6639 = vand.u32 %v5482, 4294901760
      %6640 = vmatmul.mubr.f32.gmra.mxu0 %v6639
      %v6641 = vpop.f32.mrf.mxu0
      %v6642 = vadd.f32 %v6473, %v6641
      %v6643 = vpop.f32.mrf.mxu0
      %6644 = vmatprep.mubr.f32.mxu0 0.0
      %v6645 = vand.u32 %v5485, 4294901760
      %6646 = vmatmul.mubr.f32.gmra.mxu0 %v6645
      %v6647 = vpop.f32.mrf.mxu0
      %v6648 = vadd.f32 %v6479, %v6647
      %v6649 = vpop.f32.mrf.mxu0
      %6650 = vmatprep.mubr.f32.mxu0 0.0
      %v6651 = vand.u32 %v5488, 4294901760
      %6652 = vmatmul.mubr.f32.gmra.mxu0 %v6651
      %v6653 = vpop.f32.mrf.mxu0
      %v6654 = vadd.f32 %v6485, %v6653
      %v6655 = vpop.f32.mrf.mxu0
      %6656 = vmatprep.mubr.f32.mxu0 0.0
      %v6657 = vand.u32 %v5491, 4294901760
      %6658 = vmatmul.mubr.f32.gmra.mxu0 %v6657
      %v6659 = vpop.f32.mrf.mxu0
      %v6660 = vadd.f32 %v6491, %v6659
      %v6661 = vpop.f32.mrf.mxu0
      %6662 = vmatprep.mubr.f32.mxu0 0.0
      %v6663 = vand.u32 %v5494, 4294901760
      %6664 = vmatmul.mubr.f32.gmra.mxu0 %v6663
      %v6665 = vpop.f32.mrf.mxu0
      %v6666 = vadd.f32 %v6497, %v6665
      %v6667 = vpop.f32.mrf.mxu0
      %6668 = vmatprep.mubr.f32.mxu0 0.0
      %v6669 = vand.u32 %v5497, 4294901760
      %6670 = vmatmul.mubr.f32.gmra.mxu0 %v6669
      %v6671 = vpop.f32.mrf.mxu0
      %v6672 = vadd.f32 %v6503, %v6671
      %v6673 = vpop.f32.mrf.mxu0
      %6674 = vmatprep.mubr.f32.mxu0 0.0
      %v6675 = vand.u32 %v5500, 4294901760
      %6676 = vmatmul.mubr.f32.gmra.mxu0 %v6675
      %v6677 = vpop.f32.mrf.mxu0
      %v6678 = vadd.f32 %v6509, %v6677
      %v6679 = vpop.f32.mrf.mxu0
      %6680 = vmatprep.mubr.f32.mxu0 0.0
      %v6681 = vand.u32 %v5503, 4294901760
      %6682 = vmatmul.mubr.f32.gmra.mxu0 %v6681
      %v6683 = vpop.f32.mrf.mxu0
      %v6684 = vadd.f32 %v6515, %v6683
      %v6685 = vpop.f32.mrf.mxu0
      %6686 = vdwg.mxu0
      %v6687 = vlaneseq
      %v6688 = vshrl.u32 %v6687, 7
      %v6689 = vsub.s32 0, %v6688
      %v6690 = vrot.slane %v4122, %v6689
      %v6691 = vadd.f32 %v6594, %v6690
      %v6692 = vadd.f32 %v6600, %v6690
      %v6693 = vadd.f32 %v6606, %v6690
      %v6694 = vadd.f32 %v6612, %v6690
      %v6695 = vadd.f32 %v6618, %v6690
      %v6696 = vadd.f32 %v6624, %v6690
      %v6697 = vadd.f32 %v6630, %v6690
      %v6698 = vadd.f32 %v6636, %v6690
      %v6699 = vadd.f32 %v6642, %v6690
      %v6700 = vadd.f32 %v6648, %v6690
      %v6701 = vadd.f32 %v6654, %v6690
      %v6702 = vadd.f32 %v6660, %v6690
      %v6703 = vadd.f32 %v6666, %v6690
      %v6704 = vadd.f32 %v6672, %v6690
      %v6705 = vadd.f32 %v6678, %v6690
      %v6706 = vadd.f32 %v6684, %v6690
      %v6707 = vmax.f32 %v6691, 0.0
      %v6708 = vmax.f32 %v6692, 0.0
      %v6709 = vmax.f32 %v6693, 0.0
      %v6710 = vmax.f32 %v6694, 0.0
      %v6711 = vmax.f32 %v6695, 0.0
      %v6712 = vmax.f32 %v6696, 0.0
      %v6713 = vmax.f32 %v6697, 0.0
      %v6714 = vmax.f32 %v6698, 0.0
      %v6715 = vmax.f32 %v6699, 0.0
      %v6716 = vmax.f32 %v6700, 0.0
      %v6717 = vmax.f32 %v6701, 0.0
      %v6718 = vmax.f32 %v6702, 0.0
      %v6719 = vmax.f32 %v6703, 0.0
      %v6720 = vmax.f32 %v6704, 0.0
      %v6721 = vmax.f32 %v6705, 0.0
      %v6722 = vmax.f32 %v6706, 0.0
      %v6723 = vld [vmem:[%s321] sm:$0xf]
      %v6724 = vld [vmem:[%s321 + $0x4] sm:$0xf]
      %v6725 = vunpack.c.l.bf16 %v6723
      %v6726 = vunpack.c.l.bf16 %v6724
      %6727 = vmatprep.subr.mxu0 0.0
      %v6728 = vand.u32 %v6722, 4294901760
      %6729 = vmatpush1.msra.mxu0 %v6728
      %6730 = vmatprep.subr.mxu0 0.0
      %v6731 = vand.u32 %v6721, 4294901760
      %6732 = vmatpush1.msra.mxu0 %v6731
      %6733 = vmatprep.subr.mxu0 0.0
      %v6734 = vand.u32 %v6720, 4294901760
      %6735 = vmatpush1.msra.mxu0 %v6734
      %6736 = vmatprep.subr.mxu0 0.0
      %v6737 = vand.u32 %v6719, 4294901760
      %6738 = vmatpush1.msra.mxu0 %v6737
      %6739 = vmatprep.subr.mxu0 0.0
      %v6740 = vand.u32 %v6718, 4294901760
      %6741 = vmatpush1.msra.mxu0 %v6740
      %6742 = vmatprep.subr.mxu0 0.0
      %v6743 = vand.u32 %v6717, 4294901760
      %6744 = vmatpush1.msra.mxu0 %v6743
      %6745 = vmatprep.subr.mxu0 0.0
      %v6746 = vand.u32 %v6716, 4294901760
      %6747 = vmatpush1.msra.mxu0 %v6746
      %6748 = vmatprep.subr.mxu0 0.0
      %v6749 = vand.u32 %v6715, 4294901760
      %6750 = vmatpush1.msra.mxu0 %v6749
      %6751 = vmatprep.subr.mxu0 0.0
      %v6752 = vand.u32 %v6714, 4294901760
      %6753 = vmatpush1.msra.mxu0 %v6752
      %6754 = vmatprep.subr.mxu0 0.0
      %v6755 = vand.u32 %v6713, 4294901760
      %6756 = vmatpush1.msra.mxu0 %v6755
      %6757 = vmatprep.subr.mxu0 0.0
      %v6758 = vand.u32 %v6712, 4294901760
      %6759 = vmatpush1.msra.mxu0 %v6758
      %6760 = vmatprep.subr.mxu0 0.0
      %v6761 = vand.u32 %v6711, 4294901760
      %6762 = vmatpush1.msra.mxu0 %v6761
      %6763 = vmatprep.subr.mxu0 0.0
      %v6764 = vand.u32 %v6710, 4294901760
      %6765 = vmatpush1.msra.mxu0 %v6764
      %6766 = vmatprep.subr.mxu0 0.0
      %v6767 = vand.u32 %v6709, 4294901760
      %6768 = vmatpush1.msra.mxu0 %v6767
      %6769 = vmatprep.subr.mxu0 0.0
      %v6770 = vand.u32 %v6708, 4294901760
      %6771 = vmatpush1.msra.mxu0 %v6770
      %6772 = vmatprep.subr.mxu0 0.0
      %v6773 = vand.u32 %v6707, 4294901760
      %6774 = vmatpush1.msra.mxu0 %v6773
      %6775 = vmatprep.subr.mxu0 0.0
      %6776 = vmatpush2.msra.mxu0 0.0
      %6777 = vmatprep.subr.mxu0 0.0
      %6778 = vmatpush2.msra.mxu0 0.0
      %6779 = vmatprep.subr.mxu0 0.0
      %6780 = vmatpush2.msra.mxu0 0.0
      %6781 = vmatprep.subr.mxu0 0.0
      %6782 = vmatpush2.msra.mxu0 0.0
      %6783 = vmatprep.subr.mxu0 0.0
      %6784 = vmatpush2.msra.mxu0 0.0
      %6785 = vmatprep.subr.mxu0 0.0
      %6786 = vmatpush2.msra.mxu0 0.0
      %6787 = vmatprep.subr.mxu0 0.0
      %6788 = vmatpush2.msra.mxu0 0.0
      %6789 = vmatprep.subr.mxu0 0.0
      %6790 = vmatpush2.msra.mxu0 0.0
      %6791 = vmatprep.subr.mxu0 0.0
      %6792 = vmatpush2.msra.mxu0 0.0
      %6793 = vmatprep.subr.mxu0 0.0
      %6794 = vmatpush2.msra.mxu0 0.0
      %6795 = vmatprep.subr.mxu0 0.0
      %6796 = vmatpush2.msra.mxu0 0.0
      %6797 = vmatprep.subr.mxu0 0.0
      %6798 = vmatpush2.msra.mxu0 0.0
      %6799 = vmatprep.subr.mxu0 0.0
      %6800 = vmatpush2.msra.mxu0 0.0
      %6801 = vmatprep.subr.mxu0 0.0
      %6802 = vmatpush2.msra.mxu0 0.0
      %6803 = vmatprep.subr.mxu0 0.0
      %6804 = vmatpush2.msra.mxu0 0.0
      %6805 = vmatprep.subr.mxu0 0.0
      %6806 = vmatpush2.msra.mxu0 0.0
      %6807 = vmatprep.mubr.f32.mxu0 0.0
      %v6808 = vsub.f32 %v6725, %v6725
      %v6809 = vand.u32 %v6808, 4294901760
      %v6810 = vsub.f32 %v6808, %v6809
      %v6811 = vand.u32 %v6810, 4294901760
      %6812 = vmatmul.mubr.f32.gmra.mxu0 %v6811
      %v6813 = vpop.f32.mrf.mxu0
      %v6814 = vadd.f32 0.0, %v6813
      %v6815 = vpop.f32.mrf.mxu0
      %6816 = vmatprep.mubr.f32.mxu0 0.0
      %v6817 = vsub.f32 %v6726, %v6726
      %v6818 = vand.u32 %v6817, 4294901760
      %v6819 = vsub.f32 %v6817, %v6818
      %v6820 = vand.u32 %v6819, 4294901760
      %6821 = vmatmul.mubr.f32.gmra.mxu0 %v6820
      %v6822 = vpop.f32.mrf.mxu0
      %v6823 = vadd.f32 0.0, %v6822
      %v6824 = vpop.f32.mrf.mxu0
      %6825 = vdwg.mxu0
      %6826 = vmatprep.subr.mxu0 0.0
      %v6827 = vand.u32 %v6722, 4294901760
      %v6828 = vsub.f32 %v6722, %v6827
      %v6829 = vand.u32 %v6828, 4294901760
      %v6830 = vsub.f32 %v6828, %v6829
      %v6831 = vand.u32 %v6830, 4294901760
      %6832 = vmatpush1.msra.mxu0 %v6831
      %6833 = vmatprep.subr.mxu0 0.0
      %v6834 = vand.u32 %v6721, 4294901760
      %v6835 = vsub.f32 %v6721, %v6834
      %v6836 = vand.u32 %v6835, 4294901760
      %v6837 = vsub.f32 %v6835, %v6836
      %v6838 = vand.u32 %v6837, 4294901760
      %6839 = vmatpush1.msra.mxu0 %v6838
      %6840 = vmatprep.subr.mxu0 0.0
      %v6841 = vand.u32 %v6720, 4294901760
      %v6842 = vsub.f32 %v6720, %v6841
      %v6843 = vand.u32 %v6842, 4294901760
      %v6844 = vsub.f32 %v6842, %v6843
      %v6845 = vand.u32 %v6844, 4294901760
      %6846 = vmatpush1.msra.mxu0 %v6845
      %6847 = vmatprep.subr.mxu0 0.0
      %v6848 = vand.u32 %v6719, 4294901760
      %v6849 = vsub.f32 %v6719, %v6848
      %v6850 = vand.u32 %v6849, 4294901760
      %v6851 = vsub.f32 %v6849, %v6850
      %v6852 = vand.u32 %v6851, 4294901760
      %6853 = vmatpush1.msra.mxu0 %v6852
      %6854 = vmatprep.subr.mxu0 0.0
      %v6855 = vand.u32 %v6718, 4294901760
      %v6856 = vsub.f32 %v6718, %v6855
      %v6857 = vand.u32 %v6856, 4294901760
      %v6858 = vsub.f32 %v6856, %v6857
      %v6859 = vand.u32 %v6858, 4294901760
      %6860 = vmatpush1.msra.mxu0 %v6859
      %6861 = vmatprep.subr.mxu0 0.0
      %v6862 = vand.u32 %v6717, 4294901760
      %v6863 = vsub.f32 %v6717, %v6862
      %v6864 = vand.u32 %v6863, 4294901760
      %v6865 = vsub.f32 %v6863, %v6864
      %v6866 = vand.u32 %v6865, 4294901760
      %6867 = vmatpush1.msra.mxu0 %v6866
      %6868 = vmatprep.subr.mxu0 0.0
      %v6869 = vand.u32 %v6716, 4294901760
      %v6870 = vsub.f32 %v6716, %v6869
      %v6871 = vand.u32 %v6870, 4294901760
      %v6872 = vsub.f32 %v6870, %v6871
      %v6873 = vand.u32 %v6872, 4294901760
      %6874 = vmatpush1.msra.mxu0 %v6873
      %6875 = vmatprep.subr.mxu0 0.0
      %v6876 = vand.u32 %v6715, 4294901760
      %v6877 = vsub.f32 %v6715, %v6876
      %v6878 = vand.u32 %v6877, 4294901760
      %v6879 = vsub.f32 %v6877, %v6878
      %v6880 = vand.u32 %v6879, 4294901760
      %6881 = vmatpush1.msra.mxu0 %v6880
      %6882 = vmatprep.subr.mxu0 0.0
      %v6883 = vand.u32 %v6714, 4294901760
      %v6884 = vsub.f32 %v6714, %v6883
      %v6885 = vand.u32 %v6884, 4294901760
      %v6886 = vsub.f32 %v6884, %v6885
      %v6887 = vand.u32 %v6886, 4294901760
      %6888 = vmatpush1.msra.mxu0 %v6887
      %6889 = vmatprep.subr.mxu0 0.0
      %v6890 = vand.u32 %v6713, 4294901760
      %v6891 = vsub.f32 %v6713, %v6890
      %v6892 = vand.u32 %v6891, 4294901760
      %v6893 = vsub.f32 %v6891, %v6892
      %v6894 = vand.u32 %v6893, 4294901760
      %6895 = vmatpush1.msra.mxu0 %v6894
      %6896 = vmatprep.subr.mxu0 0.0
      %v6897 = vand.u32 %v6712, 4294901760
      %v6898 = vsub.f32 %v6712, %v6897
      %v6899 = vand.u32 %v6898, 4294901760
      %v6900 = vsub.f32 %v6898, %v6899
      %v6901 = vand.u32 %v6900, 4294901760
      %6902 = vmatpush1.msra.mxu0 %v6901
      %6903 = vmatprep.subr.mxu0 0.0
      %v6904 = vand.u32 %v6711, 4294901760
      %v6905 = vsub.f32 %v6711, %v6904
      %v6906 = vand.u32 %v6905, 4294901760
      %v6907 = vsub.f32 %v6905, %v6906
      %v6908 = vand.u32 %v6907, 4294901760
      %6909 = vmatpush1.msra.mxu0 %v6908
      %6910 = vmatprep.subr.mxu0 0.0
      %v6911 = vand.u32 %v6710, 4294901760
      %v6912 = vsub.f32 %v6710, %v6911
      %v6913 = vand.u32 %v6912, 4294901760
      %v6914 = vsub.f32 %v6912, %v6913
      %v6915 = vand.u32 %v6914, 4294901760
      %6916 = vmatpush1.msra.mxu0 %v6915
      %6917 = vmatprep.subr.mxu0 0.0
      %v6918 = vand.u32 %v6709, 4294901760
      %v6919 = vsub.f32 %v6709, %v6918
      %v6920 = vand.u32 %v6919, 4294901760
      %v6921 = vsub.f32 %v6919, %v6920
      %v6922 = vand.u32 %v6921, 4294901760
      %6923 = vmatpush1.msra.mxu0 %v6922
      %6924 = vmatprep.subr.mxu0 0.0
      %v6925 = vand.u32 %v6708, 4294901760
      %v6926 = vsub.f32 %v6708, %v6925
      %v6927 = vand.u32 %v6926, 4294901760
      %v6928 = vsub.f32 %v6926, %v6927
      %v6929 = vand.u32 %v6928, 4294901760
      %6930 = vmatpush1.msra.mxu0 %v6929
      %6931 = vmatprep.subr.mxu0 0.0
      %v6932 = vand.u32 %v6707, 4294901760
      %v6933 = vsub.f32 %v6707, %v6932
      %v6934 = vand.u32 %v6933, 4294901760
      %v6935 = vsub.f32 %v6933, %v6934
      %v6936 = vand.u32 %v6935, 4294901760
      %6937 = vmatpush1.msra.mxu0 %v6936
      %6938 = vmatprep.subr.mxu0 0.0
      %6939 = vmatpush2.msra.mxu0 0.0
      %6940 = vmatprep.subr.mxu0 0.0
      %6941 = vmatpush2.msra.mxu0 0.0
      %6942 = vmatprep.subr.mxu0 0.0
      %6943 = vmatpush2.msra.mxu0 0.0
      %6944 = vmatprep.subr.mxu0 0.0
      %6945 = vmatpush2.msra.mxu0 0.0
      %6946 = vmatprep.subr.mxu0 0.0
      %6947 = vmatpush2.msra.mxu0 0.0
      %6948 = vmatprep.subr.mxu0 0.0
      %6949 = vmatpush2.msra.mxu0 0.0
      %6950 = vmatprep.subr.mxu0 0.0
      %6951 = vmatpush2.msra.mxu0 0.0
      %6952 = vmatprep.subr.mxu0 0.0
      %6953 = vmatpush2.msra.mxu0 0.0
      %6954 = vmatprep.subr.mxu0 0.0
      %6955 = vmatpush2.msra.mxu0 0.0
      %6956 = vmatprep.subr.mxu0 0.0
      %6957 = vmatpush2.msra.mxu0 0.0
      %6958 = vmatprep.subr.mxu0 0.0
      %6959 = vmatpush2.msra.mxu0 0.0
      %6960 = vmatprep.subr.mxu0 0.0
      %6961 = vmatpush2.msra.mxu0 0.0
      %6962 = vmatprep.subr.mxu0 0.0
      %6963 = vmatpush2.msra.mxu0 0.0
      %6964 = vmatprep.subr.mxu0 0.0
      %6965 = vmatpush2.msra.mxu0 0.0
      %6966 = vmatprep.subr.mxu0 0.0
      %6967 = vmatpush2.msra.mxu0 0.0
      %6968 = vmatprep.subr.mxu0 0.0
      %6969 = vmatpush2.msra.mxu0 0.0
      %6970 = vmatprep.mubr.f32.mxu0 0.0
      %6971 = vmatmul.mubr.f32.gmra.mxu0 %v6725
      %v6972 = vpop.f32.mrf.mxu0
      %v6973 = vadd.f32 %v6814, %v6972
      %v6974 = vpop.f32.mrf.mxu0
      %6975 = vmatprep.mubr.f32.mxu0 0.0
      %6976 = vmatmul.mubr.f32.gmra.mxu0 %v6726
      %v6977 = vpop.f32.mrf.mxu0
      %v6978 = vadd.f32 %v6823, %v6977
      %v6979 = vpop.f32.mrf.mxu0
      %6980 = vdwg.mxu0
      %6981 = vmatprep.subr.mxu0 0.0
      %v6982 = vand.u32 %v6722, 4294901760
      %v6983 = vsub.f32 %v6722, %v6982
      %6984 = vmatpush1.msra.mxu0 %v6983
      %6985 = vmatprep.subr.mxu0 0.0
      %v6986 = vand.u32 %v6721, 4294901760
      %v6987 = vsub.f32 %v6721, %v6986
      %6988 = vmatpush1.msra.mxu0 %v6987
      %6989 = vmatprep.subr.mxu0 0.0
      %v6990 = vand.u32 %v6720, 4294901760
      %v6991 = vsub.f32 %v6720, %v6990
      %6992 = vmatpush1.msra.mxu0 %v6991
      %6993 = vmatprep.subr.mxu0 0.0
      %v6994 = vand.u32 %v6719, 4294901760
      %v6995 = vsub.f32 %v6719, %v6994
      %6996 = vmatpush1.msra.mxu0 %v6995
      %6997 = vmatprep.subr.mxu0 0.0
      %v6998 = vand.u32 %v6718, 4294901760
      %v6999 = vsub.f32 %v6718, %v6998
      %7000 = vmatpush1.msra.mxu0 %v6999
      %7001 = vmatprep.subr.mxu0 0.0
      %v7002 = vand.u32 %v6717, 4294901760
      %v7003 = vsub.f32 %v6717, %v7002
      %7004 = vmatpush1.msra.mxu0 %v7003
      %7005 = vmatprep.subr.mxu0 0.0
      %v7006 = vand.u32 %v6716, 4294901760
      %v7007 = vsub.f32 %v6716, %v7006
      %7008 = vmatpush1.msra.mxu0 %v7007
      %7009 = vmatprep.subr.mxu0 0.0
      %v7010 = vand.u32 %v6715, 4294901760
      %v7011 = vsub.f32 %v6715, %v7010
      %7012 = vmatpush1.msra.mxu0 %v7011
      %7013 = vmatprep.subr.mxu0 0.0
      %v7014 = vand.u32 %v6714, 4294901760
      %v7015 = vsub.f32 %v6714, %v7014
      %7016 = vmatpush1.msra.mxu0 %v7015
      %7017 = vmatprep.subr.mxu0 0.0
      %v7018 = vand.u32 %v6713, 4294901760
      %v7019 = vsub.f32 %v6713, %v7018
      %7020 = vmatpush1.msra.mxu0 %v7019
      %7021 = vmatprep.subr.mxu0 0.0
      %v7022 = vand.u32 %v6712, 4294901760
      %v7023 = vsub.f32 %v6712, %v7022
      %7024 = vmatpush1.msra.mxu0 %v7023
      %7025 = vmatprep.subr.mxu0 0.0
      %v7026 = vand.u32 %v6711, 4294901760
      %v7027 = vsub.f32 %v6711, %v7026
      %7028 = vmatpush1.msra.mxu0 %v7027
      %7029 = vmatprep.subr.mxu0 0.0
      %v7030 = vand.u32 %v6710, 4294901760
      %v7031 = vsub.f32 %v6710, %v7030
      %7032 = vmatpush1.msra.mxu0 %v7031
      %7033 = vmatprep.subr.mxu0 0.0
      %v7034 = vand.u32 %v6709, 4294901760
      %v7035 = vsub.f32 %v6709, %v7034
      %7036 = vmatpush1.msra.mxu0 %v7035
      %7037 = vmatprep.subr.mxu0 0.0
      %v7038 = vand.u32 %v6708, 4294901760
      %v7039 = vsub.f32 %v6708, %v7038
      %7040 = vmatpush1.msra.mxu0 %v7039
      %7041 = vmatprep.subr.mxu0 0.0
      %v7042 = vand.u32 %v6707, 4294901760
      %v7043 = vsub.f32 %v6707, %v7042
      %7044 = vmatpush1.msra.mxu0 %v7043
      %7045 = vmatprep.subr.mxu0 0.0
      %7046 = vmatpush2.msra.mxu0 0.0
      %7047 = vmatprep.subr.mxu0 0.0
      %7048 = vmatpush2.msra.mxu0 0.0
      %7049 = vmatprep.subr.mxu0 0.0
      %7050 = vmatpush2.msra.mxu0 0.0
      %7051 = vmatprep.subr.mxu0 0.0
      %7052 = vmatpush2.msra.mxu0 0.0
      %7053 = vmatprep.subr.mxu0 0.0
      %7054 = vmatpush2.msra.mxu0 0.0
      %7055 = vmatprep.subr.mxu0 0.0
      %7056 = vmatpush2.msra.mxu0 0.0
      %7057 = vmatprep.subr.mxu0 0.0
      %7058 = vmatpush2.msra.mxu0 0.0
      %7059 = vmatprep.subr.mxu0 0.0
      %7060 = vmatpush2.msra.mxu0 0.0
      %7061 = vmatprep.subr.mxu0 0.0
      %7062 = vmatpush2.msra.mxu0 0.0
      %7063 = vmatprep.subr.mxu0 0.0
      %7064 = vmatpush2.msra.mxu0 0.0
      %7065 = vmatprep.subr.mxu0 0.0
      %7066 = vmatpush2.msra.mxu0 0.0
      %7067 = vmatprep.subr.mxu0 0.0
      %7068 = vmatpush2.msra.mxu0 0.0
      %7069 = vmatprep.subr.mxu0 0.0
      %7070 = vmatpush2.msra.mxu0 0.0
      %7071 = vmatprep.subr.mxu0 0.0
      %7072 = vmatpush2.msra.mxu0 0.0
      %7073 = vmatprep.subr.mxu0 0.0
      %7074 = vmatpush2.msra.mxu0 0.0
      %7075 = vmatprep.subr.mxu0 0.0
      %7076 = vmatpush2.msra.mxu0 0.0
      %7077 = vmatprep.mubr.f32.mxu0 0.0
      %v7078 = vsub.f32 %v6725, %v6725
      %7079 = vmatmul.mubr.f32.gmra.mxu0 %v7078
      %v7080 = vpop.f32.mrf.mxu0
      %v7081 = vadd.f32 %v6973, %v7080
      %v7082 = vpop.f32.mrf.mxu0
      %7083 = vmatprep.mubr.f32.mxu0 0.0
      %v7084 = vsub.f32 %v6726, %v6726
      %7085 = vmatmul.mubr.f32.gmra.mxu0 %v7084
      %v7086 = vpop.f32.mrf.mxu0
      %v7087 = vadd.f32 %v6978, %v7086
      %v7088 = vpop.f32.mrf.mxu0
      %7089 = vdwg.mxu0
      %7090 = vmatprep.subr.mxu0 0.0
      %v7091 = vand.u32 %v6722, 4294901760
      %7092 = vmatpush1.msra.mxu0 %v7091
      %7093 = vmatprep.subr.mxu0 0.0
      %v7094 = vand.u32 %v6721, 4294901760
      %7095 = vmatpush1.msra.mxu0 %v7094
      %7096 = vmatprep.subr.mxu0 0.0
      %v7097 = vand.u32 %v6720, 4294901760
      %7098 = vmatpush1.msra.mxu0 %v7097
      %7099 = vmatprep.subr.mxu0 0.0
      %v7100 = vand.u32 %v6719, 4294901760
      %7101 = vmatpush1.msra.mxu0 %v7100
      %7102 = vmatprep.subr.mxu0 0.0
      %v7103 = vand.u32 %v6718, 4294901760
      %7104 = vmatpush1.msra.mxu0 %v7103
      %7105 = vmatprep.subr.mxu0 0.0
      %v7106 = vand.u32 %v6717, 4294901760
      %7107 = vmatpush1.msra.mxu0 %v7106
      %7108 = vmatprep.subr.mxu0 0.0
      %v7109 = vand.u32 %v6716, 4294901760
      %7110 = vmatpush1.msra.mxu0 %v7109
      %7111 = vmatprep.subr.mxu0 0.0
      %v7112 = vand.u32 %v6715, 4294901760
      %7113 = vmatpush1.msra.mxu0 %v7112
      %7114 = vmatprep.subr.mxu0 0.0
      %v7115 = vand.u32 %v6714, 4294901760
      %7116 = vmatpush1.msra.mxu0 %v7115
      %7117 = vmatprep.subr.mxu0 0.0
      %v7118 = vand.u32 %v6713, 4294901760
      %7119 = vmatpush1.msra.mxu0 %v7118
      %7120 = vmatprep.subr.mxu0 0.0
      %v7121 = vand.u32 %v6712, 4294901760
      %7122 = vmatpush1.msra.mxu0 %v7121
      %7123 = vmatprep.subr.mxu0 0.0
      %v7124 = vand.u32 %v6711, 4294901760
      %7125 = vmatpush1.msra.mxu0 %v7124
      %7126 = vmatprep.subr.mxu0 0.0
      %v7127 = vand.u32 %v6710, 4294901760
      %7128 = vmatpush1.msra.mxu0 %v7127
      %7129 = vmatprep.subr.mxu0 0.0
      %v7130 = vand.u32 %v6709, 4294901760
      %7131 = vmatpush1.msra.mxu0 %v7130
      %7132 = vmatprep.subr.mxu0 0.0
      %v7133 = vand.u32 %v6708, 4294901760
      %7134 = vmatpush1.msra.mxu0 %v7133
      %7135 = vmatprep.subr.mxu0 0.0
      %v7136 = vand.u32 %v6707, 4294901760
      %7137 = vmatpush1.msra.mxu0 %v7136
      %7138 = vmatprep.subr.mxu0 0.0
      %7139 = vmatpush2.msra.mxu0 0.0
      %7140 = vmatprep.subr.mxu0 0.0
      %7141 = vmatpush2.msra.mxu0 0.0
      %7142 = vmatprep.subr.mxu0 0.0
      %7143 = vmatpush2.msra.mxu0 0.0
      %7144 = vmatprep.subr.mxu0 0.0
      %7145 = vmatpush2.msra.mxu0 0.0
      %7146 = vmatprep.subr.mxu0 0.0
      %7147 = vmatpush2.msra.mxu0 0.0
      %7148 = vmatprep.subr.mxu0 0.0
      %7149 = vmatpush2.msra.mxu0 0.0
      %7150 = vmatprep.subr.mxu0 0.0
      %7151 = vmatpush2.msra.mxu0 0.0
      %7152 = vmatprep.subr.mxu0 0.0
      %7153 = vmatpush2.msra.mxu0 0.0
      %7154 = vmatprep.subr.mxu0 0.0
      %7155 = vmatpush2.msra.mxu0 0.0
      %7156 = vmatprep.subr.mxu0 0.0
      %7157 = vmatpush2.msra.mxu0 0.0
      %7158 = vmatprep.subr.mxu0 0.0
      %7159 = vmatpush2.msra.mxu0 0.0
      %7160 = vmatprep.subr.mxu0 0.0
      %7161 = vmatpush2.msra.mxu0 0.0
      %7162 = vmatprep.subr.mxu0 0.0
      %7163 = vmatpush2.msra.mxu0 0.0
      %7164 = vmatprep.subr.mxu0 0.0
      %7165 = vmatpush2.msra.mxu0 0.0
      %7166 = vmatprep.subr.mxu0 0.0
      %7167 = vmatpush2.msra.mxu0 0.0
      %7168 = vmatprep.subr.mxu0 0.0
      %7169 = vmatpush2.msra.mxu0 0.0
      %7170 = vmatprep.mubr.f32.mxu0 0.0
      %v7171 = vsub.f32 %v6725, %v6725
      %v7172 = vand.u32 %v7171, 4294901760
      %7173 = vmatmul.mubr.f32.gmra.mxu0 %v7172
      %v7174 = vpop.f32.mrf.mxu0
      %v7175 = vadd.f32 %v7081, %v7174
      %v7176 = vpop.f32.mrf.mxu0
      %7177 = vmatprep.mubr.f32.mxu0 0.0
      %v7178 = vsub.f32 %v6726, %v6726
      %v7179 = vand.u32 %v7178, 4294901760
      %7180 = vmatmul.mubr.f32.gmra.mxu0 %v7179
      %v7181 = vpop.f32.mrf.mxu0
      %v7182 = vadd.f32 %v7087, %v7181
      %v7183 = vpop.f32.mrf.mxu0
      %7184 = vdwg.mxu0
      %7185 = vmatprep.subr.mxu0 0.0
      %v7186 = vand.u32 %v6722, 4294901760
      %v7187 = vsub.f32 %v6722, %v7186
      %v7188 = vand.u32 %v7187, 4294901760
      %7189 = vmatpush1.msra.mxu0 %v7188
      %7190 = vmatprep.subr.mxu0 0.0
      %v7191 = vand.u32 %v6721, 4294901760
      %v7192 = vsub.f32 %v6721, %v7191
      %v7193 = vand.u32 %v7192, 4294901760
      %7194 = vmatpush1.msra.mxu0 %v7193
      %7195 = vmatprep.subr.mxu0 0.0
      %v7196 = vand.u32 %v6720, 4294901760
      %v7197 = vsub.f32 %v6720, %v7196
      %v7198 = vand.u32 %v7197, 4294901760
      %7199 = vmatpush1.msra.mxu0 %v7198
      %7200 = vmatprep.subr.mxu0 0.0
      %v7201 = vand.u32 %v6719, 4294901760
      %v7202 = vsub.f32 %v6719, %v7201
      %v7203 = vand.u32 %v7202, 4294901760
      %7204 = vmatpush1.msra.mxu0 %v7203
      %7205 = vmatprep.subr.mxu0 0.0
      %v7206 = vand.u32 %v6718, 4294901760
      %v7207 = vsub.f32 %v6718, %v7206
      %v7208 = vand.u32 %v7207, 4294901760
      %7209 = vmatpush1.msra.mxu0 %v7208
      %7210 = vmatprep.subr.mxu0 0.0
      %v7211 = vand.u32 %v6717, 4294901760
      %v7212 = vsub.f32 %v6717, %v7211
      %v7213 = vand.u32 %v7212, 4294901760
      %7214 = vmatpush1.msra.mxu0 %v7213
      %7215 = vmatprep.subr.mxu0 0.0
      %v7216 = vand.u32 %v6716, 4294901760
      %v7217 = vsub.f32 %v6716, %v7216
      %v7218 = vand.u32 %v7217, 4294901760
      %7219 = vmatpush1.msra.mxu0 %v7218
      %7220 = vmatprep.subr.mxu0 0.0
      %v7221 = vand.u32 %v6715, 4294901760
      %v7222 = vsub.f32 %v6715, %v7221
      %v7223 = vand.u32 %v7222, 4294901760
      %7224 = vmatpush1.msra.mxu0 %v7223
      %7225 = vmatprep.subr.mxu0 0.0
      %v7226 = vand.u32 %v6714, 4294901760
      %v7227 = vsub.f32 %v6714, %v7226
      %v7228 = vand.u32 %v7227, 4294901760
      %7229 = vmatpush1.msra.mxu0 %v7228
      %7230 = vmatprep.subr.mxu0 0.0
      %v7231 = vand.u32 %v6713, 4294901760
      %v7232 = vsub.f32 %v6713, %v7231
      %v7233 = vand.u32 %v7232, 4294901760
      %7234 = vmatpush1.msra.mxu0 %v7233
      %7235 = vmatprep.subr.mxu0 0.0
      %v7236 = vand.u32 %v6712, 4294901760
      %v7237 = vsub.f32 %v6712, %v7236
      %v7238 = vand.u32 %v7237, 4294901760
      %7239 = vmatpush1.msra.mxu0 %v7238
      %7240 = vmatprep.subr.mxu0 0.0
      %v7241 = vand.u32 %v6711, 4294901760
      %v7242 = vsub.f32 %v6711, %v7241
      %v7243 = vand.u32 %v7242, 4294901760
      %7244 = vmatpush1.msra.mxu0 %v7243
      %7245 = vmatprep.subr.mxu0 0.0
      %v7246 = vand.u32 %v6710, 4294901760
      %v7247 = vsub.f32 %v6710, %v7246
      %v7248 = vand.u32 %v7247, 4294901760
      %7249 = vmatpush1.msra.mxu0 %v7248
      %7250 = vmatprep.subr.mxu0 0.0
      %v7251 = vand.u32 %v6709, 4294901760
      %v7252 = vsub.f32 %v6709, %v7251
      %v7253 = vand.u32 %v7252, 4294901760
      %7254 = vmatpush1.msra.mxu0 %v7253
      %7255 = vmatprep.subr.mxu0 0.0
      %v7256 = vand.u32 %v6708, 4294901760
      %v7257 = vsub.f32 %v6708, %v7256
      %v7258 = vand.u32 %v7257, 4294901760
      %7259 = vmatpush1.msra.mxu0 %v7258
      %7260 = vmatprep.subr.mxu0 0.0
      %v7261 = vand.u32 %v6707, 4294901760
      %v7262 = vsub.f32 %v6707, %v7261
      %v7263 = vand.u32 %v7262, 4294901760
      %7264 = vmatpush1.msra.mxu0 %v7263
      %7265 = vmatprep.subr.mxu0 0.0
      %7266 = vmatpush2.msra.mxu0 0.0
      %7267 = vmatprep.subr.mxu0 0.0
      %7268 = vmatpush2.msra.mxu0 0.0
      %7269 = vmatprep.subr.mxu0 0.0
      %7270 = vmatpush2.msra.mxu0 0.0
      %7271 = vmatprep.subr.mxu0 0.0
      %7272 = vmatpush2.msra.mxu0 0.0
      %7273 = vmatprep.subr.mxu0 0.0
      %7274 = vmatpush2.msra.mxu0 0.0
      %7275 = vmatprep.subr.mxu0 0.0
      %7276 = vmatpush2.msra.mxu0 0.0
      %7277 = vmatprep.subr.mxu0 0.0
      %7278 = vmatpush2.msra.mxu0 0.0
      %7279 = vmatprep.subr.mxu0 0.0
      %7280 = vmatpush2.msra.mxu0 0.0
      %7281 = vmatprep.subr.mxu0 0.0
      %7282 = vmatpush2.msra.mxu0 0.0
      %7283 = vmatprep.subr.mxu0 0.0
      %7284 = vmatpush2.msra.mxu0 0.0
      %7285 = vmatprep.subr.mxu0 0.0
      %7286 = vmatpush2.msra.mxu0 0.0
      %7287 = vmatprep.subr.mxu0 0.0
      %7288 = vmatpush2.msra.mxu0 0.0
      %7289 = vmatprep.subr.mxu0 0.0
      %7290 = vmatpush2.msra.mxu0 0.0
      %7291 = vmatprep.subr.mxu0 0.0
      %7292 = vmatpush2.msra.mxu0 0.0
      %7293 = vmatprep.subr.mxu0 0.0
      %7294 = vmatpush2.msra.mxu0 0.0
      %7295 = vmatprep.subr.mxu0 0.0
      %7296 = vmatpush2.msra.mxu0 0.0
      %7297 = vmatprep.mubr.f32.mxu0 0.0
      %7298 = vmatmul.mubr.f32.gmra.mxu0 %v6725
      %v7299 = vpop.f32.mrf.mxu0
      %v7300 = vadd.f32 %v7175, %v7299
      %v7301 = vpop.f32.mrf.mxu0
      %7302 = vmatprep.mubr.f32.mxu0 0.0
      %7303 = vmatmul.mubr.f32.gmra.mxu0 %v6726
      %v7304 = vpop.f32.mrf.mxu0
      %v7305 = vadd.f32 %v7182, %v7304
      %v7306 = vpop.f32.mrf.mxu0
      %7307 = vdwg.mxu0
      %7308 = vmatprep.subr.mxu0 0.0
      %v7309 = vand.u32 %v6722, 4294901760
      %7310 = vmatpush1.msra.mxu0 %v7309
      %7311 = vmatprep.subr.mxu0 0.0
      %v7312 = vand.u32 %v6721, 4294901760
      %7313 = vmatpush1.msra.mxu0 %v7312
      %7314 = vmatprep.subr.mxu0 0.0
      %v7315 = vand.u32 %v6720, 4294901760
      %7316 = vmatpush1.msra.mxu0 %v7315
      %7317 = vmatprep.subr.mxu0 0.0
      %v7318 = vand.u32 %v6719, 4294901760
      %7319 = vmatpush1.msra.mxu0 %v7318
      %7320 = vmatprep.subr.mxu0 0.0
      %v7321 = vand.u32 %v6718, 4294901760
      %7322 = vmatpush1.msra.mxu0 %v7321
      %7323 = vmatprep.subr.mxu0 0.0
      %v7324 = vand.u32 %v6717, 4294901760
      %7325 = vmatpush1.msra.mxu0 %v7324
      %7326 = vmatprep.subr.mxu0 0.0
      %v7327 = vand.u32 %v6716, 4294901760
      %7328 = vmatpush1.msra.mxu0 %v7327
      %7329 = vmatprep.subr.mxu0 0.0
      %v7330 = vand.u32 %v6715, 4294901760
      %7331 = vmatpush1.msra.mxu0 %v7330
      %7332 = vmatprep.subr.mxu0 0.0
      %v7333 = vand.u32 %v6714, 4294901760
      %7334 = vmatpush1.msra.mxu0 %v7333
      %7335 = vmatprep.subr.mxu0 0.0
      %v7336 = vand.u32 %v6713, 4294901760
      %7337 = vmatpush1.msra.mxu0 %v7336
      %7338 = vmatprep.subr.mxu0 0.0
      %v7339 = vand.u32 %v6712, 4294901760
      %7340 = vmatpush1.msra.mxu0 %v7339
      %7341 = vmatprep.subr.mxu0 0.0
      %v7342 = vand.u32 %v6711, 4294901760
      %7343 = vmatpush1.msra.mxu0 %v7342
      %7344 = vmatprep.subr.mxu0 0.0
      %v7345 = vand.u32 %v6710, 4294901760
      %7346 = vmatpush1.msra.mxu0 %v7345
      %7347 = vmatprep.subr.mxu0 0.0
      %v7348 = vand.u32 %v6709, 4294901760
      %7349 = vmatpush1.msra.mxu0 %v7348
      %7350 = vmatprep.subr.mxu0 0.0
      %v7351 = vand.u32 %v6708, 4294901760
      %7352 = vmatpush1.msra.mxu0 %v7351
      %7353 = vmatprep.subr.mxu0 0.0
      %v7354 = vand.u32 %v6707, 4294901760
      %7355 = vmatpush1.msra.mxu0 %v7354
      %7356 = vmatprep.subr.mxu0 0.0
      %7357 = vmatpush2.msra.mxu0 0.0
      %7358 = vmatprep.subr.mxu0 0.0
      %7359 = vmatpush2.msra.mxu0 0.0
      %7360 = vmatprep.subr.mxu0 0.0
      %7361 = vmatpush2.msra.mxu0 0.0
      %7362 = vmatprep.subr.mxu0 0.0
      %7363 = vmatpush2.msra.mxu0 0.0
      %7364 = vmatprep.subr.mxu0 0.0
      %7365 = vmatpush2.msra.mxu0 0.0
      %7366 = vmatprep.subr.mxu0 0.0
      %7367 = vmatpush2.msra.mxu0 0.0
      %7368 = vmatprep.subr.mxu0 0.0
      %7369 = vmatpush2.msra.mxu0 0.0
      %7370 = vmatprep.subr.mxu0 0.0
      %7371 = vmatpush2.msra.mxu0 0.0
      %7372 = vmatprep.subr.mxu0 0.0
      %7373 = vmatpush2.msra.mxu0 0.0
      %7374 = vmatprep.subr.mxu0 0.0
      %7375 = vmatpush2.msra.mxu0 0.0
      %7376 = vmatprep.subr.mxu0 0.0
      %7377 = vmatpush2.msra.mxu0 0.0
      %7378 = vmatprep.subr.mxu0 0.0
      %7379 = vmatpush2.msra.mxu0 0.0
      %7380 = vmatprep.subr.mxu0 0.0
      %7381 = vmatpush2.msra.mxu0 0.0
      %7382 = vmatprep.subr.mxu0 0.0
      %7383 = vmatpush2.msra.mxu0 0.0
      %7384 = vmatprep.subr.mxu0 0.0
      %7385 = vmatpush2.msra.mxu0 0.0
      %7386 = vmatprep.subr.mxu0 0.0
      %7387 = vmatpush2.msra.mxu0 0.0
      %7388 = vmatprep.mubr.f32.mxu0 0.0
      %7389 = vmatmul.mubr.f32.gmra.mxu0 %v6725
      %v7390 = vpop.f32.mrf.mxu0
      %v7391 = vadd.f32 %v7300, %v7390
      %v7392 = vpop.f32.mrf.mxu0
      %7393 = vmatprep.mubr.f32.mxu0 0.0
      %7394 = vmatmul.mubr.f32.gmra.mxu0 %v6726
      %v7395 = vpop.f32.mrf.mxu0
      %v7396 = vadd.f32 %v7305, %v7395
      %v7397 = vpop.f32.mrf.mxu0
      %7398 = vdwg.mxu0
      %v7399 = vld [vmem:[%s326] sm:$0xff]
      %v7400 = vld [vmem:[%s326 + $0x8] sm:$0xff]
      %v7401 = vld [vmem:[%s5 + $0xa0] sm:$0xff]
      %v7402 = vld [vmem:[%s5 + $0xa8] sm:$0x1]
      %v7403 = vlaneseq
      %v7404 = vshrl.u32 %v7403, 7
      %v7405 = vsub.s32 0, %v7404
      %v7406 = vrot.slane %v7402, %v7405
      %vm7407 = vcmask 64512
      %v7409 = vsel %vm7407, %v7399, 0
      %v7412 = vsel %vm7407, %v7400, 0
      %7414 = vmatprep.subr.mxu0 0.0
      %7415 = vmatpush1.msra.mxu0 0.0
      %7416 = vmatprep.subr.mxu0 0.0
      %7417 = vmatpush1.msra.mxu0 0.0
      %7418 = vmatprep.subr.mxu0 0.0
      %7419 = vmatpush1.msra.mxu0 0.0
      %7420 = vmatprep.subr.mxu0 0.0
      %7421 = vmatpush1.msra.mxu0 0.0
      %7422 = vmatprep.subr.mxu0 0.0
      %7423 = vmatpush1.msra.mxu0 0.0
      %7424 = vmatprep.subr.mxu0 0.0
      %7425 = vmatpush1.msra.mxu0 0.0
      %7426 = vmatprep.subr.mxu0 0.0
      %7427 = vmatpush1.msra.mxu0 0.0
      %7428 = vmatprep.subr.mxu0 0.0
      %7429 = vmatpush1.msra.mxu0 0.0
      %7430 = vmatprep.subr.mxu0 0.0
      %7431 = vmatpush1.msra.mxu0 0.0
      %7432 = vmatprep.subr.mxu0 0.0
      %7433 = vmatpush1.msra.mxu0 0.0
      %7434 = vmatprep.subr.mxu0 0.0
      %7435 = vmatpush1.msra.mxu0 0.0
      %7436 = vmatprep.subr.mxu0 0.0
      %7437 = vmatpush1.msra.mxu0 0.0
      %7438 = vmatprep.subr.mxu0 0.0
      %7439 = vmatpush1.msra.mxu0 0.0
      %7440 = vmatprep.subr.mxu0 0.0
      %7441 = vmatpush1.msra.mxu0 0.0
      %7442 = vmatprep.subr.mxu0 0.0
      %7443 = vmatpush1.msra.mxu0 0.0
      %7444 = vmatprep.subr.mxu0 0.0
      %v7445 = vand.u32 %v7401, 4294901760
      %7446 = vmatpush1.msra.mxu0 %v7445
      %7447 = vmatprep.subr.mxu0 0.0
      %7448 = vmatpush2.msra.mxu0 0.0
      %7449 = vmatprep.subr.mxu0 0.0
      %7450 = vmatpush2.msra.mxu0 0.0
      %7451 = vmatprep.subr.mxu0 0.0
      %7452 = vmatpush2.msra.mxu0 0.0
      %7453 = vmatprep.subr.mxu0 0.0
      %7454 = vmatpush2.msra.mxu0 0.0
      %7455 = vmatprep.subr.mxu0 0.0
      %7456 = vmatpush2.msra.mxu0 0.0
      %7457 = vmatprep.subr.mxu0 0.0
      %7458 = vmatpush2.msra.mxu0 0.0
      %7459 = vmatprep.subr.mxu0 0.0
      %7460 = vmatpush2.msra.mxu0 0.0
      %7461 = vmatprep.subr.mxu0 0.0
      %7462 = vmatpush2.msra.mxu0 0.0
      %7463 = vmatprep.subr.mxu0 0.0
      %7464 = vmatpush2.msra.mxu0 0.0
      %7465 = vmatprep.subr.mxu0 0.0
      %7466 = vmatpush2.msra.mxu0 0.0
      %7467 = vmatprep.subr.mxu0 0.0
      %7468 = vmatpush2.msra.mxu0 0.0
      %7469 = vmatprep.subr.mxu0 0.0
      %7470 = vmatpush2.msra.mxu0 0.0
      %7471 = vmatprep.subr.mxu0 0.0
      %7472 = vmatpush2.msra.mxu0 0.0
      %7473 = vmatprep.subr.mxu0 0.0
      %7474 = vmatpush2.msra.mxu0 0.0
      %7475 = vmatprep.subr.mxu0 0.0
      %7476 = vmatpush2.msra.mxu0 0.0
      %7477 = vmatprep.subr.mxu0 0.0
      %7478 = vmatpush2.msra.mxu0 0.0
      %7479 = vmatprep.mubr.f32.mxu0 0.0
      %v7480 = vand.u32 %v7409, 4294901760
      %v7481 = vsub.f32 %v7409, %v7480
      %v7482 = vand.u32 %v7481, 4294901760
      %v7483 = vsub.f32 %v7481, %v7482
      %v7484 = vand.u32 %v7483, 4294901760
      %7485 = vmatmul.mubr.f32.gmra.mxu0 %v7484
      %v7486 = vpop.f32.mrf.mxu0
      %v7487 = vadd.f32 %v7406, %v7486
      %v7488 = vpop.f32.mrf.mxu0
      %7489 = vmatprep.mubr.f32.mxu0 0.0
      %v7490 = vand.u32 %v7412, 4294901760
      %v7491 = vsub.f32 %v7412, %v7490
      %v7492 = vand.u32 %v7491, 4294901760
      %v7493 = vsub.f32 %v7491, %v7492
      %v7494 = vand.u32 %v7493, 4294901760
      %7495 = vmatmul.mubr.f32.gmra.mxu0 %v7494
      %v7496 = vpop.f32.mrf.mxu0
      %v7497 = vadd.f32 %v7406, %v7496
      %v7498 = vpop.f32.mrf.mxu0
      %7499 = vdwg.mxu0
      %7500 = vmatprep.subr.mxu0 0.0
      %7501 = vmatpush1.msra.mxu0 0.0
      %7502 = vmatprep.subr.mxu0 0.0
      %7503 = vmatpush1.msra.mxu0 0.0
      %7504 = vmatprep.subr.mxu0 0.0
      %7505 = vmatpush1.msra.mxu0 0.0
      %7506 = vmatprep.subr.mxu0 0.0
      %7507 = vmatpush1.msra.mxu0 0.0
      %7508 = vmatprep.subr.mxu0 0.0
      %7509 = vmatpush1.msra.mxu0 0.0
      %7510 = vmatprep.subr.mxu0 0.0
      %7511 = vmatpush1.msra.mxu0 0.0
      %7512 = vmatprep.subr.mxu0 0.0
      %7513 = vmatpush1.msra.mxu0 0.0
      %7514 = vmatprep.subr.mxu0 0.0
      %7515 = vmatpush1.msra.mxu0 0.0
      %7516 = vmatprep.subr.mxu0 0.0
      %7517 = vmatpush1.msra.mxu0 0.0
      %7518 = vmatprep.subr.mxu0 0.0
      %7519 = vmatpush1.msra.mxu0 0.0
      %7520 = vmatprep.subr.mxu0 0.0
      %7521 = vmatpush1.msra.mxu0 0.0
      %7522 = vmatprep.subr.mxu0 0.0
      %7523 = vmatpush1.msra.mxu0 0.0
      %7524 = vmatprep.subr.mxu0 0.0
      %7525 = vmatpush1.msra.mxu0 0.0
      %7526 = vmatprep.subr.mxu0 0.0
      %7527 = vmatpush1.msra.mxu0 0.0
      %7528 = vmatprep.subr.mxu0 0.0
      %7529 = vmatpush1.msra.mxu0 0.0
      %7530 = vmatprep.subr.mxu0 0.0
      %v7531 = vand.u32 %v7401, 4294901760
      %v7532 = vsub.f32 %v7401, %v7531
      %v7533 = vand.u32 %v7532, 4294901760
      %v7534 = vsub.f32 %v7532, %v7533
      %v7535 = vand.u32 %v7534, 4294901760
      %7536 = vmatpush1.msra.mxu0 %v7535
      %7537 = vmatprep.subr.mxu0 0.0
      %7538 = vmatpush2.msra.mxu0 0.0
      %7539 = vmatprep.subr.mxu0 0.0
      %7540 = vmatpush2.msra.mxu0 0.0
      %7541 = vmatprep.subr.mxu0 0.0
      %7542 = vmatpush2.msra.mxu0 0.0
      %7543 = vmatprep.subr.mxu0 0.0
      %7544 = vmatpush2.msra.mxu0 0.0
      %7545 = vmatprep.subr.mxu0 0.0
      %7546 = vmatpush2.msra.mxu0 0.0
      %7547 = vmatprep.subr.mxu0 0.0
      %7548 = vmatpush2.msra.mxu0 0.0
      %7549 = vmatprep.subr.mxu0 0.0
      %7550 = vmatpush2.msra.mxu0 0.0
      %7551 = vmatprep.subr.mxu0 0.0
      %7552 = vmatpush2.msra.mxu0 0.0
      %7553 = vmatprep.subr.mxu0 0.0
      %7554 = vmatpush2.msra.mxu0 0.0
      %7555 = vmatprep.subr.mxu0 0.0
      %7556 = vmatpush2.msra.mxu0 0.0
      %7557 = vmatprep.subr.mxu0 0.0
      %7558 = vmatpush2.msra.mxu0 0.0
      %7559 = vmatprep.subr.mxu0 0.0
      %7560 = vmatpush2.msra.mxu0 0.0
      %7561 = vmatprep.subr.mxu0 0.0
      %7562 = vmatpush2.msra.mxu0 0.0
      %7563 = vmatprep.subr.mxu0 0.0
      %7564 = vmatpush2.msra.mxu0 0.0
      %7565 = vmatprep.subr.mxu0 0.0
      %7566 = vmatpush2.msra.mxu0 0.0
      %7567 = vmatprep.subr.mxu0 0.0
      %7568 = vmatpush2.msra.mxu0 0.0
      %7569 = vmatprep.mubr.f32.mxu0 0.0
      %v7570 = vand.u32 %v7409, 4294901760
      %7571 = vmatmul.mubr.f32.gmra.mxu0 %v7570
      %v7572 = vpop.f32.mrf.mxu0
      %v7573 = vadd.f32 %v7487, %v7572
      %v7574 = vpop.f32.mrf.mxu0
      %7575 = vmatprep.mubr.f32.mxu0 0.0
      %v7576 = vand.u32 %v7412, 4294901760
      %7577 = vmatmul.mubr.f32.gmra.mxu0 %v7576
      %v7578 = vpop.f32.mrf.mxu0
      %v7579 = vadd.f32 %v7497, %v7578
      %v7580 = vpop.f32.mrf.mxu0
      %7581 = vdwg.mxu0
      %7582 = vmatprep.subr.mxu0 0.0
      %7583 = vmatpush1.msra.mxu0 0.0
      %7584 = vmatprep.subr.mxu0 0.0
      %7585 = vmatpush1.msra.mxu0 0.0
      %7586 = vmatprep.subr.mxu0 0.0
      %7587 = vmatpush1.msra.mxu0 0.0
      %7588 = vmatprep.subr.mxu0 0.0
      %7589 = vmatpush1.msra.mxu0 0.0
      %7590 = vmatprep.subr.mxu0 0.0
      %7591 = vmatpush1.msra.mxu0 0.0
      %7592 = vmatprep.subr.mxu0 0.0
      %7593 = vmatpush1.msra.mxu0 0.0
      %7594 = vmatprep.subr.mxu0 0.0
      %7595 = vmatpush1.msra.mxu0 0.0
      %7596 = vmatprep.subr.mxu0 0.0
      %7597 = vmatpush1.msra.mxu0 0.0
      %7598 = vmatprep.subr.mxu0 0.0
      %7599 = vmatpush1.msra.mxu0 0.0
      %7600 = vmatprep.subr.mxu0 0.0
      %7601 = vmatpush1.msra.mxu0 0.0
      %7602 = vmatprep.subr.mxu0 0.0
      %7603 = vmatpush1.msra.mxu0 0.0
      %7604 = vmatprep.subr.mxu0 0.0
      %7605 = vmatpush1.msra.mxu0 0.0
      %7606 = vmatprep.subr.mxu0 0.0
      %7607 = vmatpush1.msra.mxu0 0.0
      %7608 = vmatprep.subr.mxu0 0.0
      %7609 = vmatpush1.msra.mxu0 0.0
      %7610 = vmatprep.subr.mxu0 0.0
      %7611 = vmatpush1.msra.mxu0 0.0
      %7612 = vmatprep.subr.mxu0 0.0
      %v7613 = vand.u32 %v7401, 4294901760
      %v7614 = vsub.f32 %v7401, %v7613
      %7615 = vmatpush1.msra.mxu0 %v7614
      %7616 = vmatprep.subr.mxu0 0.0
      %7617 = vmatpush2.msra.mxu0 0.0
      %7618 = vmatprep.subr.mxu0 0.0
      %7619 = vmatpush2.msra.mxu0 0.0
      %7620 = vmatprep.subr.mxu0 0.0
      %7621 = vmatpush2.msra.mxu0 0.0
      %7622 = vmatprep.subr.mxu0 0.0
      %7623 = vmatpush2.msra.mxu0 0.0
      %7624 = vmatprep.subr.mxu0 0.0
      %7625 = vmatpush2.msra.mxu0 0.0
      %7626 = vmatprep.subr.mxu0 0.0
      %7627 = vmatpush2.msra.mxu0 0.0
      %7628 = vmatprep.subr.mxu0 0.0
      %7629 = vmatpush2.msra.mxu0 0.0
      %7630 = vmatprep.subr.mxu0 0.0
      %7631 = vmatpush2.msra.mxu0 0.0
      %7632 = vmatprep.subr.mxu0 0.0
      %7633 = vmatpush2.msra.mxu0 0.0
      %7634 = vmatprep.subr.mxu0 0.0
      %7635 = vmatpush2.msra.mxu0 0.0
      %7636 = vmatprep.subr.mxu0 0.0
      %7637 = vmatpush2.msra.mxu0 0.0
      %7638 = vmatprep.subr.mxu0 0.0
      %7639 = vmatpush2.msra.mxu0 0.0
      %7640 = vmatprep.subr.mxu0 0.0
      %7641 = vmatpush2.msra.mxu0 0.0
      %7642 = vmatprep.subr.mxu0 0.0
      %7643 = vmatpush2.msra.mxu0 0.0
      %7644 = vmatprep.subr.mxu0 0.0
      %7645 = vmatpush2.msra.mxu0 0.0
      %7646 = vmatprep.subr.mxu0 0.0
      %7647 = vmatpush2.msra.mxu0 0.0
      %7648 = vmatprep.mubr.f32.mxu0 0.0
      %v7649 = vand.u32 %v7409, 4294901760
      %v7650 = vsub.f32 %v7409, %v7649
      %7651 = vmatmul.mubr.f32.gmra.mxu0 %v7650
      %v7652 = vpop.f32.mrf.mxu0
      %v7653 = vadd.f32 %v7573, %v7652
      %v7654 = vpop.f32.mrf.mxu0
      %7655 = vmatprep.mubr.f32.mxu0 0.0
      %v7656 = vand.u32 %v7412, 4294901760
      %v7657 = vsub.f32 %v7412, %v7656
      %7658 = vmatmul.mubr.f32.gmra.mxu0 %v7657
      %v7659 = vpop.f32.mrf.mxu0
      %v7660 = vadd.f32 %v7579, %v7659
      %v7661 = vpop.f32.mrf.mxu0
      %7662 = vdwg.mxu0
      %7663 = vmatprep.subr.mxu0 0.0
      %7664 = vmatpush1.msra.mxu0 0.0
      %7665 = vmatprep.subr.mxu0 0.0
      %7666 = vmatpush1.msra.mxu0 0.0
      %7667 = vmatprep.subr.mxu0 0.0
      %7668 = vmatpush1.msra.mxu0 0.0
      %7669 = vmatprep.subr.mxu0 0.0
      %7670 = vmatpush1.msra.mxu0 0.0
      %7671 = vmatprep.subr.mxu0 0.0
      %7672 = vmatpush1.msra.mxu0 0.0
      %7673 = vmatprep.subr.mxu0 0.0
      %7674 = vmatpush1.msra.mxu0 0.0
      %7675 = vmatprep.subr.mxu0 0.0
      %7676 = vmatpush1.msra.mxu0 0.0
      %7677 = vmatprep.subr.mxu0 0.0
      %7678 = vmatpush1.msra.mxu0 0.0
      %7679 = vmatprep.subr.mxu0 0.0
      %7680 = vmatpush1.msra.mxu0 0.0
      %7681 = vmatprep.subr.mxu0 0.0
      %7682 = vmatpush1.msra.mxu0 0.0
      %7683 = vmatprep.subr.mxu0 0.0
      %7684 = vmatpush1.msra.mxu0 0.0
      %7685 = vmatprep.subr.mxu0 0.0
      %7686 = vmatpush1.msra.mxu0 0.0
      %7687 = vmatprep.subr.mxu0 0.0
      %7688 = vmatpush1.msra.mxu0 0.0
      %7689 = vmatprep.subr.mxu0 0.0
      %7690 = vmatpush1.msra.mxu0 0.0
      %7691 = vmatprep.subr.mxu0 0.0
      %7692 = vmatpush1.msra.mxu0 0.0
      %7693 = vmatprep.subr.mxu0 0.0
      %v7694 = vand.u32 %v7401, 4294901760
      %7695 = vmatpush1.msra.mxu0 %v7694
      %7696 = vmatprep.subr.mxu0 0.0
      %7697 = vmatpush2.msra.mxu0 0.0
      %7698 = vmatprep.subr.mxu0 0.0
      %7699 = vmatpush2.msra.mxu0 0.0
      %7700 = vmatprep.subr.mxu0 0.0
      %7701 = vmatpush2.msra.mxu0 0.0
      %7702 = vmatprep.subr.mxu0 0.0
      %7703 = vmatpush2.msra.mxu0 0.0
      %7704 = vmatprep.subr.mxu0 0.0
      %7705 = vmatpush2.msra.mxu0 0.0
      %7706 = vmatprep.subr.mxu0 0.0
      %7707 = vmatpush2.msra.mxu0 0.0
      %7708 = vmatprep.subr.mxu0 0.0
      %7709 = vmatpush2.msra.mxu0 0.0
      %7710 = vmatprep.subr.mxu0 0.0
      %7711 = vmatpush2.msra.mxu0 0.0
      %7712 = vmatprep.subr.mxu0 0.0
      %7713 = vmatpush2.msra.mxu0 0.0
      %7714 = vmatprep.subr.mxu0 0.0
      %7715 = vmatpush2.msra.mxu0 0.0
      %7716 = vmatprep.subr.mxu0 0.0
      %7717 = vmatpush2.msra.mxu0 0.0
      %7718 = vmatprep.subr.mxu0 0.0
      %7719 = vmatpush2.msra.mxu0 0.0
      %7720 = vmatprep.subr.mxu0 0.0
      %7721 = vmatpush2.msra.mxu0 0.0
      %7722 = vmatprep.subr.mxu0 0.0
      %7723 = vmatpush2.msra.mxu0 0.0
      %7724 = vmatprep.subr.mxu0 0.0
      %7725 = vmatpush2.msra.mxu0 0.0
      %7726 = vmatprep.subr.mxu0 0.0
      %7727 = vmatpush2.msra.mxu0 0.0
      %7728 = vmatprep.mubr.f32.mxu0 0.0
      %v7729 = vand.u32 %v7409, 4294901760
      %v7730 = vsub.f32 %v7409, %v7729
      %v7731 = vand.u32 %v7730, 4294901760
      %7732 = vmatmul.mubr.f32.gmra.mxu0 %v7731
      %v7733 = vpop.f32.mrf.mxu0
      %v7734 = vadd.f32 %v7653, %v7733
      %v7735 = vpop.f32.mrf.mxu0
      %7736 = vmatprep.mubr.f32.mxu0 0.0
      %v7737 = vand.u32 %v7412, 4294901760
      %v7738 = vsub.f32 %v7412, %v7737
      %v7739 = vand.u32 %v7738, 4294901760
      %7740 = vmatmul.mubr.f32.gmra.mxu0 %v7739
      %v7741 = vpop.f32.mrf.mxu0
      %v7742 = vadd.f32 %v7660, %v7741
      %v7743 = vpop.f32.mrf.mxu0
      %7744 = vdwg.mxu0
      %7745 = vmatprep.subr.mxu0 0.0
      %7746 = vmatpush1.msra.mxu0 0.0
      %7747 = vmatprep.subr.mxu0 0.0
      %7748 = vmatpush1.msra.mxu0 0.0
      %7749 = vmatprep.subr.mxu0 0.0
      %7750 = vmatpush1.msra.mxu0 0.0
      %7751 = vmatprep.subr.mxu0 0.0
      %7752 = vmatpush1.msra.mxu0 0.0
      %7753 = vmatprep.subr.mxu0 0.0
      %7754 = vmatpush1.msra.mxu0 0.0
      %7755 = vmatprep.subr.mxu0 0.0
      %7756 = vmatpush1.msra.mxu0 0.0
      %7757 = vmatprep.subr.mxu0 0.0
      %7758 = vmatpush1.msra.mxu0 0.0
      %7759 = vmatprep.subr.mxu0 0.0
      %7760 = vmatpush1.msra.mxu0 0.0
      %7761 = vmatprep.subr.mxu0 0.0
      %7762 = vmatpush1.msra.mxu0 0.0
      %7763 = vmatprep.subr.mxu0 0.0
      %7764 = vmatpush1.msra.mxu0 0.0
      %7765 = vmatprep.subr.mxu0 0.0
      %7766 = vmatpush1.msra.mxu0 0.0
      %7767 = vmatprep.subr.mxu0 0.0
      %7768 = vmatpush1.msra.mxu0 0.0
      %7769 = vmatprep.subr.mxu0 0.0
      %7770 = vmatpush1.msra.mxu0 0.0
      %7771 = vmatprep.subr.mxu0 0.0
      %7772 = vmatpush1.msra.mxu0 0.0
      %7773 = vmatprep.subr.mxu0 0.0
      %7774 = vmatpush1.msra.mxu0 0.0
      %7775 = vmatprep.subr.mxu0 0.0
      %v7776 = vand.u32 %v7401, 4294901760
      %v7777 = vsub.f32 %v7401, %v7776
      %v7778 = vand.u32 %v7777, 4294901760
      %7779 = vmatpush1.msra.mxu0 %v7778
      %7780 = vmatprep.subr.mxu0 0.0
      %7781 = vmatpush2.msra.mxu0 0.0
      %7782 = vmatprep.subr.mxu0 0.0
      %7783 = vmatpush2.msra.mxu0 0.0
      %7784 = vmatprep.subr.mxu0 0.0
      %7785 = vmatpush2.msra.mxu0 0.0
      %7786 = vmatprep.subr.mxu0 0.0
      %7787 = vmatpush2.msra.mxu0 0.0
      %7788 = vmatprep.subr.mxu0 0.0
      %7789 = vmatpush2.msra.mxu0 0.0
      %7790 = vmatprep.subr.mxu0 0.0
      %7791 = vmatpush2.msra.mxu0 0.0
      %7792 = vmatprep.subr.mxu0 0.0
      %7793 = vmatpush2.msra.mxu0 0.0
      %7794 = vmatprep.subr.mxu0 0.0
      %7795 = vmatpush2.msra.mxu0 0.0
      %7796 = vmatprep.subr.mxu0 0.0
      %7797 = vmatpush2.msra.mxu0 0.0
      %7798 = vmatprep.subr.mxu0 0.0
      %7799 = vmatpush2.msra.mxu0 0.0
      %7800 = vmatprep.subr.mxu0 0.0
      %7801 = vmatpush2.msra.mxu0 0.0
      %7802 = vmatprep.subr.mxu0 0.0
      %7803 = vmatpush2.msra.mxu0 0.0
      %7804 = vmatprep.subr.mxu0 0.0
      %7805 = vmatpush2.msra.mxu0 0.0
      %7806 = vmatprep.subr.mxu0 0.0
      %7807 = vmatpush2.msra.mxu0 0.0
      %7808 = vmatprep.subr.mxu0 0.0
      %7809 = vmatpush2.msra.mxu0 0.0
      %7810 = vmatprep.subr.mxu0 0.0
      %7811 = vmatpush2.msra.mxu0 0.0
      %7812 = vmatprep.mubr.f32.mxu0 0.0
      %v7813 = vand.u32 %v7409, 4294901760
      %7814 = vmatmul.mubr.f32.gmra.mxu0 %v7813
      %v7815 = vpop.f32.mrf.mxu0
      %v7816 = vadd.f32 %v7734, %v7815
      %v7817 = vpop.f32.mrf.mxu0
      %7818 = vmatprep.mubr.f32.mxu0 0.0
      %v7819 = vand.u32 %v7412, 4294901760
      %7820 = vmatmul.mubr.f32.gmra.mxu0 %v7819
      %v7821 = vpop.f32.mrf.mxu0
      %v7822 = vadd.f32 %v7742, %v7821
      %v7823 = vpop.f32.mrf.mxu0
      %7824 = vdwg.mxu0
      %7825 = vmatprep.subr.mxu0 0.0
      %7826 = vmatpush1.msra.mxu0 0.0
      %7827 = vmatprep.subr.mxu0 0.0
      %7828 = vmatpush1.msra.mxu0 0.0
      %7829 = vmatprep.subr.mxu0 0.0
      %7830 = vmatpush1.msra.mxu0 0.0
      %7831 = vmatprep.subr.mxu0 0.0
      %7832 = vmatpush1.msra.mxu0 0.0
      %7833 = vmatprep.subr.mxu0 0.0
      %7834 = vmatpush1.msra.mxu0 0.0
      %7835 = vmatprep.subr.mxu0 0.0
      %7836 = vmatpush1.msra.mxu0 0.0
      %7837 = vmatprep.subr.mxu0 0.0
      %7838 = vmatpush1.msra.mxu0 0.0
      %7839 = vmatprep.subr.mxu0 0.0
      %7840 = vmatpush1.msra.mxu0 0.0
      %7841 = vmatprep.subr.mxu0 0.0
      %7842 = vmatpush1.msra.mxu0 0.0
      %7843 = vmatprep.subr.mxu0 0.0
      %7844 = vmatpush1.msra.mxu0 0.0
      %7845 = vmatprep.subr.mxu0 0.0
      %7846 = vmatpush1.msra.mxu0 0.0
      %7847 = vmatprep.subr.mxu0 0.0
      %7848 = vmatpush1.msra.mxu0 0.0
      %7849 = vmatprep.subr.mxu0 0.0
      %7850 = vmatpush1.msra.mxu0 0.0
      %7851 = vmatprep.subr.mxu0 0.0
      %7852 = vmatpush1.msra.mxu0 0.0
      %7853 = vmatprep.subr.mxu0 0.0
      %7854 = vmatpush1.msra.mxu0 0.0
      %7855 = vmatprep.subr.mxu0 0.0
      %v7856 = vand.u32 %v7401, 4294901760
      %7857 = vmatpush1.msra.mxu0 %v7856
      %7858 = vmatprep.subr.mxu0 0.0
      %7859 = vmatpush2.msra.mxu0 0.0
      %7860 = vmatprep.subr.mxu0 0.0
      %7861 = vmatpush2.msra.mxu0 0.0
      %7862 = vmatprep.subr.mxu0 0.0
      %7863 = vmatpush2.msra.mxu0 0.0
      %7864 = vmatprep.subr.mxu0 0.0
      %7865 = vmatpush2.msra.mxu0 0.0
      %7866 = vmatprep.subr.mxu0 0.0
      %7867 = vmatpush2.msra.mxu0 0.0
      %7868 = vmatprep.subr.mxu0 0.0
      %7869 = vmatpush2.msra.mxu0 0.0
      %7870 = vmatprep.subr.mxu0 0.0
      %7871 = vmatpush2.msra.mxu0 0.0
      %7872 = vmatprep.subr.mxu0 0.0
      %7873 = vmatpush2.msra.mxu0 0.0
      %7874 = vmatprep.subr.mxu0 0.0
      %7875 = vmatpush2.msra.mxu0 0.0
      %7876 = vmatprep.subr.mxu0 0.0
      %7877 = vmatpush2.msra.mxu0 0.0
      %7878 = vmatprep.subr.mxu0 0.0
      %7879 = vmatpush2.msra.mxu0 0.0
      %7880 = vmatprep.subr.mxu0 0.0
      %7881 = vmatpush2.msra.mxu0 0.0
      %7882 = vmatprep.subr.mxu0 0.0
      %7883 = vmatpush2.msra.mxu0 0.0
      %7884 = vmatprep.subr.mxu0 0.0
      %7885 = vmatpush2.msra.mxu0 0.0
      %7886 = vmatprep.subr.mxu0 0.0
      %7887 = vmatpush2.msra.mxu0 0.0
      %7888 = vmatprep.subr.mxu0 0.0
      %7889 = vmatpush2.msra.mxu0 0.0
      %7890 = vmatprep.mubr.f32.mxu0 0.0
      %v7891 = vand.u32 %v7409, 4294901760
      %7892 = vmatmul.mubr.f32.gmra.mxu0 %v7891
      %v7893 = vpop.f32.mrf.mxu0
      %v7894 = vadd.f32 %v7816, %v7893
      %v7895 = vpop.f32.mrf.mxu0
      %7896 = vmatprep.mubr.f32.mxu0 0.0
      %v7897 = vand.u32 %v7412, 4294901760
      %7898 = vmatmul.mubr.f32.gmra.mxu0 %v7897
      %v7899 = vpop.f32.mrf.mxu0
      %v7900 = vadd.f32 %v7822, %v7899
      %v7901 = vpop.f32.mrf.mxu0
      %7902 = vdwg.mxu0
      %v7903 = vmax.f32 %v7894, 0.0
      %v7904 = vmax.f32 %v7900, 0.0
      %v7905 = vld [vmem:[%s5 + $0xb0] sm:$0xff]
      %v7906 = vld [vmem:[%s5 + $0xb8] sm:$0xff]
      %v7907 = vld [vmem:[%s5 + $0xc0] sm:$0x1]
      %v7908 = vlaneseq
      %v7909 = vshrl.u32 %v7908, 7
      %v7910 = vsub.s32 0, %v7909
      %v7911 = vrot.slane %v7907, %v7910
      %v7913 = vsel %vm398, %v7903, 0
      %v7916 = vsel %vm398, %v7904, 0
      %7918 = vmatprep.subr.mxu0 0.0
      %7919 = vmatpush1.msra.mxu0 0.0
      %7920 = vmatprep.subr.mxu0 0.0
      %7921 = vmatpush1.msra.mxu0 0.0
      %7922 = vmatprep.subr.mxu0 0.0
      %7923 = vmatpush1.msra.mxu0 0.0
      %7924 = vmatprep.subr.mxu0 0.0
      %7925 = vmatpush1.msra.mxu0 0.0
      %7926 = vmatprep.subr.mxu0 0.0
      %7927 = vmatpush1.msra.mxu0 0.0
      %7928 = vmatprep.subr.mxu0 0.0
      %7929 = vmatpush1.msra.mxu0 0.0
      %7930 = vmatprep.subr.mxu0 0.0
      %7931 = vmatpush1.msra.mxu0 0.0
      %7932 = vmatprep.subr.mxu0 0.0
      %7933 = vmatpush1.msra.mxu0 0.0
      %7934 = vmatprep.subr.mxu0 0.0
      %7935 = vmatpush1.msra.mxu0 0.0
      %7936 = vmatprep.subr.mxu0 0.0
      %7937 = vmatpush1.msra.mxu0 0.0
      %7938 = vmatprep.subr.mxu0 0.0
      %7939 = vmatpush1.msra.mxu0 0.0
      %7940 = vmatprep.subr.mxu0 0.0
      %7941 = vmatpush1.msra.mxu0 0.0
      %7942 = vmatprep.subr.mxu0 0.0
      %7943 = vmatpush1.msra.mxu0 0.0
      %7944 = vmatprep.subr.mxu0 0.0
      %7945 = vmatpush1.msra.mxu0 0.0
      %7946 = vmatprep.subr.mxu0 0.0
      %v7947 = vand.u32 %v7906, 4294901760
      %7948 = vmatpush1.msra.mxu0 %v7947
      %7949 = vmatprep.subr.mxu0 0.0
      %v7950 = vand.u32 %v7905, 4294901760
      %7951 = vmatpush1.msra.mxu0 %v7950
      %7952 = vmatprep.subr.mxu0 0.0
      %7953 = vmatpush2.msra.mxu0 0.0
      %7954 = vmatprep.subr.mxu0 0.0
      %7955 = vmatpush2.msra.mxu0 0.0
      %7956 = vmatprep.subr.mxu0 0.0
      %7957 = vmatpush2.msra.mxu0 0.0
      %7958 = vmatprep.subr.mxu0 0.0
      %7959 = vmatpush2.msra.mxu0 0.0
      %7960 = vmatprep.subr.mxu0 0.0
      %7961 = vmatpush2.msra.mxu0 0.0
      %7962 = vmatprep.subr.mxu0 0.0
      %7963 = vmatpush2.msra.mxu0 0.0
      %7964 = vmatprep.subr.mxu0 0.0
      %7965 = vmatpush2.msra.mxu0 0.0
      %7966 = vmatprep.subr.mxu0 0.0
      %7967 = vmatpush2.msra.mxu0 0.0
      %7968 = vmatprep.subr.mxu0 0.0
      %7969 = vmatpush2.msra.mxu0 0.0
      %7970 = vmatprep.subr.mxu0 0.0
      %7971 = vmatpush2.msra.mxu0 0.0
      %7972 = vmatprep.subr.mxu0 0.0
      %7973 = vmatpush2.msra.mxu0 0.0
      %7974 = vmatprep.subr.mxu0 0.0
      %7975 = vmatpush2.msra.mxu0 0.0
      %7976 = vmatprep.subr.mxu0 0.0
      %7977 = vmatpush2.msra.mxu0 0.0
      %7978 = vmatprep.subr.mxu0 0.0
      %7979 = vmatpush2.msra.mxu0 0.0
      %7980 = vmatprep.subr.mxu0 0.0
      %7981 = vmatpush2.msra.mxu0 0.0
      %7982 = vmatprep.subr.mxu0 0.0
      %7983 = vmatpush2.msra.mxu0 0.0
      %7984 = vmatprep.mubr.f32.mxu0 0.0
      %v7985 = vand.u32 %v7913, 4294901760
      %v7986 = vsub.f32 %v7913, %v7985
      %v7987 = vand.u32 %v7986, 4294901760
      %v7988 = vsub.f32 %v7986, %v7987
      %v7989 = vand.u32 %v7988, 4294901760
      %7990 = vmatmul.mubr.f32.gmra.mxu0 %v7989
      %v7991 = vpop.f32.mrf.mxu0
      %v7992 = vadd.f32 %v7911, %v7991
      %v7993 = vpop.f32.mrf.mxu0
      %7994 = vmatprep.mubr.f32.mxu0 0.0
      %v7995 = vand.u32 %v7916, 4294901760
      %v7996 = vsub.f32 %v7916, %v7995
      %v7997 = vand.u32 %v7996, 4294901760
      %v7998 = vsub.f32 %v7996, %v7997
      %v7999 = vand.u32 %v7998, 4294901760
      %8000 = vmatmul.mubr.f32.gmra.mxu0 %v7999
      %v8001 = vpop.f32.mrf.mxu0
      %v8002 = vadd.f32 %v7911, %v8001
      %v8003 = vpop.f32.mrf.mxu0
      %8004 = vdwg.mxu0
      %8005 = vmatprep.subr.mxu0 0.0
      %8006 = vmatpush1.msra.mxu0 0.0
      %8007 = vmatprep.subr.mxu0 0.0
      %8008 = vmatpush1.msra.mxu0 0.0
      %8009 = vmatprep.subr.mxu0 0.0
      %8010 = vmatpush1.msra.mxu0 0.0
      %8011 = vmatprep.subr.mxu0 0.0
      %8012 = vmatpush1.msra.mxu0 0.0
      %8013 = vmatprep.subr.mxu0 0.0
      %8014 = vmatpush1.msra.mxu0 0.0
      %8015 = vmatprep.subr.mxu0 0.0
      %8016 = vmatpush1.msra.mxu0 0.0
      %8017 = vmatprep.subr.mxu0 0.0
      %8018 = vmatpush1.msra.mxu0 0.0
      %8019 = vmatprep.subr.mxu0 0.0
      %8020 = vmatpush1.msra.mxu0 0.0
      %8021 = vmatprep.subr.mxu0 0.0
      %8022 = vmatpush1.msra.mxu0 0.0
      %8023 = vmatprep.subr.mxu0 0.0
      %8024 = vmatpush1.msra.mxu0 0.0
      %8025 = vmatprep.subr.mxu0 0.0
      %8026 = vmatpush1.msra.mxu0 0.0
      %8027 = vmatprep.subr.mxu0 0.0
      %8028 = vmatpush1.msra.mxu0 0.0
      %8029 = vmatprep.subr.mxu0 0.0
      %8030 = vmatpush1.msra.mxu0 0.0
      %8031 = vmatprep.subr.mxu0 0.0
      %8032 = vmatpush1.msra.mxu0 0.0
      %8033 = vmatprep.subr.mxu0 0.0
      %v8034 = vand.u32 %v7906, 4294901760
      %v8035 = vsub.f32 %v7906, %v8034
      %v8036 = vand.u32 %v8035, 4294901760
      %v8037 = vsub.f32 %v8035, %v8036
      %v8038 = vand.u32 %v8037, 4294901760
      %8039 = vmatpush1.msra.mxu0 %v8038
      %8040 = vmatprep.subr.mxu0 0.0
      %v8041 = vand.u32 %v7905, 4294901760
      %v8042 = vsub.f32 %v7905, %v8041
      %v8043 = vand.u32 %v8042, 4294901760
      %v8044 = vsub.f32 %v8042, %v8043
      %v8045 = vand.u32 %v8044, 4294901760
      %8046 = vmatpush1.msra.mxu0 %v8045
      %8047 = vmatprep.subr.mxu0 0.0
      %8048 = vmatpush2.msra.mxu0 0.0
      %8049 = vmatprep.subr.mxu0 0.0
      %8050 = vmatpush2.msra.mxu0 0.0
      %8051 = vmatprep.subr.mxu0 0.0
      %8052 = vmatpush2.msra.mxu0 0.0
      %8053 = vmatprep.subr.mxu0 0.0
      %8054 = vmatpush2.msra.mxu0 0.0
      %8055 = vmatprep.subr.mxu0 0.0
      %8056 = vmatpush2.msra.mxu0 0.0
      %8057 = vmatprep.subr.mxu0 0.0
      %8058 = vmatpush2.msra.mxu0 0.0
      %8059 = vmatprep.subr.mxu0 0.0
      %8060 = vmatpush2.msra.mxu0 0.0
      %8061 = vmatprep.subr.mxu0 0.0
      %8062 = vmatpush2.msra.mxu0 0.0
      %8063 = vmatprep.subr.mxu0 0.0
      %8064 = vmatpush2.msra.mxu0 0.0
      %8065 = vmatprep.subr.mxu0 0.0
      %8066 = vmatpush2.msra.mxu0 0.0
      %8067 = vmatprep.subr.mxu0 0.0
      %8068 = vmatpush2.msra.mxu0 0.0
      %8069 = vmatprep.subr.mxu0 0.0
      %8070 = vmatpush2.msra.mxu0 0.0
      %8071 = vmatprep.subr.mxu0 0.0
      %8072 = vmatpush2.msra.mxu0 0.0
      %8073 = vmatprep.subr.mxu0 0.0
      %8074 = vmatpush2.msra.mxu0 0.0
      %8075 = vmatprep.subr.mxu0 0.0
      %8076 = vmatpush2.msra.mxu0 0.0
      %8077 = vmatprep.subr.mxu0 0.0
      %8078 = vmatpush2.msra.mxu0 0.0
      %8079 = vmatprep.mubr.f32.mxu0 0.0
      %v8080 = vand.u32 %v7913, 4294901760
      %8081 = vmatmul.mubr.f32.gmra.mxu0 %v8080
      %v8082 = vpop.f32.mrf.mxu0
      %v8083 = vadd.f32 %v7992, %v8082
      %v8084 = vpop.f32.mrf.mxu0
      %8085 = vmatprep.mubr.f32.mxu0 0.0
      %v8086 = vand.u32 %v7916, 4294901760
      %8087 = vmatmul.mubr.f32.gmra.mxu0 %v8086
      %v8088 = vpop.f32.mrf.mxu0
      %v8089 = vadd.f32 %v8002, %v8088
      %v8090 = vpop.f32.mrf.mxu0
      %8091 = vdwg.mxu0
      %8092 = vmatprep.subr.mxu0 0.0
      %8093 = vmatpush1.msra.mxu0 0.0
      %8094 = vmatprep.subr.mxu0 0.0
      %8095 = vmatpush1.msra.mxu0 0.0
      %8096 = vmatprep.subr.mxu0 0.0
      %8097 = vmatpush1.msra.mxu0 0.0
      %8098 = vmatprep.subr.mxu0 0.0
      %8099 = vmatpush1.msra.mxu0 0.0
      %8100 = vmatprep.subr.mxu0 0.0
      %8101 = vmatpush1.msra.mxu0 0.0
      %8102 = vmatprep.subr.mxu0 0.0
      %8103 = vmatpush1.msra.mxu0 0.0
      %8104 = vmatprep.subr.mxu0 0.0
      %8105 = vmatpush1.msra.mxu0 0.0
      %8106 = vmatprep.subr.mxu0 0.0
      %8107 = vmatpush1.msra.mxu0 0.0
      %8108 = vmatprep.subr.mxu0 0.0
      %8109 = vmatpush1.msra.mxu0 0.0
      %8110 = vmatprep.subr.mxu0 0.0
      %8111 = vmatpush1.msra.mxu0 0.0
      %8112 = vmatprep.subr.mxu0 0.0
      %8113 = vmatpush1.msra.mxu0 0.0
      %8114 = vmatprep.subr.mxu0 0.0
      %8115 = vmatpush1.msra.mxu0 0.0
      %8116 = vmatprep.subr.mxu0 0.0
      %8117 = vmatpush1.msra.mxu0 0.0
      %8118 = vmatprep.subr.mxu0 0.0
      %8119 = vmatpush1.msra.mxu0 0.0
      %8120 = vmatprep.subr.mxu0 0.0
      %v8121 = vand.u32 %v7906, 4294901760
      %v8122 = vsub.f32 %v7906, %v8121
      %8123 = vmatpush1.msra.mxu0 %v8122
      %8124 = vmatprep.subr.mxu0 0.0
      %v8125 = vand.u32 %v7905, 4294901760
      %v8126 = vsub.f32 %v7905, %v8125
      %8127 = vmatpush1.msra.mxu0 %v8126
      %8128 = vmatprep.subr.mxu0 0.0
      %8129 = vmatpush2.msra.mxu0 0.0
      %8130 = vmatprep.subr.mxu0 0.0
      %8131 = vmatpush2.msra.mxu0 0.0
      %8132 = vmatprep.subr.mxu0 0.0
      %8133 = vmatpush2.msra.mxu0 0.0
      %8134 = vmatprep.subr.mxu0 0.0
      %8135 = vmatpush2.msra.mxu0 0.0
      %8136 = vmatprep.subr.mxu0 0.0
      %8137 = vmatpush2.msra.mxu0 0.0
      %8138 = vmatprep.subr.mxu0 0.0
      %8139 = vmatpush2.msra.mxu0 0.0
      %8140 = vmatprep.subr.mxu0 0.0
      %8141 = vmatpush2.msra.mxu0 0.0
      %8142 = vmatprep.subr.mxu0 0.0
      %8143 = vmatpush2.msra.mxu0 0.0
      %8144 = vmatprep.subr.mxu0 0.0
      %8145 = vmatpush2.msra.mxu0 0.0
      %8146 = vmatprep.subr.mxu0 0.0
      %8147 = vmatpush2.msra.mxu0 0.0
      %8148 = vmatprep.subr.mxu0 0.0
      %8149 = vmatpush2.msra.mxu0 0.0
      %8150 = vmatprep.subr.mxu0 0.0
      %8151 = vmatpush2.msra.mxu0 0.0
      %8152 = vmatprep.subr.mxu0 0.0
      %8153 = vmatpush2.msra.mxu0 0.0
      %8154 = vmatprep.subr.mxu0 0.0
      %8155 = vmatpush2.msra.mxu0 0.0
      %8156 = vmatprep.subr.mxu0 0.0
      %8157 = vmatpush2.msra.mxu0 0.0
      %8158 = vmatprep.subr.mxu0 0.0
      %8159 = vmatpush2.msra.mxu0 0.0
      %8160 = vmatprep.mubr.f32.mxu0 0.0
      %v8161 = vand.u32 %v7913, 4294901760
      %v8162 = vsub.f32 %v7913, %v8161
      %8163 = vmatmul.mubr.f32.gmra.mxu0 %v8162
      %v8164 = vpop.f32.mrf.mxu0
      %v8165 = vadd.f32 %v8083, %v8164
      %v8166 = vpop.f32.mrf.mxu0
      %8167 = vmatprep.mubr.f32.mxu0 0.0
      %v8168 = vand.u32 %v7916, 4294901760
      %v8169 = vsub.f32 %v7916, %v8168
      %8170 = vmatmul.mubr.f32.gmra.mxu0 %v8169
      %v8171 = vpop.f32.mrf.mxu0
      %v8172 = vadd.f32 %v8089, %v8171
      %v8173 = vpop.f32.mrf.mxu0
      %8174 = vdwg.mxu0
      %8175 = vmatprep.subr.mxu0 0.0
      %8176 = vmatpush1.msra.mxu0 0.0
      %8177 = vmatprep.subr.mxu0 0.0
      %8178 = vmatpush1.msra.mxu0 0.0
      %8179 = vmatprep.subr.mxu0 0.0
      %8180 = vmatpush1.msra.mxu0 0.0
      %8181 = vmatprep.subr.mxu0 0.0
      %8182 = vmatpush1.msra.mxu0 0.0
      %8183 = vmatprep.subr.mxu0 0.0
      %8184 = vmatpush1.msra.mxu0 0.0
      %8185 = vmatprep.subr.mxu0 0.0
      %8186 = vmatpush1.msra.mxu0 0.0
      %8187 = vmatprep.subr.mxu0 0.0
      %8188 = vmatpush1.msra.mxu0 0.0
      %8189 = vmatprep.subr.mxu0 0.0
      %8190 = vmatpush1.msra.mxu0 0.0
      %8191 = vmatprep.subr.mxu0 0.0
      %8192 = vmatpush1.msra.mxu0 0.0
      %8193 = vmatprep.subr.mxu0 0.0
      %8194 = vmatpush1.msra.mxu0 0.0
      %8195 = vmatprep.subr.mxu0 0.0
      %8196 = vmatpush1.msra.mxu0 0.0
      %8197 = vmatprep.subr.mxu0 0.0
      %8198 = vmatpush1.msra.mxu0 0.0
      %8199 = vmatprep.subr.mxu0 0.0
      %8200 = vmatpush1.msra.mxu0 0.0
      %8201 = vmatprep.subr.mxu0 0.0
      %8202 = vmatpush1.msra.mxu0 0.0
      %8203 = vmatprep.subr.mxu0 0.0
      %v8204 = vand.u32 %v7906, 4294901760
      %8205 = vmatpush1.msra.mxu0 %v8204
      %8206 = vmatprep.subr.mxu0 0.0
      %v8207 = vand.u32 %v7905, 4294901760
      %8208 = vmatpush1.msra.mxu0 %v8207
      %8209 = vmatprep.subr.mxu0 0.0
      %8210 = vmatpush2.msra.mxu0 0.0
      %8211 = vmatprep.subr.mxu0 0.0
      %8212 = vmatpush2.msra.mxu0 0.0
      %8213 = vmatprep.subr.mxu0 0.0
      %8214 = vmatpush2.msra.mxu0 0.0
      %8215 = vmatprep.subr.mxu0 0.0
      %8216 = vmatpush2.msra.mxu0 0.0
      %8217 = vmatprep.subr.mxu0 0.0
      %8218 = vmatpush2.msra.mxu0 0.0
      %8219 = vmatprep.subr.mxu0 0.0
      %8220 = vmatpush2.msra.mxu0 0.0
      %8221 = vmatprep.subr.mxu0 0.0
      %8222 = vmatpush2.msra.mxu0 0.0
      %8223 = vmatprep.subr.mxu0 0.0
      %8224 = vmatpush2.msra.mxu0 0.0
      %8225 = vmatprep.subr.mxu0 0.0
      %8226 = vmatpush2.msra.mxu0 0.0
      %8227 = vmatprep.subr.mxu0 0.0
      %8228 = vmatpush2.msra.mxu0 0.0
      %8229 = vmatprep.subr.mxu0 0.0
      %8230 = vmatpush2.msra.mxu0 0.0
      %8231 = vmatprep.subr.mxu0 0.0
      %8232 = vmatpush2.msra.mxu0 0.0
      %8233 = vmatprep.subr.mxu0 0.0
      %8234 = vmatpush2.msra.mxu0 0.0
      %8235 = vmatprep.subr.mxu0 0.0
      %8236 = vmatpush2.msra.mxu0 0.0
      %8237 = vmatprep.subr.mxu0 0.0
      %8238 = vmatpush2.msra.mxu0 0.0
      %8239 = vmatprep.subr.mxu0 0.0
      %8240 = vmatpush2.msra.mxu0 0.0
      %8241 = vmatprep.mubr.f32.mxu0 0.0
      %v8242 = vand.u32 %v7913, 4294901760
      %v8243 = vsub.f32 %v7913, %v8242
      %v8244 = vand.u32 %v8243, 4294901760
      %8245 = vmatmul.mubr.f32.gmra.mxu0 %v8244
      %v8246 = vpop.f32.mrf.mxu0
      %v8247 = vadd.f32 %v8165, %v8246
      %v8248 = vpop.f32.mrf.mxu0
      %8249 = vmatprep.mubr.f32.mxu0 0.0
      %v8250 = vand.u32 %v7916, 4294901760
      %v8251 = vsub.f32 %v7916, %v8250
      %v8252 = vand.u32 %v8251, 4294901760
      %8253 = vmatmul.mubr.f32.gmra.mxu0 %v8252
      %v8254 = vpop.f32.mrf.mxu0
      %v8255 = vadd.f32 %v8172, %v8254
      %v8256 = vpop.f32.mrf.mxu0
      %8257 = vdwg.mxu0
      %8258 = vmatprep.subr.mxu0 0.0
      %8259 = vmatpush1.msra.mxu0 0.0
      %8260 = vmatprep.subr.mxu0 0.0
      %8261 = vmatpush1.msra.mxu0 0.0
      %8262 = vmatprep.subr.mxu0 0.0
      %8263 = vmatpush1.msra.mxu0 0.0
      %8264 = vmatprep.subr.mxu0 0.0
      %8265 = vmatpush1.msra.mxu0 0.0
      %8266 = vmatprep.subr.mxu0 0.0
      %8267 = vmatpush1.msra.mxu0 0.0
      %8268 = vmatprep.subr.mxu0 0.0
      %8269 = vmatpush1.msra.mxu0 0.0
      %8270 = vmatprep.subr.mxu0 0.0
      %8271 = vmatpush1.msra.mxu0 0.0
      %8272 = vmatprep.subr.mxu0 0.0
      %8273 = vmatpush1.msra.mxu0 0.0
      %8274 = vmatprep.subr.mxu0 0.0
      %8275 = vmatpush1.msra.mxu0 0.0
      %8276 = vmatprep.subr.mxu0 0.0
      %8277 = vmatpush1.msra.mxu0 0.0
      %8278 = vmatprep.subr.mxu0 0.0
      %8279 = vmatpush1.msra.mxu0 0.0
      %8280 = vmatprep.subr.mxu0 0.0
      %8281 = vmatpush1.msra.mxu0 0.0
      %8282 = vmatprep.subr.mxu0 0.0
      %8283 = vmatpush1.msra.mxu0 0.0
      %8284 = vmatprep.subr.mxu0 0.0
      %8285 = vmatpush1.msra.mxu0 0.0
      %8286 = vmatprep.subr.mxu0 0.0
      %v8287 = vand.u32 %v7906, 4294901760
      %v8288 = vsub.f32 %v7906, %v8287
      %v8289 = vand.u32 %v8288, 4294901760
      %8290 = vmatpush1.msra.mxu0 %v8289
      %8291 = vmatprep.subr.mxu0 0.0
      %v8292 = vand.u32 %v7905, 4294901760
      %v8293 = vsub.f32 %v7905, %v8292
      %v8294 = vand.u32 %v8293, 4294901760
      %8295 = vmatpush1.msra.mxu0 %v8294
      %8296 = vmatprep.subr.mxu0 0.0
      %8297 = vmatpush2.msra.mxu0 0.0
      %8298 = vmatprep.subr.mxu0 0.0
      %8299 = vmatpush2.msra.mxu0 0.0
      %8300 = vmatprep.subr.mxu0 0.0
      %8301 = vmatpush2.msra.mxu0 0.0
      %8302 = vmatprep.subr.mxu0 0.0
      %8303 = vmatpush2.msra.mxu0 0.0
      %8304 = vmatprep.subr.mxu0 0.0
      %8305 = vmatpush2.msra.mxu0 0.0
      %8306 = vmatprep.subr.mxu0 0.0
      %8307 = vmatpush2.msra.mxu0 0.0
      %8308 = vmatprep.subr.mxu0 0.0
      %8309 = vmatpush2.msra.mxu0 0.0
      %8310 = vmatprep.subr.mxu0 0.0
      %8311 = vmatpush2.msra.mxu0 0.0
      %8312 = vmatprep.subr.mxu0 0.0
      %8313 = vmatpush2.msra.mxu0 0.0
      %8314 = vmatprep.subr.mxu0 0.0
      %8315 = vmatpush2.msra.mxu0 0.0
      %8316 = vmatprep.subr.mxu0 0.0
      %8317 = vmatpush2.msra.mxu0 0.0
      %8318 = vmatprep.subr.mxu0 0.0
      %8319 = vmatpush2.msra.mxu0 0.0
      %8320 = vmatprep.subr.mxu0 0.0
      %8321 = vmatpush2.msra.mxu0 0.0
      %8322 = vmatprep.subr.mxu0 0.0
      %8323 = vmatpush2.msra.mxu0 0.0
      %8324 = vmatprep.subr.mxu0 0.0
      %8325 = vmatpush2.msra.mxu0 0.0
      %8326 = vmatprep.subr.mxu0 0.0
      %8327 = vmatpush2.msra.mxu0 0.0
      %8328 = vmatprep.mubr.f32.mxu0 0.0
      %v8329 = vand.u32 %v7913, 4294901760
      %8330 = vmatmul.mubr.f32.gmra.mxu0 %v8329
      %v8331 = vpop.f32.mrf.mxu0
      %v8332 = vadd.f32 %v8247, %v8331
      %v8333 = vpop.f32.mrf.mxu0
      %8334 = vmatprep.mubr.f32.mxu0 0.0
      %v8335 = vand.u32 %v7916, 4294901760
      %8336 = vmatmul.mubr.f32.gmra.mxu0 %v8335
      %v8337 = vpop.f32.mrf.mxu0
      %v8338 = vadd.f32 %v8255, %v8337
      %v8339 = vpop.f32.mrf.mxu0
      %8340 = vdwg.mxu0
      %8341 = vmatprep.subr.mxu0 0.0
      %8342 = vmatpush1.msra.mxu0 0.0
      %8343 = vmatprep.subr.mxu0 0.0
      %8344 = vmatpush1.msra.mxu0 0.0
      %8345 = vmatprep.subr.mxu0 0.0
      %8346 = vmatpush1.msra.mxu0 0.0
      %8347 = vmatprep.subr.mxu0 0.0
      %8348 = vmatpush1.msra.mxu0 0.0
      %8349 = vmatprep.subr.mxu0 0.0
      %8350 = vmatpush1.msra.mxu0 0.0
      %8351 = vmatprep.subr.mxu0 0.0
      %8352 = vmatpush1.msra.mxu0 0.0
      %8353 = vmatprep.subr.mxu0 0.0
      %8354 = vmatpush1.msra.mxu0 0.0
      %8355 = vmatprep.subr.mxu0 0.0
      %8356 = vmatpush1.msra.mxu0 0.0
      %8357 = vmatprep.subr.mxu0 0.0
      %8358 = vmatpush1.msra.mxu0 0.0
      %8359 = vmatprep.subr.mxu0 0.0
      %8360 = vmatpush1.msra.mxu0 0.0
      %8361 = vmatprep.subr.mxu0 0.0
      %8362 = vmatpush1.msra.mxu0 0.0
      %8363 = vmatprep.subr.mxu0 0.0
      %8364 = vmatpush1.msra.mxu0 0.0
      %8365 = vmatprep.subr.mxu0 0.0
      %8366 = vmatpush1.msra.mxu0 0.0
      %8367 = vmatprep.subr.mxu0 0.0
      %8368 = vmatpush1.msra.mxu0 0.0
      %8369 = vmatprep.subr.mxu0 0.0
      %v8370 = vand.u32 %v7906, 4294901760
      %8371 = vmatpush1.msra.mxu0 %v8370
      %8372 = vmatprep.subr.mxu0 0.0
      %v8373 = vand.u32 %v7905, 4294901760
      %8374 = vmatpush1.msra.mxu0 %v8373
      %8375 = vmatprep.subr.mxu0 0.0
      %8376 = vmatpush2.msra.mxu0 0.0
      %8377 = vmatprep.subr.mxu0 0.0
      %8378 = vmatpush2.msra.mxu0 0.0
      %8379 = vmatprep.subr.mxu0 0.0
      %8380 = vmatpush2.msra.mxu0 0.0
      %8381 = vmatprep.subr.mxu0 0.0
      %8382 = vmatpush2.msra.mxu0 0.0
      %8383 = vmatprep.subr.mxu0 0.0
      %8384 = vmatpush2.msra.mxu0 0.0
      %8385 = vmatprep.subr.mxu0 0.0
      %8386 = vmatpush2.msra.mxu0 0.0
      %8387 = vmatprep.subr.mxu0 0.0
      %8388 = vmatpush2.msra.mxu0 0.0
      %8389 = vmatprep.subr.mxu0 0.0
      %8390 = vmatpush2.msra.mxu0 0.0
      %8391 = vmatprep.subr.mxu0 0.0
      %8392 = vmatpush2.msra.mxu0 0.0
      %8393 = vmatprep.subr.mxu0 0.0
      %8394 = vmatpush2.msra.mxu0 0.0
      %8395 = vmatprep.subr.mxu0 0.0
      %8396 = vmatpush2.msra.mxu0 0.0
      %8397 = vmatprep.subr.mxu0 0.0
      %8398 = vmatpush2.msra.mxu0 0.0
      %8399 = vmatprep.subr.mxu0 0.0
      %8400 = vmatpush2.msra.mxu0 0.0
      %8401 = vmatprep.subr.mxu0 0.0
      %8402 = vmatpush2.msra.mxu0 0.0
      %8403 = vmatprep.subr.mxu0 0.0
      %8404 = vmatpush2.msra.mxu0 0.0
      %8405 = vmatprep.subr.mxu0 0.0
      %8406 = vmatpush2.msra.mxu0 0.0
      %8407 = vmatprep.mubr.f32.mxu0 0.0
      %v8408 = vand.u32 %v7913, 4294901760
      %8409 = vmatmul.mubr.f32.gmra.mxu0 %v8408
      %v8410 = vpop.f32.mrf.mxu0
      %v8411 = vadd.f32 %v8332, %v8410
      %v8412 = vpop.f32.mrf.mxu0
      %8413 = vmatprep.mubr.f32.mxu0 0.0
      %v8414 = vand.u32 %v7916, 4294901760
      %8415 = vmatmul.mubr.f32.gmra.mxu0 %v8414
      %v8416 = vpop.f32.mrf.mxu0
      %v8417 = vadd.f32 %v8338, %v8416
      %v8418 = vpop.f32.mrf.mxu0
      %8419 = vdwg.mxu0
      %v8420 = vmax.f32 %v8411, 0.0
      %v8421 = vmax.f32 %v8417, 0.0
      %v8422 = vld [vmem:[%s5 + $0xc8] sm:$0xff]
      %v8423 = vld [vmem:[%s5 + $0xd0] sm:$0xff]
      %v8424 = vld [vmem:[%s5 + $0xd8] sm:$0xff]
      %v8425 = vld [vmem:[%s5 + $0xe0] sm:$0xff]
      %v8426 = vld [vmem:[%s5 + $0xe8] sm:$0xff]
      %v8427 = vld [vmem:[%s5 + $0xf0] sm:$0xff]
      %v8428 = vld [vmem:[%s5 + $0xf8] sm:$0xff]
      %v8429 = vld [vmem:[%s5 + $0x100] sm:$0xff]
      %v8430 = vld [vmem:[%s5 + $0x108] sm:$0xff]
      %v8432 = vsel %vm7407, %v8420, 0
      %v8435 = vsel %vm7407, %v8421, 0
      %8437 = vmatprep.subr.mxu0 0.0
      %8438 = vmatpush1.msra.mxu0 0.0
      %8439 = vmatprep.subr.mxu0 0.0
      %8440 = vmatpush1.msra.mxu0 0.0
      %8441 = vmatprep.subr.mxu0 0.0
      %8442 = vmatpush1.msra.mxu0 0.0
      %8443 = vmatprep.subr.mxu0 0.0
      %8444 = vmatpush1.msra.mxu0 0.0
      %8445 = vmatprep.subr.mxu0 0.0
      %8446 = vmatpush1.msra.mxu0 0.0
      %8447 = vmatprep.subr.mxu0 0.0
      %8448 = vmatpush1.msra.mxu0 0.0
      %8449 = vmatprep.subr.mxu0 0.0
      %8450 = vmatpush1.msra.mxu0 0.0
      %8451 = vmatprep.subr.mxu0 0.0
      %8452 = vmatpush1.msra.mxu0 0.0
      %8453 = vmatprep.subr.mxu0 0.0
      %8454 = vmatpush1.msra.mxu0 0.0
      %8455 = vmatprep.subr.mxu0 0.0
      %8456 = vmatpush1.msra.mxu0 0.0
      %8457 = vmatprep.subr.mxu0 0.0
      %8458 = vmatpush1.msra.mxu0 0.0
      %8459 = vmatprep.subr.mxu0 0.0
      %8460 = vmatpush1.msra.mxu0 0.0
      %8461 = vmatprep.subr.mxu0 0.0
      %8462 = vmatpush1.msra.mxu0 0.0
      %8463 = vmatprep.subr.mxu0 0.0
      %8464 = vmatpush1.msra.mxu0 0.0
      %8465 = vmatprep.subr.mxu0 0.0
      %8466 = vmatpush1.msra.mxu0 0.0
      %8467 = vmatprep.subr.mxu0 0.0
      %v8468 = vand.u32 %v8430, 4294901760
      %8469 = vmatpush1.msra.mxu0 %v8468
      %8470 = vmatprep.subr.mxu0 0.0
      %8471 = vmatpush2.msra.mxu0 0.0
      %8472 = vmatprep.subr.mxu0 0.0
      %8473 = vmatpush2.msra.mxu0 0.0
      %8474 = vmatprep.subr.mxu0 0.0
      %8475 = vmatpush2.msra.mxu0 0.0
      %8476 = vmatprep.subr.mxu0 0.0
      %8477 = vmatpush2.msra.mxu0 0.0
      %8478 = vmatprep.subr.mxu0 0.0
      %8479 = vmatpush2.msra.mxu0 0.0
      %8480 = vmatprep.subr.mxu0 0.0
      %8481 = vmatpush2.msra.mxu0 0.0
      %8482 = vmatprep.subr.mxu0 0.0
      %8483 = vmatpush2.msra.mxu0 0.0
      %8484 = vmatprep.subr.mxu0 0.0
      %8485 = vmatpush2.msra.mxu0 0.0
      %8486 = vmatprep.subr.mxu0 0.0
      %8487 = vmatpush2.msra.mxu0 0.0
      %8488 = vmatprep.subr.mxu0 0.0
      %8489 = vmatpush2.msra.mxu0 0.0
      %8490 = vmatprep.subr.mxu0 0.0
      %8491 = vmatpush2.msra.mxu0 0.0
      %8492 = vmatprep.subr.mxu0 0.0
      %8493 = vmatpush2.msra.mxu0 0.0
      %8494 = vmatprep.subr.mxu0 0.0
      %8495 = vmatpush2.msra.mxu0 0.0
      %8496 = vmatprep.subr.mxu0 0.0
      %8497 = vmatpush2.msra.mxu0 0.0
      %8498 = vmatprep.subr.mxu0 0.0
      %8499 = vmatpush2.msra.mxu0 0.0
      %8500 = vmatprep.subr.mxu0 0.0
      %8501 = vmatpush2.msra.mxu0 0.0
      %8502 = vmatprep.mubr.f32.mxu0 0.0
      %v8503 = vand.u32 %v8432, 4294901760
      %v8504 = vsub.f32 %v8432, %v8503
      %v8505 = vand.u32 %v8504, 4294901760
      %v8506 = vsub.f32 %v8504, %v8505
      %v8507 = vand.u32 %v8506, 4294901760
      %8508 = vmatmul.mubr.f32.gmra.mxu0 %v8507
      %v8509 = vpop.f32.mrf.mxu0
      %v8510 = vadd.f32 0.0, %v8509
      %v8511 = vpop.f32.mrf.mxu0
      %8512 = vmatprep.mubr.f32.mxu0 0.0
      %v8513 = vand.u32 %v8435, 4294901760
      %v8514 = vsub.f32 %v8435, %v8513
      %v8515 = vand.u32 %v8514, 4294901760
      %v8516 = vsub.f32 %v8514, %v8515
      %v8517 = vand.u32 %v8516, 4294901760
      %8518 = vmatmul.mubr.f32.gmra.mxu0 %v8517
      %v8519 = vpop.f32.mrf.mxu0
      %v8520 = vadd.f32 0.0, %v8519
      %v8521 = vpop.f32.mrf.mxu0
      %8522 = vdwg.mxu0
      %8523 = vmatprep.subr.mxu0 0.0
      %8524 = vmatpush1.msra.mxu0 0.0
      %8525 = vmatprep.subr.mxu0 0.0
      %8526 = vmatpush1.msra.mxu0 0.0
      %8527 = vmatprep.subr.mxu0 0.0
      %8528 = vmatpush1.msra.mxu0 0.0
      %8529 = vmatprep.subr.mxu0 0.0
      %8530 = vmatpush1.msra.mxu0 0.0
      %8531 = vmatprep.subr.mxu0 0.0
      %8532 = vmatpush1.msra.mxu0 0.0
      %8533 = vmatprep.subr.mxu0 0.0
      %8534 = vmatpush1.msra.mxu0 0.0
      %8535 = vmatprep.subr.mxu0 0.0
      %8536 = vmatpush1.msra.mxu0 0.0
      %8537 = vmatprep.subr.mxu0 0.0
      %8538 = vmatpush1.msra.mxu0 0.0
      %8539 = vmatprep.subr.mxu0 0.0
      %8540 = vmatpush1.msra.mxu0 0.0
      %8541 = vmatprep.subr.mxu0 0.0
      %8542 = vmatpush1.msra.mxu0 0.0
      %8543 = vmatprep.subr.mxu0 0.0
      %8544 = vmatpush1.msra.mxu0 0.0
      %8545 = vmatprep.subr.mxu0 0.0
      %8546 = vmatpush1.msra.mxu0 0.0
      %8547 = vmatprep.subr.mxu0 0.0
      %8548 = vmatpush1.msra.mxu0 0.0
      %8549 = vmatprep.subr.mxu0 0.0
      %8550 = vmatpush1.msra.mxu0 0.0
      %8551 = vmatprep.subr.mxu0 0.0
      %8552 = vmatpush1.msra.mxu0 0.0
      %8553 = vmatprep.subr.mxu0 0.0
      %v8554 = vand.u32 %v8430, 4294901760
      %v8555 = vsub.f32 %v8430, %v8554
      %v8556 = vand.u32 %v8555, 4294901760
      %v8557 = vsub.f32 %v8555, %v8556
      %v8558 = vand.u32 %v8557, 4294901760
      %8559 = vmatpush1.msra.mxu0 %v8558
      %8560 = vmatprep.subr.mxu0 0.0
      %8561 = vmatpush2.msra.mxu0 0.0
      %8562 = vmatprep.subr.mxu0 0.0
      %8563 = vmatpush2.msra.mxu0 0.0
      %8564 = vmatprep.subr.mxu0 0.0
      %8565 = vmatpush2.msra.mxu0 0.0
      %8566 = vmatprep.subr.mxu0 0.0
      %8567 = vmatpush2.msra.mxu0 0.0
      %8568 = vmatprep.subr.mxu0 0.0
      %8569 = vmatpush2.msra.mxu0 0.0
      %8570 = vmatprep.subr.mxu0 0.0
      %8571 = vmatpush2.msra.mxu0 0.0
      %8572 = vmatprep.subr.mxu0 0.0
      %8573 = vmatpush2.msra.mxu0 0.0
      %8574 = vmatprep.subr.mxu0 0.0
      %8575 = vmatpush2.msra.mxu0 0.0
      %8576 = vmatprep.subr.mxu0 0.0
      %8577 = vmatpush2.msra.mxu0 0.0
      %8578 = vmatprep.subr.mxu0 0.0
      %8579 = vmatpush2.msra.mxu0 0.0
      %8580 = vmatprep.subr.mxu0 0.0
      %8581 = vmatpush2.msra.mxu0 0.0
      %8582 = vmatprep.subr.mxu0 0.0
      %8583 = vmatpush2.msra.mxu0 0.0
      %8584 = vmatprep.subr.mxu0 0.0
      %8585 = vmatpush2.msra.mxu0 0.0
      %8586 = vmatprep.subr.mxu0 0.0
      %8587 = vmatpush2.msra.mxu0 0.0
      %8588 = vmatprep.subr.mxu0 0.0
      %8589 = vmatpush2.msra.mxu0 0.0
      %8590 = vmatprep.subr.mxu0 0.0
      %8591 = vmatpush2.msra.mxu0 0.0
      %8592 = vmatprep.mubr.f32.mxu0 0.0
      %v8593 = vand.u32 %v8432, 4294901760
      %8594 = vmatmul.mubr.f32.gmra.mxu0 %v8593
      %v8595 = vpop.f32.mrf.mxu0
      %v8596 = vadd.f32 %v8510, %v8595
      %v8597 = vpop.f32.mrf.mxu0
      %8598 = vmatprep.mubr.f32.mxu0 0.0
      %v8599 = vand.u32 %v8435, 4294901760
      %8600 = vmatmul.mubr.f32.gmra.mxu0 %v8599
      %v8601 = vpop.f32.mrf.mxu0
      %v8602 = vadd.f32 %v8520, %v8601
      %v8603 = vpop.f32.mrf.mxu0
      %8604 = vdwg.mxu0
      %8605 = vmatprep.subr.mxu0 0.0
      %8606 = vmatpush1.msra.mxu0 0.0
      %8607 = vmatprep.subr.mxu0 0.0
      %8608 = vmatpush1.msra.mxu0 0.0
      %8609 = vmatprep.subr.mxu0 0.0
      %8610 = vmatpush1.msra.mxu0 0.0
      %8611 = vmatprep.subr.mxu0 0.0
      %8612 = vmatpush1.msra.mxu0 0.0
      %8613 = vmatprep.subr.mxu0 0.0
      %8614 = vmatpush1.msra.mxu0 0.0
      %8615 = vmatprep.subr.mxu0 0.0
      %8616 = vmatpush1.msra.mxu0 0.0
      %8617 = vmatprep.subr.mxu0 0.0
      %8618 = vmatpush1.msra.mxu0 0.0
      %8619 = vmatprep.subr.mxu0 0.0
      %8620 = vmatpush1.msra.mxu0 0.0
      %8621 = vmatprep.subr.mxu0 0.0
      %8622 = vmatpush1.msra.mxu0 0.0
      %8623 = vmatprep.subr.mxu0 0.0
      %8624 = vmatpush1.msra.mxu0 0.0
      %8625 = vmatprep.subr.mxu0 0.0
      %8626 = vmatpush1.msra.mxu0 0.0
      %8627 = vmatprep.subr.mxu0 0.0
      %8628 = vmatpush1.msra.mxu0 0.0
      %8629 = vmatprep.subr.mxu0 0.0
      %8630 = vmatpush1.msra.mxu0 0.0
      %8631 = vmatprep.subr.mxu0 0.0
      %8632 = vmatpush1.msra.mxu0 0.0
      %8633 = vmatprep.subr.mxu0 0.0
      %8634 = vmatpush1.msra.mxu0 0.0
      %8635 = vmatprep.subr.mxu0 0.0
      %v8636 = vand.u32 %v8430, 4294901760
      %v8637 = vsub.f32 %v8430, %v8636
      %8638 = vmatpush1.msra.mxu0 %v8637
      %8639 = vmatprep.subr.mxu0 0.0
      %8640 = vmatpush2.msra.mxu0 0.0
      %8641 = vmatprep.subr.mxu0 0.0
      %8642 = vmatpush2.msra.mxu0 0.0
      %8643 = vmatprep.subr.mxu0 0.0
      %8644 = vmatpush2.msra.mxu0 0.0
      %8645 = vmatprep.subr.mxu0 0.0
      %8646 = vmatpush2.msra.mxu0 0.0
      %8647 = vmatprep.subr.mxu0 0.0
      %8648 = vmatpush2.msra.mxu0 0.0
      %8649 = vmatprep.subr.mxu0 0.0
      %8650 = vmatpush2.msra.mxu0 0.0
      %8651 = vmatprep.subr.mxu0 0.0
      %8652 = vmatpush2.msra.mxu0 0.0
      %8653 = vmatprep.subr.mxu0 0.0
      %8654 = vmatpush2.msra.mxu0 0.0
      %8655 = vmatprep.subr.mxu0 0.0
      %8656 = vmatpush2.msra.mxu0 0.0
      %8657 = vmatprep.subr.mxu0 0.0
      %8658 = vmatpush2.msra.mxu0 0.0
      %8659 = vmatprep.subr.mxu0 0.0
      %8660 = vmatpush2.msra.mxu0 0.0
      %8661 = vmatprep.subr.mxu0 0.0
      %8662 = vmatpush2.msra.mxu0 0.0
      %8663 = vmatprep.subr.mxu0 0.0
      %8664 = vmatpush2.msra.mxu0 0.0
      %8665 = vmatprep.subr.mxu0 0.0
      %8666 = vmatpush2.msra.mxu0 0.0
      %8667 = vmatprep.subr.mxu0 0.0
      %8668 = vmatpush2.msra.mxu0 0.0
      %8669 = vmatprep.subr.mxu0 0.0
      %8670 = vmatpush2.msra.mxu0 0.0
      %8671 = vmatprep.mubr.f32.mxu0 0.0
      %v8672 = vand.u32 %v8432, 4294901760
      %v8673 = vsub.f32 %v8432, %v8672
      %8674 = vmatmul.mubr.f32.gmra.mxu0 %v8673
      %v8675 = vpop.f32.mrf.mxu0
      %v8676 = vadd.f32 %v8596, %v8675
      %v8677 = vpop.f32.mrf.mxu0
      %8678 = vmatprep.mubr.f32.mxu0 0.0
      %v8679 = vand.u32 %v8435, 4294901760
      %v8680 = vsub.f32 %v8435, %v8679
      %8681 = vmatmul.mubr.f32.gmra.mxu0 %v8680
      %v8682 = vpop.f32.mrf.mxu0
      %v8683 = vadd.f32 %v8602, %v8682
      %v8684 = vpop.f32.mrf.mxu0
      %8685 = vdwg.mxu0
      %8686 = vmatprep.subr.mxu0 0.0
      %8687 = vmatpush1.msra.mxu0 0.0
      %8688 = vmatprep.subr.mxu0 0.0
      %8689 = vmatpush1.msra.mxu0 0.0
      %8690 = vmatprep.subr.mxu0 0.0
      %8691 = vmatpush1.msra.mxu0 0.0
      %8692 = vmatprep.subr.mxu0 0.0
      %8693 = vmatpush1.msra.mxu0 0.0
      %8694 = vmatprep.subr.mxu0 0.0
      %8695 = vmatpush1.msra.mxu0 0.0
      %8696 = vmatprep.subr.mxu0 0.0
      %8697 = vmatpush1.msra.mxu0 0.0
      %8698 = vmatprep.subr.mxu0 0.0
      %8699 = vmatpush1.msra.mxu0 0.0
      %8700 = vmatprep.subr.mxu0 0.0
      %8701 = vmatpush1.msra.mxu0 0.0
      %8702 = vmatprep.subr.mxu0 0.0
      %8703 = vmatpush1.msra.mxu0 0.0
      %8704 = vmatprep.subr.mxu0 0.0
      %8705 = vmatpush1.msra.mxu0 0.0
      %8706 = vmatprep.subr.mxu0 0.0
      %8707 = vmatpush1.msra.mxu0 0.0
      %8708 = vmatprep.subr.mxu0 0.0
      %8709 = vmatpush1.msra.mxu0 0.0
      %8710 = vmatprep.subr.mxu0 0.0
      %8711 = vmatpush1.msra.mxu0 0.0
      %8712 = vmatprep.subr.mxu0 0.0
      %8713 = vmatpush1.msra.mxu0 0.0
      %8714 = vmatprep.subr.mxu0 0.0
      %8715 = vmatpush1.msra.mxu0 0.0
      %8716 = vmatprep.subr.mxu0 0.0
      %v8717 = vand.u32 %v8430, 4294901760
      %8718 = vmatpush1.msra.mxu0 %v8717
      %8719 = vmatprep.subr.mxu0 0.0
      %8720 = vmatpush2.msra.mxu0 0.0
      %8721 = vmatprep.subr.mxu0 0.0
      %8722 = vmatpush2.msra.mxu0 0.0
      %8723 = vmatprep.subr.mxu0 0.0
      %8724 = vmatpush2.msra.mxu0 0.0
      %8725 = vmatprep.subr.mxu0 0.0
      %8726 = vmatpush2.msra.mxu0 0.0
      %8727 = vmatprep.subr.mxu0 0.0
      %8728 = vmatpush2.msra.mxu0 0.0
      %8729 = vmatprep.subr.mxu0 0.0
      %8730 = vmatpush2.msra.mxu0 0.0
      %8731 = vmatprep.subr.mxu0 0.0
      %8732 = vmatpush2.msra.mxu0 0.0
      %8733 = vmatprep.subr.mxu0 0.0
      %8734 = vmatpush2.msra.mxu0 0.0
      %8735 = vmatprep.subr.mxu0 0.0
      %8736 = vmatpush2.msra.mxu0 0.0
      %8737 = vmatprep.subr.mxu0 0.0
      %8738 = vmatpush2.msra.mxu0 0.0
      %8739 = vmatprep.subr.mxu0 0.0
      %8740 = vmatpush2.msra.mxu0 0.0
      %8741 = vmatprep.subr.mxu0 0.0
      %8742 = vmatpush2.msra.mxu0 0.0
      %8743 = vmatprep.subr.mxu0 0.0
      %8744 = vmatpush2.msra.mxu0 0.0
      %8745 = vmatprep.subr.mxu0 0.0
      %8746 = vmatpush2.msra.mxu0 0.0
      %8747 = vmatprep.subr.mxu0 0.0
      %8748 = vmatpush2.msra.mxu0 0.0
      %8749 = vmatprep.subr.mxu0 0.0
      %8750 = vmatpush2.msra.mxu0 0.0
      %8751 = vmatprep.mubr.f32.mxu0 0.0
      %v8752 = vand.u32 %v8432, 4294901760
      %v8753 = vsub.f32 %v8432, %v8752
      %v8754 = vand.u32 %v8753, 4294901760
      %8755 = vmatmul.mubr.f32.gmra.mxu0 %v8754
      %v8756 = vpop.f32.mrf.mxu0
      %v8757 = vadd.f32 %v8676, %v8756
      %v8758 = vpop.f32.mrf.mxu0
      %8759 = vmatprep.mubr.f32.mxu0 0.0
      %v8760 = vand.u32 %v8435, 4294901760
      %v8761 = vsub.f32 %v8435, %v8760
      %v8762 = vand.u32 %v8761, 4294901760
      %8763 = vmatmul.mubr.f32.gmra.mxu0 %v8762
      %v8764 = vpop.f32.mrf.mxu0
      %v8765 = vadd.f32 %v8683, %v8764
      %v8766 = vpop.f32.mrf.mxu0
      %8767 = vdwg.mxu0
      %8768 = vmatprep.subr.mxu0 0.0
      %8769 = vmatpush1.msra.mxu0 0.0
      %8770 = vmatprep.subr.mxu0 0.0
      %8771 = vmatpush1.msra.mxu0 0.0
      %8772 = vmatprep.subr.mxu0 0.0
      %8773 = vmatpush1.msra.mxu0 0.0
      %8774 = vmatprep.subr.mxu0 0.0
      %8775 = vmatpush1.msra.mxu0 0.0
      %8776 = vmatprep.subr.mxu0 0.0
      %8777 = vmatpush1.msra.mxu0 0.0
      %8778 = vmatprep.subr.mxu0 0.0
      %8779 = vmatpush1.msra.mxu0 0.0
      %8780 = vmatprep.subr.mxu0 0.0
      %8781 = vmatpush1.msra.mxu0 0.0
      %8782 = vmatprep.subr.mxu0 0.0
      %8783 = vmatpush1.msra.mxu0 0.0
      %8784 = vmatprep.subr.mxu0 0.0
      %8785 = vmatpush1.msra.mxu0 0.0
      %8786 = vmatprep.subr.mxu0 0.0
      %8787 = vmatpush1.msra.mxu0 0.0
      %8788 = vmatprep.subr.mxu0 0.0
      %8789 = vmatpush1.msra.mxu0 0.0
      %8790 = vmatprep.subr.mxu0 0.0
      %8791 = vmatpush1.msra.mxu0 0.0
      %8792 = vmatprep.subr.mxu0 0.0
      %8793 = vmatpush1.msra.mxu0 0.0
      %8794 = vmatprep.subr.mxu0 0.0
      %8795 = vmatpush1.msra.mxu0 0.0
      %8796 = vmatprep.subr.mxu0 0.0
      %8797 = vmatpush1.msra.mxu0 0.0
      %8798 = vmatprep.subr.mxu0 0.0
      %v8799 = vand.u32 %v8430, 4294901760
      %v8800 = vsub.f32 %v8430, %v8799
      %v8801 = vand.u32 %v8800, 4294901760
      %8802 = vmatpush1.msra.mxu0 %v8801
      %8803 = vmatprep.subr.mxu0 0.0
      %8804 = vmatpush2.msra.mxu0 0.0
      %8805 = vmatprep.subr.mxu0 0.0
      %8806 = vmatpush2.msra.mxu0 0.0
      %8807 = vmatprep.subr.mxu0 0.0
      %8808 = vmatpush2.msra.mxu0 0.0
      %8809 = vmatprep.subr.mxu0 0.0
      %8810 = vmatpush2.msra.mxu0 0.0
      %8811 = vmatprep.subr.mxu0 0.0
      %8812 = vmatpush2.msra.mxu0 0.0
      %8813 = vmatprep.subr.mxu0 0.0
      %8814 = vmatpush2.msra.mxu0 0.0
      %8815 = vmatprep.subr.mxu0 0.0
      %8816 = vmatpush2.msra.mxu0 0.0
      %8817 = vmatprep.subr.mxu0 0.0
      %8818 = vmatpush2.msra.mxu0 0.0
      %8819 = vmatprep.subr.mxu0 0.0
      %8820 = vmatpush2.msra.mxu0 0.0
      %8821 = vmatprep.subr.mxu0 0.0
      %8822 = vmatpush2.msra.mxu0 0.0
      %8823 = vmatprep.subr.mxu0 0.0
      %8824 = vmatpush2.msra.mxu0 0.0
      %8825 = vmatprep.subr.mxu0 0.0
      %8826 = vmatpush2.msra.mxu0 0.0
      %8827 = vmatprep.subr.mxu0 0.0
      %8828 = vmatpush2.msra.mxu0 0.0
      %8829 = vmatprep.subr.mxu0 0.0
      %8830 = vmatpush2.msra.mxu0 0.0
      %8831 = vmatprep.subr.mxu0 0.0
      %8832 = vmatpush2.msra.mxu0 0.0
      %8833 = vmatprep.subr.mxu0 0.0
      %8834 = vmatpush2.msra.mxu0 0.0
      %8835 = vmatprep.mubr.f32.mxu0 0.0
      %v8836 = vand.u32 %v8432, 4294901760
      %8837 = vmatmul.mubr.f32.gmra.mxu0 %v8836
      %v8838 = vpop.f32.mrf.mxu0
      %v8839 = vadd.f32 %v8757, %v8838
      %v8840 = vpop.f32.mrf.mxu0
      %8841 = vmatprep.mubr.f32.mxu0 0.0
      %v8842 = vand.u32 %v8435, 4294901760
      %8843 = vmatmul.mubr.f32.gmra.mxu0 %v8842
      %v8844 = vpop.f32.mrf.mxu0
      %v8845 = vadd.f32 %v8765, %v8844
      %v8846 = vpop.f32.mrf.mxu0
      %8847 = vdwg.mxu0
      %8848 = vmatprep.subr.mxu0 0.0
      %8849 = vmatpush1.msra.mxu0 0.0
      %8850 = vmatprep.subr.mxu0 0.0
      %8851 = vmatpush1.msra.mxu0 0.0
      %8852 = vmatprep.subr.mxu0 0.0
      %8853 = vmatpush1.msra.mxu0 0.0
      %8854 = vmatprep.subr.mxu0 0.0
      %8855 = vmatpush1.msra.mxu0 0.0
      %8856 = vmatprep.subr.mxu0 0.0
      %8857 = vmatpush1.msra.mxu0 0.0
      %8858 = vmatprep.subr.mxu0 0.0
      %8859 = vmatpush1.msra.mxu0 0.0
      %8860 = vmatprep.subr.mxu0 0.0
      %8861 = vmatpush1.msra.mxu0 0.0
      %8862 = vmatprep.subr.mxu0 0.0
      %8863 = vmatpush1.msra.mxu0 0.0
      %8864 = vmatprep.subr.mxu0 0.0
      %8865 = vmatpush1.msra.mxu0 0.0
      %8866 = vmatprep.subr.mxu0 0.0
      %8867 = vmatpush1.msra.mxu0 0.0
      %8868 = vmatprep.subr.mxu0 0.0
      %8869 = vmatpush1.msra.mxu0 0.0
      %8870 = vmatprep.subr.mxu0 0.0
      %8871 = vmatpush1.msra.mxu0 0.0
      %8872 = vmatprep.subr.mxu0 0.0
      %8873 = vmatpush1.msra.mxu0 0.0
      %8874 = vmatprep.subr.mxu0 0.0
      %8875 = vmatpush1.msra.mxu0 0.0
      %8876 = vmatprep.subr.mxu0 0.0
      %8877 = vmatpush1.msra.mxu0 0.0
      %8878 = vmatprep.subr.mxu0 0.0
      %v8879 = vand.u32 %v8430, 4294901760
      %8880 = vmatpush1.msra.mxu0 %v8879
      %8881 = vmatprep.subr.mxu0 0.0
      %8882 = vmatpush2.msra.mxu0 0.0
      %8883 = vmatprep.subr.mxu0 0.0
      %8884 = vmatpush2.msra.mxu0 0.0
      %8885 = vmatprep.subr.mxu0 0.0
      %8886 = vmatpush2.msra.mxu0 0.0
      %8887 = vmatprep.subr.mxu0 0.0
      %8888 = vmatpush2.msra.mxu0 0.0
      %8889 = vmatprep.subr.mxu0 0.0
      %8890 = vmatpush2.msra.mxu0 0.0
      %8891 = vmatprep.subr.mxu0 0.0
      %8892 = vmatpush2.msra.mxu0 0.0
      %8893 = vmatprep.subr.mxu0 0.0
      %8894 = vmatpush2.msra.mxu0 0.0
      %8895 = vmatprep.subr.mxu0 0.0
      %8896 = vmatpush2.msra.mxu0 0.0
      %8897 = vmatprep.subr.mxu0 0.0
      %8898 = vmatpush2.msra.mxu0 0.0
      %8899 = vmatprep.subr.mxu0 0.0
      %8900 = vmatpush2.msra.mxu0 0.0
      %8901 = vmatprep.subr.mxu0 0.0
      %8902 = vmatpush2.msra.mxu0 0.0
      %8903 = vmatprep.subr.mxu0 0.0
      %8904 = vmatpush2.msra.mxu0 0.0
      %8905 = vmatprep.subr.mxu0 0.0
      %8906 = vmatpush2.msra.mxu0 0.0
      %8907 = vmatprep.subr.mxu0 0.0
      %8908 = vmatpush2.msra.mxu0 0.0
      %8909 = vmatprep.subr.mxu0 0.0
      %8910 = vmatpush2.msra.mxu0 0.0
      %8911 = vmatprep.subr.mxu0 0.0
      %8912 = vmatpush2.msra.mxu0 0.0
      %8913 = vmatprep.mubr.f32.mxu0 0.0
      %v8914 = vand.u32 %v8432, 4294901760
      %8915 = vmatmul.mubr.f32.gmra.mxu0 %v8914
      %v8916 = vpop.f32.mrf.mxu0
      %v8917 = vadd.f32 %v8839, %v8916
      %v8918 = vpop.f32.mrf.mxu0
      %8919 = vmatprep.mubr.f32.mxu0 0.0
      %v8920 = vand.u32 %v8435, 4294901760
      %8921 = vmatmul.mubr.f32.gmra.mxu0 %v8920
      %v8922 = vpop.f32.mrf.mxu0
      %v8923 = vadd.f32 %v8845, %v8922
      %v8924 = vpop.f32.mrf.mxu0
      %8925 = vdwg.mxu0
      %v8927 = vsel %vm2831, %v7391, 0
      %v8930 = vsel %vm2831, %v7396, 0
      %8932 = vmatprep.subr.mxu0 0.0
      %8933 = vmatpush1.msra.mxu0 0.0
      %8934 = vmatprep.subr.mxu0 0.0
      %8935 = vmatpush1.msra.mxu0 0.0
      %8936 = vmatprep.subr.mxu0 0.0
      %8937 = vmatpush1.msra.mxu0 0.0
      %8938 = vmatprep.subr.mxu0 0.0
      %8939 = vmatpush1.msra.mxu0 0.0
      %8940 = vmatprep.subr.mxu0 0.0
      %8941 = vmatpush1.msra.mxu0 0.0
      %8942 = vmatprep.subr.mxu0 0.0
      %8943 = vmatpush1.msra.mxu0 0.0
      %8944 = vmatprep.subr.mxu0 0.0
      %8945 = vmatpush1.msra.mxu0 0.0
      %8946 = vmatprep.subr.mxu0 0.0
      %8947 = vmatpush1.msra.mxu0 0.0
      %8948 = vmatprep.subr.mxu0 0.0
      %v8949 = vand.u32 %v8429, 4294901760
      %8950 = vmatpush1.msra.mxu0 %v8949
      %8951 = vmatprep.subr.mxu0 0.0
      %v8952 = vand.u32 %v8428, 4294901760
      %8953 = vmatpush1.msra.mxu0 %v8952
      %8954 = vmatprep.subr.mxu0 0.0
      %v8955 = vand.u32 %v8427, 4294901760
      %8956 = vmatpush1.msra.mxu0 %v8955
      %8957 = vmatprep.subr.mxu0 0.0
      %v8958 = vand.u32 %v8426, 4294901760
      %8959 = vmatpush1.msra.mxu0 %v8958
      %8960 = vmatprep.subr.mxu0 0.0
      %v8961 = vand.u32 %v8425, 4294901760
      %8962 = vmatpush1.msra.mxu0 %v8961
      %8963 = vmatprep.subr.mxu0 0.0
      %v8964 = vand.u32 %v8424, 4294901760
      %8965 = vmatpush1.msra.mxu0 %v8964
      %8966 = vmatprep.subr.mxu0 0.0
      %v8967 = vand.u32 %v8423, 4294901760
      %8968 = vmatpush1.msra.mxu0 %v8967
      %8969 = vmatprep.subr.mxu0 0.0
      %v8970 = vand.u32 %v8422, 4294901760
      %8971 = vmatpush1.msra.mxu0 %v8970
      %8972 = vmatprep.subr.mxu0 0.0
      %8973 = vmatpush2.msra.mxu0 0.0
      %8974 = vmatprep.subr.mxu0 0.0
      %8975 = vmatpush2.msra.mxu0 0.0
      %8976 = vmatprep.subr.mxu0 0.0
      %8977 = vmatpush2.msra.mxu0 0.0
      %8978 = vmatprep.subr.mxu0 0.0
      %8979 = vmatpush2.msra.mxu0 0.0
      %8980 = vmatprep.subr.mxu0 0.0
      %8981 = vmatpush2.msra.mxu0 0.0
      %8982 = vmatprep.subr.mxu0 0.0
      %8983 = vmatpush2.msra.mxu0 0.0
      %8984 = vmatprep.subr.mxu0 0.0
      %8985 = vmatpush2.msra.mxu0 0.0
      %8986 = vmatprep.subr.mxu0 0.0
      %8987 = vmatpush2.msra.mxu0 0.0
      %8988 = vmatprep.subr.mxu0 0.0
      %8989 = vmatpush2.msra.mxu0 0.0
      %8990 = vmatprep.subr.mxu0 0.0
      %8991 = vmatpush2.msra.mxu0 0.0
      %8992 = vmatprep.subr.mxu0 0.0
      %8993 = vmatpush2.msra.mxu0 0.0
      %8994 = vmatprep.subr.mxu0 0.0
      %8995 = vmatpush2.msra.mxu0 0.0
      %8996 = vmatprep.subr.mxu0 0.0
      %8997 = vmatpush2.msra.mxu0 0.0
      %8998 = vmatprep.subr.mxu0 0.0
      %8999 = vmatpush2.msra.mxu0 0.0
      %9000 = vmatprep.subr.mxu0 0.0
      %9001 = vmatpush2.msra.mxu0 0.0
      %9002 = vmatprep.subr.mxu0 0.0
      %9003 = vmatpush2.msra.mxu0 0.0
      %9004 = vmatprep.mubr.f32.mxu0 0.0
      %v9005 = vand.u32 %v8927, 4294901760
      %v9006 = vsub.f32 %v8927, %v9005
      %v9007 = vand.u32 %v9006, 4294901760
      %v9008 = vsub.f32 %v9006, %v9007
      %v9009 = vand.u32 %v9008, 4294901760
      %9010 = vmatmul.mubr.f32.gmra.mxu0 %v9009
      %v9011 = vpop.f32.mrf.mxu0
      %v9012 = vadd.f32 %v8917, %v9011
      %v9013 = vpop.f32.mrf.mxu0
      %9014 = vmatprep.mubr.f32.mxu0 0.0
      %v9015 = vand.u32 %v8930, 4294901760
      %v9016 = vsub.f32 %v8930, %v9015
      %v9017 = vand.u32 %v9016, 4294901760
      %v9018 = vsub.f32 %v9016, %v9017
      %v9019 = vand.u32 %v9018, 4294901760
      %9020 = vmatmul.mubr.f32.gmra.mxu0 %v9019
      %v9021 = vpop.f32.mrf.mxu0
      %v9022 = vadd.f32 %v8923, %v9021
      %v9023 = vpop.f32.mrf.mxu0
      %9024 = vdwg.mxu0
      %9025 = vmatprep.subr.mxu0 0.0
      %9026 = vmatpush1.msra.mxu0 0.0
      %9027 = vmatprep.subr.mxu0 0.0
      %9028 = vmatpush1.msra.mxu0 0.0
      %9029 = vmatprep.subr.mxu0 0.0
      %9030 = vmatpush1.msra.mxu0 0.0
      %9031 = vmatprep.subr.mxu0 0.0
      %9032 = vmatpush1.msra.mxu0 0.0
      %9033 = vmatprep.subr.mxu0 0.0
      %9034 = vmatpush1.msra.mxu0 0.0
      %9035 = vmatprep.subr.mxu0 0.0
      %9036 = vmatpush1.msra.mxu0 0.0
      %9037 = vmatprep.subr.mxu0 0.0
      %9038 = vmatpush1.msra.mxu0 0.0
      %9039 = vmatprep.subr.mxu0 0.0
      %9040 = vmatpush1.msra.mxu0 0.0
      %9041 = vmatprep.subr.mxu0 0.0
      %v9042 = vand.u32 %v8429, 4294901760
      %v9043 = vsub.f32 %v8429, %v9042
      %v9044 = vand.u32 %v9043, 4294901760
      %v9045 = vsub.f32 %v9043, %v9044
      %v9046 = vand.u32 %v9045, 4294901760
      %9047 = vmatpush1.msra.mxu0 %v9046
      %9048 = vmatprep.subr.mxu0 0.0
      %v9049 = vand.u32 %v8428, 4294901760
      %v9050 = vsub.f32 %v8428, %v9049
      %v9051 = vand.u32 %v9050, 4294901760
      %v9052 = vsub.f32 %v9050, %v9051
      %v9053 = vand.u32 %v9052, 4294901760
      %9054 = vmatpush1.msra.mxu0 %v9053
      %9055 = vmatprep.subr.mxu0 0.0
      %v9056 = vand.u32 %v8427, 4294901760
      %v9057 = vsub.f32 %v8427, %v9056
      %v9058 = vand.u32 %v9057, 4294901760
      %v9059 = vsub.f32 %v9057, %v9058
      %v9060 = vand.u32 %v9059, 4294901760
      %9061 = vmatpush1.msra.mxu0 %v9060
      %9062 = vmatprep.subr.mxu0 0.0
      %v9063 = vand.u32 %v8426, 4294901760
      %v9064 = vsub.f32 %v8426, %v9063
      %v9065 = vand.u32 %v9064, 4294901760
      %v9066 = vsub.f32 %v9064, %v9065
      %v9067 = vand.u32 %v9066, 4294901760
      %9068 = vmatpush1.msra.mxu0 %v9067
      %9069 = vmatprep.subr.mxu0 0.0
      %v9070 = vand.u32 %v8425, 4294901760
      %v9071 = vsub.f32 %v8425, %v9070
      %v9072 = vand.u32 %v9071, 4294901760
      %v9073 = vsub.f32 %v9071, %v9072
      %v9074 = vand.u32 %v9073, 4294901760
      %9075 = vmatpush1.msra.mxu0 %v9074
      %9076 = vmatprep.subr.mxu0 0.0
      %v9077 = vand.u32 %v8424, 4294901760
      %v9078 = vsub.f32 %v8424, %v9077
      %v9079 = vand.u32 %v9078, 4294901760
      %v9080 = vsub.f32 %v9078, %v9079
      %v9081 = vand.u32 %v9080, 4294901760
      %9082 = vmatpush1.msra.mxu0 %v9081
      %9083 = vmatprep.subr.mxu0 0.0
      %v9084 = vand.u32 %v8423, 4294901760
      %v9085 = vsub.f32 %v8423, %v9084
      %v9086 = vand.u32 %v9085, 4294901760
      %v9087 = vsub.f32 %v9085, %v9086
      %v9088 = vand.u32 %v9087, 4294901760
      %9089 = vmatpush1.msra.mxu0 %v9088
      %9090 = vmatprep.subr.mxu0 0.0
      %v9091 = vand.u32 %v8422, 4294901760
      %v9092 = vsub.f32 %v8422, %v9091
      %v9093 = vand.u32 %v9092, 4294901760
      %v9094 = vsub.f32 %v9092, %v9093
      %v9095 = vand.u32 %v9094, 4294901760
      %9096 = vmatpush1.msra.mxu0 %v9095
      %9097 = vmatprep.subr.mxu0 0.0
      %9098 = vmatpush2.msra.mxu0 0.0
      %9099 = vmatprep.subr.mxu0 0.0
      %9100 = vmatpush2.msra.mxu0 0.0
      %9101 = vmatprep.subr.mxu0 0.0
      %9102 = vmatpush2.msra.mxu0 0.0
      %9103 = vmatprep.subr.mxu0 0.0
      %9104 = vmatpush2.msra.mxu0 0.0
      %9105 = vmatprep.subr.mxu0 0.0
      %9106 = vmatpush2.msra.mxu0 0.0
      %9107 = vmatprep.subr.mxu0 0.0
      %9108 = vmatpush2.msra.mxu0 0.0
      %9109 = vmatprep.subr.mxu0 0.0
      %9110 = vmatpush2.msra.mxu0 0.0
      %9111 = vmatprep.subr.mxu0 0.0
      %9112 = vmatpush2.msra.mxu0 0.0
      %9113 = vmatprep.subr.mxu0 0.0
      %9114 = vmatpush2.msra.mxu0 0.0
      %9115 = vmatprep.subr.mxu0 0.0
      %9116 = vmatpush2.msra.mxu0 0.0
      %9117 = vmatprep.subr.mxu0 0.0
      %9118 = vmatpush2.msra.mxu0 0.0
      %9119 = vmatprep.subr.mxu0 0.0
      %9120 = vmatpush2.msra.mxu0 0.0
      %9121 = vmatprep.subr.mxu0 0.0
      %9122 = vmatpush2.msra.mxu0 0.0
      %9123 = vmatprep.subr.mxu0 0.0
      %9124 = vmatpush2.msra.mxu0 0.0
      %9125 = vmatprep.subr.mxu0 0.0
      %9126 = vmatpush2.msra.mxu0 0.0
      %9127 = vmatprep.subr.mxu0 0.0
      %9128 = vmatpush2.msra.mxu0 0.0
      %9129 = vmatprep.mubr.f32.mxu0 0.0
      %v9130 = vand.u32 %v8927, 4294901760
      %9131 = vmatmul.mubr.f32.gmra.mxu0 %v9130
      %v9132 = vpop.f32.mrf.mxu0
      %v9133 = vadd.f32 %v9012, %v9132
      %v9134 = vpop.f32.mrf.mxu0
      %9135 = vmatprep.mubr.f32.mxu0 0.0
      %v9136 = vand.u32 %v8930, 4294901760
      %9137 = vmatmul.mubr.f32.gmra.mxu0 %v9136
      %v9138 = vpop.f32.mrf.mxu0
      %v9139 = vadd.f32 %v9022, %v9138
      %v9140 = vpop.f32.mrf.mxu0
      %9141 = vdwg.mxu0
      %9142 = vmatprep.subr.mxu0 0.0
      %9143 = vmatpush1.msra.mxu0 0.0
      %9144 = vmatprep.subr.mxu0 0.0
      %9145 = vmatpush1.msra.mxu0 0.0
      %9146 = vmatprep.subr.mxu0 0.0
      %9147 = vmatpush1.msra.mxu0 0.0
      %9148 = vmatprep.subr.mxu0 0.0
      %9149 = vmatpush1.msra.mxu0 0.0
      %9150 = vmatprep.subr.mxu0 0.0
      %9151 = vmatpush1.msra.mxu0 0.0
      %9152 = vmatprep.subr.mxu0 0.0
      %9153 = vmatpush1.msra.mxu0 0.0
      %9154 = vmatprep.subr.mxu0 0.0
      %9155 = vmatpush1.msra.mxu0 0.0
      %9156 = vmatprep.subr.mxu0 0.0
      %9157 = vmatpush1.msra.mxu0 0.0
      %9158 = vmatprep.subr.mxu0 0.0
      %v9159 = vand.u32 %v8429, 4294901760
      %v9160 = vsub.f32 %v8429, %v9159
      %9161 = vmatpush1.msra.mxu0 %v9160
      %9162 = vmatprep.subr.mxu0 0.0
      %v9163 = vand.u32 %v8428, 4294901760
      %v9164 = vsub.f32 %v8428, %v9163
      %9165 = vmatpush1.msra.mxu0 %v9164
      %9166 = vmatprep.subr.mxu0 0.0
      %v9167 = vand.u32 %v8427, 4294901760
      %v9168 = vsub.f32 %v8427, %v9167
      %9169 = vmatpush1.msra.mxu0 %v9168
      %9170 = vmatprep.subr.mxu0 0.0
      %v9171 = vand.u32 %v8426, 4294901760
      %v9172 = vsub.f32 %v8426, %v9171
      %9173 = vmatpush1.msra.mxu0 %v9172
      %9174 = vmatprep.subr.mxu0 0.0
      %v9175 = vand.u32 %v8425, 4294901760
      %v9176 = vsub.f32 %v8425, %v9175
      %9177 = vmatpush1.msra.mxu0 %v9176
      %9178 = vmatprep.subr.mxu0 0.0
      %v9179 = vand.u32 %v8424, 4294901760
      %v9180 = vsub.f32 %v8424, %v9179
      %9181 = vmatpush1.msra.mxu0 %v9180
      %9182 = vmatprep.subr.mxu0 0.0
      %v9183 = vand.u32 %v8423, 4294901760
      %v9184 = vsub.f32 %v8423, %v9183
      %9185 = vmatpush1.msra.mxu0 %v9184
      %9186 = vmatprep.subr.mxu0 0.0
      %v9187 = vand.u32 %v8422, 4294901760
      %v9188 = vsub.f32 %v8422, %v9187
      %9189 = vmatpush1.msra.mxu0 %v9188
      %9190 = vmatprep.subr.mxu0 0.0
      %9191 = vmatpush2.msra.mxu0 0.0
      %9192 = vmatprep.subr.mxu0 0.0
      %9193 = vmatpush2.msra.mxu0 0.0
      %9194 = vmatprep.subr.mxu0 0.0
      %9195 = vmatpush2.msra.mxu0 0.0
      %9196 = vmatprep.subr.mxu0 0.0
      %9197 = vmatpush2.msra.mxu0 0.0
      %9198 = vmatprep.subr.mxu0 0.0
      %9199 = vmatpush2.msra.mxu0 0.0
      %9200 = vmatprep.subr.mxu0 0.0
      %9201 = vmatpush2.msra.mxu0 0.0
      %9202 = vmatprep.subr.mxu0 0.0
      %9203 = vmatpush2.msra.mxu0 0.0
      %9204 = vmatprep.subr.mxu0 0.0
      %9205 = vmatpush2.msra.mxu0 0.0
      %9206 = vmatprep.subr.mxu0 0.0
      %9207 = vmatpush2.msra.mxu0 0.0
      %9208 = vmatprep.subr.mxu0 0.0
      %9209 = vmatpush2.msra.mxu0 0.0
      %9210 = vmatprep.subr.mxu0 0.0
      %9211 = vmatpush2.msra.mxu0 0.0
      %9212 = vmatprep.subr.mxu0 0.0
      %9213 = vmatpush2.msra.mxu0 0.0
      %9214 = vmatprep.subr.mxu0 0.0
      %9215 = vmatpush2.msra.mxu0 0.0
      %9216 = vmatprep.subr.mxu0 0.0
      %9217 = vmatpush2.msra.mxu0 0.0
      %9218 = vmatprep.subr.mxu0 0.0
      %9219 = vmatpush2.msra.mxu0 0.0
      %9220 = vmatprep.subr.mxu0 0.0
      %9221 = vmatpush2.msra.mxu0 0.0
      %9222 = vmatprep.mubr.f32.mxu0 0.0
      %v9223 = vand.u32 %v8927, 4294901760
      %v9224 = vsub.f32 %v8927, %v9223
      %9225 = vmatmul.mubr.f32.gmra.mxu0 %v9224
      %v9226 = vpop.f32.mrf.mxu0
      %v9227 = vadd.f32 %v9133, %v9226
      %v9228 = vpop.f32.mrf.mxu0
      %9229 = vmatprep.mubr.f32.mxu0 0.0
      %v9230 = vand.u32 %v8930, 4294901760
      %v9231 = vsub.f32 %v8930, %v9230
      %9232 = vmatmul.mubr.f32.gmra.mxu0 %v9231
      %v9233 = vpop.f32.mrf.mxu0
      %v9234 = vadd.f32 %v9139, %v9233
      %v9235 = vpop.f32.mrf.mxu0
      %9236 = vdwg.mxu0
      %9237 = vmatprep.subr.mxu0 0.0
      %9238 = vmatpush1.msra.mxu0 0.0
      %9239 = vmatprep.subr.mxu0 0.0
      %9240 = vmatpush1.msra.mxu0 0.0
      %9241 = vmatprep.subr.mxu0 0.0
      %9242 = vmatpush1.msra.mxu0 0.0
      %9243 = vmatprep.subr.mxu0 0.0
      %9244 = vmatpush1.msra.mxu0 0.0
      %9245 = vmatprep.subr.mxu0 0.0
      %9246 = vmatpush1.msra.mxu0 0.0
      %9247 = vmatprep.subr.mxu0 0.0
      %9248 = vmatpush1.msra.mxu0 0.0
      %9249 = vmatprep.subr.mxu0 0.0
      %9250 = vmatpush1.msra.mxu0 0.0
      %9251 = vmatprep.subr.mxu0 0.0
      %9252 = vmatpush1.msra.mxu0 0.0
      %9253 = vmatprep.subr.mxu0 0.0
      %v9254 = vand.u32 %v8429, 4294901760
      %9255 = vmatpush1.msra.mxu0 %v9254
      %9256 = vmatprep.subr.mxu0 0.0
      %v9257 = vand.u32 %v8428, 4294901760
      %9258 = vmatpush1.msra.mxu0 %v9257
      %9259 = vmatprep.subr.mxu0 0.0
      %v9260 = vand.u32 %v8427, 4294901760
      %9261 = vmatpush1.msra.mxu0 %v9260
      %9262 = vmatprep.subr.mxu0 0.0
      %v9263 = vand.u32 %v8426, 4294901760
      %9264 = vmatpush1.msra.mxu0 %v9263
      %9265 = vmatprep.subr.mxu0 0.0
      %v9266 = vand.u32 %v8425, 4294901760
      %9267 = vmatpush1.msra.mxu0 %v9266
      %9268 = vmatprep.subr.mxu0 0.0
      %v9269 = vand.u32 %v8424, 4294901760
      %9270 = vmatpush1.msra.mxu0 %v9269
      %9271 = vmatprep.subr.mxu0 0.0
      %v9272 = vand.u32 %v8423, 4294901760
      %9273 = vmatpush1.msra.mxu0 %v9272
      %9274 = vmatprep.subr.mxu0 0.0
      %v9275 = vand.u32 %v8422, 4294901760
      %9276 = vmatpush1.msra.mxu0 %v9275
      %9277 = vmatprep.subr.mxu0 0.0
      %9278 = vmatpush2.msra.mxu0 0.0
      %9279 = vmatprep.subr.mxu0 0.0
      %9280 = vmatpush2.msra.mxu0 0.0
      %9281 = vmatprep.subr.mxu0 0.0
      %9282 = vmatpush2.msra.mxu0 0.0
      %9283 = vmatprep.subr.mxu0 0.0
      %9284 = vmatpush2.msra.mxu0 0.0
      %9285 = vmatprep.subr.mxu0 0.0
      %9286 = vmatpush2.msra.mxu0 0.0
      %9287 = vmatprep.subr.mxu0 0.0
      %9288 = vmatpush2.msra.mxu0 0.0
      %9289 = vmatprep.subr.mxu0 0.0
      %9290 = vmatpush2.msra.mxu0 0.0
      %9291 = vmatprep.subr.mxu0 0.0
      %9292 = vmatpush2.msra.mxu0 0.0
      %9293 = vmatprep.subr.mxu0 0.0
      %9294 = vmatpush2.msra.mxu0 0.0
      %9295 = vmatprep.subr.mxu0 0.0
      %9296 = vmatpush2.msra.mxu0 0.0
      %9297 = vmatprep.subr.mxu0 0.0
      %9298 = vmatpush2.msra.mxu0 0.0
      %9299 = vmatprep.subr.mxu0 0.0
      %9300 = vmatpush2.msra.mxu0 0.0
      %9301 = vmatprep.subr.mxu0 0.0
      %9302 = vmatpush2.msra.mxu0 0.0
      %9303 = vmatprep.subr.mxu0 0.0
      %9304 = vmatpush2.msra.mxu0 0.0
      %9305 = vmatprep.subr.mxu0 0.0
      %9306 = vmatpush2.msra.mxu0 0.0
      %9307 = vmatprep.subr.mxu0 0.0
      %9308 = vmatpush2.msra.mxu0 0.0
      %9309 = vmatprep.mubr.f32.mxu0 0.0
      %v9310 = vand.u32 %v8927, 4294901760
      %v9311 = vsub.f32 %v8927, %v9310
      %v9312 = vand.u32 %v9311, 4294901760
      %9313 = vmatmul.mubr.f32.gmra.mxu0 %v9312
      %v9314 = vpop.f32.mrf.mxu0
      %v9315 = vadd.f32 %v9227, %v9314
      %v9316 = vpop.f32.mrf.mxu0
      %9317 = vmatprep.mubr.f32.mxu0 0.0
      %v9318 = vand.u32 %v8930, 4294901760
      %v9319 = vsub.f32 %v8930, %v9318
      %v9320 = vand.u32 %v9319, 4294901760
      %9321 = vmatmul.mubr.f32.gmra.mxu0 %v9320
      %v9322 = vpop.f32.mrf.mxu0
      %v9323 = vadd.f32 %v9234, %v9322
      %v9324 = vpop.f32.mrf.mxu0
      %9325 = vdwg.mxu0
      %9326 = vmatprep.subr.mxu0 0.0
      %9327 = vmatpush1.msra.mxu0 0.0
      %9328 = vmatprep.subr.mxu0 0.0
      %9329 = vmatpush1.msra.mxu0 0.0
      %9330 = vmatprep.subr.mxu0 0.0
      %9331 = vmatpush1.msra.mxu0 0.0
      %9332 = vmatprep.subr.mxu0 0.0
      %9333 = vmatpush1.msra.mxu0 0.0
      %9334 = vmatprep.subr.mxu0 0.0
      %9335 = vmatpush1.msra.mxu0 0.0
      %9336 = vmatprep.subr.mxu0 0.0
      %9337 = vmatpush1.msra.mxu0 0.0
      %9338 = vmatprep.subr.mxu0 0.0
      %9339 = vmatpush1.msra.mxu0 0.0
      %9340 = vmatprep.subr.mxu0 0.0
      %9341 = vmatpush1.msra.mxu0 0.0
      %9342 = vmatprep.subr.mxu0 0.0
      %v9343 = vand.u32 %v8429, 4294901760
      %v9344 = vsub.f32 %v8429, %v9343
      %v9345 = vand.u32 %v9344, 4294901760
      %9346 = vmatpush1.msra.mxu0 %v9345
      %9347 = vmatprep.subr.mxu0 0.0
      %v9348 = vand.u32 %v8428, 4294901760
      %v9349 = vsub.f32 %v8428, %v9348
      %v9350 = vand.u32 %v9349, 4294901760
      %9351 = vmatpush1.msra.mxu0 %v9350
      %9352 = vmatprep.subr.mxu0 0.0
      %v9353 = vand.u32 %v8427, 4294901760
      %v9354 = vsub.f32 %v8427, %v9353
      %v9355 = vand.u32 %v9354, 4294901760
      %9356 = vmatpush1.msra.mxu0 %v9355
      %9357 = vmatprep.subr.mxu0 0.0
      %v9358 = vand.u32 %v8426, 4294901760
      %v9359 = vsub.f32 %v8426, %v9358
      %v9360 = vand.u32 %v9359, 4294901760
      %9361 = vmatpush1.msra.mxu0 %v9360
      %9362 = vmatprep.subr.mxu0 0.0
      %v9363 = vand.u32 %v8425, 4294901760
      %v9364 = vsub.f32 %v8425, %v9363
      %v9365 = vand.u32 %v9364, 4294901760
      %9366 = vmatpush1.msra.mxu0 %v9365
      %9367 = vmatprep.subr.mxu0 0.0
      %v9368 = vand.u32 %v8424, 4294901760
      %v9369 = vsub.f32 %v8424, %v9368
      %v9370 = vand.u32 %v9369, 4294901760
      %9371 = vmatpush1.msra.mxu0 %v9370
      %9372 = vmatprep.subr.mxu0 0.0
      %v9373 = vand.u32 %v8423, 4294901760
      %v9374 = vsub.f32 %v8423, %v9373
      %v9375 = vand.u32 %v9374, 4294901760
      %9376 = vmatpush1.msra.mxu0 %v9375
      %9377 = vmatprep.subr.mxu0 0.0
      %v9378 = vand.u32 %v8422, 4294901760
      %v9379 = vsub.f32 %v8422, %v9378
      %v9380 = vand.u32 %v9379, 4294901760
      %9381 = vmatpush1.msra.mxu0 %v9380
      %9382 = vmatprep.subr.mxu0 0.0
      %9383 = vmatpush2.msra.mxu0 0.0
      %9384 = vmatprep.subr.mxu0 0.0
      %9385 = vmatpush2.msra.mxu0 0.0
      %9386 = vmatprep.subr.mxu0 0.0
      %9387 = vmatpush2.msra.mxu0 0.0
      %9388 = vmatprep.subr.mxu0 0.0
      %9389 = vmatpush2.msra.mxu0 0.0
      %9390 = vmatprep.subr.mxu0 0.0
      %9391 = vmatpush2.msra.mxu0 0.0
      %9392 = vmatprep.subr.mxu0 0.0
      %9393 = vmatpush2.msra.mxu0 0.0
      %9394 = vmatprep.subr.mxu0 0.0
      %9395 = vmatpush2.msra.mxu0 0.0
      %9396 = vmatprep.subr.mxu0 0.0
      %9397 = vmatpush2.msra.mxu0 0.0
      %9398 = vmatprep.subr.mxu0 0.0
      %9399 = vmatpush2.msra.mxu0 0.0
      %9400 = vmatprep.subr.mxu0 0.0
      %9401 = vmatpush2.msra.mxu0 0.0
      %9402 = vmatprep.subr.mxu0 0.0
      %9403 = vmatpush2.msra.mxu0 0.0
      %9404 = vmatprep.subr.mxu0 0.0
      %9405 = vmatpush2.msra.mxu0 0.0
      %9406 = vmatprep.subr.mxu0 0.0
      %9407 = vmatpush2.msra.mxu0 0.0
      %9408 = vmatprep.subr.mxu0 0.0
      %9409 = vmatpush2.msra.mxu0 0.0
      %9410 = vmatprep.subr.mxu0 0.0
      %9411 = vmatpush2.msra.mxu0 0.0
      %9412 = vmatprep.subr.mxu0 0.0
      %9413 = vmatpush2.msra.mxu0 0.0
      %9414 = vmatprep.mubr.f32.mxu0 0.0
      %v9415 = vand.u32 %v8927, 4294901760
      %9416 = vmatmul.mubr.f32.gmra.mxu0 %v9415
      %v9417 = vpop.f32.mrf.mxu0
      %v9418 = vadd.f32 %v9315, %v9417
      %v9419 = vpop.f32.mrf.mxu0
      %9420 = vmatprep.mubr.f32.mxu0 0.0
      %v9421 = vand.u32 %v8930, 4294901760
      %9422 = vmatmul.mubr.f32.gmra.mxu0 %v9421
      %v9423 = vpop.f32.mrf.mxu0
      %v9424 = vadd.f32 %v9323, %v9423
      %v9425 = vpop.f32.mrf.mxu0
      %9426 = vdwg.mxu0
      %9427 = vmatprep.subr.mxu0 0.0
      %9428 = vmatpush1.msra.mxu0 0.0
      %9429 = vmatprep.subr.mxu0 0.0
      %9430 = vmatpush1.msra.mxu0 0.0
      %9431 = vmatprep.subr.mxu0 0.0
      %9432 = vmatpush1.msra.mxu0 0.0
      %9433 = vmatprep.subr.mxu0 0.0
      %9434 = vmatpush1.msra.mxu0 0.0
      %9435 = vmatprep.subr.mxu0 0.0
      %9436 = vmatpush1.msra.mxu0 0.0
      %9437 = vmatprep.subr.mxu0 0.0
      %9438 = vmatpush1.msra.mxu0 0.0
      %9439 = vmatprep.subr.mxu0 0.0
      %9440 = vmatpush1.msra.mxu0 0.0
      %9441 = vmatprep.subr.mxu0 0.0
      %9442 = vmatpush1.msra.mxu0 0.0
      %9443 = vmatprep.subr.mxu0 0.0
      %v9444 = vand.u32 %v8429, 4294901760
      %9445 = vmatpush1.msra.mxu0 %v9444
      %9446 = vmatprep.subr.mxu0 0.0
      %v9447 = vand.u32 %v8428, 4294901760
      %9448 = vmatpush1.msra.mxu0 %v9447
      %9449 = vmatprep.subr.mxu0 0.0
      %v9450 = vand.u32 %v8427, 4294901760
      %9451 = vmatpush1.msra.mxu0 %v9450
      %9452 = vmatprep.subr.mxu0 0.0
      %v9453 = vand.u32 %v8426, 4294901760
      %9454 = vmatpush1.msra.mxu0 %v9453
      %9455 = vmatprep.subr.mxu0 0.0
      %v9456 = vand.u32 %v8425, 4294901760
      %9457 = vmatpush1.msra.mxu0 %v9456
      %9458 = vmatprep.subr.mxu0 0.0
      %v9459 = vand.u32 %v8424, 4294901760
      %9460 = vmatpush1.msra.mxu0 %v9459
      %9461 = vmatprep.subr.mxu0 0.0
      %v9462 = vand.u32 %v8423, 4294901760
      %9463 = vmatpush1.msra.mxu0 %v9462
      %9464 = vmatprep.subr.mxu0 0.0
      %v9465 = vand.u32 %v8422, 4294901760
      %9466 = vmatpush1.msra.mxu0 %v9465
      %9467 = vmatprep.subr.mxu0 0.0
      %9468 = vmatpush2.msra.mxu0 0.0
      %9469 = vmatprep.subr.mxu0 0.0
      %9470 = vmatpush2.msra.mxu0 0.0
      %9471 = vmatprep.subr.mxu0 0.0
      %9472 = vmatpush2.msra.mxu0 0.0
      %9473 = vmatprep.subr.mxu0 0.0
      %9474 = vmatpush2.msra.mxu0 0.0
      %9475 = vmatprep.subr.mxu0 0.0
      %9476 = vmatpush2.msra.mxu0 0.0
      %9477 = vmatprep.subr.mxu0 0.0
      %9478 = vmatpush2.msra.mxu0 0.0
      %9479 = vmatprep.subr.mxu0 0.0
      %9480 = vmatpush2.msra.mxu0 0.0
      %9481 = vmatprep.subr.mxu0 0.0
      %9482 = vmatpush2.msra.mxu0 0.0
      %9483 = vmatprep.subr.mxu0 0.0
      %9484 = vmatpush2.msra.mxu0 0.0
      %9485 = vmatprep.subr.mxu0 0.0
      %9486 = vmatpush2.msra.mxu0 0.0
      %9487 = vmatprep.subr.mxu0 0.0
      %9488 = vmatpush2.msra.mxu0 0.0
      %9489 = vmatprep.subr.mxu0 0.0
      %9490 = vmatpush2.msra.mxu0 0.0
      %9491 = vmatprep.subr.mxu0 0.0
      %9492 = vmatpush2.msra.mxu0 0.0
      %9493 = vmatprep.subr.mxu0 0.0
      %9494 = vmatpush2.msra.mxu0 0.0
      %9495 = vmatprep.subr.mxu0 0.0
      %9496 = vmatpush2.msra.mxu0 0.0
      %9497 = vmatprep.subr.mxu0 0.0
      %9498 = vmatpush2.msra.mxu0 0.0
      %9499 = vmatprep.mubr.f32.mxu0 0.0
      %v9500 = vand.u32 %v8927, 4294901760
      %9501 = vmatmul.mubr.f32.gmra.mxu0 %v9500
      %v9502 = vpop.f32.mrf.mxu0
      %v9503 = vadd.f32 %v9418, %v9502
      %v9504 = vpop.f32.mrf.mxu0
      %9505 = vmatprep.mubr.f32.mxu0 0.0
      %v9506 = vand.u32 %v8930, 4294901760
      %9507 = vmatmul.mubr.f32.gmra.mxu0 %v9506
      %v9508 = vpop.f32.mrf.mxu0
      %v9509 = vadd.f32 %v9424, %v9508
      %v9510 = vpop.f32.mrf.mxu0
      %9511 = vdwg.mxu0
      %v9512 = vld [vmem:[%s5 + $0x110] sm:$0x1]
      %v9513 = vlaneseq
      %v9514 = vshrl.u32 %v9513, 7
      %v9515 = vsub.s32 0, %v9514
      %v9516 = vrot.slane %v9512, %v9515
      %v9517 = vadd.f32 %v9503, %v9516
      %v9518 = vadd.f32 %v9509, %v9516
      %v9519 = vmax.f32 %v9517, 0.0
      %v9520 = vmax.f32 %v9518, 0.0
      %v9521 = vld [vmem:[%s5 + $0x118] sm:$0xff]
      %v9522 = vld [vmem:[%s5 + $0x120] sm:$0xff]
      %v9523 = vld [vmem:[%s5 + $0x128] sm:$0xff]
      %v9524 = vld [vmem:[%s5 + $0x130] sm:$0xff]
      %v9525 = vld [vmem:[%s5 + $0x138] sm:$0x1]
      %v9526 = vlaneseq
      %v9527 = vshrl.u32 %v9526, 7
      %v9528 = vsub.s32 0, %v9527
      %v9529 = vrot.slane %v9525, %v9528
      %v9531 = vsel %vm2814, %v9519, 0
      %v9534 = vsel %vm2814, %v9520, 0
      %9536 = vmatprep.subr.mxu0 0.0
      %9537 = vmatpush1.msra.mxu0 0.0
      %9538 = vmatprep.subr.mxu0 0.0
      %9539 = vmatpush1.msra.mxu0 0.0
      %9540 = vmatprep.subr.mxu0 0.0
      %9541 = vmatpush1.msra.mxu0 0.0
      %9542 = vmatprep.subr.mxu0 0.0
      %9543 = vmatpush1.msra.mxu0 0.0
      %9544 = vmatprep.subr.mxu0 0.0
      %9545 = vmatpush1.msra.mxu0 0.0
      %9546 = vmatprep.subr.mxu0 0.0
      %9547 = vmatpush1.msra.mxu0 0.0
      %9548 = vmatprep.subr.mxu0 0.0
      %9549 = vmatpush1.msra.mxu0 0.0
      %9550 = vmatprep.subr.mxu0 0.0
      %9551 = vmatpush1.msra.mxu0 0.0
      %9552 = vmatprep.subr.mxu0 0.0
      %9553 = vmatpush1.msra.mxu0 0.0
      %9554 = vmatprep.subr.mxu0 0.0
      %9555 = vmatpush1.msra.mxu0 0.0
      %9556 = vmatprep.subr.mxu0 0.0
      %9557 = vmatpush1.msra.mxu0 0.0
      %9558 = vmatprep.subr.mxu0 0.0
      %9559 = vmatpush1.msra.mxu0 0.0
      %9560 = vmatprep.subr.mxu0 0.0
      %v9561 = vand.u32 %v9524, 4294901760
      %9562 = vmatpush1.msra.mxu0 %v9561
      %9563 = vmatprep.subr.mxu0 0.0
      %v9564 = vand.u32 %v9523, 4294901760
      %9565 = vmatpush1.msra.mxu0 %v9564
      %9566 = vmatprep.subr.mxu0 0.0
      %v9567 = vand.u32 %v9522, 4294901760
      %9568 = vmatpush1.msra.mxu0 %v9567
      %9569 = vmatprep.subr.mxu0 0.0
      %v9570 = vand.u32 %v9521, 4294901760
      %9571 = vmatpush1.msra.mxu0 %v9570
      %9572 = vmatprep.subr.mxu0 0.0
      %9573 = vmatpush2.msra.mxu0 0.0
      %9574 = vmatprep.subr.mxu0 0.0
      %9575 = vmatpush2.msra.mxu0 0.0
      %9576 = vmatprep.subr.mxu0 0.0
      %9577 = vmatpush2.msra.mxu0 0.0
      %9578 = vmatprep.subr.mxu0 0.0
      %9579 = vmatpush2.msra.mxu0 0.0
      %9580 = vmatprep.subr.mxu0 0.0
      %9581 = vmatpush2.msra.mxu0 0.0
      %9582 = vmatprep.subr.mxu0 0.0
      %9583 = vmatpush2.msra.mxu0 0.0
      %9584 = vmatprep.subr.mxu0 0.0
      %9585 = vmatpush2.msra.mxu0 0.0
      %9586 = vmatprep.subr.mxu0 0.0
      %9587 = vmatpush2.msra.mxu0 0.0
      %9588 = vmatprep.subr.mxu0 0.0
      %9589 = vmatpush2.msra.mxu0 0.0
      %9590 = vmatprep.subr.mxu0 0.0
      %9591 = vmatpush2.msra.mxu0 0.0
      %9592 = vmatprep.subr.mxu0 0.0
      %9593 = vmatpush2.msra.mxu0 0.0
      %9594 = vmatprep.subr.mxu0 0.0
      %9595 = vmatpush2.msra.mxu0 0.0
      %9596 = vmatprep.subr.mxu0 0.0
      %9597 = vmatpush2.msra.mxu0 0.0
      %9598 = vmatprep.subr.mxu0 0.0
      %9599 = vmatpush2.msra.mxu0 0.0
      %9600 = vmatprep.subr.mxu0 0.0
      %9601 = vmatpush2.msra.mxu0 0.0
      %9602 = vmatprep.subr.mxu0 0.0
      %9603 = vmatpush2.msra.mxu0 0.0
      %9604 = vmatprep.mubr.f32.mxu0 0.0
      %v9605 = vand.u32 %v9531, 4294901760
      %v9606 = vsub.f32 %v9531, %v9605
      %v9607 = vand.u32 %v9606, 4294901760
      %v9608 = vsub.f32 %v9606, %v9607
      %v9609 = vand.u32 %v9608, 4294901760
      %9610 = vmatmul.mubr.f32.gmra.mxu0 %v9609
      %v9611 = vpop.f32.mrf.mxu0
      %v9612 = vadd.f32 %v9529, %v9611
      %v9613 = vpop.f32.mrf.mxu0
      %9614 = vmatprep.mubr.f32.mxu0 0.0
      %v9615 = vand.u32 %v9534, 4294901760
      %v9616 = vsub.f32 %v9534, %v9615
      %v9617 = vand.u32 %v9616, 4294901760
      %v9618 = vsub.f32 %v9616, %v9617
      %v9619 = vand.u32 %v9618, 4294901760
      %9620 = vmatmul.mubr.f32.gmra.mxu0 %v9619
      %v9621 = vpop.f32.mrf.mxu0
      %v9622 = vadd.f32 %v9529, %v9621
      %v9623 = vpop.f32.mrf.mxu0
      %9624 = vdwg.mxu0
      %9625 = vmatprep.subr.mxu0 0.0
      %9626 = vmatpush1.msra.mxu0 0.0
      %9627 = vmatprep.subr.mxu0 0.0
      %9628 = vmatpush1.msra.mxu0 0.0
      %9629 = vmatprep.subr.mxu0 0.0
      %9630 = vmatpush1.msra.mxu0 0.0
      %9631 = vmatprep.subr.mxu0 0.0
      %9632 = vmatpush1.msra.mxu0 0.0
      %9633 = vmatprep.subr.mxu0 0.0
      %9634 = vmatpush1.msra.mxu0 0.0
      %9635 = vmatprep.subr.mxu0 0.0
      %9636 = vmatpush1.msra.mxu0 0.0
      %9637 = vmatprep.subr.mxu0 0.0
      %9638 = vmatpush1.msra.mxu0 0.0
      %9639 = vmatprep.subr.mxu0 0.0
      %9640 = vmatpush1.msra.mxu0 0.0
      %9641 = vmatprep.subr.mxu0 0.0
      %9642 = vmatpush1.msra.mxu0 0.0
      %9643 = vmatprep.subr.mxu0 0.0
      %9644 = vmatpush1.msra.mxu0 0.0
      %9645 = vmatprep.subr.mxu0 0.0
      %9646 = vmatpush1.msra.mxu0 0.0
      %9647 = vmatprep.subr.mxu0 0.0
      %9648 = vmatpush1.msra.mxu0 0.0
      %9649 = vmatprep.subr.mxu0 0.0
      %v9650 = vand.u32 %v9524, 4294901760
      %v9651 = vsub.f32 %v9524, %v9650
      %v9652 = vand.u32 %v9651, 4294901760
      %v9653 = vsub.f32 %v9651, %v9652
      %v9654 = vand.u32 %v9653, 4294901760
      %9655 = vmatpush1.msra.mxu0 %v9654
      %9656 = vmatprep.subr.mxu0 0.0
      %v9657 = vand.u32 %v9523, 4294901760
      %v9658 = vsub.f32 %v9523, %v9657
      %v9659 = vand.u32 %v9658, 4294901760
      %v9660 = vsub.f32 %v9658, %v9659
      %v9661 = vand.u32 %v9660, 4294901760
      %9662 = vmatpush1.msra.mxu0 %v9661
      %9663 = vmatprep.subr.mxu0 0.0
      %v9664 = vand.u32 %v9522, 4294901760
      %v9665 = vsub.f32 %v9522, %v9664
      %v9666 = vand.u32 %v9665, 4294901760
      %v9667 = vsub.f32 %v9665, %v9666
      %v9668 = vand.u32 %v9667, 4294901760
      %9669 = vmatpush1.msra.mxu0 %v9668
      %9670 = vmatprep.subr.mxu0 0.0
      %v9671 = vand.u32 %v9521, 4294901760
      %v9672 = vsub.f32 %v9521, %v9671
      %v9673 = vand.u32 %v9672, 4294901760
      %v9674 = vsub.f32 %v9672, %v9673
      %v9675 = vand.u32 %v9674, 4294901760
      %9676 = vmatpush1.msra.mxu0 %v9675
      %9677 = vmatprep.subr.mxu0 0.0
      %9678 = vmatpush2.msra.mxu0 0.0
      %9679 = vmatprep.subr.mxu0 0.0
      %9680 = vmatpush2.msra.mxu0 0.0
      %9681 = vmatprep.subr.mxu0 0.0
      %9682 = vmatpush2.msra.mxu0 0.0
      %9683 = vmatprep.subr.mxu0 0.0
      %9684 = vmatpush2.msra.mxu0 0.0
      %9685 = vmatprep.subr.mxu0 0.0
      %9686 = vmatpush2.msra.mxu0 0.0
      %9687 = vmatprep.subr.mxu0 0.0
      %9688 = vmatpush2.msra.mxu0 0.0
      %9689 = vmatprep.subr.mxu0 0.0
      %9690 = vmatpush2.msra.mxu0 0.0
      %9691 = vmatprep.subr.mxu0 0.0
      %9692 = vmatpush2.msra.mxu0 0.0
      %9693 = vmatprep.subr.mxu0 0.0
      %9694 = vmatpush2.msra.mxu0 0.0
      %9695 = vmatprep.subr.mxu0 0.0
      %9696 = vmatpush2.msra.mxu0 0.0
      %9697 = vmatprep.subr.mxu0 0.0
      %9698 = vmatpush2.msra.mxu0 0.0
      %9699 = vmatprep.subr.mxu0 0.0
      %9700 = vmatpush2.msra.mxu0 0.0
      %9701 = vmatprep.subr.mxu0 0.0
      %9702 = vmatpush2.msra.mxu0 0.0
      %9703 = vmatprep.subr.mxu0 0.0
      %9704 = vmatpush2.msra.mxu0 0.0
      %9705 = vmatprep.subr.mxu0 0.0
      %9706 = vmatpush2.msra.mxu0 0.0
      %9707 = vmatprep.subr.mxu0 0.0
      %9708 = vmatpush2.msra.mxu0 0.0
      %9709 = vmatprep.mubr.f32.mxu0 0.0
      %v9710 = vand.u32 %v9531, 4294901760
      %9711 = vmatmul.mubr.f32.gmra.mxu0 %v9710
      %v9712 = vpop.f32.mrf.mxu0
      %v9713 = vadd.f32 %v9612, %v9712
      %v9714 = vpop.f32.mrf.mxu0
      %9715 = vmatprep.mubr.f32.mxu0 0.0
      %v9716 = vand.u32 %v9534, 4294901760
      %9717 = vmatmul.mubr.f32.gmra.mxu0 %v9716
      %v9718 = vpop.f32.mrf.mxu0
      %v9719 = vadd.f32 %v9622, %v9718
      %v9720 = vpop.f32.mrf.mxu0
      %9721 = vdwg.mxu0
      %9722 = vmatprep.subr.mxu0 0.0
      %9723 = vmatpush1.msra.mxu0 0.0
      %9724 = vmatprep.subr.mxu0 0.0
      %9725 = vmatpush1.msra.mxu0 0.0
      %9726 = vmatprep.subr.mxu0 0.0
      %9727 = vmatpush1.msra.mxu0 0.0
      %9728 = vmatprep.subr.mxu0 0.0
      %9729 = vmatpush1.msra.mxu0 0.0
      %9730 = vmatprep.subr.mxu0 0.0
      %9731 = vmatpush1.msra.mxu0 0.0
      %9732 = vmatprep.subr.mxu0 0.0
      %9733 = vmatpush1.msra.mxu0 0.0
      %9734 = vmatprep.subr.mxu0 0.0
      %9735 = vmatpush1.msra.mxu0 0.0
      %9736 = vmatprep.subr.mxu0 0.0
      %9737 = vmatpush1.msra.mxu0 0.0
      %9738 = vmatprep.subr.mxu0 0.0
      %9739 = vmatpush1.msra.mxu0 0.0
      %9740 = vmatprep.subr.mxu0 0.0
      %9741 = vmatpush1.msra.mxu0 0.0
      %9742 = vmatprep.subr.mxu0 0.0
      %9743 = vmatpush1.msra.mxu0 0.0
      %9744 = vmatprep.subr.mxu0 0.0
      %9745 = vmatpush1.msra.mxu0 0.0
      %9746 = vmatprep.subr.mxu0 0.0
      %v9747 = vand.u32 %v9524, 4294901760
      %v9748 = vsub.f32 %v9524, %v9747
      %9749 = vmatpush1.msra.mxu0 %v9748
      %9750 = vmatprep.subr.mxu0 0.0
      %v9751 = vand.u32 %v9523, 4294901760
      %v9752 = vsub.f32 %v9523, %v9751
      %9753 = vmatpush1.msra.mxu0 %v9752
      %9754 = vmatprep.subr.mxu0 0.0
      %v9755 = vand.u32 %v9522, 4294901760
      %v9756 = vsub.f32 %v9522, %v9755
      %9757 = vmatpush1.msra.mxu0 %v9756
      %9758 = vmatprep.subr.mxu0 0.0
      %v9759 = vand.u32 %v9521, 4294901760
      %v9760 = vsub.f32 %v9521, %v9759
      %9761 = vmatpush1.msra.mxu0 %v9760
      %9762 = vmatprep.subr.mxu0 0.0
      %9763 = vmatpush2.msra.mxu0 0.0
      %9764 = vmatprep.subr.mxu0 0.0
      %9765 = vmatpush2.msra.mxu0 0.0
      %9766 = vmatprep.subr.mxu0 0.0
      %9767 = vmatpush2.msra.mxu0 0.0
      %9768 = vmatprep.subr.mxu0 0.0
      %9769 = vmatpush2.msra.mxu0 0.0
      %9770 = vmatprep.subr.mxu0 0.0
      %9771 = vmatpush2.msra.mxu0 0.0
      %9772 = vmatprep.subr.mxu0 0.0
      %9773 = vmatpush2.msra.mxu0 0.0
      %9774 = vmatprep.subr.mxu0 0.0
      %9775 = vmatpush2.msra.mxu0 0.0
      %9776 = vmatprep.subr.mxu0 0.0
      %9777 = vmatpush2.msra.mxu0 0.0
      %9778 = vmatprep.subr.mxu0 0.0
      %9779 = vmatpush2.msra.mxu0 0.0
      %9780 = vmatprep.subr.mxu0 0.0
      %9781 = vmatpush2.msra.mxu0 0.0
      %9782 = vmatprep.subr.mxu0 0.0
      %9783 = vmatpush2.msra.mxu0 0.0
      %9784 = vmatprep.subr.mxu0 0.0
      %9785 = vmatpush2.msra.mxu0 0.0
      %9786 = vmatprep.subr.mxu0 0.0
      %9787 = vmatpush2.msra.mxu0 0.0
      %9788 = vmatprep.subr.mxu0 0.0
      %9789 = vmatpush2.msra.mxu0 0.0
      %9790 = vmatprep.subr.mxu0 0.0
      %9791 = vmatpush2.msra.mxu0 0.0
      %9792 = vmatprep.subr.mxu0 0.0
      %9793 = vmatpush2.msra.mxu0 0.0
      %9794 = vmatprep.mubr.f32.mxu0 0.0
      %v9795 = vand.u32 %v9531, 4294901760
      %v9796 = vsub.f32 %v9531, %v9795
      %9797 = vmatmul.mubr.f32.gmra.mxu0 %v9796
      %v9798 = vpop.f32.mrf.mxu0
      %v9799 = vadd.f32 %v9713, %v9798
      %v9800 = vpop.f32.mrf.mxu0
      %9801 = vmatprep.mubr.f32.mxu0 0.0
      %v9802 = vand.u32 %v9534, 4294901760
      %v9803 = vsub.f32 %v9534, %v9802
      %9804 = vmatmul.mubr.f32.gmra.mxu0 %v9803
      %v9805 = vpop.f32.mrf.mxu0
      %v9806 = vadd.f32 %v9719, %v9805
      %v9807 = vpop.f32.mrf.mxu0
      %9808 = vdwg.mxu0
      %9809 = vmatprep.subr.mxu0 0.0
      %9810 = vmatpush1.msra.mxu0 0.0
      %9811 = vmatprep.subr.mxu0 0.0
      %9812 = vmatpush1.msra.mxu0 0.0
      %9813 = vmatprep.subr.mxu0 0.0
      %9814 = vmatpush1.msra.mxu0 0.0
      %9815 = vmatprep.subr.mxu0 0.0
      %9816 = vmatpush1.msra.mxu0 0.0
      %9817 = vmatprep.subr.mxu0 0.0
      %9818 = vmatpush1.msra.mxu0 0.0
      %9819 = vmatprep.subr.mxu0 0.0
      %9820 = vmatpush1.msra.mxu0 0.0
      %9821 = vmatprep.subr.mxu0 0.0
      %9822 = vmatpush1.msra.mxu0 0.0
      %9823 = vmatprep.subr.mxu0 0.0
      %9824 = vmatpush1.msra.mxu0 0.0
      %9825 = vmatprep.subr.mxu0 0.0
      %9826 = vmatpush1.msra.mxu0 0.0
      %9827 = vmatprep.subr.mxu0 0.0
      %9828 = vmatpush1.msra.mxu0 0.0
      %9829 = vmatprep.subr.mxu0 0.0
      %9830 = vmatpush1.msra.mxu0 0.0
      %9831 = vmatprep.subr.mxu0 0.0
      %9832 = vmatpush1.msra.mxu0 0.0
      %9833 = vmatprep.subr.mxu0 0.0
      %v9834 = vand.u32 %v9524, 4294901760
      %9835 = vmatpush1.msra.mxu0 %v9834
      %9836 = vmatprep.subr.mxu0 0.0
      %v9837 = vand.u32 %v9523, 4294901760
      %9838 = vmatpush1.msra.mxu0 %v9837
      %9839 = vmatprep.subr.mxu0 0.0
      %v9840 = vand.u32 %v9522, 4294901760
      %9841 = vmatpush1.msra.mxu0 %v9840
      %9842 = vmatprep.subr.mxu0 0.0
      %v9843 = vand.u32 %v9521, 4294901760
      %9844 = vmatpush1.msra.mxu0 %v9843
      %9845 = vmatprep.subr.mxu0 0.0
      %9846 = vmatpush2.msra.mxu0 0.0
      %9847 = vmatprep.subr.mxu0 0.0
      %9848 = vmatpush2.msra.mxu0 0.0
      %9849 = vmatprep.subr.mxu0 0.0
      %9850 = vmatpush2.msra.mxu0 0.0
      %9851 = vmatprep.subr.mxu0 0.0
      %9852 = vmatpush2.msra.mxu0 0.0
      %9853 = vmatprep.subr.mxu0 0.0
      %9854 = vmatpush2.msra.mxu0 0.0
      %9855 = vmatprep.subr.mxu0 0.0
      %9856 = vmatpush2.msra.mxu0 0.0
      %9857 = vmatprep.subr.mxu0 0.0
      %9858 = vmatpush2.msra.mxu0 0.0
      %9859 = vmatprep.subr.mxu0 0.0
      %9860 = vmatpush2.msra.mxu0 0.0
      %9861 = vmatprep.subr.mxu0 0.0
      %9862 = vmatpush2.msra.mxu0 0.0
      %9863 = vmatprep.subr.mxu0 0.0
      %9864 = vmatpush2.msra.mxu0 0.0
      %9865 = vmatprep.subr.mxu0 0.0
      %9866 = vmatpush2.msra.mxu0 0.0
      %9867 = vmatprep.subr.mxu0 0.0
      %9868 = vmatpush2.msra.mxu0 0.0
      %9869 = vmatprep.subr.mxu0 0.0
      %9870 = vmatpush2.msra.mxu0 0.0
      %9871 = vmatprep.subr.mxu0 0.0
      %9872 = vmatpush2.msra.mxu0 0.0
      %9873 = vmatprep.subr.mxu0 0.0
      %9874 = vmatpush2.msra.mxu0 0.0
      %9875 = vmatprep.subr.mxu0 0.0
      %9876 = vmatpush2.msra.mxu0 0.0
      %9877 = vmatprep.mubr.f32.mxu0 0.0
      %v9878 = vand.u32 %v9531, 4294901760
      %v9879 = vsub.f32 %v9531, %v9878
      %v9880 = vand.u32 %v9879, 4294901760
      %9881 = vmatmul.mubr.f32.gmra.mxu0 %v9880
      %v9882 = vpop.f32.mrf.mxu0
      %v9883 = vadd.f32 %v9799, %v9882
      %v9884 = vpop.f32.mrf.mxu0
      %9885 = vmatprep.mubr.f32.mxu0 0.0
      %v9886 = vand.u32 %v9534, 4294901760
      %v9887 = vsub.f32 %v9534, %v9886
      %v9888 = vand.u32 %v9887, 4294901760
      %9889 = vmatmul.mubr.f32.gmra.mxu0 %v9888
      %v9890 = vpop.f32.mrf.mxu0
      %v9891 = vadd.f32 %v9806, %v9890
      %v9892 = vpop.f32.mrf.mxu0
      %9893 = vdwg.mxu0
      %9894 = vmatprep.subr.mxu0 0.0
      %9895 = vmatpush1.msra.mxu0 0.0
      %9896 = vmatprep.subr.mxu0 0.0
      %9897 = vmatpush1.msra.mxu0 0.0
      %9898 = vmatprep.subr.mxu0 0.0
      %9899 = vmatpush1.msra.mxu0 0.0
      %9900 = vmatprep.subr.mxu0 0.0
      %9901 = vmatpush1.msra.mxu0 0.0
      %9902 = vmatprep.subr.mxu0 0.0
      %9903 = vmatpush1.msra.mxu0 0.0
      %9904 = vmatprep.subr.mxu0 0.0
      %9905 = vmatpush1.msra.mxu0 0.0
      %9906 = vmatprep.subr.mxu0 0.0
      %9907 = vmatpush1.msra.mxu0 0.0
      %9908 = vmatprep.subr.mxu0 0.0
      %9909 = vmatpush1.msra.mxu0 0.0
      %9910 = vmatprep.subr.mxu0 0.0
      %9911 = vmatpush1.msra.mxu0 0.0
      %9912 = vmatprep.subr.mxu0 0.0
      %9913 = vmatpush1.msra.mxu0 0.0
      %9914 = vmatprep.subr.mxu0 0.0
      %9915 = vmatpush1.msra.mxu0 0.0
      %9916 = vmatprep.subr.mxu0 0.0
      %9917 = vmatpush1.msra.mxu0 0.0
      %9918 = vmatprep.subr.mxu0 0.0
      %v9919 = vand.u32 %v9524, 4294901760
      %v9920 = vsub.f32 %v9524, %v9919
      %v9921 = vand.u32 %v9920, 4294901760
      %9922 = vmatpush1.msra.mxu0 %v9921
      %9923 = vmatprep.subr.mxu0 0.0
      %v9924 = vand.u32 %v9523, 4294901760
      %v9925 = vsub.f32 %v9523, %v9924
      %v9926 = vand.u32 %v9925, 4294901760
      %9927 = vmatpush1.msra.mxu0 %v9926
      %9928 = vmatprep.subr.mxu0 0.0
      %v9929 = vand.u32 %v9522, 4294901760
      %v9930 = vsub.f32 %v9522, %v9929
      %v9931 = vand.u32 %v9930, 4294901760
      %9932 = vmatpush1.msra.mxu0 %v9931
      %9933 = vmatprep.subr.mxu0 0.0
      %v9934 = vand.u32 %v9521, 4294901760
      %v9935 = vsub.f32 %v9521, %v9934
      %v9936 = vand.u32 %v9935, 4294901760
      %9937 = vmatpush1.msra.mxu0 %v9936
      %9938 = vmatprep.subr.mxu0 0.0
      %9939 = vmatpush2.msra.mxu0 0.0
      %9940 = vmatprep.subr.mxu0 0.0
      %9941 = vmatpush2.msra.mxu0 0.0
      %9942 = vmatprep.subr.mxu0 0.0
      %9943 = vmatpush2.msra.mxu0 0.0
      %9944 = vmatprep.subr.mxu0 0.0
      %9945 = vmatpush2.msra.mxu0 0.0
      %9946 = vmatprep.subr.mxu0 0.0
      %9947 = vmatpush2.msra.mxu0 0.0
      %9948 = vmatprep.subr.mxu0 0.0
      %9949 = vmatpush2.msra.mxu0 0.0
      %9950 = vmatprep.subr.mxu0 0.0
      %9951 = vmatpush2.msra.mxu0 0.0
      %9952 = vmatprep.subr.mxu0 0.0
      %9953 = vmatpush2.msra.mxu0 0.0
      %9954 = vmatprep.subr.mxu0 0.0
      %9955 = vmatpush2.msra.mxu0 0.0
      %9956 = vmatprep.subr.mxu0 0.0
      %9957 = vmatpush2.msra.mxu0 0.0
      %9958 = vmatprep.subr.mxu0 0.0
      %9959 = vmatpush2.msra.mxu0 0.0
      %9960 = vmatprep.subr.mxu0 0.0
      %9961 = vmatpush2.msra.mxu0 0.0
      %9962 = vmatprep.subr.mxu0 0.0
      %9963 = vmatpush2.msra.mxu0 0.0
      %9964 = vmatprep.subr.mxu0 0.0
      %9965 = vmatpush2.msra.mxu0 0.0
      %9966 = vmatprep.subr.mxu0 0.0
      %9967 = vmatpush2.msra.mxu0 0.0
      %9968 = vmatprep.subr.mxu0 0.0
      %9969 = vmatpush2.msra.mxu0 0.0
      %9970 = vmatprep.mubr.f32.mxu0 0.0
      %v9971 = vand.u32 %v9531, 4294901760
      %9972 = vmatmul.mubr.f32.gmra.mxu0 %v9971
      %v9973 = vpop.f32.mrf.mxu0
      %v9974 = vadd.f32 %v9883, %v9973
      %v9975 = vpop.f32.mrf.mxu0
      %9976 = vmatprep.mubr.f32.mxu0 0.0
      %v9977 = vand.u32 %v9534, 4294901760
      %9978 = vmatmul.mubr.f32.gmra.mxu0 %v9977
      %v9979 = vpop.f32.mrf.mxu0
      %v9980 = vadd.f32 %v9891, %v9979
      %v9981 = vpop.f32.mrf.mxu0
      %9982 = vdwg.mxu0
      %9983 = vmatprep.subr.mxu0 0.0
      %9984 = vmatpush1.msra.mxu0 0.0
      %9985 = vmatprep.subr.mxu0 0.0
      %9986 = vmatpush1.msra.mxu0 0.0
      %9987 = vmatprep.subr.mxu0 0.0
      %9988 = vmatpush1.msra.mxu0 0.0
      %9989 = vmatprep.subr.mxu0 0.0
      %9990 = vmatpush1.msra.mxu0 0.0
      %9991 = vmatprep.subr.mxu0 0.0
      %9992 = vmatpush1.msra.mxu0 0.0
      %9993 = vmatprep.subr.mxu0 0.0
      %9994 = vmatpush1.msra.mxu0 0.0
      %9995 = vmatprep.subr.mxu0 0.0
      %9996 = vmatpush1.msra.mxu0 0.0
      %9997 = vmatprep.subr.mxu0 0.0
      %9998 = vmatpush1.msra.mxu0 0.0
      %9999 = vmatprep.subr.mxu0 0.0
      %10000 = vmatpush1.msra.mxu0 0.0
      %10001 = vmatprep.subr.mxu0 0.0
      %10002 = vmatpush1.msra.mxu0 0.0
      %10003 = vmatprep.subr.mxu0 0.0
      %10004 = vmatpush1.msra.mxu0 0.0
      %10005 = vmatprep.subr.mxu0 0.0
      %10006 = vmatpush1.msra.mxu0 0.0
      %10007 = vmatprep.subr.mxu0 0.0
      %v10008 = vand.u32 %v9524, 4294901760
      %10009 = vmatpush1.msra.mxu0 %v10008
      %10010 = vmatprep.subr.mxu0 0.0
      %v10011 = vand.u32 %v9523, 4294901760
      %10012 = vmatpush1.msra.mxu0 %v10011
      %10013 = vmatprep.subr.mxu0 0.0
      %v10014 = vand.u32 %v9522, 4294901760
      %10015 = vmatpush1.msra.mxu0 %v10014
      %10016 = vmatprep.subr.mxu0 0.0
      %v10017 = vand.u32 %v9521, 4294901760
      %10018 = vmatpush1.msra.mxu0 %v10017
      %10019 = vmatprep.subr.mxu0 0.0
      %10020 = vmatpush2.msra.mxu0 0.0
      %10021 = vmatprep.subr.mxu0 0.0
      %10022 = vmatpush2.msra.mxu0 0.0
      %10023 = vmatprep.subr.mxu0 0.0
      %10024 = vmatpush2.msra.mxu0 0.0
      %10025 = vmatprep.subr.mxu0 0.0
      %10026 = vmatpush2.msra.mxu0 0.0
      %10027 = vmatprep.subr.mxu0 0.0
      %10028 = vmatpush2.msra.mxu0 0.0
      %10029 = vmatprep.subr.mxu0 0.0
      %10030 = vmatpush2.msra.mxu0 0.0
      %10031 = vmatprep.subr.mxu0 0.0
      %10032 = vmatpush2.msra.mxu0 0.0
      %10033 = vmatprep.subr.mxu0 0.0
      %10034 = vmatpush2.msra.mxu0 0.0
      %10035 = vmatprep.subr.mxu0 0.0
      %10036 = vmatpush2.msra.mxu0 0.0
      %10037 = vmatprep.subr.mxu0 0.0
      %10038 = vmatpush2.msra.mxu0 0.0
      %10039 = vmatprep.subr.mxu0 0.0
      %10040 = vmatpush2.msra.mxu0 0.0
      %10041 = vmatprep.subr.mxu0 0.0
      %10042 = vmatpush2.msra.mxu0 0.0
      %10043 = vmatprep.subr.mxu0 0.0
      %10044 = vmatpush2.msra.mxu0 0.0
      %10045 = vmatprep.subr.mxu0 0.0
      %10046 = vmatpush2.msra.mxu0 0.0
      %10047 = vmatprep.subr.mxu0 0.0
      %10048 = vmatpush2.msra.mxu0 0.0
      %10049 = vmatprep.subr.mxu0 0.0
      %10050 = vmatpush2.msra.mxu0 0.0
      %10051 = vmatprep.mubr.f32.mxu0 0.0
      %v10052 = vand.u32 %v9531, 4294901760
      %10053 = vmatmul.mubr.f32.gmra.mxu0 %v10052
      %v10054 = vpop.f32.mrf.mxu0
      %v10055 = vadd.f32 %v9974, %v10054
      %v10056 = vpop.f32.mrf.mxu0
      %10057 = vmatprep.mubr.f32.mxu0 0.0
      %v10058 = vand.u32 %v9534, 4294901760
      %10059 = vmatmul.mubr.f32.gmra.mxu0 %v10058
      %v10060 = vpop.f32.mrf.mxu0
      %v10061 = vadd.f32 %v9980, %v10060
      %v10062 = vpop.f32.mrf.mxu0
      %10063 = vdwg.mxu0
      %vm10064 = vcmask 23552
      %10065 = vst.msk [vmem:[%s331] sm:$0xff] %vm10064, %v10055
      %10066 = vst.msk [vmem:[%s331 + $0x8] sm:$0xff] %vm10064, %v10061
      %p10067 = scmp.lt.s32.totalorder %s17, 1
      %s10068 = scalar_select %p10067, %s17, 1
      %s10069 = smul.addr %s10068, 2
      %s10070 = smul.addr %s10069, 8
      %s10071 = scalar_lea.vmem %s6, %s10070
      // Predicated region
      $region45: #{gnn_forward.1} parent=43 // pred_check
        %p10072 = pneg %p186
      $region46: #{gnn_forward.1} parent=43 // pred_check_branch
        %10074 = sbr.rel (%p10072) target = $region48
      $region47: #{gnn_forward.1} parent=43 // pred_region
        _
      $region48: #{gnn_forward.1} parent=43 // pred_fallthru
        _
    $region44: #{gnn_forward.1} parent=5 // pred_fallthru
      _
    %p10075 = scmp.le.s32.totalorder 2, %s12
    // Predicated region
    $region49: #{gnn_forward.1} parent=5 // pred_check
      %p10076 = pneg %p10075
    $region50: #{gnn_forward.1} parent=5 // pred_check_branch
      %10078 = sbr.rel (%p10076) target = $region52
    $region51: #{gnn_forward.1} parent=5 // pred_region
      %s10079 = ssub.s32 %s12, 2
      // Predicated region
      $region53: #{gnn_forward.1} parent=51 // pred_check
        %p10080 = pneg %p192
      $region54: #{gnn_forward.1} parent=51 // pred_check_branch
        %10082 = sbr.rel (%p10080) target = $region56
      $region55: #{gnn_forward.1} parent=51 // pred_region
        %p10083 = scmp.lt.s32.totalorder %s18, 1
        %s10084 = scalar_select %p10083, %s18, 1
        %s10085 = smul.addr %s10084, 2
        %s10086 = smul.addr %s10085, 8
        %s10087 = scalar_lea.vmem %s6, %s10086
      $region56: #{gnn_forward.1} parent=51 // pred_fallthru
        _
    $region52: #{gnn_forward.1} parent=5 // pred_fallthru
      _
  $region6: #{gnn_forward.1} parent=0 // loop_footer
    %s16 = sadd.s32 1, %s12
  $region7: #{gnn_forward.1} parent=0 // loop_footer_branch
    %11 = sbr.rel target = $region3
  $region8: #{gnn_forward.1} parent=0 // loop_exit
    _

</llo_original>
